<compile_context>
chip_gen: v7x
topology: tpu7x:2x2x1
jax: 0.10.0
libtpu: 0.0.40
codegen_flags: <defaults>
</compile_context>

<pallas_src>
import numpy as np
import jax
import jax.numpy as jnp
from jax.experimental import pallas as pl
from jax.experimental.pallas import tpu as pltpu

_NAUG = 16  # augmented-h columns: [x_fwd, x_rev, 14 zero pad] -> K stays a multiple of 16


def _round_up(x, m):
    return ((x + m - 1) // m) * m


def _gelu_exact(x):
    # PyTorch default nn.GELU == exact erf formulation.
    return 0.5 * x * (1.0 + jax.lax.erf(x * 0.7071067811865476))


# --------------------------------------------------------------------------------------
# Kernel
# --------------------------------------------------------------------------------------
def global_feature_encoder_kernel(
    front_ref,   # (bb, 48)            [25 ECal pixels | 7 zero | 5 scalars | 11 zero]
    hcal_ref,    # (bb, T)             HCal sequence (f32)
    wfront_ref,  # (48, 10*Dp)         [Toeplitz conv weight | scalars weight]
    bfront_ref,  # (1, 10*Dp)          [conv bias tiled x9   | scalars bias]
    whh_ref,     # (2*Dp+NAUG, 8*Dp)   fused recurrent weight, augmented with w_ih rows
    blstm_ref,   # (1, 8*Dp)           fused LSTM bias (b_ih + b_hh, both directions)
    out_ref,     # (bb, Dp)
    haug_ref,    # VMEM scratch (bb, 2*Dp+NAUG): [h_fwd | h_rev | x_fwd | x_rev | 0...]
):
    Dp = out_ref.shape[1]
    bb, T = hcal_ref.shape
    G = 2 * Dp                                   # per-gate chunk = [fwd | rev]

    # -------- Front end: ECal Conv2d(1->D,3)+GELU+AvgPool  fused with  Linear(5->D) ----
    z = jnp.dot(front_ref[...], wfront_ref[...],
                preferred_element_type=jnp.float32) + bfront_ref[...]     # (bb, 10*Dp)
    act = _gelu_exact(z[:, 0:9 * Dp])            # GELU only on the conv lanes
    pooled = act[:, 0:Dp]
    for p in range(1, 9):                        # global average pool = 9 lane-slice adds
        pooled = pooled + act[:, p * Dp:(p + 1) * Dp]
    ecal_feat = pooled * (1.0 / 9.0)
    scalars_feat = z[:, 9 * Dp:10 * Dp]

    # -------- HCal: fused bidirectional LSTM (input_size=1, T steps) -------------------
    hcal = hcal_ref[...]                                                   # (bb, T) f32
    whh = whh_ref[...]
    bias = blstm_ref[...]

    # Augmented hidden state: input columns folded into the recurrent matmul.
    haug_ref[...] = jnp.zeros_like(haug_ref)
    haug_ref[:, G:G + 1] = hcal[:, 0:1].astype(haug_ref.dtype)             # x_fwd(t=0)
    haug_ref[:, G + 1:G + 2] = hcal[:, T - 1:T].astype(haug_ref.dtype)     # x_rev(t=T-1)

    c = jnp.zeros((bb, G), jnp.float32)
    h = jnp.zeros((bb, G), jnp.float32)
    for step in range(T):                        # static unroll, T = 9 (serial chain)
        gates = jnp.dot(haug_ref[...], whh,
                        preferred_element_type=jnp.float32) + bias         # (bb, 8*Dp) f32
        # PyTorch gate order i, f, g, o; each 2Dp chunk holds [fwd | rev].
        # sigmoid(x) = 0.5*(1+tanh(0.5*x)): single EUP transcendental per gate.
        i_g = 0.5 * (1.0 + jnp.tanh(0.5 * gates[:, 0:G]))
        f_g = 0.5 * (1.0 + jnp.tanh(0.5 * gates[:, G:2 * G]))
        g_g = jnp.tanh(gates[:, 2 * G:3 * G])
        o_g = 0.5 * (1.0 + jnp.tanh(0.5 * gates[:, 3 * G:4 * G]))
        c = f_g * c + i_g * g_g                  # cell state / gates kept in f32
        h = o_g * jnp.tanh(c)
        if step + 1 < T:
            haug_ref[:, 0:G] = h.astype(haug_ref.dtype)
            haug_ref[:, G:G + 1] = hcal[:, step + 1:step + 2].astype(haug_ref.dtype)
            haug_ref[:, G + 1:G + 2] = hcal[:, T - 2 - step:T - 1 - step].astype(haug_ref.dtype)
    hcal_feat = h[:, 0:Dp] + h[:, Dp:2 * Dp]     # = h_n[-2] + h_n[-1]

    # nn.Dropout is identity at inference time.
    out_ref[...] = ecal_feat + hcal_feat + scalars_feat


# --------------------------------------------------------------------------------------
# One-time weight packing (numpy, hoisted off the per-call path)
# --------------------------------------------------------------------------------------
def pack_global_feature_encoder_params(params, *, use_bf16_matmul=True):
    D = params["w_conv"].shape[1]
    Dp = _round_up(D, 128)                       # lane-aligned d_model
    f32 = np.float32
    mm_dtype = jnp.bfloat16 if use_bf16_matmul else jnp.float32

    w_conv = np.asarray(params["w_conv"], f32)                 # (9, D), taps row-major
    b_conv = np.asarray(params["b_conv"], f32).reshape(1, D)
    w_scal = np.asarray(params["w_scal"], f32)                 # (5, D)
    b_scal = np.asarray(params["b_scal"], f32).reshape(1, D)

    # Fused front-end weight: Toeplitz-expanded conv (columns 0..9*Dp) + scalars Linear
    # (columns 9*Dp..10*Dp). Input row layout: [25 pixels | 7 zero | 5 scalars | 11 zero].
    w_front = np.zeros((48, 10 * Dp), f32)
    for oi in range(3):
        for oj in range(3):
            pos = oi * 3 + oj
            for ki in range(3):
                for kj in range(3):
                    r = (oi + ki) * 5 + (oj + kj)
                    w_front[r, pos * Dp:pos * Dp + D] = w_conv[ki * 3 + kj]
    w_front[32:37, 9 * Dp:9 * Dp + D] = w_scal

    b_front = np.zeros((1, 10 * Dp), f32)
    for pos in range(9):
        b_front[0, pos * Dp:pos * Dp + D] = b_conv[0]
    b_front[0, 9 * Dp:9 * Dp + D] = b_scal[0]

    # Fused, augmented BiLSTM recurrent weight.
    # Rows: [h_fwd (Dp) | h_rev (Dp) | x_fwd | x_rev | zero pad]  (2*Dp + NAUG)
    # Cols: gate-interleaved [i_f|i_r|f_f|f_r|g_f|g_r|o_f|o_r]     (8*Dp)
    w_hh_f = np.asarray(params["w_hh_f"], f32)
    w_hh_r = np.asarray(params["w_hh_r"], f32)
    w_ih_f = np.asarray(params["w_ih_f"], f32).reshape(1, 4 * D)
    w_ih_r = np.asarray(params["w_ih_r"], f32).reshape(1, 4 * D)
    b_f = np.asarray(params["b_f"], f32).reshape(1, 4 * D)
    b_r = np.asarray(params["b_r"], f32).reshape(1, 4 * D)

    whh_aug = np.zeros((2 * Dp + _NAUG, 8 * Dp), f32)
    b_lstm = np.zeros((1, 8 * Dp), f32)
    for k in range(4):                           # gate k in (i, f, g, o)
        base = 2 * k * Dp
        whh_aug[0:D, base:base + D] = w_hh_f[:, k * D:(k + 1) * D]
        whh_aug[Dp:Dp + D, base + Dp:base + Dp + D] = w_hh_r[:, k * D:(k + 1) * D]
        whh_aug[2 * Dp, base:base + D] = w_ih_f[0, k * D:(k + 1) * D]
        whh_aug[2 * Dp + 1, base + Dp:base + Dp + D] = w_ih_r[0, k * D:(k + 1) * D]
        b_lstm[0, base:base + D] = b_f[0, k * D:(k + 1) * D]
        b_lstm[0, base + Dp:base + Dp + D] = b_r[0, k * D:(k + 1) * D]

    return {
        "D": D, "Dp": Dp, "mm_dtype": mm_dtype,
        "w_front": jnp.asarray(w_front).astype(mm_dtype),
        "b_front": jnp.asarray(b_front),                     # biases stay f32
        "whh_aug": jnp.asarray(whh_aug).astype(mm_dtype),
        "b_lstm": jnp.asarray(b_lstm),
    }


# --------------------------------------------------------------------------------------
# Wrapper
# --------------------------------------------------------------------------------------
def global_feature_encoder(ecal, hcal, scalars, packed):
    """ecal: (B,5,5), hcal: (B,T=9), scalars: (B,5) -> (B, d_model)."""
    B = ecal.shape[0]
    T = hcal.shape[1]
    D, Dp = packed["D"], packed["Dp"]
    mm_dtype = packed["mm_dtype"]
    f32 = jnp.float32

    # Batch tile: multiple of 8 sublanes, capped at 128 rows; prefer >= 2 grid steps
    # whenever the batch allows so the "parallel" axis can shard across v7x's two TCs.
    Bp8 = _round_up(max(B, 1), 8)
    if Bp8 >= 16:
        bb = min(128, _round_up((Bp8 + 1) // 2, 8))
    else:
        bb = Bp8
    Bp = _round_up(Bp8, bb)
    # NOTE(VMEM): resident whh_aug scales as ~16*Dp^2 bytes in f32 (half in bf16);
    # for very large d_model shrink bb first and/or raise vmem_limit_bytes.

    # Fused front-end operand: [ECal pixels | pad | scalars | pad] -> (Bp, 48).
    front = jnp.concatenate(
        [jnp.pad(ecal.reshape(B, 25).astype(f32), ((0, 0), (0, 7))),
         jnp.pad(scalars.astype(f32), ((0, 0), (0, 11)))], axis=1)
    front = jnp.pad(front, ((0, Bp - B), (0, 0))).astype(mm_dtype)          # (Bp, 48)
    hcal_p = jnp.pad(hcal.astype(f32), ((0, Bp - B), (0, 0)))               # (Bp, T)

    args = (front, hcal_p, packed["w_front"], packed["b_front"],
            packed["whh_aug"], packed["b_lstm"])

    in_specs = [
        pl.BlockSpec((bb, 48), lambda i: (i, 0)),                  # fused input (batch-tiled)
        pl.BlockSpec((bb, T), lambda i: (i, 0)),                   # hcal (batch-tiled)
        pl.BlockSpec((48, 10 * Dp), lambda i: (0, 0)),             # front weight (resident)
        pl.BlockSpec((1, 10 * Dp), lambda i: (0, 0)),              # front bias (resident)
        pl.BlockSpec((2 * Dp + _NAUG, 8 * Dp), lambda i: (0, 0)),  # augmented w_hh (resident)
        pl.BlockSpec((1, 8 * Dp), lambda i: (0, 0)),               # lstm bias (resident)
    ]

    out = pl.pallas_call(
        global_feature_encoder_kernel,
        out_shape=jax.ShapeDtypeStruct((Bp, Dp), jnp.float32),
        grid=(Bp // bb,),
        in_specs=in_specs,
        out_specs=pl.BlockSpec((bb, Dp), lambda i: (i, 0)),
        scratch_shapes=[pltpu.VMEM((bb, 2 * Dp + _NAUG), mm_dtype)],
        compiler_params=pltpu.CompilerParams(dimension_semantics=("parallel",)),
    )(*args)

    return out[:B, :D]


# --------------------------------------------------------------------------------------
# Pure-JAX reference mirroring the PyTorch forward (eval mode)
# --------------------------------------------------------------------------------------
def reference_jax(ecal, hcal, scalars, params):
    B = ecal.shape[0]
    D = params["w_conv"].shape[1]
    patches = jnp.stack(
        [ecal[:, i:i + 3, j:j + 3].reshape(B, 9) for i in range(3) for j in range(3)],
        axis=1,
    )                                                                        # (B, 9, 9)
    conv = jnp.einsum("bpk,kd->bpd", patches, params["w_conv"]) + params["b_conv"]
    ecal_feat = jnp.mean(jax.nn.gelu(conv, approximate=False), axis=1)

    def run(wih, whh, b, reverse):
        h = jnp.zeros((B, D), jnp.float32)
        c = jnp.zeros((B, D), jnp.float32)
        idxs = range(hcal.shape[1] - 1, -1, -1) if reverse else range(hcal.shape[1])
        for t in idxs:
            x_t = hcal[:, t:t + 1]
            gates = x_t * wih + h @ whh + b
            i_g = jax.nn.sigmoid(gates[:, :D])
            f_g = jax.nn.sigmoid(gates[:, D:2 * D])
            g_g = jnp.tanh(gates[:, 2 * D:3 * D])
            o_g = jax.nn.sigmoid(gates[:, 3 * D:])
            c = f_g * c + i_g * g_g
            h = o_g * jnp.tanh(c)
        return h

    hcal_feat = (run(params["w_ih_f"], params["w_hh_f"], params["b_f"], False)
                 + run(params["w_ih_r"], params["w_hh_r"], params["b_r"], True))
    scal_feat = scalars @ params["w_scal"] + params["b_scal"]
    return ecal_feat + hcal_feat + scal_feat


if __name__ == "__main__":
    D = 128         # d_model (small, lane-aligned)
    B = 4           # batch
    T = 9           # HCal sequence length (fixed by the module spec)

    key = jax.random.PRNGKey(0)
    ks = jax.random.split(key, 16)

    params = {
        # Conv2d(1, D, 3): torch weight (D,1,3,3) flattened row-major over taps -> (9, D)
        "w_conv": 0.3 * jax.random.normal(ks[0], (9, D), jnp.float32),
        "b_conv": 0.1 * jax.random.normal(ks[1], (1, D), jnp.float32),
        # LSTM forward direction: W_ih (4D,1)->(1,4D), W_hh (4D,D)->(D,4D), b = b_ih+b_hh
        "w_ih_f": 0.3 * jax.random.normal(ks[2], (1, 4 * D), jnp.float32),
        "w_hh_f": 0.1 * jax.random.normal(ks[3], (D, 4 * D), jnp.float32),
        "b_f":    0.1 * jax.random.normal(ks[4], (1, 4 * D), jnp.float32),
        # LSTM reverse direction
        "w_ih_r": 0.3 * jax.random.normal(ks[5], (1, 4 * D), jnp.float32),
        "w_hh_r": 0.1 * jax.random.normal(ks[6], (D, 4 * D), jnp.float32),
        "b_r":    0.1 * jax.random.normal(ks[7], (1, 4 * D), jnp.float32),
        # Linear(5, D)
        "w_scal": 0.3 * jax.random.normal(ks[8], (5, D), jnp.float32),
        "b_scal": 0.1 * jax.random.normal(ks[9], (1, D), jnp.float32),
    }

    ecal = jax.random.normal(ks[10], (B, 5, 5), jnp.float32)
    hcal = jax.random.normal(ks[11], (B, T), jnp.float32)
    scalars = jax.random.normal(ks[12], (B, 5), jnp.float32)

    ref = jax.block_until_ready(reference_jax(ecal, hcal, scalars, params))

    # f32 matmul path: tight validation.
    packed_f32 = pack_global_feature_encoder_params(params, use_bf16_matmul=False)
    out_f32 = jax.block_until_ready(global_feature_encoder(ecal, hcal, scalars, packed_f32))
    np.testing.assert_allclose(np.asarray(out_f32), np.asarray(ref), rtol=2e-3, atol=2e-3)

    # bf16 MXU-operand path (v6e/v7x default): loose validation (operand quantization).
    packed_bf16 = pack_global_feature_encoder_params(params, use_bf16_matmul=True)
    out_bf16 = jax.block_until_ready(global_feature_encoder(ecal, hcal, scalars, packed_bf16))
    np.testing.assert_allclose(np.asarray(out_bf16), np.asarray(ref), rtol=1e-1, atol=1e-1)

    print("KERNEL_OK")
</pallas_src>

<mosaic_0001>
module attributes {stable_mosaic.version = 11 : i64} {
  func.func @global_feature_encoder_kernel(%arg0: i32, %arg1: memref<8x48xf32, #tpu.memory_space<vmem>>, %arg2: memref<8x9xf32, #tpu.memory_space<vmem>>, %arg3: memref<48x1280xf32, #tpu.memory_space<vmem>>, %arg4: memref<1x1280xf32, #tpu.memory_space<vmem>>, %arg5: memref<272x1024xf32, #tpu.memory_space<vmem>>, %arg6: memref<1x1024xf32, #tpu.memory_space<vmem>>, %arg7: memref<8x128xf32, #tpu.memory_space<vmem>>, %arg8: memref<8x272xf32, #tpu.memory_space<vmem>>) attributes {dimension_semantics = [#tpu.dimension_semantics<parallel>], iteration_bounds = array<i64: 1>, scalar_prefetch = 0 : i64, scratch_operands = 1 : i64, tpu.core_type = #tpu.core_type<tc>, window_params = [{transform_indices = @transform_0, window_bounds = array<i64: 8, 48>}, {transform_indices = @transform_1, window_bounds = array<i64: 8, 9>}, {pipeline_mode = #tpu.pipeline_mode<synchronous>, transform_indices = @transform_2, window_bounds = array<i64: 48, 1280>}, {pipeline_mode = #tpu.pipeline_mode<synchronous>, transform_indices = @transform_3, window_bounds = array<i64: 1, 1280>}, {pipeline_mode = #tpu.pipeline_mode<synchronous>, transform_indices = @transform_4, window_bounds = array<i64: 272, 1024>}, {pipeline_mode = #tpu.pipeline_mode<synchronous>, transform_indices = @transform_5, window_bounds = array<i64: 1, 1024>}, {transform_indices = @transform_6, window_bounds = array<i64: 8, 128>}]} {
    %c0 = arith.constant 0 : index
    %c0_0 = arith.constant 0 : index
    %0 = vector.load %arg1[%c0, %c0_0] : memref<8x48xf32, #tpu.memory_space<vmem>>, vector<8x48xf32>
    %c0_1 = arith.constant 0 : index
    %c0_2 = arith.constant 0 : index
    %1 = vector.load %arg3[%c0_1, %c0_2] : memref<48x1280xf32, #tpu.memory_space<vmem>>, vector<48x1280xf32>
    %cst = arith.constant dense<0.000000e+00> : vector<8x1280xf32>
    %2 = tpu.matmul %0, %1, %cst {dimension_numbers = #tpu.dot_dimension_numbers<[1], [0], [0], [1], [0, 0, 1, 1], [], []>} : vector<8x48xf32>, vector<48x1280xf32>, vector<8x1280xf32> -> vector<8x1280xf32>
    %c0_3 = arith.constant 0 : index
    %c0_4 = arith.constant 0 : index
    %3 = vector.load %arg4[%c0_3, %c0_4] : memref<1x1280xf32, #tpu.memory_space<vmem>>, vector<1x1280xf32>
    %4 = vector.broadcast %3 : vector<1x1280xf32> to vector<8x1280xf32>
    %5 = arith.addf %2, %4 : vector<8x1280xf32>
    %6 = vector.extract_strided_slice %5 {offsets = [0, 0], sizes = [8, 1152], strides = [1, 1]} : vector<8x1280xf32> to vector<8x1152xf32>
    %cst_5 = arith.constant 5.000000e-01 : f32
    %7 = vector.broadcast %cst_5 : f32 to vector<8x1152xf32>
    %8 = arith.mulf %7, %6 : vector<8x1152xf32>
    %cst_6 = arith.constant 0.707106769 : f32
    %9 = vector.broadcast %cst_6 : f32 to vector<8x1152xf32>
    %10 = arith.mulf %6, %9 : vector<8x1152xf32>
    %11 = math.erf %10 : vector<8x1152xf32>
    %cst_7 = arith.constant 1.000000e+00 : f32
    %12 = vector.broadcast %cst_7 : f32 to vector<8x1152xf32>
    %13 = arith.addf %12, %11 : vector<8x1152xf32>
    %14 = arith.mulf %8, %13 : vector<8x1152xf32>
    %15 = vector.extract_strided_slice %14 {offsets = [0, 0], sizes = [8, 128], strides = [1, 1]} : vector<8x1152xf32> to vector<8x128xf32>
    %16 = vector.extract_strided_slice %14 {offsets = [0, 128], sizes = [8, 128], strides = [1, 1]} : vector<8x1152xf32> to vector<8x128xf32>
    %17 = arith.addf %15, %16 : vector<8x128xf32>
    %18 = vector.extract_strided_slice %14 {offsets = [0, 256], sizes = [8, 128], strides = [1, 1]} : vector<8x1152xf32> to vector<8x128xf32>
    %19 = arith.addf %17, %18 : vector<8x128xf32>
    %20 = vector.extract_strided_slice %14 {offsets = [0, 384], sizes = [8, 128], strides = [1, 1]} : vector<8x1152xf32> to vector<8x128xf32>
    %21 = arith.addf %19, %20 : vector<8x128xf32>
    %22 = vector.extract_strided_slice %14 {offsets = [0, 512], sizes = [8, 128], strides = [1, 1]} : vector<8x1152xf32> to vector<8x128xf32>
    %23 = arith.addf %21, %22 : vector<8x128xf32>
    %24 = vector.extract_strided_slice %14 {offsets = [0, 640], sizes = [8, 128], strides = [1, 1]} : vector<8x1152xf32> to vector<8x128xf32>
    %25 = arith.addf %23, %24 : vector<8x128xf32>
    %26 = vector.extract_strided_slice %14 {offsets = [0, 768], sizes = [8, 128], strides = [1, 1]} : vector<8x1152xf32> to vector<8x128xf32>
    %27 = arith.addf %25, %26 : vector<8x128xf32>
    %28 = vector.extract_strided_slice %14 {offsets = [0, 896], sizes = [8, 128], strides = [1, 1]} : vector<8x1152xf32> to vector<8x128xf32>
    %29 = arith.addf %27, %28 : vector<8x128xf32>
    %30 = vector.extract_strided_slice %14 {offsets = [0, 1024], sizes = [8, 128], strides = [1, 1]} : vector<8x1152xf32> to vector<8x128xf32>
    %31 = arith.addf %29, %30 : vector<8x128xf32>
    %cst_8 = arith.constant 0.111111112 : f32
    %32 = vector.broadcast %cst_8 : f32 to vector<8x128xf32>
    %33 = arith.mulf %31, %32 : vector<8x128xf32>
    %34 = vector.extract_strided_slice %5 {offsets = [0, 1152], sizes = [8, 128], strides = [1, 1]} : vector<8x1280xf32> to vector<8x128xf32>
    %c0_9 = arith.constant 0 : index
    %c0_10 = arith.constant 0 : index
    %35 = vector.load %arg2[%c0_9, %c0_10] : memref<8x9xf32, #tpu.memory_space<vmem>>, vector<8x9xf32>
    %c0_11 = arith.constant 0 : index
    %c0_12 = arith.constant 0 : index
    %36 = vector.load %arg5[%c0_11, %c0_12] : memref<272x1024xf32, #tpu.memory_space<vmem>>, vector<272x1024xf32>
    %c0_13 = arith.constant 0 : index
    %c0_14 = arith.constant 0 : index
    %37 = vector.load %arg6[%c0_13, %c0_14] : memref<1x1024xf32, #tpu.memory_space<vmem>>, vector<1x1024xf32>
    %cst_15 = arith.constant 0.000000e+00 : f32
    %38 = vector.broadcast %cst_15 : f32 to vector<8x272xf32>
    %c0_16 = arith.constant 0 : index
    %c0_17 = arith.constant 0 : index
    %39 = vector.load %arg8[%c0_16, %c0_17] : memref<8x272xf32, #tpu.memory_space<vmem>>, vector<8x272xf32>
    tpu.vector_store %arg8[%c0_16, %c0_17], %38 {strides = array<i32>} : memref<8x272xf32, #tpu.memory_space<vmem>>, vector<8x272xf32>,
    %40 = vector.extract_strided_slice %35 {offsets = [0, 0], sizes = [8, 1], strides = [1, 1]} : vector<8x9xf32> to vector<8x1xf32>
    %c0_18 = arith.constant 0 : index
    %c256 = arith.constant 256 : index
    %41 = vector.load %arg8[%c0_18, %c256] : memref<8x272xf32, #tpu.memory_space<vmem>>, vector<8x1xf32>
    tpu.vector_store %arg8[%c0_18, %c256], %40 {strides = array<i32>} : memref<8x272xf32, #tpu.memory_space<vmem>>, vector<8x1xf32>,
    %42 = vector.extract_strided_slice %35 {offsets = [0, 8], sizes = [8, 1], strides = [1, 1]} : vector<8x9xf32> to vector<8x1xf32>
    %c0_19 = arith.constant 0 : index
    %c257 = arith.constant 257 : index
    %43 = vector.load %arg8[%c0_19, %c257] : memref<8x272xf32, #tpu.memory_space<vmem>>, vector<8x1xf32>
    tpu.vector_store %arg8[%c0_19, %c257], %42 {strides = array<i32>} : memref<8x272xf32, #tpu.memory_space<vmem>>, vector<8x1xf32>,
    %cst_20 = arith.constant 0.000000e+00 : f32
    %44 = vector.broadcast %cst_20 : f32 to vector<8x256xf32>
    %c0_21 = arith.constant 0 : index
    %c0_22 = arith.constant 0 : index
    %45 = vector.load %arg8[%c0_21, %c0_22] : memref<8x272xf32, #tpu.memory_space<vmem>>, vector<8x272xf32>
    %cst_23 = arith.constant dense<0.000000e+00> : vector<8x1024xf32>
    %46 = tpu.matmul %45, %36, %cst_23 {dimension_numbers = #tpu.dot_dimension_numbers<[1], [0], [0], [1], [0, 0, 1, 1], [], []>} : vector<8x272xf32>, vector<272x1024xf32>, vector<8x1024xf32> -> vector<8x1024xf32>
    %47 = vector.broadcast %37 : vector<1x1024xf32> to vector<8x1024xf32>
    %48 = arith.addf %46, %47 : vector<8x1024xf32>
    %49 = vector.extract_strided_slice %48 {offsets = [0, 0], sizes = [8, 256], strides = [1, 1]} : vector<8x1024xf32> to vector<8x256xf32>
    %cst_24 = arith.constant 5.000000e-01 : f32
    %50 = vector.broadcast %cst_24 : f32 to vector<8x256xf32>
    %51 = arith.mulf %50, %49 : vector<8x256xf32>
    %52 = math.tanh %51 : vector<8x256xf32>
    %cst_25 = arith.constant 1.000000e+00 : f32
    %53 = vector.broadcast %cst_25 : f32 to vector<8x256xf32>
    %54 = arith.addf %53, %52 : vector<8x256xf32>
    %cst_26 = arith.constant 5.000000e-01 : f32
    %55 = vector.broadcast %cst_26 : f32 to vector<8x256xf32>
    %56 = arith.mulf %55, %54 : vector<8x256xf32>
    %57 = vector.extract_strided_slice %48 {offsets = [0, 256], sizes = [8, 256], strides = [1, 1]} : vector<8x1024xf32> to vector<8x256xf32>
    %cst_27 = arith.constant 5.000000e-01 : f32
    %58 = vector.broadcast %cst_27 : f32 to vector<8x256xf32>
    %59 = arith.mulf %58, %57 : vector<8x256xf32>
    %60 = math.tanh %59 : vector<8x256xf32>
    %cst_28 = arith.constant 1.000000e+00 : f32
    %61 = vector.broadcast %cst_28 : f32 to vector<8x256xf32>
    %62 = arith.addf %61, %60 : vector<8x256xf32>
    %cst_29 = arith.constant 5.000000e-01 : f32
    %63 = vector.broadcast %cst_29 : f32 to vector<8x256xf32>
    %64 = arith.mulf %63, %62 : vector<8x256xf32>
    %65 = vector.extract_strided_slice %48 {offsets = [0, 512], sizes = [8, 256], strides = [1, 1]} : vector<8x1024xf32> to vector<8x256xf32>
    %66 = math.tanh %65 : vector<8x256xf32>
    %67 = vector.extract_strided_slice %48 {offsets = [0, 768], sizes = [8, 256], strides = [1, 1]} : vector<8x1024xf32> to vector<8x256xf32>
    %cst_30 = arith.constant 5.000000e-01 : f32
    %68 = vector.broadcast %cst_30 : f32 to vector<8x256xf32>
    %69 = arith.mulf %68, %67 : vector<8x256xf32>
    %70 = math.tanh %69 : vector<8x256xf32>
    %cst_31 = arith.constant 1.000000e+00 : f32
    %71 = vector.broadcast %cst_31 : f32 to vector<8x256xf32>
    %72 = arith.addf %71, %70 : vector<8x256xf32>
    %cst_32 = arith.constant 5.000000e-01 : f32
    %73 = vector.broadcast %cst_32 : f32 to vector<8x256xf32>
    %74 = arith.mulf %73, %72 : vector<8x256xf32>
    %75 = arith.mulf %64, %44 : vector<8x256xf32>
    %76 = arith.mulf %56, %66 : vector<8x256xf32>
    %77 = arith.addf %75, %76 : vector<8x256xf32>
    %78 = math.tanh %77 : vector<8x256xf32>
    %79 = arith.mulf %74, %78 : vector<8x256xf32>
    %c0_33 = arith.constant 0 : index
    %c0_34 = arith.constant 0 : index
    %80 = vector.load %arg8[%c0_33, %c0_34] : memref<8x272xf32, #tpu.memory_space<vmem>>, vector<8x256xf32>
    tpu.vector_store %arg8[%c0_33, %c0_34], %79 {strides = array<i32>} : memref<8x272xf32, #tpu.memory_space<vmem>>, vector<8x256xf32>,
    %81 = vector.extract_strided_slice %35 {offsets = [0, 1], sizes = [8, 1], strides = [1, 1]} : vector<8x9xf32> to vector<8x1xf32>
    %c0_35 = arith.constant 0 : index
    %c256_36 = arith.constant 256 : index
    %82 = vector.load %arg8[%c0_35, %c256_36] : memref<8x272xf32, #tpu.memory_space<vmem>>, vector<8x1xf32>
    tpu.vector_store %arg8[%c0_35, %c256_36], %81 {strides = array<i32>} : memref<8x272xf32, #tpu.memory_space<vmem>>, vector<8x1xf32>,
    %83 = vector.extract_strided_slice %35 {offsets = [0, 7], sizes = [8, 1], strides = [1, 1]} : vector<8x9xf32> to vector<8x1xf32>
    %c0_37 = arith.constant 0 : index
    %c257_38 = arith.constant 257 : index
    %84 = vector.load %arg8[%c0_37, %c257_38] : memref<8x272xf32, #tpu.memory_space<vmem>>, vector<8x1xf32>
    tpu.vector_store %arg8[%c0_37, %c257_38], %83 {strides = array<i32>} : memref<8x272xf32, #tpu.memory_space<vmem>>, vector<8x1xf32>,
    %c0_39 = arith.constant 0 : index
    %c0_40 = arith.constant 0 : index
    %85 = vector.load %arg8[%c0_39, %c0_40] : memref<8x272xf32, #tpu.memory_space<vmem>>, vector<8x272xf32>
    %cst_41 = arith.constant dense<0.000000e+00> : vector<8x1024xf32>
    %86 = tpu.matmul %85, %36, %cst_41 {dimension_numbers = #tpu.dot_dimension_numbers<[1], [0], [0], [1], [0, 0, 1, 1], [], []>} : vector<8x272xf32>, vector<272x1024xf32>, vector<8x1024xf32> -> vector<8x1024xf32>
    %87 = vector.broadcast %37 : vector<1x1024xf32> to vector<8x1024xf32>
    %88 = arith.addf %86, %87 : vector<8x1024xf32>
    %89 = vector.extract_strided_slice %88 {offsets = [0, 0], sizes = [8, 256], strides = [1, 1]} : vector<8x1024xf32> to vector<8x256xf32>
    %cst_42 = arith.constant 5.000000e-01 : f32
    %90 = vector.broadcast %cst_42 : f32 to vector<8x256xf32>
    %91 = arith.mulf %90, %89 : vector<8x256xf32>
    %92 = math.tanh %91 : vector<8x256xf32>
    %cst_43 = arith.constant 1.000000e+00 : f32
    %93 = vector.broadcast %cst_43 : f32 to vector<8x256xf32>
    %94 = arith.addf %93, %92 : vector<8x256xf32>
    %cst_44 = arith.constant 5.000000e-01 : f32
    %95 = vector.broadcast %cst_44 : f32 to vector<8x256xf32>
    %96 = arith.mulf %95, %94 : vector<8x256xf32>
    %97 = vector.extract_strided_slice %88 {offsets = [0, 256], sizes = [8, 256], strides = [1, 1]} : vector<8x1024xf32> to vector<8x256xf32>
    %cst_45 = arith.constant 5.000000e-01 : f32
    %98 = vector.broadcast %cst_45 : f32 to vector<8x256xf32>
    %99 = arith.mulf %98, %97 : vector<8x256xf32>
    %100 = math.tanh %99 : vector<8x256xf32>
    %cst_46 = arith.constant 1.000000e+00 : f32
    %101 = vector.broadcast %cst_46 : f32 to vector<8x256xf32>
    %102 = arith.addf %101, %100 : vector<8x256xf32>
    %cst_47 = arith.constant 5.000000e-01 : f32
    %103 = vector.broadcast %cst_47 : f32 to vector<8x256xf32>
    %104 = arith.mulf %103, %102 : vector<8x256xf32>
    %105 = vector.extract_strided_slice %88 {offsets = [0, 512], sizes = [8, 256], strides = [1, 1]} : vector<8x1024xf32> to vector<8x256xf32>
    %106 = math.tanh %105 : vector<8x256xf32>
    %107 = vector.extract_strided_slice %88 {offsets = [0, 768], sizes = [8, 256], strides = [1, 1]} : vector<8x1024xf32> to vector<8x256xf32>
    %cst_48 = arith.constant 5.000000e-01 : f32
    %108 = vector.broadcast %cst_48 : f32 to vector<8x256xf32>
    %109 = arith.mulf %108, %107 : vector<8x256xf32>
    %110 = math.tanh %109 : vector<8x256xf32>
    %cst_49 = arith.constant 1.000000e+00 : f32
    %111 = vector.broadcast %cst_49 : f32 to vector<8x256xf32>
    %112 = arith.addf %111, %110 : vector<8x256xf32>
    %cst_50 = arith.constant 5.000000e-01 : f32
    %113 = vector.broadcast %cst_50 : f32 to vector<8x256xf32>
    %114 = arith.mulf %113, %112 : vector<8x256xf32>
    %115 = arith.mulf %104, %77 : vector<8x256xf32>
    %116 = arith.mulf %96, %106 : vector<8x256xf32>
    %117 = arith.addf %115, %116 : vector<8x256xf32>
    %118 = math.tanh %117 : vector<8x256xf32>
    %119 = arith.mulf %114, %118 : vector<8x256xf32>
    %c0_51 = arith.constant 0 : index
    %c0_52 = arith.constant 0 : index
    %120 = vector.load %arg8[%c0_51, %c0_52] : memref<8x272xf32, #tpu.memory_space<vmem>>, vector<8x256xf32>
    tpu.vector_store %arg8[%c0_51, %c0_52], %119 {strides = array<i32>} : memref<8x272xf32, #tpu.memory_space<vmem>>, vector<8x256xf32>,
    %121 = vector.extract_strided_slice %35 {offsets = [0, 2], sizes = [8, 1], strides = [1, 1]} : vector<8x9xf32> to vector<8x1xf32>
    %c0_53 = arith.constant 0 : index
    %c256_54 = arith.constant 256 : index
    %122 = vector.load %arg8[%c0_53, %c256_54] : memref<8x272xf32, #tpu.memory_space<vmem>>, vector<8x1xf32>
    tpu.vector_store %arg8[%c0_53, %c256_54], %121 {strides = array<i32>} : memref<8x272xf32, #tpu.memory_space<vmem>>, vector<8x1xf32>,
    %123 = vector.extract_strided_slice %35 {offsets = [0, 6], sizes = [8, 1], strides = [1, 1]} : vector<8x9xf32> to vector<8x1xf32>
    %c0_55 = arith.constant 0 : index
    %c257_56 = arith.constant 257 : index
    %124 = vector.load %arg8[%c0_55, %c257_56] : memref<8x272xf32, #tpu.memory_space<vmem>>, vector<8x1xf32>
    tpu.vector_store %arg8[%c0_55, %c257_56], %123 {strides = array<i32>} : memref<8x272xf32, #tpu.memory_space<vmem>>, vector<8x1xf32>,
    %c0_57 = arith.constant 0 : index
    %c0_58 = arith.constant 0 : index
    %125 = vector.load %arg8[%c0_57, %c0_58] : memref<8x272xf32, #tpu.memory_space<vmem>>, vector<8x272xf32>
    %cst_59 = arith.constant dense<0.000000e+00> : vector<8x1024xf32>
    %126 = tpu.matmul %125, %36, %cst_59 {dimension_numbers = #tpu.dot_dimension_numbers<[1], [0], [0], [1], [0, 0, 1, 1], [], []>} : vector<8x272xf32>, vector<272x1024xf32>, vector<8x1024xf32> -> vector<8x1024xf32>
    %127 = vector.broadcast %37 : vector<1x1024xf32> to vector<8x1024xf32>
    %128 = arith.addf %126, %127 : vector<8x1024xf32>
    %129 = vector.extract_strided_slice %128 {offsets = [0, 0], sizes = [8, 256], strides = [1, 1]} : vector<8x1024xf32> to vector<8x256xf32>
    %cst_60 = arith.constant 5.000000e-01 : f32
    %130 = vector.broadcast %cst_60 : f32 to vector<8x256xf32>
    %131 = arith.mulf %130, %129 : vector<8x256xf32>
    %132 = math.tanh %131 : vector<8x256xf32>
    %cst_61 = arith.constant 1.000000e+00 : f32
    %133 = vector.broadcast %cst_61 : f32 to vector<8x256xf32>
    %134 = arith.addf %133, %132 : vector<8x256xf32>
    %cst_62 = arith.constant 5.000000e-01 : f32
    %135 = vector.broadcast %cst_62 : f32 to vector<8x256xf32>
    %136 = arith.mulf %135, %134 : vector<8x256xf32>
    %137 = vector.extract_strided_slice %128 {offsets = [0, 256], sizes = [8, 256], strides = [1, 1]} : vector<8x1024xf32> to vector<8x256xf32>
    %cst_63 = arith.constant 5.000000e-01 : f32
    %138 = vector.broadcast %cst_63 : f32 to vector<8x256xf32>
    %139 = arith.mulf %138, %137 : vector<8x256xf32>
    %140 = math.tanh %139 : vector<8x256xf32>
    %cst_64 = arith.constant 1.000000e+00 : f32
    %141 = vector.broadcast %cst_64 : f32 to vector<8x256xf32>
    %142 = arith.addf %141, %140 : vector<8x256xf32>
    %cst_65 = arith.constant 5.000000e-01 : f32
    %143 = vector.broadcast %cst_65 : f32 to vector<8x256xf32>
    %144 = arith.mulf %143, %142 : vector<8x256xf32>
    %145 = vector.extract_strided_slice %128 {offsets = [0, 512], sizes = [8, 256], strides = [1, 1]} : vector<8x1024xf32> to vector<8x256xf32>
    %146 = math.tanh %145 : vector<8x256xf32>
    %147 = vector.extract_strided_slice %128 {offsets = [0, 768], sizes = [8, 256], strides = [1, 1]} : vector<8x1024xf32> to vector<8x256xf32>
    %cst_66 = arith.constant 5.000000e-01 : f32
    %148 = vector.broadcast %cst_66 : f32 to vector<8x256xf32>
    %149 = arith.mulf %148, %147 : vector<8x256xf32>
    %150 = math.tanh %149 : vector<8x256xf32>
    %cst_67 = arith.constant 1.000000e+00 : f32
    %151 = vector.broadcast %cst_67 : f32 to vector<8x256xf32>
    %152 = arith.addf %151, %150 : vector<8x256xf32>
    %cst_68 = arith.constant 5.000000e-01 : f32
    %153 = vector.broadcast %cst_68 : f32 to vector<8x256xf32>
    %154 = arith.mulf %153, %152 : vector<8x256xf32>
    %155 = arith.mulf %144, %117 : vector<8x256xf32>
    %156 = arith.mulf %136, %146 : vector<8x256xf32>
    %157 = arith.addf %155, %156 : vector<8x256xf32>
    %158 = math.tanh %157 : vector<8x256xf32>
    %159 = arith.mulf %154, %158 : vector<8x256xf32>
    %c0_69 = arith.constant 0 : index
    %c0_70 = arith.constant 0 : index
    %160 = vector.load %arg8[%c0_69, %c0_70] : memref<8x272xf32, #tpu.memory_space<vmem>>, vector<8x256xf32>
    tpu.vector_store %arg8[%c0_69, %c0_70], %159 {strides = array<i32>} : memref<8x272xf32, #tpu.memory_space<vmem>>, vector<8x256xf32>,
    %161 = vector.extract_strided_slice %35 {offsets = [0, 3], sizes = [8, 1], strides = [1, 1]} : vector<8x9xf32> to vector<8x1xf32>
    %c0_71 = arith.constant 0 : index
    %c256_72 = arith.constant 256 : index
    %162 = vector.load %arg8[%c0_71, %c256_72] : memref<8x272xf32, #tpu.memory_space<vmem>>, vector<8x1xf32>
    tpu.vector_store %arg8[%c0_71, %c256_72], %161 {strides = array<i32>} : memref<8x272xf32, #tpu.memory_space<vmem>>, vector<8x1xf32>,
    %163 = vector.extract_strided_slice %35 {offsets = [0, 5], sizes = [8, 1], strides = [1, 1]} : vector<8x9xf32> to vector<8x1xf32>
    %c0_73 = arith.constant 0 : index
    %c257_74 = arith.constant 257 : index
    %164 = vector.load %arg8[%c0_73, %c257_74] : memref<8x272xf32, #tpu.memory_space<vmem>>, vector<8x1xf32>
    tpu.vector_store %arg8[%c0_73, %c257_74], %163 {strides = array<i32>} : memref<8x272xf32, #tpu.memory_space<vmem>>, vector<8x1xf32>,
    %c0_75 = arith.constant 0 : index
    %c0_76 = arith.constant 0 : index
    %165 = vector.load %arg8[%c0_75, %c0_76] : memref<8x272xf32, #tpu.memory_space<vmem>>, vector<8x272xf32>
    %cst_77 = arith.constant dense<0.000000e+00> : vector<8x1024xf32>
    %166 = tpu.matmul %165, %36, %cst_77 {dimension_numbers = #tpu.dot_dimension_numbers<[1], [0], [0], [1], [0, 0, 1, 1], [], []>} : vector<8x272xf32>, vector<272x1024xf32>, vector<8x1024xf32> -> vector<8x1024xf32>
    %167 = vector.broadcast %37 : vector<1x1024xf32> to vector<8x1024xf32>
    %168 = arith.addf %166, %167 : vector<8x1024xf32>
    %169 = vector.extract_strided_slice %168 {offsets = [0, 0], sizes = [8, 256], strides = [1, 1]} : vector<8x1024xf32> to vector<8x256xf32>
    %cst_78 = arith.constant 5.000000e-01 : f32
    %170 = vector.broadcast %cst_78 : f32 to vector<8x256xf32>
    %171 = arith.mulf %170, %169 : vector<8x256xf32>
    %172 = math.tanh %171 : vector<8x256xf32>
    %cst_79 = arith.constant 1.000000e+00 : f32
    %173 = vector.broadcast %cst_79 : f32 to vector<8x256xf32>
    %174 = arith.addf %173, %172 : vector<8x256xf32>
    %cst_80 = arith.constant 5.000000e-01 : f32
    %175 = vector.broadcast %cst_80 : f32 to vector<8x256xf32>
    %176 = arith.mulf %175, %174 : vector<8x256xf32>
    %177 = vector.extract_strided_slice %168 {offsets = [0, 256], sizes = [8, 256], strides = [1, 1]} : vector<8x1024xf32> to vector<8x256xf32>
    %cst_81 = arith.constant 5.000000e-01 : f32
    %178 = vector.broadcast %cst_81 : f32 to vector<8x256xf32>
    %179 = arith.mulf %178, %177 : vector<8x256xf32>
    %180 = math.tanh %179 : vector<8x256xf32>
    %cst_82 = arith.constant 1.000000e+00 : f32
    %181 = vector.broadcast %cst_82 : f32 to vector<8x256xf32>
    %182 = arith.addf %181, %180 : vector<8x256xf32>
    %cst_83 = arith.constant 5.000000e-01 : f32
    %183 = vector.broadcast %cst_83 : f32 to vector<8x256xf32>
    %184 = arith.mulf %183, %182 : vector<8x256xf32>
    %185 = vector.extract_strided_slice %168 {offsets = [0, 512], sizes = [8, 256], strides = [1, 1]} : vector<8x1024xf32> to vector<8x256xf32>
    %186 = math.tanh %185 : vector<8x256xf32>
    %187 = vector.extract_strided_slice %168 {offsets = [0, 768], sizes = [8, 256], strides = [1, 1]} : vector<8x1024xf32> to vector<8x256xf32>
    %cst_84 = arith.constant 5.000000e-01 : f32
    %188 = vector.broadcast %cst_84 : f32 to vector<8x256xf32>
    %189 = arith.mulf %188, %187 : vector<8x256xf32>
    %190 = math.tanh %189 : vector<8x256xf32>
    %cst_85 = arith.constant 1.000000e+00 : f32
    %191 = vector.broadcast %cst_85 : f32 to vector<8x256xf32>
    %192 = arith.addf %191, %190 : vector<8x256xf32>
    %cst_86 = arith.constant 5.000000e-01 : f32
    %193 = vector.broadcast %cst_86 : f32 to vector<8x256xf32>
    %194 = arith.mulf %193, %192 : vector<8x256xf32>
    %195 = arith.mulf %184, %157 : vector<8x256xf32>
    %196 = arith.mulf %176, %186 : vector<8x256xf32>
    %197 = arith.addf %195, %196 : vector<8x256xf32>
    %198 = math.tanh %197 : vector<8x256xf32>
    %199 = arith.mulf %194, %198 : vector<8x256xf32>
    %c0_87 = arith.constant 0 : index
    %c0_88 = arith.constant 0 : index
    %200 = vector.load %arg8[%c0_87, %c0_88] : memref<8x272xf32, #tpu.memory_space<vmem>>, vector<8x256xf32>
    tpu.vector_store %arg8[%c0_87, %c0_88], %199 {strides = array<i32>} : memref<8x272xf32, #tpu.memory_space<vmem>>, vector<8x256xf32>,
    %201 = vector.extract_strided_slice %35 {offsets = [0, 4], sizes = [8, 1], strides = [1, 1]} : vector<8x9xf32> to vector<8x1xf32>
    %c0_89 = arith.constant 0 : index
    %c256_90 = arith.constant 256 : index
    %202 = vector.load %arg8[%c0_89, %c256_90] : memref<8x272xf32, #tpu.memory_space<vmem>>, vector<8x1xf32>
    tpu.vector_store %arg8[%c0_89, %c256_90], %201 {strides = array<i32>} : memref<8x272xf32, #tpu.memory_space<vmem>>, vector<8x1xf32>,
    %203 = vector.extract_strided_slice %35 {offsets = [0, 4], sizes = [8, 1], strides = [1, 1]} : vector<8x9xf32> to vector<8x1xf32>
    %c0_91 = arith.constant 0 : index
    %c257_92 = arith.constant 257 : index
    %204 = vector.load %arg8[%c0_91, %c257_92] : memref<8x272xf32, #tpu.memory_space<vmem>>, vector<8x1xf32>
    tpu.vector_store %arg8[%c0_91, %c257_92], %203 {strides = array<i32>} : memref<8x272xf32, #tpu.memory_space<vmem>>, vector<8x1xf32>,
    %c0_93 = arith.constant 0 : index
    %c0_94 = arith.constant 0 : index
    %205 = vector.load %arg8[%c0_93, %c0_94] : memref<8x272xf32, #tpu.memory_space<vmem>>, vector<8x272xf32>
    %cst_95 = arith.constant dense<0.000000e+00> : vector<8x1024xf32>
    %206 = tpu.matmul %205, %36, %cst_95 {dimension_numbers = #tpu.dot_dimension_numbers<[1], [0], [0], [1], [0, 0, 1, 1], [], []>} : vector<8x272xf32>, vector<272x1024xf32>, vector<8x1024xf32> -> vector<8x1024xf32>
    %207 = vector.broadcast %37 : vector<1x1024xf32> to vector<8x1024xf32>
    %208 = arith.addf %206, %207 : vector<8x1024xf32>
    %209 = vector.extract_strided_slice %208 {offsets = [0, 0], sizes = [8, 256], strides = [1, 1]} : vector<8x1024xf32> to vector<8x256xf32>
    %cst_96 = arith.constant 5.000000e-01 : f32
    %210 = vector.broadcast %cst_96 : f32 to vector<8x256xf32>
    %211 = arith.mulf %210, %209 : vector<8x256xf32>
    %212 = math.tanh %211 : vector<8x256xf32>
    %cst_97 = arith.constant 1.000000e+00 : f32
    %213 = vector.broadcast %cst_97 : f32 to vector<8x256xf32>
    %214 = arith.addf %213, %212 : vector<8x256xf32>
    %cst_98 = arith.constant 5.000000e-01 : f32
    %215 = vector.broadcast %cst_98 : f32 to vector<8x256xf32>
    %216 = arith.mulf %215, %214 : vector<8x256xf32>
    %217 = vector.extract_strided_slice %208 {offsets = [0, 256], sizes = [8, 256], strides = [1, 1]} : vector<8x1024xf32> to vector<8x256xf32>
    %cst_99 = arith.constant 5.000000e-01 : f32
    %218 = vector.broadcast %cst_99 : f32 to vector<8x256xf32>
    %219 = arith.mulf %218, %217 : vector<8x256xf32>
    %220 = math.tanh %219 : vector<8x256xf32>
    %cst_100 = arith.constant 1.000000e+00 : f32
    %221 = vector.broadcast %cst_100 : f32 to vector<8x256xf32>
    %222 = arith.addf %221, %220 : vector<8x256xf32>
    %cst_101 = arith.constant 5.000000e-01 : f32
    %223 = vector.broadcast %cst_101 : f32 to vector<8x256xf32>
    %224 = arith.mulf %223, %222 : vector<8x256xf32>
    %225 = vector.extract_strided_slice %208 {offsets = [0, 512], sizes = [8, 256], strides = [1, 1]} : vector<8x1024xf32> to vector<8x256xf32>
    %226 = math.tanh %225 : vector<8x256xf32>
    %227 = vector.extract_strided_slice %208 {offsets = [0, 768], sizes = [8, 256], strides = [1, 1]} : vector<8x1024xf32> to vector<8x256xf32>
    %cst_102 = arith.constant 5.000000e-01 : f32
    %228 = vector.broadcast %cst_102 : f32 to vector<8x256xf32>
    %229 = arith.mulf %228, %227 : vector<8x256xf32>
    %230 = math.tanh %229 : vector<8x256xf32>
    %cst_103 = arith.constant 1.000000e+00 : f32
    %231 = vector.broadcast %cst_103 : f32 to vector<8x256xf32>
    %232 = arith.addf %231, %230 : vector<8x256xf32>
    %cst_104 = arith.constant 5.000000e-01 : f32
    %233 = vector.broadcast %cst_104 : f32 to vector<8x256xf32>
    %234 = arith.mulf %233, %232 : vector<8x256xf32>
    %235 = arith.mulf %224, %197 : vector<8x256xf32>
    %236 = arith.mulf %216, %226 : vector<8x256xf32>
    %237 = arith.addf %235, %236 : vector<8x256xf32>
    %238 = math.tanh %237 : vector<8x256xf32>
    %239 = arith.mulf %234, %238 : vector<8x256xf32>
    %c0_105 = arith.constant 0 : index
    %c0_106 = arith.constant 0 : index
    %240 = vector.load %arg8[%c0_105, %c0_106] : memref<8x272xf32, #tpu.memory_space<vmem>>, vector<8x256xf32>
    tpu.vector_store %arg8[%c0_105, %c0_106], %239 {strides = array<i32>} : memref<8x272xf32, #tpu.memory_space<vmem>>, vector<8x256xf32>,
    %241 = vector.extract_strided_slice %35 {offsets = [0, 5], sizes = [8, 1], strides = [1, 1]} : vector<8x9xf32> to vector<8x1xf32>
    %c0_107 = arith.constant 0 : index
    %c256_108 = arith.constant 256 : index
    %242 = vector.load %arg8[%c0_107, %c256_108] : memref<8x272xf32, #tpu.memory_space<vmem>>, vector<8x1xf32>
    tpu.vector_store %arg8[%c0_107, %c256_108], %241 {strides = array<i32>} : memref<8x272xf32, #tpu.memory_space<vmem>>, vector<8x1xf32>,
    %243 = vector.extract_strided_slice %35 {offsets = [0, 3], sizes = [8, 1], strides = [1, 1]} : vector<8x9xf32> to vector<8x1xf32>
    %c0_109 = arith.constant 0 : index
    %c257_110 = arith.constant 257 : index
    %244 = vector.load %arg8[%c0_109, %c257_110] : memref<8x272xf32, #tpu.memory_space<vmem>>, vector<8x1xf32>
    tpu.vector_store %arg8[%c0_109, %c257_110], %243 {strides = array<i32>} : memref<8x272xf32, #tpu.memory_space<vmem>>, vector<8x1xf32>,
    %c0_111 = arith.constant 0 : index
    %c0_112 = arith.constant 0 : index
    %245 = vector.load %arg8[%c0_111, %c0_112] : memref<8x272xf32, #tpu.memory_space<vmem>>, vector<8x272xf32>
    %cst_113 = arith.constant dense<0.000000e+00> : vector<8x1024xf32>
    %246 = tpu.matmul %245, %36, %cst_113 {dimension_numbers = #tpu.dot_dimension_numbers<[1], [0], [0], [1], [0, 0, 1, 1], [], []>} : vector<8x272xf32>, vector<272x1024xf32>, vector<8x1024xf32> -> vector<8x1024xf32>
    %247 = vector.broadcast %37 : vector<1x1024xf32> to vector<8x1024xf32>
    %248 = arith.addf %246, %247 : vector<8x1024xf32>
    %249 = vector.extract_strided_slice %248 {offsets = [0, 0], sizes = [8, 256], strides = [1, 1]} : vector<8x1024xf32> to vector<8x256xf32>
    %cst_114 = arith.constant 5.000000e-01 : f32
    %250 = vector.broadcast %cst_114 : f32 to vector<8x256xf32>
    %251 = arith.mulf %250, %249 : vector<8x256xf32>
    %252 = math.tanh %251 : vector<8x256xf32>
    %cst_115 = arith.constant 1.000000e+00 : f32
    %253 = vector.broadcast %cst_115 : f32 to vector<8x256xf32>
    %254 = arith.addf %253, %252 : vector<8x256xf32>
    %cst_116 = arith.constant 5.000000e-01 : f32
    %255 = vector.broadcast %cst_116 : f32 to vector<8x256xf32>
    %256 = arith.mulf %255, %254 : vector<8x256xf32>
    %257 = vector.extract_strided_slice %248 {offsets = [0, 256], sizes = [8, 256], strides = [1, 1]} : vector<8x1024xf32> to vector<8x256xf32>
    %cst_117 = arith.constant 5.000000e-01 : f32
    %258 = vector.broadcast %cst_117 : f32 to vector<8x256xf32>
    %259 = arith.mulf %258, %257 : vector<8x256xf32>
    %260 = math.tanh %259 : vector<8x256xf32>
    %cst_118 = arith.constant 1.000000e+00 : f32
    %261 = vector.broadcast %cst_118 : f32 to vector<8x256xf32>
    %262 = arith.addf %261, %260 : vector<8x256xf32>
    %cst_119 = arith.constant 5.000000e-01 : f32
    %263 = vector.broadcast %cst_119 : f32 to vector<8x256xf32>
    %264 = arith.mulf %263, %262 : vector<8x256xf32>
    %265 = vector.extract_strided_slice %248 {offsets = [0, 512], sizes = [8, 256], strides = [1, 1]} : vector<8x1024xf32> to vector<8x256xf32>
    %266 = math.tanh %265 : vector<8x256xf32>
    %267 = vector.extract_strided_slice %248 {offsets = [0, 768], sizes = [8, 256], strides = [1, 1]} : vector<8x1024xf32> to vector<8x256xf32>
    %cst_120 = arith.constant 5.000000e-01 : f32
    %268 = vector.broadcast %cst_120 : f32 to vector<8x256xf32>
    %269 = arith.mulf %268, %267 : vector<8x256xf32>
    %270 = math.tanh %269 : vector<8x256xf32>
    %cst_121 = arith.constant 1.000000e+00 : f32
    %271 = vector.broadcast %cst_121 : f32 to vector<8x256xf32>
    %272 = arith.addf %271, %270 : vector<8x256xf32>
    %cst_122 = arith.constant 5.000000e-01 : f32
    %273 = vector.broadcast %cst_122 : f32 to vector<8x256xf32>
    %274 = arith.mulf %273, %272 : vector<8x256xf32>
    %275 = arith.mulf %264, %237 : vector<8x256xf32>
    %276 = arith.mulf %256, %266 : vector<8x256xf32>
    %277 = arith.addf %275, %276 : vector<8x256xf32>
    %278 = math.tanh %277 : vector<8x256xf32>
    %279 = arith.mulf %274, %278 : vector<8x256xf32>
    %c0_123 = arith.constant 0 : index
    %c0_124 = arith.constant 0 : index
    %280 = vector.load %arg8[%c0_123, %c0_124] : memref<8x272xf32, #tpu.memory_space<vmem>>, vector<8x256xf32>
    tpu.vector_store %arg8[%c0_123, %c0_124], %279 {strides = array<i32>} : memref<8x272xf32, #tpu.memory_space<vmem>>, vector<8x256xf32>,
    %281 = vector.extract_strided_slice %35 {offsets = [0, 6], sizes = [8, 1], strides = [1, 1]} : vector<8x9xf32> to vector<8x1xf32>
    %c0_125 = arith.constant 0 : index
    %c256_126 = arith.constant 256 : index
    %282 = vector.load %arg8[%c0_125, %c256_126] : memref<8x272xf32, #tpu.memory_space<vmem>>, vector<8x1xf32>
    tpu.vector_store %arg8[%c0_125, %c256_126], %281 {strides = array<i32>} : memref<8x272xf32, #tpu.memory_space<vmem>>, vector<8x1xf32>,
    %283 = vector.extract_strided_slice %35 {offsets = [0, 2], sizes = [8, 1], strides = [1, 1]} : vector<8x9xf32> to vector<8x1xf32>
    %c0_127 = arith.constant 0 : index
    %c257_128 = arith.constant 257 : index
    %284 = vector.load %arg8[%c0_127, %c257_128] : memref<8x272xf32, #tpu.memory_space<vmem>>, vector<8x1xf32>
    tpu.vector_store %arg8[%c0_127, %c257_128], %283 {strides = array<i32>} : memref<8x272xf32, #tpu.memory_space<vmem>>, vector<8x1xf32>,
    %c0_129 = arith.constant 0 : index
    %c0_130 = arith.constant 0 : index
    %285 = vector.load %arg8[%c0_129, %c0_130] : memref<8x272xf32, #tpu.memory_space<vmem>>, vector<8x272xf32>
    %cst_131 = arith.constant dense<0.000000e+00> : vector<8x1024xf32>
    %286 = tpu.matmul %285, %36, %cst_131 {dimension_numbers = #tpu.dot_dimension_numbers<[1], [0], [0], [1], [0, 0, 1, 1], [], []>} : vector<8x272xf32>, vector<272x1024xf32>, vector<8x1024xf32> -> vector<8x1024xf32>
    %287 = vector.broadcast %37 : vector<1x1024xf32> to vector<8x1024xf32>
    %288 = arith.addf %286, %287 : vector<8x1024xf32>
    %289 = vector.extract_strided_slice %288 {offsets = [0, 0], sizes = [8, 256], strides = [1, 1]} : vector<8x1024xf32> to vector<8x256xf32>
    %cst_132 = arith.constant 5.000000e-01 : f32
    %290 = vector.broadcast %cst_132 : f32 to vector<8x256xf32>
    %291 = arith.mulf %290, %289 : vector<8x256xf32>
    %292 = math.tanh %291 : vector<8x256xf32>
    %cst_133 = arith.constant 1.000000e+00 : f32
    %293 = vector.broadcast %cst_133 : f32 to vector<8x256xf32>
    %294 = arith.addf %293, %292 : vector<8x256xf32>
    %cst_134 = arith.constant 5.000000e-01 : f32
    %295 = vector.broadcast %cst_134 : f32 to vector<8x256xf32>
    %296 = arith.mulf %295, %294 : vector<8x256xf32>
    %297 = vector.extract_strided_slice %288 {offsets = [0, 256], sizes = [8, 256], strides = [1, 1]} : vector<8x1024xf32> to vector<8x256xf32>
    %cst_135 = arith.constant 5.000000e-01 : f32
    %298 = vector.broadcast %cst_135 : f32 to vector<8x256xf32>
    %299 = arith.mulf %298, %297 : vector<8x256xf32>
    %300 = math.tanh %299 : vector<8x256xf32>
    %cst_136 = arith.constant 1.000000e+00 : f32
    %301 = vector.broadcast %cst_136 : f32 to vector<8x256xf32>
    %302 = arith.addf %301, %300 : vector<8x256xf32>
    %cst_137 = arith.constant 5.000000e-01 : f32
    %303 = vector.broadcast %cst_137 : f32 to vector<8x256xf32>
    %304 = arith.mulf %303, %302 : vector<8x256xf32>
    %305 = vector.extract_strided_slice %288 {offsets = [0, 512], sizes = [8, 256], strides = [1, 1]} : vector<8x1024xf32> to vector<8x256xf32>
    %306 = math.tanh %305 : vector<8x256xf32>
    %307 = vector.extract_strided_slice %288 {offsets = [0, 768], sizes = [8, 256], strides = [1, 1]} : vector<8x1024xf32> to vector<8x256xf32>
    %cst_138 = arith.constant 5.000000e-01 : f32
    %308 = vector.broadcast %cst_138 : f32 to vector<8x256xf32>
    %309 = arith.mulf %308, %307 : vector<8x256xf32>
    %310 = math.tanh %309 : vector<8x256xf32>
    %cst_139 = arith.constant 1.000000e+00 : f32
    %311 = vector.broadcast %cst_139 : f32 to vector<8x256xf32>
    %312 = arith.addf %311, %310 : vector<8x256xf32>
    %cst_140 = arith.constant 5.000000e-01 : f32
    %313 = vector.broadcast %cst_140 : f32 to vector<8x256xf32>
    %314 = arith.mulf %313, %312 : vector<8x256xf32>
    %315 = arith.mulf %304, %277 : vector<8x256xf32>
    %316 = arith.mulf %296, %306 : vector<8x256xf32>
    %317 = arith.addf %315, %316 : vector<8x256xf32>
    %318 = math.tanh %317 : vector<8x256xf32>
    %319 = arith.mulf %314, %318 : vector<8x256xf32>
    %c0_141 = arith.constant 0 : index
    %c0_142 = arith.constant 0 : index
    %320 = vector.load %arg8[%c0_141, %c0_142] : memref<8x272xf32, #tpu.memory_space<vmem>>, vector<8x256xf32>
    tpu.vector_store %arg8[%c0_141, %c0_142], %319 {strides = array<i32>} : memref<8x272xf32, #tpu.memory_space<vmem>>, vector<8x256xf32>,
    %321 = vector.extract_strided_slice %35 {offsets = [0, 7], sizes = [8, 1], strides = [1, 1]} : vector<8x9xf32> to vector<8x1xf32>
    %c0_143 = arith.constant 0 : index
    %c256_144 = arith.constant 256 : index
    %322 = vector.load %arg8[%c0_143, %c256_144] : memref<8x272xf32, #tpu.memory_space<vmem>>, vector<8x1xf32>
    tpu.vector_store %arg8[%c0_143, %c256_144], %321 {strides = array<i32>} : memref<8x272xf32, #tpu.memory_space<vmem>>, vector<8x1xf32>,
    %323 = vector.extract_strided_slice %35 {offsets = [0, 1], sizes = [8, 1], strides = [1, 1]} : vector<8x9xf32> to vector<8x1xf32>
    %c0_145 = arith.constant 0 : index
    %c257_146 = arith.constant 257 : index
    %324 = vector.load %arg8[%c0_145, %c257_146] : memref<8x272xf32, #tpu.memory_space<vmem>>, vector<8x1xf32>
    tpu.vector_store %arg8[%c0_145, %c257_146], %323 {strides = array<i32>} : memref<8x272xf32, #tpu.memory_space<vmem>>, vector<8x1xf32>,
    %c0_147 = arith.constant 0 : index
    %c0_148 = arith.constant 0 : index
    %325 = vector.load %arg8[%c0_147, %c0_148] : memref<8x272xf32, #tpu.memory_space<vmem>>, vector<8x272xf32>
    %cst_149 = arith.constant dense<0.000000e+00> : vector<8x1024xf32>
    %326 = tpu.matmul %325, %36, %cst_149 {dimension_numbers = #tpu.dot_dimension_numbers<[1], [0], [0], [1], [0, 0, 1, 1], [], []>} : vector<8x272xf32>, vector<272x1024xf32>, vector<8x1024xf32> -> vector<8x1024xf32>
    %327 = vector.broadcast %37 : vector<1x1024xf32> to vector<8x1024xf32>
    %328 = arith.addf %326, %327 : vector<8x1024xf32>
    %329 = vector.extract_strided_slice %328 {offsets = [0, 0], sizes = [8, 256], strides = [1, 1]} : vector<8x1024xf32> to vector<8x256xf32>
    %cst_150 = arith.constant 5.000000e-01 : f32
    %330 = vector.broadcast %cst_150 : f32 to vector<8x256xf32>
    %331 = arith.mulf %330, %329 : vector<8x256xf32>
    %332 = math.tanh %331 : vector<8x256xf32>
    %cst_151 = arith.constant 1.000000e+00 : f32
    %333 = vector.broadcast %cst_151 : f32 to vector<8x256xf32>
    %334 = arith.addf %333, %332 : vector<8x256xf32>
    %cst_152 = arith.constant 5.000000e-01 : f32
    %335 = vector.broadcast %cst_152 : f32 to vector<8x256xf32>
    %336 = arith.mulf %335, %334 : vector<8x256xf32>
    %337 = vector.extract_strided_slice %328 {offsets = [0, 256], sizes = [8, 256], strides = [1, 1]} : vector<8x1024xf32> to vector<8x256xf32>
    %cst_153 = arith.constant 5.000000e-01 : f32
    %338 = vector.broadcast %cst_153 : f32 to vector<8x256xf32>
    %339 = arith.mulf %338, %337 : vector<8x256xf32>
    %340 = math.tanh %339 : vector<8x256xf32>
    %cst_154 = arith.constant 1.000000e+00 : f32
    %341 = vector.broadcast %cst_154 : f32 to vector<8x256xf32>
    %342 = arith.addf %341, %340 : vector<8x256xf32>
    %cst_155 = arith.constant 5.000000e-01 : f32
    %343 = vector.broadcast %cst_155 : f32 to vector<8x256xf32>
    %344 = arith.mulf %343, %342 : vector<8x256xf32>
    %345 = vector.extract_strided_slice %328 {offsets = [0, 512], sizes = [8, 256], strides = [1, 1]} : vector<8x1024xf32> to vector<8x256xf32>
    %346 = math.tanh %345 : vector<8x256xf32>
    %347 = vector.extract_strided_slice %328 {offsets = [0, 768], sizes = [8, 256], strides = [1, 1]} : vector<8x1024xf32> to vector<8x256xf32>
    %cst_156 = arith.constant 5.000000e-01 : f32
    %348 = vector.broadcast %cst_156 : f32 to vector<8x256xf32>
    %349 = arith.mulf %348, %347 : vector<8x256xf32>
    %350 = math.tanh %349 : vector<8x256xf32>
    %cst_157 = arith.constant 1.000000e+00 : f32
    %351 = vector.broadcast %cst_157 : f32 to vector<8x256xf32>
    %352 = arith.addf %351, %350 : vector<8x256xf32>
    %cst_158 = arith.constant 5.000000e-01 : f32
    %353 = vector.broadcast %cst_158 : f32 to vector<8x256xf32>
    %354 = arith.mulf %353, %352 : vector<8x256xf32>
    %355 = arith.mulf %344, %317 : vector<8x256xf32>
    %356 = arith.mulf %336, %346 : vector<8x256xf32>
    %357 = arith.addf %355, %356 : vector<8x256xf32>
    %358 = math.tanh %357 : vector<8x256xf32>
    %359 = arith.mulf %354, %358 : vector<8x256xf32>
    %c0_159 = arith.constant 0 : index
    %c0_160 = arith.constant 0 : index
    %360 = vector.load %arg8[%c0_159, %c0_160] : memref<8x272xf32, #tpu.memory_space<vmem>>, vector<8x256xf32>
    tpu.vector_store %arg8[%c0_159, %c0_160], %359 {strides = array<i32>} : memref<8x272xf32, #tpu.memory_space<vmem>>, vector<8x256xf32>,
    %361 = vector.extract_strided_slice %35 {offsets = [0, 8], sizes = [8, 1], strides = [1, 1]} : vector<8x9xf32> to vector<8x1xf32>
    %c0_161 = arith.constant 0 : index
    %c256_162 = arith.constant 256 : index
    %362 = vector.load %arg8[%c0_161, %c256_162] : memref<8x272xf32, #tpu.memory_space<vmem>>, vector<8x1xf32>
    tpu.vector_store %arg8[%c0_161, %c256_162], %361 {strides = array<i32>} : memref<8x272xf32, #tpu.memory_space<vmem>>, vector<8x1xf32>,
    %363 = vector.extract_strided_slice %35 {offsets = [0, 0], sizes = [8, 1], strides = [1, 1]} : vector<8x9xf32> to vector<8x1xf32>
    %c0_163 = arith.constant 0 : index
    %c257_164 = arith.constant 257 : index
    %364 = vector.load %arg8[%c0_163, %c257_164] : memref<8x272xf32, #tpu.memory_space<vmem>>, vector<8x1xf32>
    tpu.vector_store %arg8[%c0_163, %c257_164], %363 {strides = array<i32>} : memref<8x272xf32, #tpu.memory_space<vmem>>, vector<8x1xf32>,
    %c0_165 = arith.constant 0 : index
    %c0_166 = arith.constant 0 : index
    %365 = vector.load %arg8[%c0_165, %c0_166] : memref<8x272xf32, #tpu.memory_space<vmem>>, vector<8x272xf32>
    %cst_167 = arith.constant dense<0.000000e+00> : vector<8x1024xf32>
    %366 = tpu.matmul %365, %36, %cst_167 {dimension_numbers = #tpu.dot_dimension_numbers<[1], [0], [0], [1], [0, 0, 1, 1], [], []>} : vector<8x272xf32>, vector<272x1024xf32>, vector<8x1024xf32> -> vector<8x1024xf32>
    %367 = vector.broadcast %37 : vector<1x1024xf32> to vector<8x1024xf32>
    %368 = arith.addf %366, %367 : vector<8x1024xf32>
    %369 = vector.extract_strided_slice %368 {offsets = [0, 0], sizes = [8, 256], strides = [1, 1]} : vector<8x1024xf32> to vector<8x256xf32>
    %cst_168 = arith.constant 5.000000e-01 : f32
    %370 = vector.broadcast %cst_168 : f32 to vector<8x256xf32>
    %371 = arith.mulf %370, %369 : vector<8x256xf32>
    %372 = math.tanh %371 : vector<8x256xf32>
    %cst_169 = arith.constant 1.000000e+00 : f32
    %373 = vector.broadcast %cst_169 : f32 to vector<8x256xf32>
    %374 = arith.addf %373, %372 : vector<8x256xf32>
    %cst_170 = arith.constant 5.000000e-01 : f32
    %375 = vector.broadcast %cst_170 : f32 to vector<8x256xf32>
    %376 = arith.mulf %375, %374 : vector<8x256xf32>
    %377 = vector.extract_strided_slice %368 {offsets = [0, 256], sizes = [8, 256], strides = [1, 1]} : vector<8x1024xf32> to vector<8x256xf32>
    %cst_171 = arith.constant 5.000000e-01 : f32
    %378 = vector.broadcast %cst_171 : f32 to vector<8x256xf32>
    %379 = arith.mulf %378, %377 : vector<8x256xf32>
    %380 = math.tanh %379 : vector<8x256xf32>
    %cst_172 = arith.constant 1.000000e+00 : f32
    %381 = vector.broadcast %cst_172 : f32 to vector<8x256xf32>
    %382 = arith.addf %381, %380 : vector<8x256xf32>
    %cst_173 = arith.constant 5.000000e-01 : f32
    %383 = vector.broadcast %cst_173 : f32 to vector<8x256xf32>
    %384 = arith.mulf %383, %382 : vector<8x256xf32>
    %385 = vector.extract_strided_slice %368 {offsets = [0, 512], sizes = [8, 256], strides = [1, 1]} : vector<8x1024xf32> to vector<8x256xf32>
    %386 = math.tanh %385 : vector<8x256xf32>
    %387 = vector.extract_strided_slice %368 {offsets = [0, 768], sizes = [8, 256], strides = [1, 1]} : vector<8x1024xf32> to vector<8x256xf32>
    %cst_174 = arith.constant 5.000000e-01 : f32
    %388 = vector.broadcast %cst_174 : f32 to vector<8x256xf32>
    %389 = arith.mulf %388, %387 : vector<8x256xf32>
    %390 = math.tanh %389 : vector<8x256xf32>
    %cst_175 = arith.constant 1.000000e+00 : f32
    %391 = vector.broadcast %cst_175 : f32 to vector<8x256xf32>
    %392 = arith.addf %391, %390 : vector<8x256xf32>
    %cst_176 = arith.constant 5.000000e-01 : f32
    %393 = vector.broadcast %cst_176 : f32 to vector<8x256xf32>
    %394 = arith.mulf %393, %392 : vector<8x256xf32>
    %395 = arith.mulf %384, %357 : vector<8x256xf32>
    %396 = arith.mulf %376, %386 : vector<8x256xf32>
    %397 = arith.addf %395, %396 : vector<8x256xf32>
    %398 = math.tanh %397 : vector<8x256xf32>
    %399 = arith.mulf %394, %398 : vector<8x256xf32>
    %400 = vector.extract_strided_slice %399 {offsets = [0, 0], sizes = [8, 128], strides = [1, 1]} : vector<8x256xf32> to vector<8x128xf32>
    %401 = vector.extract_strided_slice %399 {offsets = [0, 128], sizes = [8, 128], strides = [1, 1]} : vector<8x256xf32> to vector<8x128xf32>
    %402 = arith.addf %400, %401 : vector<8x128xf32>
    %403 = arith.addf %33, %402 : vector<8x128xf32>
    %404 = arith.addf %403, %34 : vector<8x128xf32>
    %c0_177 = arith.constant 0 : index
    %c0_178 = arith.constant 0 : index
    %405 = vector.load %arg7[%c0_177, %c0_178] : memref<8x128xf32, #tpu.memory_space<vmem>>, vector<8x128xf32>
    tpu.vector_store %arg7[%c0_177, %c0_178], %404 {strides = array<i32>} : memref<8x128xf32, #tpu.memory_space<vmem>>, vector<8x128xf32>,
    return
  }
  func.func @transform_0(%arg0: i32) -> (i32, i32) {
    %c0_i32 = arith.constant 0 : i32
    %c0_i32_0 = arith.constant 0 : i32
    return %arg0, %c0_i32 : i32, i32
  }
  func.func @transform_1(%arg0: i32) -> (i32, i32) {
    %c0_i32 = arith.constant 0 : i32
    %c0_i32_0 = arith.constant 0 : i32
    return %arg0, %c0_i32 : i32, i32
  }
  func.func @transform_2(%arg0: i32) -> (i32, i32) {
    %c0_i32 = arith.constant 0 : i32
    %c0_i32_0 = arith.constant 0 : i32
    %c0_i32_1 = arith.constant 0 : i32
    return %c0_i32, %c0_i32_0 : i32, i32
  }
  func.func @transform_3(%arg0: i32) -> (i32, i32) {
    %c0_i32 = arith.constant 0 : i32
    %c0_i32_0 = arith.constant 0 : i32
    %c0_i32_1 = arith.constant 0 : i32
    return %c0_i32, %c0_i32_0 : i32, i32
  }
  func.func @transform_4(%arg0: i32) -> (i32, i32) {
    %c0_i32 = arith.constant 0 : i32
    %c0_i32_0 = arith.constant 0 : i32
    %c0_i32_1 = arith.constant 0 : i32
    return %c0_i32, %c0_i32_0 : i32, i32
  }
  func.func @transform_5(%arg0: i32) -> (i32, i32) {
    %c0_i32 = arith.constant 0 : i32
    %c0_i32_0 = arith.constant 0 : i32
    %c0_i32_1 = arith.constant 0 : i32
    return %c0_i32, %c0_i32_0 : i32, i32
  }
  func.func @transform_6(%arg0: i32) -> (i32, i32) {
    %c0_i32 = arith.constant 0 : i32
    %c0_i32_0 = arith.constant 0 : i32
    return %arg0, %c0_i32 : i32, i32
  }
}

</mosaic_0001>

<llo_original>
// kernel: tpu_custom_call.1
$region0: #{tpu_custom_call.1}
  #allocation0 [shape = 'u32[]', space=smem, size = 0x4, offset = 0x4, fixed_abs, tag = 'smem constant byte address 0x4 - core index']
  #allocation1 [shape = 'u32[144,128]{1,0:T(1,128)}', space=vmem, size = 0x12000, scoped, tag = 'internal scratch']
  #allocation2 [shape = 'f32[8,272]{1,0:T(8,128)}', space=vmem, size = 0x3000, scoped, tag = 'scratch operand']
  %s0 = inlined_call_operand.hbm [shape: f32[8,48], index: 0, kind: input, shape index: {}]
  %s1 = inlined_call_operand.hbm [shape: f32[8,9], index: 1, kind: input, shape index: {}]
  %s2 = inlined_call_operand.hbm [shape: f32[48,1280], index: 2, kind: input, shape index: {}]
  %s3 = inlined_call_operand.hbm [shape: f32[1,1280], index: 3, kind: input, shape index: {}]
  %s4 = inlined_call_operand.hbm [shape: f32[272,1024], index: 4, kind: input, shape index: {}]
  %s5 = inlined_call_operand.hbm [shape: f32[1,1024], index: 5, kind: input, shape index: {}]
  %s6 = inlined_call_operand.hbm [shape: f32[8,128], index: 6, kind: output, shape index: {}]
  %s7 = sld [smem:[#allocation0]]
  $region58: #{tpu_custom_call.1} parent=0
    _
  %s9 = ssub.s32 1, %s7
  %s10 = scalar_select 0, %s9, %s7
  $region1: #{tpu_custom_call.1} parent=0
    #allocation3 [shape = 'u8[4096]{0}', space=vmem, size = 0x1000, scoped, tag = 'input window, operand 0, single buffered']
    #allocation4 [shape = 's32[1]{0}', space=sflag, size = 0x4, scoped, tag = 'scoped memory for tpu_custom_call.1']
    #allocation5 [shape = 's32[1]{0}', space=sflag, size = 0x4, scoped, tag = 'scoped memory for tpu_custom_call.1']
    #allocation6 [shape = 'u8[4096]{0}', space=vmem, size = 0x1000, scoped, tag = 'input window, operand 1, single buffered']
    #allocation7 [shape = 's32[1]{0}', space=sflag, size = 0x4, scoped, tag = 'scoped memory for tpu_custom_call.1']
    #allocation8 [shape = 'u8[245760]{0}', space=vmem, size = 0x3c000, scoped, tag = 'input window, operand 2, single buffered']
    #allocation9 [shape = 'u8[5120]{0}', space=vmem, size = 0x1400, scoped, tag = 'input window, operand 3, single buffered']
    #allocation10 [shape = 's32[1]{0}', space=sflag, size = 0x4, scoped, tag = 'scoped memory for tpu_custom_call.1']
    #allocation11 [shape = 'u8[1114112]{0}', space=vmem, size = 0x110000, scoped, tag = 'input window, operand 4, single buffered']
    #allocation12 [shape = 'u8[4096]{0}', space=vmem, size = 0x1000, scoped, tag = 'input window, operand 5, single buffered']
    #allocation13 [shape = 's32[1]{0}', space=sflag, size = 0x4, scoped, tag = 'scoped memory for tpu_custom_call.1']
    #allocation14 [shape = 'u8[4096]{0}', space=vmem, size = 0x1000, scoped, tag = 'output window, operand 0, single buffered']
    %11 = vsyncpa [#allocation4], 0
    %12 = vsyncpa [#allocation7], 0
    %13 = vsyncpa [#allocation10], 0
    %14 = vsyncpa [#allocation13], 0
    %15 = vsyncpa [#allocation5], 0
    // Predicated region
    $region2: #{tpu_custom_call.1} parent=1 // pred_check
      _
    $region3: #{tpu_custom_call.1} parent=1 // pred_check_branch
      %17 = sbr.rel (0) target = $region5
    $region4: #{tpu_custom_call.1} parent=1 // pred_region
      %s19 = ssub.s32 128, 128
      %20 = vsyncadd [#allocation4], %s19
      %s22 = sshll.u32 [#allocation3], 4
      %s23 = int_to_ptr.vmem [resolvable:$true] %s22
      %25 = dma.hbm_to_vmem [thread:$0]  %s0, 128, %s23, [#allocation4]
    $region5: #{tpu_custom_call.1} parent=1 // pred_fallthru
      _
    // Predicated region
    $region6: #{tpu_custom_call.1} parent=1 // pred_check
      _
    $region7: #{tpu_custom_call.1} parent=1 // pred_check_branch
      %27 = sbr.rel (0) target = $region9
    $region8: #{tpu_custom_call.1} parent=1 // pred_region
      %s29 = ssub.s32 128, 128
      %30 = vsyncadd [#allocation7], %s29
      %s32 = sshll.u32 [#allocation6], 4
      %s33 = int_to_ptr.vmem [resolvable:$true] %s32
      %35 = dma.hbm_to_vmem [thread:$0]  %s1, 128, %s33, [#allocation7]
    $region9: #{tpu_custom_call.1} parent=1 // pred_fallthru
      _
    // Predicated region
    $region10: #{tpu_custom_call.1} parent=1 // pred_check
      _
    $region11: #{tpu_custom_call.1} parent=1 // pred_check_branch
      %37 = sbr.rel (0) target = $region13
    $region12: #{tpu_custom_call.1} parent=1 // pred_region
      %s39 = ssub.s32 7680, 7680
      %40 = vsyncadd [#allocation7], %s39
      %s41 = sshll.u32 [#allocation8], 4
      %s42 = int_to_ptr.vmem [resolvable:$true] %s41
      %47 = dma.hbm_to_vmem [thread:$0]  %s2, 7680, %s42, [#allocation7], 1280, 1280, 80
    $region13: #{tpu_custom_call.1} parent=1 // pred_fallthru
      _
    // Predicated region
    $region14: #{tpu_custom_call.1} parent=1 // pred_check
      _
    $region15: #{tpu_custom_call.1} parent=1 // pred_check_branch
      %49 = sbr.rel (0) target = $region17
    $region16: #{tpu_custom_call.1} parent=1 // pred_region
      %s51 = ssub.s32 160, 160
      %52 = vsyncadd [#allocation10], %s51
      %s54 = sshll.u32 [#allocation9], 4
      %s55 = int_to_ptr.vmem [resolvable:$true] %s54
      %57 = dma.hbm_to_vmem [thread:$0]  %s3, 160, %s55, [#allocation10]
    $region17: #{tpu_custom_call.1} parent=1 // pred_fallthru
      _
    // Predicated region
    $region18: #{tpu_custom_call.1} parent=1 // pred_check
      _
    $region19: #{tpu_custom_call.1} parent=1 // pred_check_branch
      %59 = sbr.rel (0) target = $region21
    $region20: #{tpu_custom_call.1} parent=1 // pred_region
      %s61 = ssub.s32 34816, 34816
      %62 = vsyncadd [#allocation10], %s61
      %s63 = sshll.u32 [#allocation11], 4
      %s64 = int_to_ptr.vmem [resolvable:$true] %s63
      %69 = dma.hbm_to_vmem [thread:$0]  %s4, 34816, %s64, [#allocation10], 1024, 1024, 64
    $region21: #{tpu_custom_call.1} parent=1 // pred_fallthru
      _
    // Predicated region
    $region22: #{tpu_custom_call.1} parent=1 // pred_check
      _
    $region23: #{tpu_custom_call.1} parent=1 // pred_check_branch
      %71 = sbr.rel (0) target = $region25
    $region24: #{tpu_custom_call.1} parent=1 // pred_region
      %s73 = ssub.s32 128, 128
      %74 = vsyncadd [#allocation13], %s73
      %s76 = sshll.u32 [#allocation12], 4
      %s77 = int_to_ptr.vmem [resolvable:$true] %s76
      %79 = dma.hbm_to_vmem [thread:$0]  %s5, 128, %s77, [#allocation13]
    $region25: #{tpu_custom_call.1} parent=1 // pred_fallthru
      _
    // Predicated region
    $region26: #{tpu_custom_call.1} parent=1 // pred_check
      _
    $region27: #{tpu_custom_call.1} parent=1 // pred_check_branch
      %81 = sbr.rel (0) target = $region29
    $region28: #{tpu_custom_call.1} parent=1 // pred_region
      %82 = dma.done [#allocation4], 128
    $region29: #{tpu_custom_call.1} parent=1 // pred_fallthru
      _
    // Predicated region
    $region30: #{tpu_custom_call.1} parent=1 // pred_check
      _
    $region31: #{tpu_custom_call.1} parent=1 // pred_check_branch
      %84 = sbr.rel (0) target = $region33
    $region32: #{tpu_custom_call.1} parent=1 // pred_region
      %85 = dma.done [#allocation7], 128
    $region33: #{tpu_custom_call.1} parent=1 // pred_fallthru
      _
    // Predicated region
    $region34: #{tpu_custom_call.1} parent=1 // pred_check
      _
    $region35: #{tpu_custom_call.1} parent=1 // pred_check_branch
      %87 = sbr.rel (0) target = $region37
    $region36: #{tpu_custom_call.1} parent=1 // pred_region
      %88 = dma.done [#allocation7], 7680
    $region37: #{tpu_custom_call.1} parent=1 // pred_fallthru
      _
    // Predicated region
    $region38: #{tpu_custom_call.1} parent=1 // pred_check
      _
    $region39: #{tpu_custom_call.1} parent=1 // pred_check_branch
      %90 = sbr.rel (0) target = $region41
    $region40: #{tpu_custom_call.1} parent=1 // pred_region
      %91 = dma.done [#allocation10], 160
    $region41: #{tpu_custom_call.1} parent=1 // pred_fallthru
      _
    // Predicated region
    $region42: #{tpu_custom_call.1} parent=1 // pred_check
      _
    $region43: #{tpu_custom_call.1} parent=1 // pred_check_branch
      %93 = sbr.rel (0) target = $region45
    $region44: #{tpu_custom_call.1} parent=1 // pred_region
      %94 = dma.done [#allocation10], 34816
    $region45: #{tpu_custom_call.1} parent=1 // pred_fallthru
      _
    // Predicated region
    $region46: #{tpu_custom_call.1} parent=1 // pred_check
      _
    $region47: #{tpu_custom_call.1} parent=1 // pred_check_branch
      %96 = sbr.rel (0) target = $region49
    $region48: #{tpu_custom_call.1} parent=1 // pred_region
      %97 = dma.done [#allocation13], 128
    $region49: #{tpu_custom_call.1} parent=1 // pred_fallthru
      _
    %v98 = vld [vmem:[#allocation3] sm:$0xff]
    %v99 = vld [vmem:[#allocation8] sm:$0xff]
    %v100 = vld [vmem:[#allocation8 + $0x8] sm:$0xff]
    %v101 = vld [vmem:[#allocation8 + $0x10] sm:$0xff]
    %v102 = vld [vmem:[#allocation8 + $0x18] sm:$0xff]
    %v103 = vld [vmem:[#allocation8 + $0x20] sm:$0xff]
    %v104 = vld [vmem:[#allocation8 + $0x28] sm:$0xff]
    %v105 = vld [vmem:[#allocation8 + $0x30] sm:$0xff]
    %v106 = vld [vmem:[#allocation8 + $0x38] sm:$0xff]
    %v107 = vld [vmem:[#allocation8 + $0x40] sm:$0xff]
    %v108 = vld [vmem:[#allocation8 + $0x48] sm:$0xff]
    %v109 = vld [vmem:[#allocation8 + $0x50] sm:$0xff]
    %v110 = vld [vmem:[#allocation8 + $0x58] sm:$0xff]
    %v111 = vld [vmem:[#allocation8 + $0x60] sm:$0xff]
    %v112 = vld [vmem:[#allocation8 + $0x68] sm:$0xff]
    %v113 = vld [vmem:[#allocation8 + $0x70] sm:$0xff]
    %v114 = vld [vmem:[#allocation8 + $0x78] sm:$0xff]
    %v115 = vld [vmem:[#allocation8 + $0x80] sm:$0xff]
    %v116 = vld [vmem:[#allocation8 + $0x88] sm:$0xff]
    %v117 = vld [vmem:[#allocation8 + $0x90] sm:$0xff]
    %v118 = vld [vmem:[#allocation8 + $0x98] sm:$0xff]
    %v119 = vld [vmem:[#allocation8 + $0xa0] sm:$0xff]
    %v120 = vld [vmem:[#allocation8 + $0xa8] sm:$0xff]
    %v121 = vld [vmem:[#allocation8 + $0xb0] sm:$0xff]
    %v122 = vld [vmem:[#allocation8 + $0xb8] sm:$0xff]
    %v123 = vld [vmem:[#allocation8 + $0xc0] sm:$0xff]
    %v124 = vld [vmem:[#allocation8 + $0xc8] sm:$0xff]
    %v125 = vld [vmem:[#allocation8 + $0xd0] sm:$0xff]
    %v126 = vld [vmem:[#allocation8 + $0xd8] sm:$0xff]
    %v127 = vld [vmem:[#allocation8 + $0xe0] sm:$0xff]
    %v128 = vld [vmem:[#allocation8 + $0xe8] sm:$0xff]
    %v129 = vld [vmem:[#allocation8 + $0xf0] sm:$0xff]
    %v130 = vld [vmem:[#allocation8 + $0xf8] sm:$0xff]
    %v131 = vld [vmem:[#allocation8 + $0x100] sm:$0xff]
    %v132 = vld [vmem:[#allocation8 + $0x108] sm:$0xff]
    %v133 = vld [vmem:[#allocation8 + $0x110] sm:$0xff]
    %v134 = vld [vmem:[#allocation8 + $0x118] sm:$0xff]
    %v135 = vld [vmem:[#allocation8 + $0x120] sm:$0xff]
    %v136 = vld [vmem:[#allocation8 + $0x128] sm:$0xff]
    %v137 = vld [vmem:[#allocation8 + $0x130] sm:$0xff]
    %v138 = vld [vmem:[#allocation8 + $0x138] sm:$0xff]
    %v139 = vld [vmem:[#allocation8 + $0x140] sm:$0xff]
    %v140 = vld [vmem:[#allocation8 + $0x148] sm:$0xff]
    %v141 = vld [vmem:[#allocation8 + $0x150] sm:$0xff]
    %v142 = vld [vmem:[#allocation8 + $0x158] sm:$0xff]
    %v143 = vld [vmem:[#allocation8 + $0x160] sm:$0xff]
    %v144 = vld [vmem:[#allocation8 + $0x168] sm:$0xff]
    %v145 = vld [vmem:[#allocation8 + $0x170] sm:$0xff]
    %v146 = vld [vmem:[#allocation8 + $0x178] sm:$0xff]
    %v147 = vld [vmem:[#allocation8 + $0x180] sm:$0xff]
    %v148 = vld [vmem:[#allocation8 + $0x188] sm:$0xff]
    %v149 = vld [vmem:[#allocation8 + $0x190] sm:$0xff]
    %v150 = vld [vmem:[#allocation8 + $0x198] sm:$0xff]
    %v151 = vld [vmem:[#allocation8 + $0x1a0] sm:$0xff]
    %v152 = vld [vmem:[#allocation8 + $0x1a8] sm:$0xff]
    %v153 = vld [vmem:[#allocation8 + $0x1b0] sm:$0xff]
    %v154 = vld [vmem:[#allocation8 + $0x1b8] sm:$0xff]
    %v155 = vld [vmem:[#allocation8 + $0x1c0] sm:$0xff]
    %v156 = vld [vmem:[#allocation8 + $0x1c8] sm:$0xff]
    %v157 = vld [vmem:[#allocation8 + $0x1d0] sm:$0xff]
    %v158 = vld [vmem:[#allocation8 + $0x1d8] sm:$0xff]
    %v159 = vld [vmem:[#allocation9] sm:$0xff]
    %v160 = vld [vmem:[#allocation9 + $0x8] sm:$0x3]
    %v163 = vlaneseq
    %v164 = vshrl.u32 %v163, 7
    %v165 = vsub.s32 0, %v164
    %v166 = vrot.slane %v159, %v165
    %v167 = vlaneseq
    %v168 = vshrl.u32 %v167, 7
    %v169 = vsub.s32 1, %v168
    %v170 = vrot.slane %v159, %v169
    %v171 = vlaneseq
    %v172 = vshrl.u32 %v171, 7
    %v173 = vsub.s32 2, %v172
    %v174 = vrot.slane %v159, %v173
    %v175 = vlaneseq
    %v176 = vshrl.u32 %v175, 7
    %v177 = vsub.s32 3, %v176
    %v178 = vrot.slane %v159, %v177
    %v179 = vlaneseq
    %v180 = vshrl.u32 %v179, 7
    %v181 = vsub.s32 4, %v180
    %v182 = vrot.slane %v159, %v181
    %v183 = vlaneseq
    %v184 = vshrl.u32 %v183, 7
    %v185 = vsub.s32 5, %v184
    %v186 = vrot.slane %v159, %v185
    %v187 = vlaneseq
    %v188 = vshrl.u32 %v187, 7
    %v189 = vsub.s32 6, %v188
    %v190 = vrot.slane %v159, %v189
    %v191 = vlaneseq
    %v192 = vshrl.u32 %v191, 7
    %v193 = vsub.s32 7, %v192
    %v194 = vrot.slane %v159, %v193
    %v195 = vlaneseq
    %v196 = vshrl.u32 %v195, 7
    %v197 = vsub.s32 0, %v196
    %v198 = vrot.slane %v160, %v197
    %v199 = vlaneseq
    %v200 = vshrl.u32 %v199, 7
    %v201 = vsub.s32 1, %v200
    %v202 = vrot.slane %v160, %v201
    %vm213 = vcmask 392192
    %v215 = vsel %vm213, %v98, 0
    %217 = vmatprep.subr.mxu0 %v100
    %218 = vmatpush1.msra.mxu0 %v99
    %219 = vmatprep.subr.mxu0 %v110
    %220 = vmatpush1.msra.mxu0 %v109
    %221 = vmatprep.subr.mxu0 %v120
    %222 = vmatpush1.msra.mxu0 %v119
    %223 = vmatprep.subr.mxu0 %v130
    %224 = vmatpush1.msra.mxu0 %v129
    %225 = vmatprep.subr.mxu0 %v140
    %226 = vmatpush1.msra.mxu0 %v139
    %227 = vmatprep.subr.mxu0 %v150
    %228 = vmatpush1.msra.mxu0 %v149
    %229 = vmatprep.subr.mxu0 0.0
    %230 = vmatpush1.msra.mxu0 0.0
    %231 = vmatprep.subr.mxu0 0.0
    %232 = vmatpush1.msra.mxu0 0.0
    %233 = vmatprep.subr.mxu0 0.0
    %234 = vmatpush1.msra.mxu0 0.0
    %235 = vmatprep.subr.mxu0 0.0
    %236 = vmatpush1.msra.mxu0 0.0
    %237 = vmatprep.subr.mxu0 0.0
    %238 = vmatpush1.msra.mxu0 0.0
    %239 = vmatprep.subr.mxu0 0.0
    %240 = vmatpush1.msra.mxu0 0.0
    %241 = vmatprep.subr.mxu0 0.0
    %242 = vmatpush1.msra.mxu0 0.0
    %243 = vmatprep.subr.mxu0 0.0
    %244 = vmatpush1.msra.mxu0 0.0
    %245 = vmatprep.subr.mxu0 0.0
    %246 = vmatpush1.msra.mxu0 0.0
    %247 = vmatprep.subr.mxu0 0.0
    %248 = vmatpush1.msra.mxu0 0.0
    %249 = vmatprep.subr.mxu0 0.0
    %250 = vmatpush1.msra.mxu0 0.0
    %251 = vmatprep.subr.mxu0 0.0
    %252 = vmatpush1.msra.mxu0 0.0
    %253 = vmatprep.subr.mxu0 0.0
    %254 = vmatpush1.msra.mxu0 0.0
    %255 = vmatprep.subr.mxu0 0.0
    %256 = vmatpush1.msra.mxu0 0.0
    %257 = vmatprep.subr.mxu0 0.0
    %258 = vmatpush1.msra.mxu0 0.0
    %259 = vmatprep.subr.mxu0 0.0
    %260 = vmatpush1.msra.mxu0 0.0
    %261 = vmatprep.subr.mxu0 0.0
    %262 = vmatpush1.msra.mxu0 0.0
    %263 = vmatprep.subr.mxu0 0.0
    %264 = vmatpush1.msra.mxu0 0.0
    %265 = vmatprep.subr.mxu0 0.0
    %266 = vmatpush1.msra.mxu0 0.0
    %267 = vmatprep.subr.mxu0 0.0
    %268 = vmatpush1.msra.mxu0 0.0
    %269 = vmatprep.subr.mxu0 0.0
    %270 = vmatpush1.msra.mxu0 0.0
    %271 = vmatprep.subr.mxu0 0.0
    %272 = vmatpush1.msra.mxu0 0.0
    %273 = vmatprep.subr.mxu0 0.0
    %274 = vmatpush1.msra.mxu0 0.0
    %275 = vmatprep.subr.mxu0 0.0
    %276 = vmatpush1.msra.mxu0 0.0
    %277 = vmatprep.subr.mxu0 0.0
    %278 = vmatpush1.msra.mxu0 0.0
    %279 = vmatprep.subr.mxu0 0.0
    %280 = vmatpush1.msra.mxu0 0.0
    %281 = vmatprep.mubr.f32.mxu0 0.0
    %282 = vmatmul.mubr.f32.gmra.mrb[0].mxu0 %v215
    %v283 = vpop.f32.mrb[0].mxu0
    %v284 = vadd.f32 %v166, %v283
    %v285 = vpop.f32.mrb[0].mxu0
    %v286 = vadd.f32 %v170, %v285
    %287 = vdwg.mxu0
    %288 = vmatprep.subr.mxu0 %v102
    %289 = vmatpush1.msra.mxu0 %v101
    %290 = vmatprep.subr.mxu0 %v112
    %291 = vmatpush1.msra.mxu0 %v111
    %292 = vmatprep.subr.mxu0 %v122
    %293 = vmatpush1.msra.mxu0 %v121
    %294 = vmatprep.subr.mxu0 %v132
    %295 = vmatpush1.msra.mxu0 %v131
    %296 = vmatprep.subr.mxu0 %v142
    %297 = vmatpush1.msra.mxu0 %v141
    %298 = vmatprep.subr.mxu0 %v152
    %299 = vmatpush1.msra.mxu0 %v151
    %300 = vmatprep.subr.mxu0 0.0
    %301 = vmatpush1.msra.mxu0 0.0
    %302 = vmatprep.subr.mxu0 0.0
    %303 = vmatpush1.msra.mxu0 0.0
    %304 = vmatprep.subr.mxu0 0.0
    %305 = vmatpush1.msra.mxu0 0.0
    %306 = vmatprep.subr.mxu0 0.0
    %307 = vmatpush1.msra.mxu0 0.0
    %308 = vmatprep.subr.mxu0 0.0
    %309 = vmatpush1.msra.mxu0 0.0
    %310 = vmatprep.subr.mxu0 0.0
    %311 = vmatpush1.msra.mxu0 0.0
    %312 = vmatprep.subr.mxu0 0.0
    %313 = vmatpush1.msra.mxu0 0.0
    %314 = vmatprep.subr.mxu0 0.0
    %315 = vmatpush1.msra.mxu0 0.0
    %316 = vmatprep.subr.mxu0 0.0
    %317 = vmatpush1.msra.mxu0 0.0
    %318 = vmatprep.subr.mxu0 0.0
    %319 = vmatpush1.msra.mxu0 0.0
    %320 = vmatprep.subr.mxu0 0.0
    %321 = vmatpush1.msra.mxu0 0.0
    %322 = vmatprep.subr.mxu0 0.0
    %323 = vmatpush1.msra.mxu0 0.0
    %324 = vmatprep.subr.mxu0 0.0
    %325 = vmatpush1.msra.mxu0 0.0
    %326 = vmatprep.subr.mxu0 0.0
    %327 = vmatpush1.msra.mxu0 0.0
    %328 = vmatprep.subr.mxu0 0.0
    %329 = vmatpush1.msra.mxu0 0.0
    %330 = vmatprep.subr.mxu0 0.0
    %331 = vmatpush1.msra.mxu0 0.0
    %332 = vmatprep.subr.mxu0 0.0
    %333 = vmatpush1.msra.mxu0 0.0
    %334 = vmatprep.subr.mxu0 0.0
    %335 = vmatpush1.msra.mxu0 0.0
    %336 = vmatprep.subr.mxu0 0.0
    %337 = vmatpush1.msra.mxu0 0.0
    %338 = vmatprep.subr.mxu0 0.0
    %339 = vmatpush1.msra.mxu0 0.0
    %340 = vmatprep.subr.mxu0 0.0
    %341 = vmatpush1.msra.mxu0 0.0
    %342 = vmatprep.subr.mxu0 0.0
    %343 = vmatpush1.msra.mxu0 0.0
    %344 = vmatprep.subr.mxu0 0.0
    %345 = vmatpush1.msra.mxu0 0.0
    %346 = vmatprep.subr.mxu0 0.0
    %347 = vmatpush1.msra.mxu0 0.0
    %348 = vmatprep.subr.mxu0 0.0
    %349 = vmatpush1.msra.mxu0 0.0
    %350 = vmatprep.subr.mxu0 0.0
    %351 = vmatpush1.msra.mxu0 0.0
    %352 = vmatprep.mubr.f32.mxu0 0.0
    %353 = vmatmul.mubr.f32.gmra.mrb[0].mxu0 %v215
    %v354 = vpop.f32.mrb[0].mxu0
    %v355 = vadd.f32 %v174, %v354
    %v356 = vpop.f32.mrb[0].mxu0
    %v357 = vadd.f32 %v178, %v356
    %358 = vdwg.mxu0
    %359 = vmatprep.subr.mxu0 %v104
    %360 = vmatpush1.msra.mxu0 %v103
    %361 = vmatprep.subr.mxu0 %v114
    %362 = vmatpush1.msra.mxu0 %v113
    %363 = vmatprep.subr.mxu0 %v124
    %364 = vmatpush1.msra.mxu0 %v123
    %365 = vmatprep.subr.mxu0 %v134
    %366 = vmatpush1.msra.mxu0 %v133
    %367 = vmatprep.subr.mxu0 %v144
    %368 = vmatpush1.msra.mxu0 %v143
    %369 = vmatprep.subr.mxu0 %v154
    %370 = vmatpush1.msra.mxu0 %v153
    %371 = vmatprep.subr.mxu0 0.0
    %372 = vmatpush1.msra.mxu0 0.0
    %373 = vmatprep.subr.mxu0 0.0
    %374 = vmatpush1.msra.mxu0 0.0
    %375 = vmatprep.subr.mxu0 0.0
    %376 = vmatpush1.msra.mxu0 0.0
    %377 = vmatprep.subr.mxu0 0.0
    %378 = vmatpush1.msra.mxu0 0.0
    %379 = vmatprep.subr.mxu0 0.0
    %380 = vmatpush1.msra.mxu0 0.0
    %381 = vmatprep.subr.mxu0 0.0
    %382 = vmatpush1.msra.mxu0 0.0
    %383 = vmatprep.subr.mxu0 0.0
    %384 = vmatpush1.msra.mxu0 0.0
    %385 = vmatprep.subr.mxu0 0.0
    %386 = vmatpush1.msra.mxu0 0.0
    %387 = vmatprep.subr.mxu0 0.0
    %388 = vmatpush1.msra.mxu0 0.0
    %389 = vmatprep.subr.mxu0 0.0
    %390 = vmatpush1.msra.mxu0 0.0
    %391 = vmatprep.subr.mxu0 0.0
    %392 = vmatpush1.msra.mxu0 0.0
    %393 = vmatprep.subr.mxu0 0.0
    %394 = vmatpush1.msra.mxu0 0.0
    %395 = vmatprep.subr.mxu0 0.0
    %396 = vmatpush1.msra.mxu0 0.0
    %397 = vmatprep.subr.mxu0 0.0
    %398 = vmatpush1.msra.mxu0 0.0
    %399 = vmatprep.subr.mxu0 0.0
    %400 = vmatpush1.msra.mxu0 0.0
    %401 = vmatprep.subr.mxu0 0.0
    %402 = vmatpush1.msra.mxu0 0.0
    %403 = vmatprep.subr.mxu0 0.0
    %404 = vmatpush1.msra.mxu0 0.0
    %405 = vmatprep.subr.mxu0 0.0
    %406 = vmatpush1.msra.mxu0 0.0
    %407 = vmatprep.subr.mxu0 0.0
    %408 = vmatpush1.msra.mxu0 0.0
    %409 = vmatprep.subr.mxu0 0.0
    %410 = vmatpush1.msra.mxu0 0.0
    %411 = vmatprep.subr.mxu0 0.0
    %412 = vmatpush1.msra.mxu0 0.0
    %413 = vmatprep.subr.mxu0 0.0
    %414 = vmatpush1.msra.mxu0 0.0
    %415 = vmatprep.subr.mxu0 0.0
    %416 = vmatpush1.msra.mxu0 0.0
    %417 = vmatprep.subr.mxu0 0.0
    %418 = vmatpush1.msra.mxu0 0.0
    %419 = vmatprep.subr.mxu0 0.0
    %420 = vmatpush1.msra.mxu0 0.0
    %421 = vmatprep.subr.mxu0 0.0
    %422 = vmatpush1.msra.mxu0 0.0
    %423 = vmatprep.mubr.f32.mxu0 0.0
    %424 = vmatmul.mubr.f32.gmra.mrb[0].mxu0 %v215
    %v425 = vpop.f32.mrb[0].mxu0
    %v426 = vadd.f32 %v182, %v425
    %v427 = vpop.f32.mrb[0].mxu0
    %v428 = vadd.f32 %v186, %v427
    %429 = vdwg.mxu0
    %430 = vmatprep.subr.mxu0 %v106
    %431 = vmatpush1.msra.mxu0 %v105
    %432 = vmatprep.subr.mxu0 %v116
    %433 = vmatpush1.msra.mxu0 %v115
    %434 = vmatprep.subr.mxu0 %v126
    %435 = vmatpush1.msra.mxu0 %v125
    %436 = vmatprep.subr.mxu0 %v136
    %437 = vmatpush1.msra.mxu0 %v135
    %438 = vmatprep.subr.mxu0 %v146
    %439 = vmatpush1.msra.mxu0 %v145
    %440 = vmatprep.subr.mxu0 %v156
    %441 = vmatpush1.msra.mxu0 %v155
    %442 = vmatprep.subr.mxu0 0.0
    %443 = vmatpush1.msra.mxu0 0.0
    %444 = vmatprep.subr.mxu0 0.0
    %445 = vmatpush1.msra.mxu0 0.0
    %446 = vmatprep.subr.mxu0 0.0
    %447 = vmatpush1.msra.mxu0 0.0
    %448 = vmatprep.subr.mxu0 0.0
    %449 = vmatpush1.msra.mxu0 0.0
    %450 = vmatprep.subr.mxu0 0.0
    %451 = vmatpush1.msra.mxu0 0.0
    %452 = vmatprep.subr.mxu0 0.0
    %453 = vmatpush1.msra.mxu0 0.0
    %454 = vmatprep.subr.mxu0 0.0
    %455 = vmatpush1.msra.mxu0 0.0
    %456 = vmatprep.subr.mxu0 0.0
    %457 = vmatpush1.msra.mxu0 0.0
    %458 = vmatprep.subr.mxu0 0.0
    %459 = vmatpush1.msra.mxu0 0.0
    %460 = vmatprep.subr.mxu0 0.0
    %461 = vmatpush1.msra.mxu0 0.0
    %462 = vmatprep.subr.mxu0 0.0
    %463 = vmatpush1.msra.mxu0 0.0
    %464 = vmatprep.subr.mxu0 0.0
    %465 = vmatpush1.msra.mxu0 0.0
    %466 = vmatprep.subr.mxu0 0.0
    %467 = vmatpush1.msra.mxu0 0.0
    %468 = vmatprep.subr.mxu0 0.0
    %469 = vmatpush1.msra.mxu0 0.0
    %470 = vmatprep.subr.mxu0 0.0
    %471 = vmatpush1.msra.mxu0 0.0
    %472 = vmatprep.subr.mxu0 0.0
    %473 = vmatpush1.msra.mxu0 0.0
    %474 = vmatprep.subr.mxu0 0.0
    %475 = vmatpush1.msra.mxu0 0.0
    %476 = vmatprep.subr.mxu0 0.0
    %477 = vmatpush1.msra.mxu0 0.0
    %478 = vmatprep.subr.mxu0 0.0
    %479 = vmatpush1.msra.mxu0 0.0
    %480 = vmatprep.subr.mxu0 0.0
    %481 = vmatpush1.msra.mxu0 0.0
    %482 = vmatprep.subr.mxu0 0.0
    %483 = vmatpush1.msra.mxu0 0.0
    %484 = vmatprep.subr.mxu0 0.0
    %485 = vmatpush1.msra.mxu0 0.0
    %486 = vmatprep.subr.mxu0 0.0
    %487 = vmatpush1.msra.mxu0 0.0
    %488 = vmatprep.subr.mxu0 0.0
    %489 = vmatpush1.msra.mxu0 0.0
    %490 = vmatprep.subr.mxu0 0.0
    %491 = vmatpush1.msra.mxu0 0.0
    %492 = vmatprep.subr.mxu0 0.0
    %493 = vmatpush1.msra.mxu0 0.0
    %494 = vmatprep.mubr.f32.mxu0 0.0
    %495 = vmatmul.mubr.f32.gmra.mrb[0].mxu0 %v215
    %v496 = vpop.f32.mrb[0].mxu0
    %v497 = vadd.f32 %v190, %v496
    %v498 = vpop.f32.mrb[0].mxu0
    %v499 = vadd.f32 %v194, %v498
    %500 = vdwg.mxu0
    %501 = vmatprep.subr.mxu0 %v108
    %502 = vmatpush1.msra.mxu0 %v107
    %503 = vmatprep.subr.mxu0 %v118
    %504 = vmatpush1.msra.mxu0 %v117
    %505 = vmatprep.subr.mxu0 %v128
    %506 = vmatpush1.msra.mxu0 %v127
    %507 = vmatprep.subr.mxu0 %v138
    %508 = vmatpush1.msra.mxu0 %v137
    %509 = vmatprep.subr.mxu0 %v148
    %510 = vmatpush1.msra.mxu0 %v147
    %511 = vmatprep.subr.mxu0 %v158
    %512 = vmatpush1.msra.mxu0 %v157
    %513 = vmatprep.subr.mxu0 0.0
    %514 = vmatpush1.msra.mxu0 0.0
    %515 = vmatprep.subr.mxu0 0.0
    %516 = vmatpush1.msra.mxu0 0.0
    %517 = vmatprep.subr.mxu0 0.0
    %518 = vmatpush1.msra.mxu0 0.0
    %519 = vmatprep.subr.mxu0 0.0
    %520 = vmatpush1.msra.mxu0 0.0
    %521 = vmatprep.subr.mxu0 0.0
    %522 = vmatpush1.msra.mxu0 0.0
    %523 = vmatprep.subr.mxu0 0.0
    %524 = vmatpush1.msra.mxu0 0.0
    %525 = vmatprep.subr.mxu0 0.0
    %526 = vmatpush1.msra.mxu0 0.0
    %527 = vmatprep.subr.mxu0 0.0
    %528 = vmatpush1.msra.mxu0 0.0
    %529 = vmatprep.subr.mxu0 0.0
    %530 = vmatpush1.msra.mxu0 0.0
    %531 = vmatprep.subr.mxu0 0.0
    %532 = vmatpush1.msra.mxu0 0.0
    %533 = vmatprep.subr.mxu0 0.0
    %534 = vmatpush1.msra.mxu0 0.0
    %535 = vmatprep.subr.mxu0 0.0
    %536 = vmatpush1.msra.mxu0 0.0
    %537 = vmatprep.subr.mxu0 0.0
    %538 = vmatpush1.msra.mxu0 0.0
    %539 = vmatprep.subr.mxu0 0.0
    %540 = vmatpush1.msra.mxu0 0.0
    %541 = vmatprep.subr.mxu0 0.0
    %542 = vmatpush1.msra.mxu0 0.0
    %543 = vmatprep.subr.mxu0 0.0
    %544 = vmatpush1.msra.mxu0 0.0
    %545 = vmatprep.subr.mxu0 0.0
    %546 = vmatpush1.msra.mxu0 0.0
    %547 = vmatprep.subr.mxu0 0.0
    %548 = vmatpush1.msra.mxu0 0.0
    %549 = vmatprep.subr.mxu0 0.0
    %550 = vmatpush1.msra.mxu0 0.0
    %551 = vmatprep.subr.mxu0 0.0
    %552 = vmatpush1.msra.mxu0 0.0
    %553 = vmatprep.subr.mxu0 0.0
    %554 = vmatpush1.msra.mxu0 0.0
    %555 = vmatprep.subr.mxu0 0.0
    %556 = vmatpush1.msra.mxu0 0.0
    %557 = vmatprep.subr.mxu0 0.0
    %558 = vmatpush1.msra.mxu0 0.0
    %559 = vmatprep.subr.mxu0 0.0
    %560 = vmatpush1.msra.mxu0 0.0
    %561 = vmatprep.subr.mxu0 0.0
    %562 = vmatpush1.msra.mxu0 0.0
    %563 = vmatprep.subr.mxu0 0.0
    %564 = vmatpush1.msra.mxu0 0.0
    %565 = vmatprep.mubr.f32.mxu0 0.0
    %566 = vmatmul.mubr.f32.gmra.mrb[0].mxu0 %v215
    %v567 = vpop.f32.mrb[0].mxu0
    %v568 = vadd.f32 %v198, %v567
    %v569 = vpop.f32.mrb[0].mxu0
    %v570 = vadd.f32 %v202, %v569
    %571 = vdwg.mxu0
    %v572 = vmul.f32 %v284, 0.5
    %v573 = vmul.f32 %v286, 0.5
    %v574 = vmul.f32 %v355, 0.5
    %v575 = vmul.f32 %v357, 0.5
    %v576 = vmul.f32 %v426, 0.5
    %v577 = vmul.f32 %v428, 0.5
    %v578 = vmul.f32 %v497, 0.5
    %v579 = vmul.f32 %v499, 0.5
    %v580 = vmul.f32 %v568, 0.5
    %v581 = vmul.f32 %v284, 0.70710677
    %v582 = vmul.f32 %v286, 0.70710677
    %v583 = vmul.f32 %v355, 0.70710677
    %v584 = vmul.f32 %v357, 0.70710677
    %v585 = vmul.f32 %v426, 0.70710677
    %v586 = vmul.f32 %v428, 0.70710677
    %v587 = vmul.f32 %v497, 0.70710677
    %v588 = vmul.f32 %v499, 0.70710677
    %v589 = vmul.f32 %v568, 0.70710677
    %v590 = verf.f32.pop %v581
    %v591 = verf.f32.pop %v582
    %v592 = verf.f32.pop %v583
    %v593 = verf.f32.pop %v584
    %v594 = verf.f32.pop %v585
    %v595 = verf.f32.pop %v586
    %v596 = verf.f32.pop %v587
    %v597 = verf.f32.pop %v588
    %v598 = verf.f32.pop %v589
    %v599 = vadd.f32 %v590, 1.0
    %v600 = vadd.f32 %v591, 1.0
    %v601 = vadd.f32 %v592, 1.0
    %v602 = vadd.f32 %v593, 1.0
    %v603 = vadd.f32 %v594, 1.0
    %v604 = vadd.f32 %v595, 1.0
    %v605 = vadd.f32 %v596, 1.0
    %v606 = vadd.f32 %v597, 1.0
    %v607 = vadd.f32 %v598, 1.0
    %v608 = vmul.f32 %v572, %v599
    %v609 = vmul.f32 %v573, %v600
    %v610 = vmul.f32 %v574, %v601
    %v611 = vmul.f32 %v575, %v602
    %v612 = vmul.f32 %v576, %v603
    %v613 = vmul.f32 %v577, %v604
    %v614 = vmul.f32 %v578, %v605
    %v615 = vmul.f32 %v579, %v606
    %v616 = vmul.f32 %v580, %v607
    %v617 = vadd.f32 %v608, %v609
    %v618 = vadd.f32 %v617, %v610
    %v619 = vadd.f32 %v618, %v611
    %v620 = vadd.f32 %v619, %v612
    %v621 = vadd.f32 %v620, %v613
    %v622 = vadd.f32 %v621, %v614
    %v623 = vadd.f32 %v622, %v615
    %v624 = vadd.f32 %v623, %v616
    %v625 = vmul.f32 %v624, 0.11111111
    %v626 = vld [vmem:[#allocation6] sm:$0xff]
    %v627 = vld [vmem:[#allocation11] sm:$0xff]
    %v628 = vld [vmem:[#allocation11 + $0x8] sm:$0xff]
    %v629 = vld [vmem:[#allocation11 + $0x10] sm:$0xff]
    %v630 = vld [vmem:[#allocation11 + $0x18] sm:$0xff]
    %v631 = vld [vmem:[#allocation11 + $0x20] sm:$0xff]
    %v632 = vld [vmem:[#allocation11 + $0x28] sm:$0xff]
    %v633 = vld [vmem:[#allocation11 + $0x30] sm:$0xff]
    %v634 = vld [vmem:[#allocation11 + $0x38] sm:$0xff]
    %v635 = vld [vmem:[#allocation11 + $0x40] sm:$0xff]
    %v636 = vld [vmem:[#allocation11 + $0x48] sm:$0xff]
    %v637 = vld [vmem:[#allocation11 + $0x50] sm:$0xff]
    %v638 = vld [vmem:[#allocation11 + $0x58] sm:$0xff]
    %v639 = vld [vmem:[#allocation11 + $0x60] sm:$0xff]
    %v640 = vld [vmem:[#allocation11 + $0x68] sm:$0xff]
    %v641 = vld [vmem:[#allocation11 + $0x70] sm:$0xff]
    %v642 = vld [vmem:[#allocation11 + $0x78] sm:$0xff]
    %v643 = vld [vmem:[#allocation11 + $0x80] sm:$0xff]
    %v644 = vld [vmem:[#allocation11 + $0x88] sm:$0xff]
    %v645 = vld [vmem:[#allocation11 + $0x90] sm:$0xff]
    %v646 = vld [vmem:[#allocation11 + $0x98] sm:$0xff]
    %v647 = vld [vmem:[#allocation11 + $0xa0] sm:$0xff]
    %v648 = vld [vmem:[#allocation11 + $0xa8] sm:$0xff]
    %v649 = vld [vmem:[#allocation11 + $0xb0] sm:$0xff]
    %v650 = vld [vmem:[#allocation11 + $0xb8] sm:$0xff]
    %v651 = vld [vmem:[#allocation11 + $0xc0] sm:$0xff]
    %v652 = vld [vmem:[#allocation11 + $0xc8] sm:$0xff]
    %v653 = vld [vmem:[#allocation11 + $0xd0] sm:$0xff]
    %v654 = vld [vmem:[#allocation11 + $0xd8] sm:$0xff]
    %v655 = vld [vmem:[#allocation11 + $0xe0] sm:$0xff]
    %v656 = vld [vmem:[#allocation11 + $0xe8] sm:$0xff]
    %v657 = vld [vmem:[#allocation11 + $0xf0] sm:$0xff]
    %v658 = vld [vmem:[#allocation11 + $0xf8] sm:$0xff]
    %v659 = vld [vmem:[#allocation11 + $0x100] sm:$0xff]
    %v660 = vld [vmem:[#allocation11 + $0x108] sm:$0xff]
    %v661 = vld [vmem:[#allocation11 + $0x110] sm:$0xff]
    %v662 = vld [vmem:[#allocation11 + $0x118] sm:$0xff]
    %v663 = vld [vmem:[#allocation11 + $0x120] sm:$0xff]
    %v664 = vld [vmem:[#allocation11 + $0x128] sm:$0xff]
    %v665 = vld [vmem:[#allocation11 + $0x130] sm:$0xff]
    %v666 = vld [vmem:[#allocation11 + $0x138] sm:$0xff]
    %v667 = vld [vmem:[#allocation11 + $0x140] sm:$0xff]
    %v668 = vld [vmem:[#allocation11 + $0x148] sm:$0xff]
    %v669 = vld [vmem:[#allocation11 + $0x150] sm:$0xff]
    %v670 = vld [vmem:[#allocation11 + $0x158] sm:$0xff]
    %v671 = vld [vmem:[#allocation11 + $0x160] sm:$0xff]
    %v672 = vld [vmem:[#allocation11 + $0x168] sm:$0xff]
    %v673 = vld [vmem:[#allocation11 + $0x170] sm:$0xff]
    %v674 = vld [vmem:[#allocation11 + $0x178] sm:$0xff]
    %v675 = vld [vmem:[#allocation11 + $0x180] sm:$0xff]
    %v676 = vld [vmem:[#allocation11 + $0x188] sm:$0xff]
    %v677 = vld [vmem:[#allocation11 + $0x190] sm:$0xff]
    %v678 = vld [vmem:[#allocation11 + $0x198] sm:$0xff]
    %v679 = vld [vmem:[#allocation11 + $0x1a0] sm:$0xff]
    %v680 = vld [vmem:[#allocation11 + $0x1a8] sm:$0xff]
    %v681 = vld [vmem:[#allocation11 + $0x1b0] sm:$0xff]
    %v682 = vld [vmem:[#allocation11 + $0x1b8] sm:$0xff]
    %v683 = vld [vmem:[#allocation11 + $0x1c0] sm:$0xff]
    %v684 = vld [vmem:[#allocation11 + $0x1c8] sm:$0xff]
    %v685 = vld [vmem:[#allocation11 + $0x1d0] sm:$0xff]
    %v686 = vld [vmem:[#allocation11 + $0x1d8] sm:$0xff]
    %v687 = vld [vmem:[#allocation11 + $0x1e0] sm:$0xff]
    %v688 = vld [vmem:[#allocation11 + $0x1e8] sm:$0xff]
    %v689 = vld [vmem:[#allocation11 + $0x1f0] sm:$0xff]
    %v690 = vld [vmem:[#allocation11 + $0x1f8] sm:$0xff]
    %v691 = vld [vmem:[#allocation11 + $0x200] sm:$0xff]
    %v692 = vld [vmem:[#allocation11 + $0x208] sm:$0xff]
    %v693 = vld [vmem:[#allocation11 + $0x210] sm:$0xff]
    %v694 = vld [vmem:[#allocation11 + $0x218] sm:$0xff]
    %v695 = vld [vmem:[#allocation11 + $0x220] sm:$0xff]
    %v696 = vld [vmem:[#allocation11 + $0x228] sm:$0xff]
    %v697 = vld [vmem:[#allocation11 + $0x230] sm:$0xff]
    %v698 = vld [vmem:[#allocation11 + $0x238] sm:$0xff]
    %v699 = vld [vmem:[#allocation11 + $0x240] sm:$0xff]
    %v700 = vld [vmem:[#allocation11 + $0x248] sm:$0xff]
    %v701 = vld [vmem:[#allocation11 + $0x250] sm:$0xff]
    %v702 = vld [vmem:[#allocation11 + $0x258] sm:$0xff]
    %v703 = vld [vmem:[#allocation11 + $0x260] sm:$0xff]
    %v704 = vld [vmem:[#allocation11 + $0x268] sm:$0xff]
    %v705 = vld [vmem:[#allocation11 + $0x270] sm:$0xff]
    %v706 = vld [vmem:[#allocation11 + $0x278] sm:$0xff]
    %v707 = vld [vmem:[#allocation11 + $0x280] sm:$0xff]
    %v708 = vld [vmem:[#allocation11 + $0x288] sm:$0xff]
    %v709 = vld [vmem:[#allocation11 + $0x290] sm:$0xff]
    %v710 = vld [vmem:[#allocation11 + $0x298] sm:$0xff]
    %v711 = vld [vmem:[#allocation11 + $0x2a0] sm:$0xff]
    %v712 = vld [vmem:[#allocation11 + $0x2a8] sm:$0xff]
    %v713 = vld [vmem:[#allocation11 + $0x2b0] sm:$0xff]
    %v714 = vld [vmem:[#allocation11 + $0x2b8] sm:$0xff]
    %v715 = vld [vmem:[#allocation11 + $0x2c0] sm:$0xff]
    %v716 = vld [vmem:[#allocation11 + $0x2c8] sm:$0xff]
    %v717 = vld [vmem:[#allocation11 + $0x2d0] sm:$0xff]
    %v718 = vld [vmem:[#allocation11 + $0x2d8] sm:$0xff]
    %v719 = vld [vmem:[#allocation11 + $0x2e0] sm:$0xff]
    %v720 = vld [vmem:[#allocation11 + $0x2e8] sm:$0xff]
    %v721 = vld [vmem:[#allocation11 + $0x2f0] sm:$0xff]
    %v722 = vld [vmem:[#allocation11 + $0x2f8] sm:$0xff]
    %v723 = vld [vmem:[#allocation11 + $0x300] sm:$0xff]
    %v724 = vld [vmem:[#allocation11 + $0x308] sm:$0xff]
    %v725 = vld [vmem:[#allocation11 + $0x310] sm:$0xff]
    %v726 = vld [vmem:[#allocation11 + $0x318] sm:$0xff]
    %v727 = vld [vmem:[#allocation11 + $0x320] sm:$0xff]
    %v728 = vld [vmem:[#allocation11 + $0x328] sm:$0xff]
    %v729 = vld [vmem:[#allocation11 + $0x330] sm:$0xff]
    %v730 = vld [vmem:[#allocation11 + $0x338] sm:$0xff]
    %v731 = vld [vmem:[#allocation11 + $0x340] sm:$0xff]
    %v732 = vld [vmem:[#allocation11 + $0x348] sm:$0xff]
    %v733 = vld [vmem:[#allocation11 + $0x350] sm:$0xff]
    %v734 = vld [vmem:[#allocation11 + $0x358] sm:$0xff]
    %v735 = vld [vmem:[#allocation11 + $0x360] sm:$0xff]
    %v736 = vld [vmem:[#allocation11 + $0x368] sm:$0xff]
    %v737 = vld [vmem:[#allocation11 + $0x370] sm:$0xff]
    %v738 = vld [vmem:[#allocation11 + $0x378] sm:$0xff]
    %v739 = vld [vmem:[#allocation11 + $0x380] sm:$0xff]
    %v740 = vld [vmem:[#allocation11 + $0x388] sm:$0xff]
    %v741 = vld [vmem:[#allocation11 + $0x390] sm:$0xff]
    %v742 = vld [vmem:[#allocation11 + $0x398] sm:$0xff]
    %v743 = vld [vmem:[#allocation11 + $0x3a0] sm:$0xff]
    %v744 = vld [vmem:[#allocation11 + $0x3a8] sm:$0xff]
    %v745 = vld [vmem:[#allocation11 + $0x3b0] sm:$0xff]
    %v746 = vld [vmem:[#allocation11 + $0x3b8] sm:$0xff]
    %v747 = vld [vmem:[#allocation11 + $0x3c0] sm:$0xff]
    %v748 = vld [vmem:[#allocation11 + $0x3c8] sm:$0xff]
    %v749 = vld [vmem:[#allocation11 + $0x3d0] sm:$0xff]
    %v750 = vld [vmem:[#allocation11 + $0x3d8] sm:$0xff]
    %v751 = vld [vmem:[#allocation11 + $0x3e0] sm:$0xff]
    %v752 = vld [vmem:[#allocation11 + $0x3e8] sm:$0xff]
    %v753 = vld [vmem:[#allocation11 + $0x3f0] sm:$0xff]
    %v754 = vld [vmem:[#allocation11 + $0x3f8] sm:$0xff]
    %v755 = vld [vmem:[#allocation11 + $0x400] sm:$0xff]
    %v756 = vld [vmem:[#allocation11 + $0x408] sm:$0xff]
    %v757 = vld [vmem:[#allocation11 + $0x410] sm:$0xff]
    %v758 = vld [vmem:[#allocation11 + $0x418] sm:$0xff]
    %v759 = vld [vmem:[#allocation11 + $0x420] sm:$0xff]
    %v760 = vld [vmem:[#allocation11 + $0x428] sm:$0xff]
    %v761 = vld [vmem:[#allocation11 + $0x430] sm:$0xff]
    %v762 = vld [vmem:[#allocation11 + $0x438] sm:$0xff]
    %v763 = vld [vmem:[#allocation11 + $0x440] sm:$0xff]
    %v764 = vld [vmem:[#allocation11 + $0x448] sm:$0xff]
    %v765 = vld [vmem:[#allocation11 + $0x450] sm:$0xff]
    %v766 = vld [vmem:[#allocation11 + $0x458] sm:$0xff]
    %v767 = vld [vmem:[#allocation11 + $0x460] sm:$0xff]
    %v768 = vld [vmem:[#allocation11 + $0x468] sm:$0xff]
    %v769 = vld [vmem:[#allocation11 + $0x470] sm:$0xff]
    %v770 = vld [vmem:[#allocation11 + $0x478] sm:$0xff]
    %v771 = vld [vmem:[#allocation11 + $0x480] sm:$0xff]
    %v772 = vld [vmem:[#allocation11 + $0x488] sm:$0xff]
    %v773 = vld [vmem:[#allocation11 + $0x490] sm:$0xff]
    %v774 = vld [vmem:[#allocation11 + $0x498] sm:$0xff]
    %v775 = vld [vmem:[#allocation11 + $0x4a0] sm:$0xff]
    %v776 = vld [vmem:[#allocation11 + $0x4a8] sm:$0xff]
    %v777 = vld [vmem:[#allocation11 + $0x4b0] sm:$0xff]
    %v778 = vld [vmem:[#allocation11 + $0x4b8] sm:$0xff]
    %v779 = vld [vmem:[#allocation11 + $0x4c0] sm:$0xff]
    %v780 = vld [vmem:[#allocation11 + $0x4c8] sm:$0xff]
    %v781 = vld [vmem:[#allocation11 + $0x4d0] sm:$0xff]
    %v782 = vld [vmem:[#allocation11 + $0x4d8] sm:$0xff]
    %v783 = vld [vmem:[#allocation11 + $0x4e0] sm:$0xff]
    %v784 = vld [vmem:[#allocation11 + $0x4e8] sm:$0xff]
    %v785 = vld [vmem:[#allocation11 + $0x4f0] sm:$0xff]
    %v786 = vld [vmem:[#allocation11 + $0x4f8] sm:$0xff]
    %v787 = vld [vmem:[#allocation11 + $0x500] sm:$0xff]
    %v788 = vld [vmem:[#allocation11 + $0x508] sm:$0xff]
    %v789 = vld [vmem:[#allocation11 + $0x510] sm:$0xff]
    %v790 = vld [vmem:[#allocation11 + $0x518] sm:$0xff]
    %v791 = vld [vmem:[#allocation11 + $0x520] sm:$0xff]
    %v792 = vld [vmem:[#allocation11 + $0x528] sm:$0xff]
    %v793 = vld [vmem:[#allocation11 + $0x530] sm:$0xff]
    %v794 = vld [vmem:[#allocation11 + $0x538] sm:$0xff]
    %v795 = vld [vmem:[#allocation11 + $0x540] sm:$0xff]
    %v796 = vld [vmem:[#allocation11 + $0x548] sm:$0xff]
    %v797 = vld [vmem:[#allocation11 + $0x550] sm:$0xff]
    %v798 = vld [vmem:[#allocation11 + $0x558] sm:$0xff]
    %v799 = vld [vmem:[#allocation11 + $0x560] sm:$0xff]
    %v800 = vld [vmem:[#allocation11 + $0x568] sm:$0xff]
    %v801 = vld [vmem:[#allocation11 + $0x570] sm:$0xff]
    %v802 = vld [vmem:[#allocation11 + $0x578] sm:$0xff]
    %v803 = vld [vmem:[#allocation11 + $0x580] sm:$0xff]
    %v804 = vld [vmem:[#allocation11 + $0x588] sm:$0xff]
    %v805 = vld [vmem:[#allocation11 + $0x590] sm:$0xff]
    %v806 = vld [vmem:[#allocation11 + $0x598] sm:$0xff]
    %v807 = vld [vmem:[#allocation11 + $0x5a0] sm:$0xff]
    %v808 = vld [vmem:[#allocation11 + $0x5a8] sm:$0xff]
    %v809 = vld [vmem:[#allocation11 + $0x5b0] sm:$0xff]
    %v810 = vld [vmem:[#allocation11 + $0x5b8] sm:$0xff]
    %v811 = vld [vmem:[#allocation11 + $0x5c0] sm:$0xff]
    %v812 = vld [vmem:[#allocation11 + $0x5c8] sm:$0xff]
    %v813 = vld [vmem:[#allocation11 + $0x5d0] sm:$0xff]
    %v814 = vld [vmem:[#allocation11 + $0x5d8] sm:$0xff]
    %v815 = vld [vmem:[#allocation11 + $0x5e0] sm:$0xff]
    %v816 = vld [vmem:[#allocation11 + $0x5e8] sm:$0xff]
    %v817 = vld [vmem:[#allocation11 + $0x5f0] sm:$0xff]
    %v818 = vld [vmem:[#allocation11 + $0x5f8] sm:$0xff]
    %v819 = vld [vmem:[#allocation11 + $0x600] sm:$0xff]
    %v820 = vld [vmem:[#allocation11 + $0x608] sm:$0xff]
    %v821 = vld [vmem:[#allocation11 + $0x610] sm:$0xff]
    %v822 = vld [vmem:[#allocation11 + $0x618] sm:$0xff]
    %v823 = vld [vmem:[#allocation11 + $0x620] sm:$0xff]
    %v824 = vld [vmem:[#allocation11 + $0x628] sm:$0xff]
    %v825 = vld [vmem:[#allocation11 + $0x630] sm:$0xff]
    %v826 = vld [vmem:[#allocation11 + $0x638] sm:$0xff]
    %v827 = vld [vmem:[#allocation11 + $0x640] sm:$0xff]
    %v828 = vld [vmem:[#allocation11 + $0x648] sm:$0xff]
    %v829 = vld [vmem:[#allocation11 + $0x650] sm:$0xff]
    %v830 = vld [vmem:[#allocation11 + $0x658] sm:$0xff]
    %v831 = vld [vmem:[#allocation11 + $0x660] sm:$0xff]
    %v832 = vld [vmem:[#allocation11 + $0x668] sm:$0xff]
    %v833 = vld [vmem:[#allocation11 + $0x670] sm:$0xff]
    %v834 = vld [vmem:[#allocation11 + $0x678] sm:$0xff]
    %v835 = vld [vmem:[#allocation11 + $0x680] sm:$0xff]
    %v836 = vld [vmem:[#allocation11 + $0x688] sm:$0xff]
    %v837 = vld [vmem:[#allocation11 + $0x690] sm:$0xff]
    %v838 = vld [vmem:[#allocation11 + $0x698] sm:$0xff]
    %v839 = vld [vmem:[#allocation11 + $0x6a0] sm:$0xff]
    %v840 = vld [vmem:[#allocation11 + $0x6a8] sm:$0xff]
    %v841 = vld [vmem:[#allocation11 + $0x6b0] sm:$0xff]
    %v842 = vld [vmem:[#allocation11 + $0x6b8] sm:$0xff]
    %v843 = vld [vmem:[#allocation11 + $0x6c0] sm:$0xff]
    %v844 = vld [vmem:[#allocation11 + $0x6c8] sm:$0xff]
    %v845 = vld [vmem:[#allocation11 + $0x6d0] sm:$0xff]
    %v846 = vld [vmem:[#allocation11 + $0x6d8] sm:$0xff]
    %v847 = vld [vmem:[#allocation11 + $0x6e0] sm:$0xff]
    %v848 = vld [vmem:[#allocation11 + $0x6e8] sm:$0xff]
    %v849 = vld [vmem:[#allocation11 + $0x6f0] sm:$0xff]
    %v850 = vld [vmem:[#allocation11 + $0x6f8] sm:$0xff]
    %v851 = vld [vmem:[#allocation11 + $0x700] sm:$0xff]
    %v852 = vld [vmem:[#allocation11 + $0x708] sm:$0xff]
    %v853 = vld [vmem:[#allocation11 + $0x710] sm:$0xff]
    %v854 = vld [vmem:[#allocation11 + $0x718] sm:$0xff]
    %v855 = vld [vmem:[#allocation11 + $0x720] sm:$0xff]
    %v856 = vld [vmem:[#allocation11 + $0x728] sm:$0xff]
    %v857 = vld [vmem:[#allocation11 + $0x730] sm:$0xff]
    %v858 = vld [vmem:[#allocation11 + $0x738] sm:$0xff]
    %v859 = vld [vmem:[#allocation11 + $0x740] sm:$0xff]
    %v860 = vld [vmem:[#allocation11 + $0x748] sm:$0xff]
    %v861 = vld [vmem:[#allocation11 + $0x750] sm:$0xff]
    %v862 = vld [vmem:[#allocation11 + $0x758] sm:$0xff]
    %v863 = vld [vmem:[#allocation11 + $0x760] sm:$0xff]
    %v864 = vld [vmem:[#allocation11 + $0x768] sm:$0xff]
    %v865 = vld [vmem:[#allocation11 + $0x770] sm:$0xff]
    %v866 = vld [vmem:[#allocation11 + $0x778] sm:$0xff]
    %v867 = vld [vmem:[#allocation11 + $0x780] sm:$0xff]
    %v868 = vld [vmem:[#allocation11 + $0x788] sm:$0xff]
    %v869 = vld [vmem:[#allocation11 + $0x790] sm:$0xff]
    %v870 = vld [vmem:[#allocation11 + $0x798] sm:$0xff]
    %v871 = vld [vmem:[#allocation11 + $0x7a0] sm:$0xff]
    %v872 = vld [vmem:[#allocation11 + $0x7a8] sm:$0xff]
    %v873 = vld [vmem:[#allocation11 + $0x7b0] sm:$0xff]
    %v874 = vld [vmem:[#allocation11 + $0x7b8] sm:$0xff]
    %v875 = vld [vmem:[#allocation11 + $0x7c0] sm:$0xff]
    %v876 = vld [vmem:[#allocation11 + $0x7c8] sm:$0xff]
    %v877 = vld [vmem:[#allocation11 + $0x7d0] sm:$0xff]
    %v878 = vld [vmem:[#allocation11 + $0x7d8] sm:$0xff]
    %v879 = vld [vmem:[#allocation11 + $0x7e0] sm:$0xff]
    %v880 = vld [vmem:[#allocation11 + $0x7e8] sm:$0xff]
    %v881 = vld [vmem:[#allocation11 + $0x7f0] sm:$0xff]
    %v882 = vld [vmem:[#allocation11 + $0x7f8] sm:$0xff]
    %v883 = vld [vmem:[#allocation11 + $0x800] sm:$0xff]
    %v884 = vld [vmem:[#allocation11 + $0x808] sm:$0xff]
    %v885 = vld [vmem:[#allocation11 + $0x810] sm:$0xff]
    %v886 = vld [vmem:[#allocation11 + $0x818] sm:$0xff]
    %v887 = vld [vmem:[#allocation11 + $0x820] sm:$0xff]
    %v888 = vld [vmem:[#allocation11 + $0x828] sm:$0xff]
    %v889 = vld [vmem:[#allocation11 + $0x830] sm:$0xff]
    %v890 = vld [vmem:[#allocation11 + $0x838] sm:$0xff]
    %v891 = vld [vmem:[#allocation11 + $0x840] sm:$0xff]
    %v892 = vld [vmem:[#allocation11 + $0x848] sm:$0xff]
    %v893 = vld [vmem:[#allocation11 + $0x850] sm:$0xff]
    %v894 = vld [vmem:[#allocation11 + $0x858] sm:$0xff]
    %v895 = vld [vmem:[#allocation11 + $0x860] sm:$0xff]
    %v896 = vld [vmem:[#allocation11 + $0x868] sm:$0xff]
    %v897 = vld [vmem:[#allocation11 + $0x870] sm:$0xff]
    %v898 = vld [vmem:[#allocation11 + $0x878] sm:$0xff]
    %v899 = vld [vmem:[#allocation12] sm:$0xff]
    %900 = vst [vmem:[#allocation2] sm:$0xff] 0.0
    %901 = vst [vmem:[#allocation2 + $0x8] sm:$0xff] 0.0
    %vm902 = vcmask 130048
    %903 = vst.msk [vmem:[#allocation2 + $0x10] sm:$0xff] %vm902, 0.0
    %vm904 = vcmask 7168
    %905 = vst.msk [vmem:[#allocation2 + $0x10] sm:$0xff] %vm904, %v626
    %907 = vrot.lane.b32.xlu0 %v626, 121
    %v908 = vpop.permute.xlu0 %907
    %vm910 = vcmask 15368
    %911 = vst.msk [vmem:[#allocation2 + $0x10] sm:$0xff] %vm910, %v908
    %v912 = vld [vmem:[#allocation2] sm:$0xff]
    %v913 = vld [vmem:[#allocation2 + $0x8] sm:$0xff]
    %v914 = vld [vmem:[#allocation2 + $0x10] sm:$0xff]
    %v916 = vlaneseq
    %v917 = vshrl.u32 %v916, 7
    %v918 = vsub.s32 0, %v917
    %v919 = vrot.slane %v899, %v918
    %v920 = vlaneseq
    %v921 = vshrl.u32 %v920, 7
    %v922 = vsub.s32 1, %v921
    %v923 = vrot.slane %v899, %v922
    %v924 = vlaneseq
    %v925 = vshrl.u32 %v924, 7
    %v926 = vsub.s32 2, %v925
    %v927 = vrot.slane %v899, %v926
    %v928 = vlaneseq
    %v929 = vshrl.u32 %v928, 7
    %v930 = vsub.s32 3, %v929
    %v931 = vrot.slane %v899, %v930
    %v932 = vlaneseq
    %v933 = vshrl.u32 %v932, 7
    %v934 = vsub.s32 4, %v933
    %v935 = vrot.slane %v899, %v934
    %v936 = vlaneseq
    %v937 = vshrl.u32 %v936, 7
    %v938 = vsub.s32 5, %v937
    %v939 = vrot.slane %v899, %v938
    %v940 = vlaneseq
    %v941 = vshrl.u32 %v940, 7
    %v942 = vsub.s32 6, %v941
    %v943 = vrot.slane %v899, %v942
    %v944 = vlaneseq
    %v945 = vshrl.u32 %v944, 7
    %v946 = vsub.s32 7, %v945
    %v947 = vrot.slane %v899, %v946
    %v957 = vsel %vm902, %v914, 0
    %959 = vmatprep.subr.mxu0 %v628
    %960 = vmatpush1.msra.mxu0 %v627
    %961 = vmatprep.subr.mxu0 %v636
    %962 = vmatpush1.msra.mxu0 %v635
    %963 = vmatprep.subr.mxu0 %v644
    %964 = vmatpush1.msra.mxu0 %v643
    %965 = vmatprep.subr.mxu0 %v652
    %966 = vmatpush1.msra.mxu0 %v651
    %967 = vmatprep.subr.mxu0 %v660
    %968 = vmatpush1.msra.mxu0 %v659
    %969 = vmatprep.subr.mxu0 %v668
    %970 = vmatpush1.msra.mxu0 %v667
    %971 = vmatprep.subr.mxu0 %v676
    %972 = vmatpush1.msra.mxu0 %v675
    %973 = vmatprep.subr.mxu0 %v684
    %974 = vmatpush1.msra.mxu0 %v683
    %975 = vmatprep.subr.mxu0 %v692
    %976 = vmatpush1.msra.mxu0 %v691
    %977 = vmatprep.subr.mxu0 %v700
    %978 = vmatpush1.msra.mxu0 %v699
    %979 = vmatprep.subr.mxu0 %v708
    %980 = vmatpush1.msra.mxu0 %v707
    %981 = vmatprep.subr.mxu0 %v716
    %982 = vmatpush1.msra.mxu0 %v715
    %983 = vmatprep.subr.mxu0 %v724
    %984 = vmatpush1.msra.mxu0 %v723
    %985 = vmatprep.subr.mxu0 %v732
    %986 = vmatpush1.msra.mxu0 %v731
    %987 = vmatprep.subr.mxu0 %v740
    %988 = vmatpush1.msra.mxu0 %v739
    %989 = vmatprep.subr.mxu0 %v748
    %990 = vmatpush1.msra.mxu0 %v747
    %991 = vmatprep.subr.mxu0 %v756
    %992 = vmatpush1.msra.mxu0 %v755
    %993 = vmatprep.subr.mxu0 %v764
    %994 = vmatpush1.msra.mxu0 %v763
    %995 = vmatprep.subr.mxu0 %v772
    %996 = vmatpush1.msra.mxu0 %v771
    %997 = vmatprep.subr.mxu0 %v780
    %998 = vmatpush1.msra.mxu0 %v779
    %999 = vmatprep.subr.mxu0 %v788
    %1000 = vmatpush1.msra.mxu0 %v787
    %1001 = vmatprep.subr.mxu0 %v796
    %1002 = vmatpush1.msra.mxu0 %v795
    %1003 = vmatprep.subr.mxu0 %v804
    %1004 = vmatpush1.msra.mxu0 %v803
    %1005 = vmatprep.subr.mxu0 %v812
    %1006 = vmatpush1.msra.mxu0 %v811
    %1007 = vmatprep.subr.mxu0 %v820
    %1008 = vmatpush1.msra.mxu0 %v819
    %1009 = vmatprep.subr.mxu0 %v828
    %1010 = vmatpush1.msra.mxu0 %v827
    %1011 = vmatprep.subr.mxu0 %v836
    %1012 = vmatpush1.msra.mxu0 %v835
    %1013 = vmatprep.subr.mxu0 %v844
    %1014 = vmatpush1.msra.mxu0 %v843
    %1015 = vmatprep.subr.mxu0 %v852
    %1016 = vmatpush1.msra.mxu0 %v851
    %1017 = vmatprep.subr.mxu0 %v860
    %1018 = vmatpush1.msra.mxu0 %v859
    %1019 = vmatprep.subr.mxu0 %v868
    %1020 = vmatpush1.msra.mxu0 %v867
    %1021 = vmatprep.subr.mxu0 %v876
    %1022 = vmatpush1.msra.mxu0 %v875
    %1023 = vmatprep.mubr.f32.mxu0 %v913
    %1024 = vmatmul.mubr.f32.gmra.mrb[0].mxu0 %v912
    %v1025 = vpop.f32.mrb[0].mxu0
    %v1026 = vadd.f32 %v919, %v1025
    %v1027 = vpop.f32.mrb[0].mxu0
    %v1028 = vadd.f32 %v923, %v1027
    %1029 = vdwg.mxu0
    %1030 = vmatprep.subr.mxu0 %v884
    %1031 = vmatpush1.msra.mxu0 %v883
    %1032 = vmatprep.subr.mxu0 %v892
    %1033 = vmatpush1.msra.mxu0 %v891
    %1034 = vmatprep.subr.mxu0 0.0
    %1035 = vmatpush1.msra.mxu0 0.0
    %1036 = vmatprep.subr.mxu0 0.0
    %1037 = vmatpush1.msra.mxu0 0.0
    %1038 = vmatprep.subr.mxu0 0.0
    %1039 = vmatpush1.msra.mxu0 0.0
    %1040 = vmatprep.subr.mxu0 0.0
    %1041 = vmatpush1.msra.mxu0 0.0
    %1042 = vmatprep.subr.mxu0 0.0
    %1043 = vmatpush1.msra.mxu0 0.0
    %1044 = vmatprep.subr.mxu0 0.0
    %1045 = vmatpush1.msra.mxu0 0.0
    %1046 = vmatprep.subr.mxu0 0.0
    %1047 = vmatpush1.msra.mxu0 0.0
    %1048 = vmatprep.subr.mxu0 0.0
    %1049 = vmatpush1.msra.mxu0 0.0
    %1050 = vmatprep.subr.mxu0 0.0
    %1051 = vmatpush1.msra.mxu0 0.0
    %1052 = vmatprep.subr.mxu0 0.0
    %1053 = vmatpush1.msra.mxu0 0.0
    %1054 = vmatprep.subr.mxu0 0.0
    %1055 = vmatpush1.msra.mxu0 0.0
    %1056 = vmatprep.subr.mxu0 0.0
    %1057 = vmatpush1.msra.mxu0 0.0
    %1058 = vmatprep.subr.mxu0 0.0
    %1059 = vmatpush1.msra.mxu0 0.0
    %1060 = vmatprep.subr.mxu0 0.0
    %1061 = vmatpush1.msra.mxu0 0.0
    %1062 = vmatprep.subr.mxu0 0.0
    %1063 = vmatpush1.msra.mxu0 0.0
    %1064 = vmatprep.subr.mxu0 0.0
    %1065 = vmatpush1.msra.mxu0 0.0
    %1066 = vmatprep.subr.mxu0 0.0
    %1067 = vmatpush1.msra.mxu0 0.0
    %1068 = vmatprep.subr.mxu0 0.0
    %1069 = vmatpush1.msra.mxu0 0.0
    %1070 = vmatprep.subr.mxu0 0.0
    %1071 = vmatpush1.msra.mxu0 0.0
    %1072 = vmatprep.subr.mxu0 0.0
    %1073 = vmatpush1.msra.mxu0 0.0
    %1074 = vmatprep.subr.mxu0 0.0
    %1075 = vmatpush1.msra.mxu0 0.0
    %1076 = vmatprep.subr.mxu0 0.0
    %1077 = vmatpush1.msra.mxu0 0.0
    %1078 = vmatprep.subr.mxu0 0.0
    %1079 = vmatpush1.msra.mxu0 0.0
    %1080 = vmatprep.subr.mxu0 0.0
    %1081 = vmatpush1.msra.mxu0 0.0
    %1082 = vmatprep.subr.mxu0 0.0
    %1083 = vmatpush1.msra.mxu0 0.0
    %1084 = vmatprep.subr.mxu0 0.0
    %1085 = vmatpush1.msra.mxu0 0.0
    %1086 = vmatprep.subr.mxu0 0.0
    %1087 = vmatpush1.msra.mxu0 0.0
    %1088 = vmatprep.subr.mxu0 0.0
    %1089 = vmatpush1.msra.mxu0 0.0
    %1090 = vmatprep.subr.mxu0 0.0
    %1091 = vmatpush1.msra.mxu0 0.0
    %1092 = vmatprep.subr.mxu0 0.0
    %1093 = vmatpush1.msra.mxu0 0.0
    %1094 = vmatprep.mubr.f32.mxu0 0.0
    %1095 = vmatmul.mubr.f32.gmra.mrb[0].mxu0 %v957
    %v1096 = vpop.f32.mrb[0].mxu0
    %v1097 = vadd.f32 %v1026, %v1096
    %v1098 = vpop.f32.mrb[0].mxu0
    %v1099 = vadd.f32 %v1028, %v1098
    %1100 = vdwg.mxu0
    %1101 = vmatprep.subr.mxu0 %v630
    %1102 = vmatpush1.msra.mxu0 %v629
    %1103 = vmatprep.subr.mxu0 %v638
    %1104 = vmatpush1.msra.mxu0 %v637
    %1105 = vmatprep.subr.mxu0 %v646
    %1106 = vmatpush1.msra.mxu0 %v645
    %1107 = vmatprep.subr.mxu0 %v654
    %1108 = vmatpush1.msra.mxu0 %v653
    %1109 = vmatprep.subr.mxu0 %v662
    %1110 = vmatpush1.msra.mxu0 %v661
    %1111 = vmatprep.subr.mxu0 %v670
    %1112 = vmatpush1.msra.mxu0 %v669
    %1113 = vmatprep.subr.mxu0 %v678
    %1114 = vmatpush1.msra.mxu0 %v677
    %1115 = vmatprep.subr.mxu0 %v686
    %1116 = vmatpush1.msra.mxu0 %v685
    %1117 = vmatprep.subr.mxu0 %v694
    %1118 = vmatpush1.msra.mxu0 %v693
    %1119 = vmatprep.subr.mxu0 %v702
    %1120 = vmatpush1.msra.mxu0 %v701
    %1121 = vmatprep.subr.mxu0 %v710
    %1122 = vmatpush1.msra.mxu0 %v709
    %1123 = vmatprep.subr.mxu0 %v718
    %1124 = vmatpush1.msra.mxu0 %v717
    %1125 = vmatprep.subr.mxu0 %v726
    %1126 = vmatpush1.msra.mxu0 %v725
    %1127 = vmatprep.subr.mxu0 %v734
    %1128 = vmatpush1.msra.mxu0 %v733
    %1129 = vmatprep.subr.mxu0 %v742
    %1130 = vmatpush1.msra.mxu0 %v741
    %1131 = vmatprep.subr.mxu0 %v750
    %1132 = vmatpush1.msra.mxu0 %v749
    %1133 = vmatprep.subr.mxu0 %v758
    %1134 = vmatpush1.msra.mxu0 %v757
    %1135 = vmatprep.subr.mxu0 %v766
    %1136 = vmatpush1.msra.mxu0 %v765
    %1137 = vmatprep.subr.mxu0 %v774
    %1138 = vmatpush1.msra.mxu0 %v773
    %1139 = vmatprep.subr.mxu0 %v782
    %1140 = vmatpush1.msra.mxu0 %v781
    %1141 = vmatprep.subr.mxu0 %v790
    %1142 = vmatpush1.msra.mxu0 %v789
    %1143 = vmatprep.subr.mxu0 %v798
    %1144 = vmatpush1.msra.mxu0 %v797
    %1145 = vmatprep.subr.mxu0 %v806
    %1146 = vmatpush1.msra.mxu0 %v805
    %1147 = vmatprep.subr.mxu0 %v814
    %1148 = vmatpush1.msra.mxu0 %v813
    %1149 = vmatprep.subr.mxu0 %v822
    %1150 = vmatpush1.msra.mxu0 %v821
    %1151 = vmatprep.subr.mxu0 %v830
    %1152 = vmatpush1.msra.mxu0 %v829
    %1153 = vmatprep.subr.mxu0 %v838
    %1154 = vmatpush1.msra.mxu0 %v837
    %1155 = vmatprep.subr.mxu0 %v846
    %1156 = vmatpush1.msra.mxu0 %v845
    %1157 = vmatprep.subr.mxu0 %v854
    %1158 = vmatpush1.msra.mxu0 %v853
    %1159 = vmatprep.subr.mxu0 %v862
    %1160 = vmatpush1.msra.mxu0 %v861
    %1161 = vmatprep.subr.mxu0 %v870
    %1162 = vmatpush1.msra.mxu0 %v869
    %1163 = vmatprep.subr.mxu0 %v878
    %1164 = vmatpush1.msra.mxu0 %v877
    %1165 = vmatprep.mubr.f32.mxu0 %v913
    %1166 = vmatmul.mubr.f32.gmra.mrb[0].mxu0 %v912
    %v1167 = vpop.f32.mrb[0].mxu0
    %v1168 = vadd.f32 %v927, %v1167
    %v1169 = vpop.f32.mrb[0].mxu0
    %v1170 = vadd.f32 %v931, %v1169
    %1171 = vdwg.mxu0
    %1172 = vmatprep.subr.mxu0 %v886
    %1173 = vmatpush1.msra.mxu0 %v885
    %1174 = vmatprep.subr.mxu0 %v894
    %1175 = vmatpush1.msra.mxu0 %v893
    %1176 = vmatprep.subr.mxu0 0.0
    %1177 = vmatpush1.msra.mxu0 0.0
    %1178 = vmatprep.subr.mxu0 0.0
    %1179 = vmatpush1.msra.mxu0 0.0
    %1180 = vmatprep.subr.mxu0 0.0
    %1181 = vmatpush1.msra.mxu0 0.0
    %1182 = vmatprep.subr.mxu0 0.0
    %1183 = vmatpush1.msra.mxu0 0.0
    %1184 = vmatprep.subr.mxu0 0.0
    %1185 = vmatpush1.msra.mxu0 0.0
    %1186 = vmatprep.subr.mxu0 0.0
    %1187 = vmatpush1.msra.mxu0 0.0
    %1188 = vmatprep.subr.mxu0 0.0
    %1189 = vmatpush1.msra.mxu0 0.0
    %1190 = vmatprep.subr.mxu0 0.0
    %1191 = vmatpush1.msra.mxu0 0.0
    %1192 = vmatprep.subr.mxu0 0.0
    %1193 = vmatpush1.msra.mxu0 0.0
    %1194 = vmatprep.subr.mxu0 0.0
    %1195 = vmatpush1.msra.mxu0 0.0
    %1196 = vmatprep.subr.mxu0 0.0
    %1197 = vmatpush1.msra.mxu0 0.0
    %1198 = vmatprep.subr.mxu0 0.0
    %1199 = vmatpush1.msra.mxu0 0.0
    %1200 = vmatprep.subr.mxu0 0.0
    %1201 = vmatpush1.msra.mxu0 0.0
    %1202 = vmatprep.subr.mxu0 0.0
    %1203 = vmatpush1.msra.mxu0 0.0
    %1204 = vmatprep.subr.mxu0 0.0
    %1205 = vmatpush1.msra.mxu0 0.0
    %1206 = vmatprep.subr.mxu0 0.0
    %1207 = vmatpush1.msra.mxu0 0.0
    %1208 = vmatprep.subr.mxu0 0.0
    %1209 = vmatpush1.msra.mxu0 0.0
    %1210 = vmatprep.subr.mxu0 0.0
    %1211 = vmatpush1.msra.mxu0 0.0
    %1212 = vmatprep.subr.mxu0 0.0
    %1213 = vmatpush1.msra.mxu0 0.0
    %1214 = vmatprep.subr.mxu0 0.0
    %1215 = vmatpush1.msra.mxu0 0.0
    %1216 = vmatprep.subr.mxu0 0.0
    %1217 = vmatpush1.msra.mxu0 0.0
    %1218 = vmatprep.subr.mxu0 0.0
    %1219 = vmatpush1.msra.mxu0 0.0
    %1220 = vmatprep.subr.mxu0 0.0
    %1221 = vmatpush1.msra.mxu0 0.0
    %1222 = vmatprep.subr.mxu0 0.0
    %1223 = vmatpush1.msra.mxu0 0.0
    %1224 = vmatprep.subr.mxu0 0.0
    %1225 = vmatpush1.msra.mxu0 0.0
    %1226 = vmatprep.subr.mxu0 0.0
    %1227 = vmatpush1.msra.mxu0 0.0
    %1228 = vmatprep.subr.mxu0 0.0
    %1229 = vmatpush1.msra.mxu0 0.0
    %1230 = vmatprep.subr.mxu0 0.0
    %1231 = vmatpush1.msra.mxu0 0.0
    %1232 = vmatprep.subr.mxu0 0.0
    %1233 = vmatpush1.msra.mxu0 0.0
    %1234 = vmatprep.subr.mxu0 0.0
    %1235 = vmatpush1.msra.mxu0 0.0
    %1236 = vmatprep.mubr.f32.mxu0 0.0
    %1237 = vmatmul.mubr.f32.gmra.mrb[0].mxu0 %v957
    %v1238 = vpop.f32.mrb[0].mxu0
    %v1239 = vadd.f32 %v1168, %v1238
    %v1240 = vpop.f32.mrb[0].mxu0
    %v1241 = vadd.f32 %v1170, %v1240
    %1242 = vdwg.mxu0
    %1243 = vmatprep.subr.mxu0 %v632
    %1244 = vmatpush1.msra.mxu0 %v631
    %1245 = vmatprep.subr.mxu0 %v640
    %1246 = vmatpush1.msra.mxu0 %v639
    %1247 = vmatprep.subr.mxu0 %v648
    %1248 = vmatpush1.msra.mxu0 %v647
    %1249 = vmatprep.subr.mxu0 %v656
    %1250 = vmatpush1.msra.mxu0 %v655
    %1251 = vmatprep.subr.mxu0 %v664
    %1252 = vmatpush1.msra.mxu0 %v663
    %1253 = vmatprep.subr.mxu0 %v672
    %1254 = vmatpush1.msra.mxu0 %v671
    %1255 = vmatprep.subr.mxu0 %v680
    %1256 = vmatpush1.msra.mxu0 %v679
    %1257 = vmatprep.subr.mxu0 %v688
    %1258 = vmatpush1.msra.mxu0 %v687
    %1259 = vmatprep.subr.mxu0 %v696
    %1260 = vmatpush1.msra.mxu0 %v695
    %1261 = vmatprep.subr.mxu0 %v704
    %1262 = vmatpush1.msra.mxu0 %v703
    %1263 = vmatprep.subr.mxu0 %v712
    %1264 = vmatpush1.msra.mxu0 %v711
    %1265 = vmatprep.subr.mxu0 %v720
    %1266 = vmatpush1.msra.mxu0 %v719
    %1267 = vmatprep.subr.mxu0 %v728
    %1268 = vmatpush1.msra.mxu0 %v727
    %1269 = vmatprep.subr.mxu0 %v736
    %1270 = vmatpush1.msra.mxu0 %v735
    %1271 = vmatprep.subr.mxu0 %v744
    %1272 = vmatpush1.msra.mxu0 %v743
    %1273 = vmatprep.subr.mxu0 %v752
    %1274 = vmatpush1.msra.mxu0 %v751
    %1275 = vmatprep.subr.mxu0 %v760
    %1276 = vmatpush1.msra.mxu0 %v759
    %1277 = vmatprep.subr.mxu0 %v768
    %1278 = vmatpush1.msra.mxu0 %v767
    %1279 = vmatprep.subr.mxu0 %v776
    %1280 = vmatpush1.msra.mxu0 %v775
    %1281 = vmatprep.subr.mxu0 %v784
    %1282 = vmatpush1.msra.mxu0 %v783
    %1283 = vmatprep.subr.mxu0 %v792
    %1284 = vmatpush1.msra.mxu0 %v791
    %1285 = vmatprep.subr.mxu0 %v800
    %1286 = vmatpush1.msra.mxu0 %v799
    %1287 = vmatprep.subr.mxu0 %v808
    %1288 = vmatpush1.msra.mxu0 %v807
    %1289 = vmatprep.subr.mxu0 %v816
    %1290 = vmatpush1.msra.mxu0 %v815
    %1291 = vmatprep.subr.mxu0 %v824
    %1292 = vmatpush1.msra.mxu0 %v823
    %1293 = vmatprep.subr.mxu0 %v832
    %1294 = vmatpush1.msra.mxu0 %v831
    %1295 = vmatprep.subr.mxu0 %v840
    %1296 = vmatpush1.msra.mxu0 %v839
    %1297 = vmatprep.subr.mxu0 %v848
    %1298 = vmatpush1.msra.mxu0 %v847
    %1299 = vmatprep.subr.mxu0 %v856
    %1300 = vmatpush1.msra.mxu0 %v855
    %1301 = vmatprep.subr.mxu0 %v864
    %1302 = vmatpush1.msra.mxu0 %v863
    %1303 = vmatprep.subr.mxu0 %v872
    %1304 = vmatpush1.msra.mxu0 %v871
    %1305 = vmatprep.subr.mxu0 %v880
    %1306 = vmatpush1.msra.mxu0 %v879
    %1307 = vmatprep.mubr.f32.mxu0 %v913
    %1308 = vmatmul.mubr.f32.gmra.mrb[0].mxu0 %v912
    %v1309 = vpop.f32.mrb[0].mxu0
    %v1310 = vadd.f32 %v935, %v1309
    %v1311 = vpop.f32.mrb[0].mxu0
    %v1312 = vadd.f32 %v939, %v1311
    %1313 = vdwg.mxu0
    %1314 = vmatprep.subr.mxu0 %v888
    %1315 = vmatpush1.msra.mxu0 %v887
    %1316 = vmatprep.subr.mxu0 %v896
    %1317 = vmatpush1.msra.mxu0 %v895
    %1318 = vmatprep.subr.mxu0 0.0
    %1319 = vmatpush1.msra.mxu0 0.0
    %1320 = vmatprep.subr.mxu0 0.0
    %1321 = vmatpush1.msra.mxu0 0.0
    %1322 = vmatprep.subr.mxu0 0.0
    %1323 = vmatpush1.msra.mxu0 0.0
    %1324 = vmatprep.subr.mxu0 0.0
    %1325 = vmatpush1.msra.mxu0 0.0
    %1326 = vmatprep.subr.mxu0 0.0
    %1327 = vmatpush1.msra.mxu0 0.0
    %1328 = vmatprep.subr.mxu0 0.0
    %1329 = vmatpush1.msra.mxu0 0.0
    %1330 = vmatprep.subr.mxu0 0.0
    %1331 = vmatpush1.msra.mxu0 0.0
    %1332 = vmatprep.subr.mxu0 0.0
    %1333 = vmatpush1.msra.mxu0 0.0
    %1334 = vmatprep.subr.mxu0 0.0
    %1335 = vmatpush1.msra.mxu0 0.0
    %1336 = vmatprep.subr.mxu0 0.0
    %1337 = vmatpush1.msra.mxu0 0.0
    %1338 = vmatprep.subr.mxu0 0.0
    %1339 = vmatpush1.msra.mxu0 0.0
    %1340 = vmatprep.subr.mxu0 0.0
    %1341 = vmatpush1.msra.mxu0 0.0
    %1342 = vmatprep.subr.mxu0 0.0
    %1343 = vmatpush1.msra.mxu0 0.0
    %1344 = vmatprep.subr.mxu0 0.0
    %1345 = vmatpush1.msra.mxu0 0.0
    %1346 = vmatprep.subr.mxu0 0.0
    %1347 = vmatpush1.msra.mxu0 0.0
    %1348 = vmatprep.subr.mxu0 0.0
    %1349 = vmatpush1.msra.mxu0 0.0
    %1350 = vmatprep.subr.mxu0 0.0
    %1351 = vmatpush1.msra.mxu0 0.0
    %1352 = vmatprep.subr.mxu0 0.0
    %1353 = vmatpush1.msra.mxu0 0.0
    %1354 = vmatprep.subr.mxu0 0.0
    %1355 = vmatpush1.msra.mxu0 0.0
    %1356 = vmatprep.subr.mxu0 0.0
    %1357 = vmatpush1.msra.mxu0 0.0
    %1358 = vmatprep.subr.mxu0 0.0
    %1359 = vmatpush1.msra.mxu0 0.0
    %1360 = vmatprep.subr.mxu0 0.0
    %1361 = vmatpush1.msra.mxu0 0.0
    %1362 = vmatprep.subr.mxu0 0.0
    %1363 = vmatpush1.msra.mxu0 0.0
    %1364 = vmatprep.subr.mxu0 0.0
    %1365 = vmatpush1.msra.mxu0 0.0
    %1366 = vmatprep.subr.mxu0 0.0
    %1367 = vmatpush1.msra.mxu0 0.0
    %1368 = vmatprep.subr.mxu0 0.0
    %1369 = vmatpush1.msra.mxu0 0.0
    %1370 = vmatprep.subr.mxu0 0.0
    %1371 = vmatpush1.msra.mxu0 0.0
    %1372 = vmatprep.subr.mxu0 0.0
    %1373 = vmatpush1.msra.mxu0 0.0
    %1374 = vmatprep.subr.mxu0 0.0
    %1375 = vmatpush1.msra.mxu0 0.0
    %1376 = vmatprep.subr.mxu0 0.0
    %1377 = vmatpush1.msra.mxu0 0.0
    %1378 = vmatprep.mubr.f32.mxu0 0.0
    %1379 = vmatmul.mubr.f32.gmra.mrb[0].mxu0 %v957
    %v1380 = vpop.f32.mrb[0].mxu0
    %v1381 = vadd.f32 %v1310, %v1380
    %v1382 = vpop.f32.mrb[0].mxu0
    %v1383 = vadd.f32 %v1312, %v1382
    %1384 = vdwg.mxu0
    %1385 = vmatprep.subr.mxu0 %v634
    %1386 = vmatpush1.msra.mxu0 %v633
    %1387 = vmatprep.subr.mxu0 %v642
    %1388 = vmatpush1.msra.mxu0 %v641
    %1389 = vmatprep.subr.mxu0 %v650
    %1390 = vmatpush1.msra.mxu0 %v649
    %1391 = vmatprep.subr.mxu0 %v658
    %1392 = vmatpush1.msra.mxu0 %v657
    %1393 = vmatprep.subr.mxu0 %v666
    %1394 = vmatpush1.msra.mxu0 %v665
    %1395 = vmatprep.subr.mxu0 %v674
    %1396 = vmatpush1.msra.mxu0 %v673
    %1397 = vmatprep.subr.mxu0 %v682
    %1398 = vmatpush1.msra.mxu0 %v681
    %1399 = vmatprep.subr.mxu0 %v690
    %1400 = vmatpush1.msra.mxu0 %v689
    %1401 = vmatprep.subr.mxu0 %v698
    %1402 = vmatpush1.msra.mxu0 %v697
    %1403 = vmatprep.subr.mxu0 %v706
    %1404 = vmatpush1.msra.mxu0 %v705
    %1405 = vmatprep.subr.mxu0 %v714
    %1406 = vmatpush1.msra.mxu0 %v713
    %1407 = vmatprep.subr.mxu0 %v722
    %1408 = vmatpush1.msra.mxu0 %v721
    %1409 = vmatprep.subr.mxu0 %v730
    %1410 = vmatpush1.msra.mxu0 %v729
    %1411 = vmatprep.subr.mxu0 %v738
    %1412 = vmatpush1.msra.mxu0 %v737
    %1413 = vmatprep.subr.mxu0 %v746
    %1414 = vmatpush1.msra.mxu0 %v745
    %1415 = vmatprep.subr.mxu0 %v754
    %1416 = vmatpush1.msra.mxu0 %v753
    %1417 = vmatprep.subr.mxu0 %v762
    %1418 = vmatpush1.msra.mxu0 %v761
    %1419 = vmatprep.subr.mxu0 %v770
    %1420 = vmatpush1.msra.mxu0 %v769
    %1421 = vmatprep.subr.mxu0 %v778
    %1422 = vmatpush1.msra.mxu0 %v777
    %1423 = vmatprep.subr.mxu0 %v786
    %1424 = vmatpush1.msra.mxu0 %v785
    %1425 = vmatprep.subr.mxu0 %v794
    %1426 = vmatpush1.msra.mxu0 %v793
    %1427 = vmatprep.subr.mxu0 %v802
    %1428 = vmatpush1.msra.mxu0 %v801
    %1429 = vmatprep.subr.mxu0 %v810
    %1430 = vmatpush1.msra.mxu0 %v809
    %1431 = vmatprep.subr.mxu0 %v818
    %1432 = vmatpush1.msra.mxu0 %v817
    %1433 = vmatprep.subr.mxu0 %v826
    %1434 = vmatpush1.msra.mxu0 %v825
    %1435 = vmatprep.subr.mxu0 %v834
    %1436 = vmatpush1.msra.mxu0 %v833
    %1437 = vmatprep.subr.mxu0 %v842
    %1438 = vmatpush1.msra.mxu0 %v841
    %1439 = vmatprep.subr.mxu0 %v850
    %1440 = vmatpush1.msra.mxu0 %v849
    %1441 = vmatprep.subr.mxu0 %v858
    %1442 = vmatpush1.msra.mxu0 %v857
    %1443 = vmatprep.subr.mxu0 %v866
    %1444 = vmatpush1.msra.mxu0 %v865
    %1445 = vmatprep.subr.mxu0 %v874
    %1446 = vmatpush1.msra.mxu0 %v873
    %1447 = vmatprep.subr.mxu0 %v882
    %1448 = vmatpush1.msra.mxu0 %v881
    %1449 = vmatprep.mubr.f32.mxu0 %v913
    %1450 = vmatmul.mubr.f32.gmra.mrb[0].mxu0 %v912
    %v1451 = vpop.f32.mrb[0].mxu0
    %v1452 = vadd.f32 %v943, %v1451
    %v1453 = vpop.f32.mrb[0].mxu0
    %v1454 = vadd.f32 %v947, %v1453
    %1455 = vdwg.mxu0
    %1456 = vmatprep.subr.mxu0 %v890
    %1457 = vmatpush1.msra.mxu0 %v889
    %1458 = vmatprep.subr.mxu0 %v898
    %1459 = vmatpush1.msra.mxu0 %v897
    %1460 = vmatprep.subr.mxu0 0.0
    %1461 = vmatpush1.msra.mxu0 0.0
    %1462 = vmatprep.subr.mxu0 0.0
    %1463 = vmatpush1.msra.mxu0 0.0
    %1464 = vmatprep.subr.mxu0 0.0
    %1465 = vmatpush1.msra.mxu0 0.0
    %1466 = vmatprep.subr.mxu0 0.0
    %1467 = vmatpush1.msra.mxu0 0.0
    %1468 = vmatprep.subr.mxu0 0.0
    %1469 = vmatpush1.msra.mxu0 0.0
    %1470 = vmatprep.subr.mxu0 0.0
    %1471 = vmatpush1.msra.mxu0 0.0
    %1472 = vmatprep.subr.mxu0 0.0
    %1473 = vmatpush1.msra.mxu0 0.0
    %1474 = vmatprep.subr.mxu0 0.0
    %1475 = vmatpush1.msra.mxu0 0.0
    %1476 = vmatprep.subr.mxu0 0.0
    %1477 = vmatpush1.msra.mxu0 0.0
    %1478 = vmatprep.subr.mxu0 0.0
    %1479 = vmatpush1.msra.mxu0 0.0
    %1480 = vmatprep.subr.mxu0 0.0
    %1481 = vmatpush1.msra.mxu0 0.0
    %1482 = vmatprep.subr.mxu0 0.0
    %1483 = vmatpush1.msra.mxu0 0.0
    %1484 = vmatprep.subr.mxu0 0.0
    %1485 = vmatpush1.msra.mxu0 0.0
    %1486 = vmatprep.subr.mxu0 0.0
    %1487 = vmatpush1.msra.mxu0 0.0
    %1488 = vmatprep.subr.mxu0 0.0
    %1489 = vmatpush1.msra.mxu0 0.0
    %1490 = vmatprep.subr.mxu0 0.0
    %1491 = vmatpush1.msra.mxu0 0.0
    %1492 = vmatprep.subr.mxu0 0.0
    %1493 = vmatpush1.msra.mxu0 0.0
    %1494 = vmatprep.subr.mxu0 0.0
    %1495 = vmatpush1.msra.mxu0 0.0
    %1496 = vmatprep.subr.mxu0 0.0
    %1497 = vmatpush1.msra.mxu0 0.0
    %1498 = vmatprep.subr.mxu0 0.0
    %1499 = vmatpush1.msra.mxu0 0.0
    %1500 = vmatprep.subr.mxu0 0.0
    %1501 = vmatpush1.msra.mxu0 0.0
    %1502 = vmatprep.subr.mxu0 0.0
    %1503 = vmatpush1.msra.mxu0 0.0
    %1504 = vmatprep.subr.mxu0 0.0
    %1505 = vmatpush1.msra.mxu0 0.0
    %1506 = vmatprep.subr.mxu0 0.0
    %1507 = vmatpush1.msra.mxu0 0.0
    %1508 = vmatprep.subr.mxu0 0.0
    %1509 = vmatpush1.msra.mxu0 0.0
    %1510 = vmatprep.subr.mxu0 0.0
    %1511 = vmatpush1.msra.mxu0 0.0
    %1512 = vmatprep.subr.mxu0 0.0
    %1513 = vmatpush1.msra.mxu0 0.0
    %1514 = vmatprep.subr.mxu0 0.0
    %1515 = vmatpush1.msra.mxu0 0.0
    %1516 = vmatprep.subr.mxu0 0.0
    %1517 = vmatpush1.msra.mxu0 0.0
    %1518 = vmatprep.subr.mxu0 0.0
    %1519 = vmatpush1.msra.mxu0 0.0
    %1520 = vmatprep.mubr.f32.mxu0 0.0
    %1521 = vmatmul.mubr.f32.gmra.mrb[0].mxu0 %v957
    %v1522 = vpop.f32.mrb[0].mxu0
    %v1523 = vadd.f32 %v1452, %v1522
    %v1524 = vpop.f32.mrb[0].mxu0
    %v1525 = vadd.f32 %v1454, %v1524
    %1526 = vdwg.mxu0
    %v1527 = vmul.f32 %v1097, 0.5
    %v1528 = vmul.f32 %v1099, 0.5
    %v1529 = vtanh.pop %v1527
    %v1530 = vtanh.pop %v1528
    %v1531 = vadd.f32 %v1529, 1.0
    %v1532 = vadd.f32 %v1530, 1.0
    %v1533 = vmul.f32 %v1531, 0.5
    %v1534 = vmul.f32 %v1532, 0.5
    %v1535 = vmul.f32 %v1239, 0.5
    %v1536 = vmul.f32 %v1241, 0.5
    %v1537 = vtanh.pop %v1535
    %v1538 = vtanh.pop %v1536
    %v1539 = vadd.f32 %v1537, 1.0
    %v1540 = vadd.f32 %v1538, 1.0
    %v1541 = vmul.f32 %v1539, 0.5
    %v1542 = vmul.f32 %v1540, 0.5
    %v1543 = vtanh.pop %v1381
    %v1544 = vtanh.pop %v1383
    %v1545 = vmul.f32 %v1523, 0.5
    %v1546 = vmul.f32 %v1525, 0.5
    %v1547 = vtanh.pop %v1545
    %v1548 = vtanh.pop %v1546
    %v1549 = vadd.f32 %v1547, 1.0
    %v1550 = vadd.f32 %v1548, 1.0
    %v1551 = vmul.f32 %v1549, 0.5
    %v1552 = vmul.f32 %v1550, 0.5
    %v1553 = vmul.f32 %v1541, 0.0
    %v1554 = vmul.f32 %v1542, 0.0
    %v1555 = vmul.f32 %v1533, %v1543
    %v1556 = vmul.f32 %v1534, %v1544
    %v1557 = vadd.f32 %v1553, %v1555
    %v1558 = vadd.f32 %v1554, %v1556
    %v1559 = vtanh.pop %v1557
    %v1560 = vtanh.pop %v1558
    %v1561 = vmul.f32 %v1551, %v1559
    %v1562 = vmul.f32 %v1552, %v1560
    %1563 = vst [vmem:[#allocation2] sm:$0xff] %v1561
    %1564 = vst [vmem:[#allocation2 + $0x8] sm:$0xff] %v1562
    %1565 = vrot.lane.b32.xlu0 %v626, 127
    %v1566 = vpop.permute.xlu0 %1565
    %1568 = vst.msk [vmem:[#allocation2 + $0x10] sm:$0xff] %vm904, %v1566
    %1569 = vrot.lane.b32.xlu0 %v626, 122
    %v1570 = vpop.permute.xlu0 %1569
    %1572 = vst.msk [vmem:[#allocation2 + $0x10] sm:$0xff] %vm910, %v1570
    %v1573 = vld [vmem:[#allocation2] sm:$0xff]
    %v1574 = vld [vmem:[#allocation2 + $0x8] sm:$0xff]
    %v1575 = vld [vmem:[#allocation2 + $0x10] sm:$0xff]
    %v1577 = vsel %vm902, %v1575, 0
    %1579 = vmatprep.subr.mxu0 %v628
    %1580 = vmatpush1.msra.mxu0 %v627
    %1581 = vmatprep.subr.mxu0 %v636
    %1582 = vmatpush1.msra.mxu0 %v635
    %1583 = vmatprep.subr.mxu0 %v644
    %1584 = vmatpush1.msra.mxu0 %v643
    %1585 = vmatprep.subr.mxu0 %v652
    %1586 = vmatpush1.msra.mxu0 %v651
    %1587 = vmatprep.subr.mxu0 %v660
    %1588 = vmatpush1.msra.mxu0 %v659
    %1589 = vmatprep.subr.mxu0 %v668
    %1590 = vmatpush1.msra.mxu0 %v667
    %1591 = vmatprep.subr.mxu0 %v676
    %1592 = vmatpush1.msra.mxu0 %v675
    %1593 = vmatprep.subr.mxu0 %v684
    %1594 = vmatpush1.msra.mxu0 %v683
    %1595 = vmatprep.subr.mxu0 %v692
    %1596 = vmatpush1.msra.mxu0 %v691
    %1597 = vmatprep.subr.mxu0 %v700
    %1598 = vmatpush1.msra.mxu0 %v699
    %1599 = vmatprep.subr.mxu0 %v708
    %1600 = vmatpush1.msra.mxu0 %v707
    %1601 = vmatprep.subr.mxu0 %v716
    %1602 = vmatpush1.msra.mxu0 %v715
    %1603 = vmatprep.subr.mxu0 %v724
    %1604 = vmatpush1.msra.mxu0 %v723
    %1605 = vmatprep.subr.mxu0 %v732
    %1606 = vmatpush1.msra.mxu0 %v731
    %1607 = vmatprep.subr.mxu0 %v740
    %1608 = vmatpush1.msra.mxu0 %v739
    %1609 = vmatprep.subr.mxu0 %v748
    %1610 = vmatpush1.msra.mxu0 %v747
    %1611 = vmatprep.subr.mxu0 %v756
    %1612 = vmatpush1.msra.mxu0 %v755
    %1613 = vmatprep.subr.mxu0 %v764
    %1614 = vmatpush1.msra.mxu0 %v763
    %1615 = vmatprep.subr.mxu0 %v772
    %1616 = vmatpush1.msra.mxu0 %v771
    %1617 = vmatprep.subr.mxu0 %v780
    %1618 = vmatpush1.msra.mxu0 %v779
    %1619 = vmatprep.subr.mxu0 %v788
    %1620 = vmatpush1.msra.mxu0 %v787
    %1621 = vmatprep.subr.mxu0 %v796
    %1622 = vmatpush1.msra.mxu0 %v795
    %1623 = vmatprep.subr.mxu0 %v804
    %1624 = vmatpush1.msra.mxu0 %v803
    %1625 = vmatprep.subr.mxu0 %v812
    %1626 = vmatpush1.msra.mxu0 %v811
    %1627 = vmatprep.subr.mxu0 %v820
    %1628 = vmatpush1.msra.mxu0 %v819
    %1629 = vmatprep.subr.mxu0 %v828
    %1630 = vmatpush1.msra.mxu0 %v827
    %1631 = vmatprep.subr.mxu0 %v836
    %1632 = vmatpush1.msra.mxu0 %v835
    %1633 = vmatprep.subr.mxu0 %v844
    %1634 = vmatpush1.msra.mxu0 %v843
    %1635 = vmatprep.subr.mxu0 %v852
    %1636 = vmatpush1.msra.mxu0 %v851
    %1637 = vmatprep.subr.mxu0 %v860
    %1638 = vmatpush1.msra.mxu0 %v859
    %1639 = vmatprep.subr.mxu0 %v868
    %1640 = vmatpush1.msra.mxu0 %v867
    %1641 = vmatprep.subr.mxu0 %v876
    %1642 = vmatpush1.msra.mxu0 %v875
    %1643 = vmatprep.mubr.f32.mxu0 %v1574
    %1644 = vmatmul.mubr.f32.gmra.mrb[0].mxu0 %v1573
    %v1645 = vpop.f32.mrb[0].mxu0
    %v1646 = vadd.f32 %v919, %v1645
    %v1647 = vpop.f32.mrb[0].mxu0
    %v1648 = vadd.f32 %v923, %v1647
    %1649 = vdwg.mxu0
    %1650 = vmatprep.subr.mxu0 %v884
    %1651 = vmatpush1.msra.mxu0 %v883
    %1652 = vmatprep.subr.mxu0 %v892
    %1653 = vmatpush1.msra.mxu0 %v891
    %1654 = vmatprep.subr.mxu0 0.0
    %1655 = vmatpush1.msra.mxu0 0.0
    %1656 = vmatprep.subr.mxu0 0.0
    %1657 = vmatpush1.msra.mxu0 0.0
    %1658 = vmatprep.subr.mxu0 0.0
    %1659 = vmatpush1.msra.mxu0 0.0
    %1660 = vmatprep.subr.mxu0 0.0
    %1661 = vmatpush1.msra.mxu0 0.0
    %1662 = vmatprep.subr.mxu0 0.0
    %1663 = vmatpush1.msra.mxu0 0.0
    %1664 = vmatprep.subr.mxu0 0.0
    %1665 = vmatpush1.msra.mxu0 0.0
    %1666 = vmatprep.subr.mxu0 0.0
    %1667 = vmatpush1.msra.mxu0 0.0
    %1668 = vmatprep.subr.mxu0 0.0
    %1669 = vmatpush1.msra.mxu0 0.0
    %1670 = vmatprep.subr.mxu0 0.0
    %1671 = vmatpush1.msra.mxu0 0.0
    %1672 = vmatprep.subr.mxu0 0.0
    %1673 = vmatpush1.msra.mxu0 0.0
    %1674 = vmatprep.subr.mxu0 0.0
    %1675 = vmatpush1.msra.mxu0 0.0
    %1676 = vmatprep.subr.mxu0 0.0
    %1677 = vmatpush1.msra.mxu0 0.0
    %1678 = vmatprep.subr.mxu0 0.0
    %1679 = vmatpush1.msra.mxu0 0.0
    %1680 = vmatprep.subr.mxu0 0.0
    %1681 = vmatpush1.msra.mxu0 0.0
    %1682 = vmatprep.subr.mxu0 0.0
    %1683 = vmatpush1.msra.mxu0 0.0
    %1684 = vmatprep.subr.mxu0 0.0
    %1685 = vmatpush1.msra.mxu0 0.0
    %1686 = vmatprep.subr.mxu0 0.0
    %1687 = vmatpush1.msra.mxu0 0.0
    %1688 = vmatprep.subr.mxu0 0.0
    %1689 = vmatpush1.msra.mxu0 0.0
    %1690 = vmatprep.subr.mxu0 0.0
    %1691 = vmatpush1.msra.mxu0 0.0
    %1692 = vmatprep.subr.mxu0 0.0
    %1693 = vmatpush1.msra.mxu0 0.0
    %1694 = vmatprep.subr.mxu0 0.0
    %1695 = vmatpush1.msra.mxu0 0.0
    %1696 = vmatprep.subr.mxu0 0.0
    %1697 = vmatpush1.msra.mxu0 0.0
    %1698 = vmatprep.subr.mxu0 0.0
    %1699 = vmatpush1.msra.mxu0 0.0
    %1700 = vmatprep.subr.mxu0 0.0
    %1701 = vmatpush1.msra.mxu0 0.0
    %1702 = vmatprep.subr.mxu0 0.0
    %1703 = vmatpush1.msra.mxu0 0.0
    %1704 = vmatprep.subr.mxu0 0.0
    %1705 = vmatpush1.msra.mxu0 0.0
    %1706 = vmatprep.subr.mxu0 0.0
    %1707 = vmatpush1.msra.mxu0 0.0
    %1708 = vmatprep.subr.mxu0 0.0
    %1709 = vmatpush1.msra.mxu0 0.0
    %1710 = vmatprep.subr.mxu0 0.0
    %1711 = vmatpush1.msra.mxu0 0.0
    %1712 = vmatprep.subr.mxu0 0.0
    %1713 = vmatpush1.msra.mxu0 0.0
    %1714 = vmatprep.mubr.f32.mxu0 0.0
    %1715 = vmatmul.mubr.f32.gmra.mrb[0].mxu0 %v1577
    %v1716 = vpop.f32.mrb[0].mxu0
    %v1717 = vadd.f32 %v1646, %v1716
    %v1718 = vpop.f32.mrb[0].mxu0
    %v1719 = vadd.f32 %v1648, %v1718
    %1720 = vdwg.mxu0
    %1721 = vmatprep.subr.mxu0 %v630
    %1722 = vmatpush1.msra.mxu0 %v629
    %1723 = vmatprep.subr.mxu0 %v638
    %1724 = vmatpush1.msra.mxu0 %v637
    %1725 = vmatprep.subr.mxu0 %v646
    %1726 = vmatpush1.msra.mxu0 %v645
    %1727 = vmatprep.subr.mxu0 %v654
    %1728 = vmatpush1.msra.mxu0 %v653
    %1729 = vmatprep.subr.mxu0 %v662
    %1730 = vmatpush1.msra.mxu0 %v661
    %1731 = vmatprep.subr.mxu0 %v670
    %1732 = vmatpush1.msra.mxu0 %v669
    %1733 = vmatprep.subr.mxu0 %v678
    %1734 = vmatpush1.msra.mxu0 %v677
    %1735 = vmatprep.subr.mxu0 %v686
    %1736 = vmatpush1.msra.mxu0 %v685
    %1737 = vmatprep.subr.mxu0 %v694
    %1738 = vmatpush1.msra.mxu0 %v693
    %1739 = vmatprep.subr.mxu0 %v702
    %1740 = vmatpush1.msra.mxu0 %v701
    %1741 = vmatprep.subr.mxu0 %v710
    %1742 = vmatpush1.msra.mxu0 %v709
    %1743 = vmatprep.subr.mxu0 %v718
    %1744 = vmatpush1.msra.mxu0 %v717
    %1745 = vmatprep.subr.mxu0 %v726
    %1746 = vmatpush1.msra.mxu0 %v725
    %1747 = vmatprep.subr.mxu0 %v734
    %1748 = vmatpush1.msra.mxu0 %v733
    %1749 = vmatprep.subr.mxu0 %v742
    %1750 = vmatpush1.msra.mxu0 %v741
    %1751 = vmatprep.subr.mxu0 %v750
    %1752 = vmatpush1.msra.mxu0 %v749
    %1753 = vmatprep.subr.mxu0 %v758
    %1754 = vmatpush1.msra.mxu0 %v757
    %1755 = vmatprep.subr.mxu0 %v766
    %1756 = vmatpush1.msra.mxu0 %v765
    %1757 = vmatprep.subr.mxu0 %v774
    %1758 = vmatpush1.msra.mxu0 %v773
    %1759 = vmatprep.subr.mxu0 %v782
    %1760 = vmatpush1.msra.mxu0 %v781
    %1761 = vmatprep.subr.mxu0 %v790
    %1762 = vmatpush1.msra.mxu0 %v789
    %1763 = vmatprep.subr.mxu0 %v798
    %1764 = vmatpush1.msra.mxu0 %v797
    %1765 = vmatprep.subr.mxu0 %v806
    %1766 = vmatpush1.msra.mxu0 %v805
    %1767 = vmatprep.subr.mxu0 %v814
    %1768 = vmatpush1.msra.mxu0 %v813
    %1769 = vmatprep.subr.mxu0 %v822
    %1770 = vmatpush1.msra.mxu0 %v821
    %1771 = vmatprep.subr.mxu0 %v830
    %1772 = vmatpush1.msra.mxu0 %v829
    %1773 = vmatprep.subr.mxu0 %v838
    %1774 = vmatpush1.msra.mxu0 %v837
    %1775 = vmatprep.subr.mxu0 %v846
    %1776 = vmatpush1.msra.mxu0 %v845
    %1777 = vmatprep.subr.mxu0 %v854
    %1778 = vmatpush1.msra.mxu0 %v853
    %1779 = vmatprep.subr.mxu0 %v862
    %1780 = vmatpush1.msra.mxu0 %v861
    %1781 = vmatprep.subr.mxu0 %v870
    %1782 = vmatpush1.msra.mxu0 %v869
    %1783 = vmatprep.subr.mxu0 %v878
    %1784 = vmatpush1.msra.mxu0 %v877
    %1785 = vmatprep.mubr.f32.mxu0 %v1574
    %1786 = vmatmul.mubr.f32.gmra.mrb[0].mxu0 %v1573
    %v1787 = vpop.f32.mrb[0].mxu0
    %v1788 = vadd.f32 %v927, %v1787
    %v1789 = vpop.f32.mrb[0].mxu0
    %v1790 = vadd.f32 %v931, %v1789
    %1791 = vdwg.mxu0
    %1792 = vmatprep.subr.mxu0 %v886
    %1793 = vmatpush1.msra.mxu0 %v885
    %1794 = vmatprep.subr.mxu0 %v894
    %1795 = vmatpush1.msra.mxu0 %v893
    %1796 = vmatprep.subr.mxu0 0.0
    %1797 = vmatpush1.msra.mxu0 0.0
    %1798 = vmatprep.subr.mxu0 0.0
    %1799 = vmatpush1.msra.mxu0 0.0
    %1800 = vmatprep.subr.mxu0 0.0
    %1801 = vmatpush1.msra.mxu0 0.0
    %1802 = vmatprep.subr.mxu0 0.0
    %1803 = vmatpush1.msra.mxu0 0.0
    %1804 = vmatprep.subr.mxu0 0.0
    %1805 = vmatpush1.msra.mxu0 0.0
    %1806 = vmatprep.subr.mxu0 0.0
    %1807 = vmatpush1.msra.mxu0 0.0
    %1808 = vmatprep.subr.mxu0 0.0
    %1809 = vmatpush1.msra.mxu0 0.0
    %1810 = vmatprep.subr.mxu0 0.0
    %1811 = vmatpush1.msra.mxu0 0.0
    %1812 = vmatprep.subr.mxu0 0.0
    %1813 = vmatpush1.msra.mxu0 0.0
    %1814 = vmatprep.subr.mxu0 0.0
    %1815 = vmatpush1.msra.mxu0 0.0
    %1816 = vmatprep.subr.mxu0 0.0
    %1817 = vmatpush1.msra.mxu0 0.0
    %1818 = vmatprep.subr.mxu0 0.0
    %1819 = vmatpush1.msra.mxu0 0.0
    %1820 = vmatprep.subr.mxu0 0.0
    %1821 = vmatpush1.msra.mxu0 0.0
    %1822 = vmatprep.subr.mxu0 0.0
    %1823 = vmatpush1.msra.mxu0 0.0
    %1824 = vmatprep.subr.mxu0 0.0
    %1825 = vmatpush1.msra.mxu0 0.0
    %1826 = vmatprep.subr.mxu0 0.0
    %1827 = vmatpush1.msra.mxu0 0.0
    %1828 = vmatprep.subr.mxu0 0.0
    %1829 = vmatpush1.msra.mxu0 0.0
    %1830 = vmatprep.subr.mxu0 0.0
    %1831 = vmatpush1.msra.mxu0 0.0
    %1832 = vmatprep.subr.mxu0 0.0
    %1833 = vmatpush1.msra.mxu0 0.0
    %1834 = vmatprep.subr.mxu0 0.0
    %1835 = vmatpush1.msra.mxu0 0.0
    %1836 = vmatprep.subr.mxu0 0.0
    %1837 = vmatpush1.msra.mxu0 0.0
    %1838 = vmatprep.subr.mxu0 0.0
    %1839 = vmatpush1.msra.mxu0 0.0
    %1840 = vmatprep.subr.mxu0 0.0
    %1841 = vmatpush1.msra.mxu0 0.0
    %1842 = vmatprep.subr.mxu0 0.0
    %1843 = vmatpush1.msra.mxu0 0.0
    %1844 = vmatprep.subr.mxu0 0.0
    %1845 = vmatpush1.msra.mxu0 0.0
    %1846 = vmatprep.subr.mxu0 0.0
    %1847 = vmatpush1.msra.mxu0 0.0
    %1848 = vmatprep.subr.mxu0 0.0
    %1849 = vmatpush1.msra.mxu0 0.0
    %1850 = vmatprep.subr.mxu0 0.0
    %1851 = vmatpush1.msra.mxu0 0.0
    %1852 = vmatprep.subr.mxu0 0.0
    %1853 = vmatpush1.msra.mxu0 0.0
    %1854 = vmatprep.subr.mxu0 0.0
    %1855 = vmatpush1.msra.mxu0 0.0
    %1856 = vmatprep.mubr.f32.mxu0 0.0
    %1857 = vmatmul.mubr.f32.gmra.mrb[0].mxu0 %v1577
    %v1858 = vpop.f32.mrb[0].mxu0
    %v1859 = vadd.f32 %v1788, %v1858
    %v1860 = vpop.f32.mrb[0].mxu0
    %v1861 = vadd.f32 %v1790, %v1860
    %1862 = vdwg.mxu0
    %1863 = vmatprep.subr.mxu0 %v632
    %1864 = vmatpush1.msra.mxu0 %v631
    %1865 = vmatprep.subr.mxu0 %v640
    %1866 = vmatpush1.msra.mxu0 %v639
    %1867 = vmatprep.subr.mxu0 %v648
    %1868 = vmatpush1.msra.mxu0 %v647
    %1869 = vmatprep.subr.mxu0 %v656
    %1870 = vmatpush1.msra.mxu0 %v655
    %1871 = vmatprep.subr.mxu0 %v664
    %1872 = vmatpush1.msra.mxu0 %v663
    %1873 = vmatprep.subr.mxu0 %v672
    %1874 = vmatpush1.msra.mxu0 %v671
    %1875 = vmatprep.subr.mxu0 %v680
    %1876 = vmatpush1.msra.mxu0 %v679
    %1877 = vmatprep.subr.mxu0 %v688
    %1878 = vmatpush1.msra.mxu0 %v687
    %1879 = vmatprep.subr.mxu0 %v696
    %1880 = vmatpush1.msra.mxu0 %v695
    %1881 = vmatprep.subr.mxu0 %v704
    %1882 = vmatpush1.msra.mxu0 %v703
    %1883 = vmatprep.subr.mxu0 %v712
    %1884 = vmatpush1.msra.mxu0 %v711
    %1885 = vmatprep.subr.mxu0 %v720
    %1886 = vmatpush1.msra.mxu0 %v719
    %1887 = vmatprep.subr.mxu0 %v728
    %1888 = vmatpush1.msra.mxu0 %v727
    %1889 = vmatprep.subr.mxu0 %v736
    %1890 = vmatpush1.msra.mxu0 %v735
    %1891 = vmatprep.subr.mxu0 %v744
    %1892 = vmatpush1.msra.mxu0 %v743
    %1893 = vmatprep.subr.mxu0 %v752
    %1894 = vmatpush1.msra.mxu0 %v751
    %1895 = vmatprep.subr.mxu0 %v760
    %1896 = vmatpush1.msra.mxu0 %v759
    %1897 = vmatprep.subr.mxu0 %v768
    %1898 = vmatpush1.msra.mxu0 %v767
    %1899 = vmatprep.subr.mxu0 %v776
    %1900 = vmatpush1.msra.mxu0 %v775
    %1901 = vmatprep.subr.mxu0 %v784
    %1902 = vmatpush1.msra.mxu0 %v783
    %1903 = vmatprep.subr.mxu0 %v792
    %1904 = vmatpush1.msra.mxu0 %v791
    %1905 = vmatprep.subr.mxu0 %v800
    %1906 = vmatpush1.msra.mxu0 %v799
    %1907 = vmatprep.subr.mxu0 %v808
    %1908 = vmatpush1.msra.mxu0 %v807
    %1909 = vmatprep.subr.mxu0 %v816
    %1910 = vmatpush1.msra.mxu0 %v815
    %1911 = vmatprep.subr.mxu0 %v824
    %1912 = vmatpush1.msra.mxu0 %v823
    %1913 = vmatprep.subr.mxu0 %v832
    %1914 = vmatpush1.msra.mxu0 %v831
    %1915 = vmatprep.subr.mxu0 %v840
    %1916 = vmatpush1.msra.mxu0 %v839
    %1917 = vmatprep.subr.mxu0 %v848
    %1918 = vmatpush1.msra.mxu0 %v847
    %1919 = vmatprep.subr.mxu0 %v856
    %1920 = vmatpush1.msra.mxu0 %v855
    %1921 = vmatprep.subr.mxu0 %v864
    %1922 = vmatpush1.msra.mxu0 %v863
    %1923 = vmatprep.subr.mxu0 %v872
    %1924 = vmatpush1.msra.mxu0 %v871
    %1925 = vmatprep.subr.mxu0 %v880
    %1926 = vmatpush1.msra.mxu0 %v879
    %1927 = vmatprep.mubr.f32.mxu0 %v1574
    %1928 = vmatmul.mubr.f32.gmra.mrb[0].mxu0 %v1573
    %v1929 = vpop.f32.mrb[0].mxu0
    %v1930 = vadd.f32 %v935, %v1929
    %v1931 = vpop.f32.mrb[0].mxu0
    %v1932 = vadd.f32 %v939, %v1931
    %1933 = vdwg.mxu0
    %1934 = vmatprep.subr.mxu0 %v888
    %1935 = vmatpush1.msra.mxu0 %v887
    %1936 = vmatprep.subr.mxu0 %v896
    %1937 = vmatpush1.msra.mxu0 %v895
    %1938 = vmatprep.subr.mxu0 0.0
    %1939 = vmatpush1.msra.mxu0 0.0
    %1940 = vmatprep.subr.mxu0 0.0
    %1941 = vmatpush1.msra.mxu0 0.0
    %1942 = vmatprep.subr.mxu0 0.0
    %1943 = vmatpush1.msra.mxu0 0.0
    %1944 = vmatprep.subr.mxu0 0.0
    %1945 = vmatpush1.msra.mxu0 0.0
    %1946 = vmatprep.subr.mxu0 0.0
    %1947 = vmatpush1.msra.mxu0 0.0
    %1948 = vmatprep.subr.mxu0 0.0
    %1949 = vmatpush1.msra.mxu0 0.0
    %1950 = vmatprep.subr.mxu0 0.0
    %1951 = vmatpush1.msra.mxu0 0.0
    %1952 = vmatprep.subr.mxu0 0.0
    %1953 = vmatpush1.msra.mxu0 0.0
    %1954 = vmatprep.subr.mxu0 0.0
    %1955 = vmatpush1.msra.mxu0 0.0
    %1956 = vmatprep.subr.mxu0 0.0
    %1957 = vmatpush1.msra.mxu0 0.0
    %1958 = vmatprep.subr.mxu0 0.0
    %1959 = vmatpush1.msra.mxu0 0.0
    %1960 = vmatprep.subr.mxu0 0.0
    %1961 = vmatpush1.msra.mxu0 0.0
    %1962 = vmatprep.subr.mxu0 0.0
    %1963 = vmatpush1.msra.mxu0 0.0
    %1964 = vmatprep.subr.mxu0 0.0
    %1965 = vmatpush1.msra.mxu0 0.0
    %1966 = vmatprep.subr.mxu0 0.0
    %1967 = vmatpush1.msra.mxu0 0.0
    %1968 = vmatprep.subr.mxu0 0.0
    %1969 = vmatpush1.msra.mxu0 0.0
    %1970 = vmatprep.subr.mxu0 0.0
    %1971 = vmatpush1.msra.mxu0 0.0
    %1972 = vmatprep.subr.mxu0 0.0
    %1973 = vmatpush1.msra.mxu0 0.0
    %1974 = vmatprep.subr.mxu0 0.0
    %1975 = vmatpush1.msra.mxu0 0.0
    %1976 = vmatprep.subr.mxu0 0.0
    %1977 = vmatpush1.msra.mxu0 0.0
    %1978 = vmatprep.subr.mxu0 0.0
    %1979 = vmatpush1.msra.mxu0 0.0
    %1980 = vmatprep.subr.mxu0 0.0
    %1981 = vmatpush1.msra.mxu0 0.0
    %1982 = vmatprep.subr.mxu0 0.0
    %1983 = vmatpush1.msra.mxu0 0.0
    %1984 = vmatprep.subr.mxu0 0.0
    %1985 = vmatpush1.msra.mxu0 0.0
    %1986 = vmatprep.subr.mxu0 0.0
    %1987 = vmatpush1.msra.mxu0 0.0
    %1988 = vmatprep.subr.mxu0 0.0
    %1989 = vmatpush1.msra.mxu0 0.0
    %1990 = vmatprep.subr.mxu0 0.0
    %1991 = vmatpush1.msra.mxu0 0.0
    %1992 = vmatprep.subr.mxu0 0.0
    %1993 = vmatpush1.msra.mxu0 0.0
    %1994 = vmatprep.subr.mxu0 0.0
    %1995 = vmatpush1.msra.mxu0 0.0
    %1996 = vmatprep.subr.mxu0 0.0
    %1997 = vmatpush1.msra.mxu0 0.0
    %1998 = vmatprep.mubr.f32.mxu0 0.0
    %1999 = vmatmul.mubr.f32.gmra.mrb[0].mxu0 %v1577
    %v2000 = vpop.f32.mrb[0].mxu0
    %v2001 = vadd.f32 %v1930, %v2000
    %v2002 = vpop.f32.mrb[0].mxu0
    %v2003 = vadd.f32 %v1932, %v2002
    %2004 = vdwg.mxu0
    %2005 = vmatprep.subr.mxu0 %v634
    %2006 = vmatpush1.msra.mxu0 %v633
    %2007 = vmatprep.subr.mxu0 %v642
    %2008 = vmatpush1.msra.mxu0 %v641
    %2009 = vmatprep.subr.mxu0 %v650
    %2010 = vmatpush1.msra.mxu0 %v649
    %2011 = vmatprep.subr.mxu0 %v658
    %2012 = vmatpush1.msra.mxu0 %v657
    %2013 = vmatprep.subr.mxu0 %v666
    %2014 = vmatpush1.msra.mxu0 %v665
    %2015 = vmatprep.subr.mxu0 %v674
    %2016 = vmatpush1.msra.mxu0 %v673
    %2017 = vmatprep.subr.mxu0 %v682
    %2018 = vmatpush1.msra.mxu0 %v681
    %2019 = vmatprep.subr.mxu0 %v690
    %2020 = vmatpush1.msra.mxu0 %v689
    %2021 = vmatprep.subr.mxu0 %v698
    %2022 = vmatpush1.msra.mxu0 %v697
    %2023 = vmatprep.subr.mxu0 %v706
    %2024 = vmatpush1.msra.mxu0 %v705
    %2025 = vmatprep.subr.mxu0 %v714
    %2026 = vmatpush1.msra.mxu0 %v713
    %2027 = vmatprep.subr.mxu0 %v722
    %2028 = vmatpush1.msra.mxu0 %v721
    %2029 = vmatprep.subr.mxu0 %v730
    %2030 = vmatpush1.msra.mxu0 %v729
    %2031 = vmatprep.subr.mxu0 %v738
    %2032 = vmatpush1.msra.mxu0 %v737
    %2033 = vmatprep.subr.mxu0 %v746
    %2034 = vmatpush1.msra.mxu0 %v745
    %2035 = vmatprep.subr.mxu0 %v754
    %2036 = vmatpush1.msra.mxu0 %v753
    %2037 = vmatprep.subr.mxu0 %v762
    %2038 = vmatpush1.msra.mxu0 %v761
    %2039 = vmatprep.subr.mxu0 %v770
    %2040 = vmatpush1.msra.mxu0 %v769
    %2041 = vmatprep.subr.mxu0 %v778
    %2042 = vmatpush1.msra.mxu0 %v777
    %2043 = vmatprep.subr.mxu0 %v786
    %2044 = vmatpush1.msra.mxu0 %v785
    %2045 = vmatprep.subr.mxu0 %v794
    %2046 = vmatpush1.msra.mxu0 %v793
    %2047 = vmatprep.subr.mxu0 %v802
    %2048 = vmatpush1.msra.mxu0 %v801
    %2049 = vmatprep.subr.mxu0 %v810
    %2050 = vmatpush1.msra.mxu0 %v809
    %2051 = vmatprep.subr.mxu0 %v818
    %2052 = vmatpush1.msra.mxu0 %v817
    %2053 = vmatprep.subr.mxu0 %v826
    %2054 = vmatpush1.msra.mxu0 %v825
    %2055 = vmatprep.subr.mxu0 %v834
    %2056 = vmatpush1.msra.mxu0 %v833
    %2057 = vmatprep.subr.mxu0 %v842
    %2058 = vmatpush1.msra.mxu0 %v841
    %2059 = vmatprep.subr.mxu0 %v850
    %2060 = vmatpush1.msra.mxu0 %v849
    %2061 = vmatprep.subr.mxu0 %v858
    %2062 = vmatpush1.msra.mxu0 %v857
    %2063 = vmatprep.subr.mxu0 %v866
    %2064 = vmatpush1.msra.mxu0 %v865
    %2065 = vmatprep.subr.mxu0 %v874
    %2066 = vmatpush1.msra.mxu0 %v873
    %2067 = vmatprep.subr.mxu0 %v882
    %2068 = vmatpush1.msra.mxu0 %v881
    %2069 = vmatprep.mubr.f32.mxu0 %v1574
    %2070 = vmatmul.mubr.f32.gmra.mrb[0].mxu0 %v1573
    %v2071 = vpop.f32.mrb[0].mxu0
    %v2072 = vadd.f32 %v943, %v2071
    %v2073 = vpop.f32.mrb[0].mxu0
    %v2074 = vadd.f32 %v947, %v2073
    %2075 = vdwg.mxu0
    %2076 = vmatprep.subr.mxu0 %v890
    %2077 = vmatpush1.msra.mxu0 %v889
    %2078 = vmatprep.subr.mxu0 %v898
    %2079 = vmatpush1.msra.mxu0 %v897
    %2080 = vmatprep.subr.mxu0 0.0
    %2081 = vmatpush1.msra.mxu0 0.0
    %2082 = vmatprep.subr.mxu0 0.0
    %2083 = vmatpush1.msra.mxu0 0.0
    %2084 = vmatprep.subr.mxu0 0.0
    %2085 = vmatpush1.msra.mxu0 0.0
    %2086 = vmatprep.subr.mxu0 0.0
    %2087 = vmatpush1.msra.mxu0 0.0
    %2088 = vmatprep.subr.mxu0 0.0
    %2089 = vmatpush1.msra.mxu0 0.0
    %2090 = vmatprep.subr.mxu0 0.0
    %2091 = vmatpush1.msra.mxu0 0.0
    %2092 = vmatprep.subr.mxu0 0.0
    %2093 = vmatpush1.msra.mxu0 0.0
    %2094 = vmatprep.subr.mxu0 0.0
    %2095 = vmatpush1.msra.mxu0 0.0
    %2096 = vmatprep.subr.mxu0 0.0
    %2097 = vmatpush1.msra.mxu0 0.0
    %2098 = vmatprep.subr.mxu0 0.0
    %2099 = vmatpush1.msra.mxu0 0.0
    %2100 = vmatprep.subr.mxu0 0.0
    %2101 = vmatpush1.msra.mxu0 0.0
    %2102 = vmatprep.subr.mxu0 0.0
    %2103 = vmatpush1.msra.mxu0 0.0
    %2104 = vmatprep.subr.mxu0 0.0
    %2105 = vmatpush1.msra.mxu0 0.0
    %2106 = vmatprep.subr.mxu0 0.0
    %2107 = vmatpush1.msra.mxu0 0.0
    %2108 = vmatprep.subr.mxu0 0.0
    %2109 = vmatpush1.msra.mxu0 0.0
    %2110 = vmatprep.subr.mxu0 0.0
    %2111 = vmatpush1.msra.mxu0 0.0
    %2112 = vmatprep.subr.mxu0 0.0
    %2113 = vmatpush1.msra.mxu0 0.0
    %2114 = vmatprep.subr.mxu0 0.0
    %2115 = vmatpush1.msra.mxu0 0.0
    %2116 = vmatprep.subr.mxu0 0.0
    %2117 = vmatpush1.msra.mxu0 0.0
    %2118 = vmatprep.subr.mxu0 0.0
    %2119 = vmatpush1.msra.mxu0 0.0
    %2120 = vmatprep.subr.mxu0 0.0
    %2121 = vmatpush1.msra.mxu0 0.0
    %2122 = vmatprep.subr.mxu0 0.0
    %2123 = vmatpush1.msra.mxu0 0.0
    %2124 = vmatprep.subr.mxu0 0.0
    %2125 = vmatpush1.msra.mxu0 0.0
    %2126 = vmatprep.subr.mxu0 0.0
    %2127 = vmatpush1.msra.mxu0 0.0
    %2128 = vmatprep.subr.mxu0 0.0
    %2129 = vmatpush1.msra.mxu0 0.0
    %2130 = vmatprep.subr.mxu0 0.0
    %2131 = vmatpush1.msra.mxu0 0.0
    %2132 = vmatprep.subr.mxu0 0.0
    %2133 = vmatpush1.msra.mxu0 0.0
    %2134 = vmatprep.subr.mxu0 0.0
    %2135 = vmatpush1.msra.mxu0 0.0
    %2136 = vmatprep.subr.mxu0 0.0
    %2137 = vmatpush1.msra.mxu0 0.0
    %2138 = vmatprep.subr.mxu0 0.0
    %2139 = vmatpush1.msra.mxu0 0.0
    %2140 = vmatprep.mubr.f32.mxu0 0.0
    %2141 = vmatmul.mubr.f32.gmra.mrb[0].mxu0 %v1577
    %v2142 = vpop.f32.mrb[0].mxu0
    %v2143 = vadd.f32 %v2072, %v2142
    %v2144 = vpop.f32.mrb[0].mxu0
    %v2145 = vadd.f32 %v2074, %v2144
    %2146 = vdwg.mxu0
    %v2147 = vmul.f32 %v1717, 0.5
    %v2148 = vmul.f32 %v1719, 0.5
    %v2149 = vtanh.pop %v2147
    %v2150 = vtanh.pop %v2148
    %v2151 = vadd.f32 %v2149, 1.0
    %v2152 = vadd.f32 %v2150, 1.0
    %v2153 = vmul.f32 %v2151, 0.5
    %v2154 = vmul.f32 %v2152, 0.5
    %v2155 = vmul.f32 %v1859, 0.5
    %v2156 = vmul.f32 %v1861, 0.5
    %v2157 = vtanh.pop %v2155
    %v2158 = vtanh.pop %v2156
    %v2159 = vadd.f32 %v2157, 1.0
    %v2160 = vadd.f32 %v2158, 1.0
    %v2161 = vmul.f32 %v2159, 0.5
    %v2162 = vmul.f32 %v2160, 0.5
    %v2163 = vtanh.pop %v2001
    %v2164 = vtanh.pop %v2003
    %v2165 = vmul.f32 %v2143, 0.5
    %v2166 = vmul.f32 %v2145, 0.5
    %v2167 = vtanh.pop %v2165
    %v2168 = vtanh.pop %v2166
    %v2169 = vadd.f32 %v2167, 1.0
    %v2170 = vadd.f32 %v2168, 1.0
    %v2171 = vmul.f32 %v2169, 0.5
    %v2172 = vmul.f32 %v2170, 0.5
    %v2173 = vmul.f32 %v2161, %v1557
    %v2174 = vmul.f32 %v2162, %v1558
    %v2175 = vmul.f32 %v2153, %v2163
    %v2176 = vmul.f32 %v2154, %v2164
    %v2177 = vadd.f32 %v2173, %v2175
    %v2178 = vadd.f32 %v2174, %v2176
    %v2179 = vtanh.pop %v2177
    %v2180 = vtanh.pop %v2178
    %v2181 = vmul.f32 %v2171, %v2179
    %v2182 = vmul.f32 %v2172, %v2180
    %2183 = vst [vmem:[#allocation2] sm:$0xff] %v2181
    %2184 = vst [vmem:[#allocation2 + $0x8] sm:$0xff] %v2182
    %2185 = vrot.lane.b32.xlu0 %v626, 126
    %v2186 = vpop.permute.xlu0 %2185
    %2188 = vst.msk [vmem:[#allocation2 + $0x10] sm:$0xff] %vm904, %v2186
    %2189 = vrot.lane.b32.xlu0 %v626, 123
    %v2190 = vpop.permute.xlu0 %2189
    %2192 = vst.msk [vmem:[#allocation2 + $0x10] sm:$0xff] %vm910, %v2190
    %v2193 = vld [vmem:[#allocation2] sm:$0xff]
    %v2194 = vld [vmem:[#allocation2 + $0x8] sm:$0xff]
    %v2195 = vld [vmem:[#allocation2 + $0x10] sm:$0xff]
    %v2197 = vsel %vm902, %v2195, 0
    %2199 = vmatprep.subr.mxu0 %v628
    %2200 = vmatpush1.msra.mxu0 %v627
    %2201 = vmatprep.subr.mxu0 %v636
    %2202 = vmatpush1.msra.mxu0 %v635
    %2203 = vmatprep.subr.mxu0 %v644
    %2204 = vmatpush1.msra.mxu0 %v643
    %2205 = vmatprep.subr.mxu0 %v652
    %2206 = vmatpush1.msra.mxu0 %v651
    %2207 = vmatprep.subr.mxu0 %v660
    %2208 = vmatpush1.msra.mxu0 %v659
    %2209 = vmatprep.subr.mxu0 %v668
    %2210 = vmatpush1.msra.mxu0 %v667
    %2211 = vmatprep.subr.mxu0 %v676
    %2212 = vmatpush1.msra.mxu0 %v675
    %2213 = vmatprep.subr.mxu0 %v684
    %2214 = vmatpush1.msra.mxu0 %v683
    %2215 = vmatprep.subr.mxu0 %v692
    %2216 = vmatpush1.msra.mxu0 %v691
    %2217 = vmatprep.subr.mxu0 %v700
    %2218 = vmatpush1.msra.mxu0 %v699
    %2219 = vmatprep.subr.mxu0 %v708
    %2220 = vmatpush1.msra.mxu0 %v707
    %2221 = vmatprep.subr.mxu0 %v716
    %2222 = vmatpush1.msra.mxu0 %v715
    %2223 = vmatprep.subr.mxu0 %v724
    %2224 = vmatpush1.msra.mxu0 %v723
    %2225 = vmatprep.subr.mxu0 %v732
    %2226 = vmatpush1.msra.mxu0 %v731
    %2227 = vmatprep.subr.mxu0 %v740
    %2228 = vmatpush1.msra.mxu0 %v739
    %2229 = vmatprep.subr.mxu0 %v748
    %2230 = vmatpush1.msra.mxu0 %v747
    %2231 = vmatprep.subr.mxu0 %v756
    %2232 = vmatpush1.msra.mxu0 %v755
    %2233 = vmatprep.subr.mxu0 %v764
    %2234 = vmatpush1.msra.mxu0 %v763
    %2235 = vmatprep.subr.mxu0 %v772
    %2236 = vmatpush1.msra.mxu0 %v771
    %2237 = vmatprep.subr.mxu0 %v780
    %2238 = vmatpush1.msra.mxu0 %v779
    %2239 = vmatprep.subr.mxu0 %v788
    %2240 = vmatpush1.msra.mxu0 %v787
    %2241 = vmatprep.subr.mxu0 %v796
    %2242 = vmatpush1.msra.mxu0 %v795
    %2243 = vmatprep.subr.mxu0 %v804
    %2244 = vmatpush1.msra.mxu0 %v803
    %2245 = vmatprep.subr.mxu0 %v812
    %2246 = vmatpush1.msra.mxu0 %v811
    %2247 = vmatprep.subr.mxu0 %v820
    %2248 = vmatpush1.msra.mxu0 %v819
    %2249 = vmatprep.subr.mxu0 %v828
    %2250 = vmatpush1.msra.mxu0 %v827
    %2251 = vmatprep.subr.mxu0 %v836
    %2252 = vmatpush1.msra.mxu0 %v835
    %2253 = vmatprep.subr.mxu0 %v844
    %2254 = vmatpush1.msra.mxu0 %v843
    %2255 = vmatprep.subr.mxu0 %v852
    %2256 = vmatpush1.msra.mxu0 %v851
    %2257 = vmatprep.subr.mxu0 %v860
    %2258 = vmatpush1.msra.mxu0 %v859
    %2259 = vmatprep.subr.mxu0 %v868
    %2260 = vmatpush1.msra.mxu0 %v867
    %2261 = vmatprep.subr.mxu0 %v876
    %2262 = vmatpush1.msra.mxu0 %v875
    %2263 = vmatprep.mubr.f32.mxu0 %v2194
    %2264 = vmatmul.mubr.f32.gmra.mrb[0].mxu0 %v2193
    %v2265 = vpop.f32.mrb[0].mxu0
    %v2266 = vadd.f32 %v919, %v2265
    %v2267 = vpop.f32.mrb[0].mxu0
    %v2268 = vadd.f32 %v923, %v2267
    %2269 = vdwg.mxu0
    %2270 = vmatprep.subr.mxu0 %v884
    %2271 = vmatpush1.msra.mxu0 %v883
    %2272 = vmatprep.subr.mxu0 %v892
    %2273 = vmatpush1.msra.mxu0 %v891
    %2274 = vmatprep.subr.mxu0 0.0
    %2275 = vmatpush1.msra.mxu0 0.0
    %2276 = vmatprep.subr.mxu0 0.0
    %2277 = vmatpush1.msra.mxu0 0.0
    %2278 = vmatprep.subr.mxu0 0.0
    %2279 = vmatpush1.msra.mxu0 0.0
    %2280 = vmatprep.subr.mxu0 0.0
    %2281 = vmatpush1.msra.mxu0 0.0
    %2282 = vmatprep.subr.mxu0 0.0
    %2283 = vmatpush1.msra.mxu0 0.0
    %2284 = vmatprep.subr.mxu0 0.0
    %2285 = vmatpush1.msra.mxu0 0.0
    %2286 = vmatprep.subr.mxu0 0.0
    %2287 = vmatpush1.msra.mxu0 0.0
    %2288 = vmatprep.subr.mxu0 0.0
    %2289 = vmatpush1.msra.mxu0 0.0
    %2290 = vmatprep.subr.mxu0 0.0
    %2291 = vmatpush1.msra.mxu0 0.0
    %2292 = vmatprep.subr.mxu0 0.0
    %2293 = vmatpush1.msra.mxu0 0.0
    %2294 = vmatprep.subr.mxu0 0.0
    %2295 = vmatpush1.msra.mxu0 0.0
    %2296 = vmatprep.subr.mxu0 0.0
    %2297 = vmatpush1.msra.mxu0 0.0
    %2298 = vmatprep.subr.mxu0 0.0
    %2299 = vmatpush1.msra.mxu0 0.0
    %2300 = vmatprep.subr.mxu0 0.0
    %2301 = vmatpush1.msra.mxu0 0.0
    %2302 = vmatprep.subr.mxu0 0.0
    %2303 = vmatpush1.msra.mxu0 0.0
    %2304 = vmatprep.subr.mxu0 0.0
    %2305 = vmatpush1.msra.mxu0 0.0
    %2306 = vmatprep.subr.mxu0 0.0
    %2307 = vmatpush1.msra.mxu0 0.0
    %2308 = vmatprep.subr.mxu0 0.0
    %2309 = vmatpush1.msra.mxu0 0.0
    %2310 = vmatprep.subr.mxu0 0.0
    %2311 = vmatpush1.msra.mxu0 0.0
    %2312 = vmatprep.subr.mxu0 0.0
    %2313 = vmatpush1.msra.mxu0 0.0
    %2314 = vmatprep.subr.mxu0 0.0
    %2315 = vmatpush1.msra.mxu0 0.0
    %2316 = vmatprep.subr.mxu0 0.0
    %2317 = vmatpush1.msra.mxu0 0.0
    %2318 = vmatprep.subr.mxu0 0.0
    %2319 = vmatpush1.msra.mxu0 0.0
    %2320 = vmatprep.subr.mxu0 0.0
    %2321 = vmatpush1.msra.mxu0 0.0
    %2322 = vmatprep.subr.mxu0 0.0
    %2323 = vmatpush1.msra.mxu0 0.0
    %2324 = vmatprep.subr.mxu0 0.0
    %2325 = vmatpush1.msra.mxu0 0.0
    %2326 = vmatprep.subr.mxu0 0.0
    %2327 = vmatpush1.msra.mxu0 0.0
    %2328 = vmatprep.subr.mxu0 0.0
    %2329 = vmatpush1.msra.mxu0 0.0
    %2330 = vmatprep.subr.mxu0 0.0
    %2331 = vmatpush1.msra.mxu0 0.0
    %2332 = vmatprep.subr.mxu0 0.0
    %2333 = vmatpush1.msra.mxu0 0.0
    %2334 = vmatprep.mubr.f32.mxu0 0.0
    %2335 = vmatmul.mubr.f32.gmra.mrb[0].mxu0 %v2197
    %v2336 = vpop.f32.mrb[0].mxu0
    %v2337 = vadd.f32 %v2266, %v2336
    %v2338 = vpop.f32.mrb[0].mxu0
    %v2339 = vadd.f32 %v2268, %v2338
    %2340 = vdwg.mxu0
    %2341 = vmatprep.subr.mxu0 %v630
    %2342 = vmatpush1.msra.mxu0 %v629
    %2343 = vmatprep.subr.mxu0 %v638
    %2344 = vmatpush1.msra.mxu0 %v637
    %2345 = vmatprep.subr.mxu0 %v646
    %2346 = vmatpush1.msra.mxu0 %v645
    %2347 = vmatprep.subr.mxu0 %v654
    %2348 = vmatpush1.msra.mxu0 %v653
    %2349 = vmatprep.subr.mxu0 %v662
    %2350 = vmatpush1.msra.mxu0 %v661
    %2351 = vmatprep.subr.mxu0 %v670
    %2352 = vmatpush1.msra.mxu0 %v669
    %2353 = vmatprep.subr.mxu0 %v678
    %2354 = vmatpush1.msra.mxu0 %v677
    %2355 = vmatprep.subr.mxu0 %v686
    %2356 = vmatpush1.msra.mxu0 %v685
    %2357 = vmatprep.subr.mxu0 %v694
    %2358 = vmatpush1.msra.mxu0 %v693
    %2359 = vmatprep.subr.mxu0 %v702
    %2360 = vmatpush1.msra.mxu0 %v701
    %2361 = vmatprep.subr.mxu0 %v710
    %2362 = vmatpush1.msra.mxu0 %v709
    %2363 = vmatprep.subr.mxu0 %v718
    %2364 = vmatpush1.msra.mxu0 %v717
    %2365 = vmatprep.subr.mxu0 %v726
    %2366 = vmatpush1.msra.mxu0 %v725
    %2367 = vmatprep.subr.mxu0 %v734
    %2368 = vmatpush1.msra.mxu0 %v733
    %2369 = vmatprep.subr.mxu0 %v742
    %2370 = vmatpush1.msra.mxu0 %v741
    %2371 = vmatprep.subr.mxu0 %v750
    %2372 = vmatpush1.msra.mxu0 %v749
    %2373 = vmatprep.subr.mxu0 %v758
    %2374 = vmatpush1.msra.mxu0 %v757
    %2375 = vmatprep.subr.mxu0 %v766
    %2376 = vmatpush1.msra.mxu0 %v765
    %2377 = vmatprep.subr.mxu0 %v774
    %2378 = vmatpush1.msra.mxu0 %v773
    %2379 = vmatprep.subr.mxu0 %v782
    %2380 = vmatpush1.msra.mxu0 %v781
    %2381 = vmatprep.subr.mxu0 %v790
    %2382 = vmatpush1.msra.mxu0 %v789
    %2383 = vmatprep.subr.mxu0 %v798
    %2384 = vmatpush1.msra.mxu0 %v797
    %2385 = vmatprep.subr.mxu0 %v806
    %2386 = vmatpush1.msra.mxu0 %v805
    %2387 = vmatprep.subr.mxu0 %v814
    %2388 = vmatpush1.msra.mxu0 %v813
    %2389 = vmatprep.subr.mxu0 %v822
    %2390 = vmatpush1.msra.mxu0 %v821
    %2391 = vmatprep.subr.mxu0 %v830
    %2392 = vmatpush1.msra.mxu0 %v829
    %2393 = vmatprep.subr.mxu0 %v838
    %2394 = vmatpush1.msra.mxu0 %v837
    %2395 = vmatprep.subr.mxu0 %v846
    %2396 = vmatpush1.msra.mxu0 %v845
    %2397 = vmatprep.subr.mxu0 %v854
    %2398 = vmatpush1.msra.mxu0 %v853
    %2399 = vmatprep.subr.mxu0 %v862
    %2400 = vmatpush1.msra.mxu0 %v861
    %2401 = vmatprep.subr.mxu0 %v870
    %2402 = vmatpush1.msra.mxu0 %v869
    %2403 = vmatprep.subr.mxu0 %v878
    %2404 = vmatpush1.msra.mxu0 %v877
    %2405 = vmatprep.mubr.f32.mxu0 %v2194
    %2406 = vmatmul.mubr.f32.gmra.mrb[0].mxu0 %v2193
    %v2407 = vpop.f32.mrb[0].mxu0
    %v2408 = vadd.f32 %v927, %v2407
    %v2409 = vpop.f32.mrb[0].mxu0
    %v2410 = vadd.f32 %v931, %v2409
    %2411 = vdwg.mxu0
    %2412 = vmatprep.subr.mxu0 %v886
    %2413 = vmatpush1.msra.mxu0 %v885
    %2414 = vmatprep.subr.mxu0 %v894
    %2415 = vmatpush1.msra.mxu0 %v893
    %2416 = vmatprep.subr.mxu0 0.0
    %2417 = vmatpush1.msra.mxu0 0.0
    %2418 = vmatprep.subr.mxu0 0.0
    %2419 = vmatpush1.msra.mxu0 0.0
    %2420 = vmatprep.subr.mxu0 0.0
    %2421 = vmatpush1.msra.mxu0 0.0
    %2422 = vmatprep.subr.mxu0 0.0
    %2423 = vmatpush1.msra.mxu0 0.0
    %2424 = vmatprep.subr.mxu0 0.0
    %2425 = vmatpush1.msra.mxu0 0.0
    %2426 = vmatprep.subr.mxu0 0.0
    %2427 = vmatpush1.msra.mxu0 0.0
    %2428 = vmatprep.subr.mxu0 0.0
    %2429 = vmatpush1.msra.mxu0 0.0
    %2430 = vmatprep.subr.mxu0 0.0
    %2431 = vmatpush1.msra.mxu0 0.0
    %2432 = vmatprep.subr.mxu0 0.0
    %2433 = vmatpush1.msra.mxu0 0.0
    %2434 = vmatprep.subr.mxu0 0.0
    %2435 = vmatpush1.msra.mxu0 0.0
    %2436 = vmatprep.subr.mxu0 0.0
    %2437 = vmatpush1.msra.mxu0 0.0
    %2438 = vmatprep.subr.mxu0 0.0
    %2439 = vmatpush1.msra.mxu0 0.0
    %2440 = vmatprep.subr.mxu0 0.0
    %2441 = vmatpush1.msra.mxu0 0.0
    %2442 = vmatprep.subr.mxu0 0.0
    %2443 = vmatpush1.msra.mxu0 0.0
    %2444 = vmatprep.subr.mxu0 0.0
    %2445 = vmatpush1.msra.mxu0 0.0
    %2446 = vmatprep.subr.mxu0 0.0
    %2447 = vmatpush1.msra.mxu0 0.0
    %2448 = vmatprep.subr.mxu0 0.0
    %2449 = vmatpush1.msra.mxu0 0.0
    %2450 = vmatprep.subr.mxu0 0.0
    %2451 = vmatpush1.msra.mxu0 0.0
    %2452 = vmatprep.subr.mxu0 0.0
    %2453 = vmatpush1.msra.mxu0 0.0
    %2454 = vmatprep.subr.mxu0 0.0
    %2455 = vmatpush1.msra.mxu0 0.0
    %2456 = vmatprep.subr.mxu0 0.0
    %2457 = vmatpush1.msra.mxu0 0.0
    %2458 = vmatprep.subr.mxu0 0.0
    %2459 = vmatpush1.msra.mxu0 0.0
    %2460 = vmatprep.subr.mxu0 0.0
    %2461 = vmatpush1.msra.mxu0 0.0
    %2462 = vmatprep.subr.mxu0 0.0
    %2463 = vmatpush1.msra.mxu0 0.0
    %2464 = vmatprep.subr.mxu0 0.0
    %2465 = vmatpush1.msra.mxu0 0.0
    %2466 = vmatprep.subr.mxu0 0.0
    %2467 = vmatpush1.msra.mxu0 0.0
    %2468 = vmatprep.subr.mxu0 0.0
    %2469 = vmatpush1.msra.mxu0 0.0
    %2470 = vmatprep.subr.mxu0 0.0
    %2471 = vmatpush1.msra.mxu0 0.0
    %2472 = vmatprep.subr.mxu0 0.0
    %2473 = vmatpush1.msra.mxu0 0.0
    %2474 = vmatprep.subr.mxu0 0.0
    %2475 = vmatpush1.msra.mxu0 0.0
    %2476 = vmatprep.mubr.f32.mxu0 0.0
    %2477 = vmatmul.mubr.f32.gmra.mrb[0].mxu0 %v2197
    %v2478 = vpop.f32.mrb[0].mxu0
    %v2479 = vadd.f32 %v2408, %v2478
    %v2480 = vpop.f32.mrb[0].mxu0
    %v2481 = vadd.f32 %v2410, %v2480
    %2482 = vdwg.mxu0
    %2483 = vmatprep.subr.mxu0 %v632
    %2484 = vmatpush1.msra.mxu0 %v631
    %2485 = vmatprep.subr.mxu0 %v640
    %2486 = vmatpush1.msra.mxu0 %v639
    %2487 = vmatprep.subr.mxu0 %v648
    %2488 = vmatpush1.msra.mxu0 %v647
    %2489 = vmatprep.subr.mxu0 %v656
    %2490 = vmatpush1.msra.mxu0 %v655
    %2491 = vmatprep.subr.mxu0 %v664
    %2492 = vmatpush1.msra.mxu0 %v663
    %2493 = vmatprep.subr.mxu0 %v672
    %2494 = vmatpush1.msra.mxu0 %v671
    %2495 = vmatprep.subr.mxu0 %v680
    %2496 = vmatpush1.msra.mxu0 %v679
    %2497 = vmatprep.subr.mxu0 %v688
    %2498 = vmatpush1.msra.mxu0 %v687
    %2499 = vmatprep.subr.mxu0 %v696
    %2500 = vmatpush1.msra.mxu0 %v695
    %2501 = vmatprep.subr.mxu0 %v704
    %2502 = vmatpush1.msra.mxu0 %v703
    %2503 = vmatprep.subr.mxu0 %v712
    %2504 = vmatpush1.msra.mxu0 %v711
    %2505 = vmatprep.subr.mxu0 %v720
    %2506 = vmatpush1.msra.mxu0 %v719
    %2507 = vmatprep.subr.mxu0 %v728
    %2508 = vmatpush1.msra.mxu0 %v727
    %2509 = vmatprep.subr.mxu0 %v736
    %2510 = vmatpush1.msra.mxu0 %v735
    %2511 = vmatprep.subr.mxu0 %v744
    %2512 = vmatpush1.msra.mxu0 %v743
    %2513 = vmatprep.subr.mxu0 %v752
    %2514 = vmatpush1.msra.mxu0 %v751
    %2515 = vmatprep.subr.mxu0 %v760
    %2516 = vmatpush1.msra.mxu0 %v759
    %2517 = vmatprep.subr.mxu0 %v768
    %2518 = vmatpush1.msra.mxu0 %v767
    %2519 = vmatprep.subr.mxu0 %v776
    %2520 = vmatpush1.msra.mxu0 %v775
    %2521 = vmatprep.subr.mxu0 %v784
    %2522 = vmatpush1.msra.mxu0 %v783
    %2523 = vmatprep.subr.mxu0 %v792
    %2524 = vmatpush1.msra.mxu0 %v791
    %2525 = vmatprep.subr.mxu0 %v800
    %2526 = vmatpush1.msra.mxu0 %v799
    %2527 = vmatprep.subr.mxu0 %v808
    %2528 = vmatpush1.msra.mxu0 %v807
    %2529 = vmatprep.subr.mxu0 %v816
    %2530 = vmatpush1.msra.mxu0 %v815
    %2531 = vmatprep.subr.mxu0 %v824
    %2532 = vmatpush1.msra.mxu0 %v823
    %2533 = vmatprep.subr.mxu0 %v832
    %2534 = vmatpush1.msra.mxu0 %v831
    %2535 = vmatprep.subr.mxu0 %v840
    %2536 = vmatpush1.msra.mxu0 %v839
    %2537 = vmatprep.subr.mxu0 %v848
    %2538 = vmatpush1.msra.mxu0 %v847
    %2539 = vmatprep.subr.mxu0 %v856
    %2540 = vmatpush1.msra.mxu0 %v855
    %2541 = vmatprep.subr.mxu0 %v864
    %2542 = vmatpush1.msra.mxu0 %v863
    %2543 = vmatprep.subr.mxu0 %v872
    %2544 = vmatpush1.msra.mxu0 %v871
    %2545 = vmatprep.subr.mxu0 %v880
    %2546 = vmatpush1.msra.mxu0 %v879
    %2547 = vmatprep.mubr.f32.mxu0 %v2194
    %2548 = vmatmul.mubr.f32.gmra.mrb[0].mxu0 %v2193
    %v2549 = vpop.f32.mrb[0].mxu0
    %v2550 = vadd.f32 %v935, %v2549
    %v2551 = vpop.f32.mrb[0].mxu0
    %v2552 = vadd.f32 %v939, %v2551
    %2553 = vdwg.mxu0
    %2554 = vmatprep.subr.mxu0 %v888
    %2555 = vmatpush1.msra.mxu0 %v887
    %2556 = vmatprep.subr.mxu0 %v896
    %2557 = vmatpush1.msra.mxu0 %v895
    %2558 = vmatprep.subr.mxu0 0.0
    %2559 = vmatpush1.msra.mxu0 0.0
    %2560 = vmatprep.subr.mxu0 0.0
    %2561 = vmatpush1.msra.mxu0 0.0
    %2562 = vmatprep.subr.mxu0 0.0
    %2563 = vmatpush1.msra.mxu0 0.0
    %2564 = vmatprep.subr.mxu0 0.0
    %2565 = vmatpush1.msra.mxu0 0.0
    %2566 = vmatprep.subr.mxu0 0.0
    %2567 = vmatpush1.msra.mxu0 0.0
    %2568 = vmatprep.subr.mxu0 0.0
    %2569 = vmatpush1.msra.mxu0 0.0
    %2570 = vmatprep.subr.mxu0 0.0
    %2571 = vmatpush1.msra.mxu0 0.0
    %2572 = vmatprep.subr.mxu0 0.0
    %2573 = vmatpush1.msra.mxu0 0.0
    %2574 = vmatprep.subr.mxu0 0.0
    %2575 = vmatpush1.msra.mxu0 0.0
    %2576 = vmatprep.subr.mxu0 0.0
    %2577 = vmatpush1.msra.mxu0 0.0
    %2578 = vmatprep.subr.mxu0 0.0
    %2579 = vmatpush1.msra.mxu0 0.0
    %2580 = vmatprep.subr.mxu0 0.0
    %2581 = vmatpush1.msra.mxu0 0.0
    %2582 = vmatprep.subr.mxu0 0.0
    %2583 = vmatpush1.msra.mxu0 0.0
    %2584 = vmatprep.subr.mxu0 0.0
    %2585 = vmatpush1.msra.mxu0 0.0
    %2586 = vmatprep.subr.mxu0 0.0
    %2587 = vmatpush1.msra.mxu0 0.0
    %2588 = vmatprep.subr.mxu0 0.0
    %2589 = vmatpush1.msra.mxu0 0.0
    %2590 = vmatprep.subr.mxu0 0.0
    %2591 = vmatpush1.msra.mxu0 0.0
    %2592 = vmatprep.subr.mxu0 0.0
    %2593 = vmatpush1.msra.mxu0 0.0
    %2594 = vmatprep.subr.mxu0 0.0
    %2595 = vmatpush1.msra.mxu0 0.0
    %2596 = vmatprep.subr.mxu0 0.0
    %2597 = vmatpush1.msra.mxu0 0.0
    %2598 = vmatprep.subr.mxu0 0.0
    %2599 = vmatpush1.msra.mxu0 0.0
    %2600 = vmatprep.subr.mxu0 0.0
    %2601 = vmatpush1.msra.mxu0 0.0
    %2602 = vmatprep.subr.mxu0 0.0
    %2603 = vmatpush1.msra.mxu0 0.0
    %2604 = vmatprep.subr.mxu0 0.0
    %2605 = vmatpush1.msra.mxu0 0.0
    %2606 = vmatprep.subr.mxu0 0.0
    %2607 = vmatpush1.msra.mxu0 0.0
    %2608 = vmatprep.subr.mxu0 0.0
    %2609 = vmatpush1.msra.mxu0 0.0
    %2610 = vmatprep.subr.mxu0 0.0
    %2611 = vmatpush1.msra.mxu0 0.0
    %2612 = vmatprep.subr.mxu0 0.0
    %2613 = vmatpush1.msra.mxu0 0.0
    %2614 = vmatprep.subr.mxu0 0.0
    %2615 = vmatpush1.msra.mxu0 0.0
    %2616 = vmatprep.subr.mxu0 0.0
    %2617 = vmatpush1.msra.mxu0 0.0
    %2618 = vmatprep.mubr.f32.mxu0 0.0
    %2619 = vmatmul.mubr.f32.gmra.mrb[0].mxu0 %v2197
    %v2620 = vpop.f32.mrb[0].mxu0
    %v2621 = vadd.f32 %v2550, %v2620
    %v2622 = vpop.f32.mrb[0].mxu0
    %v2623 = vadd.f32 %v2552, %v2622
    %2624 = vdwg.mxu0
    %2625 = vmatprep.subr.mxu0 %v634
    %2626 = vmatpush1.msra.mxu0 %v633
    %2627 = vmatprep.subr.mxu0 %v642
    %2628 = vmatpush1.msra.mxu0 %v641
    %2629 = vmatprep.subr.mxu0 %v650
    %2630 = vmatpush1.msra.mxu0 %v649
    %2631 = vmatprep.subr.mxu0 %v658
    %2632 = vmatpush1.msra.mxu0 %v657
    %2633 = vmatprep.subr.mxu0 %v666
    %2634 = vmatpush1.msra.mxu0 %v665
    %2635 = vmatprep.subr.mxu0 %v674
    %2636 = vmatpush1.msra.mxu0 %v673
    %2637 = vmatprep.subr.mxu0 %v682
    %2638 = vmatpush1.msra.mxu0 %v681
    %2639 = vmatprep.subr.mxu0 %v690
    %2640 = vmatpush1.msra.mxu0 %v689
    %2641 = vmatprep.subr.mxu0 %v698
    %2642 = vmatpush1.msra.mxu0 %v697
    %2643 = vmatprep.subr.mxu0 %v706
    %2644 = vmatpush1.msra.mxu0 %v705
    %2645 = vmatprep.subr.mxu0 %v714
    %2646 = vmatpush1.msra.mxu0 %v713
    %2647 = vmatprep.subr.mxu0 %v722
    %2648 = vmatpush1.msra.mxu0 %v721
    %2649 = vmatprep.subr.mxu0 %v730
    %2650 = vmatpush1.msra.mxu0 %v729
    %2651 = vmatprep.subr.mxu0 %v738
    %2652 = vmatpush1.msra.mxu0 %v737
    %2653 = vmatprep.subr.mxu0 %v746
    %2654 = vmatpush1.msra.mxu0 %v745
    %2655 = vmatprep.subr.mxu0 %v754
    %2656 = vmatpush1.msra.mxu0 %v753
    %2657 = vmatprep.subr.mxu0 %v762
    %2658 = vmatpush1.msra.mxu0 %v761
    %2659 = vmatprep.subr.mxu0 %v770
    %2660 = vmatpush1.msra.mxu0 %v769
    %2661 = vmatprep.subr.mxu0 %v778
    %2662 = vmatpush1.msra.mxu0 %v777
    %2663 = vmatprep.subr.mxu0 %v786
    %2664 = vmatpush1.msra.mxu0 %v785
    %2665 = vmatprep.subr.mxu0 %v794
    %2666 = vmatpush1.msra.mxu0 %v793
    %2667 = vmatprep.subr.mxu0 %v802
    %2668 = vmatpush1.msra.mxu0 %v801
    %2669 = vmatprep.subr.mxu0 %v810
    %2670 = vmatpush1.msra.mxu0 %v809
    %2671 = vmatprep.subr.mxu0 %v818
    %2672 = vmatpush1.msra.mxu0 %v817
    %2673 = vmatprep.subr.mxu0 %v826
    %2674 = vmatpush1.msra.mxu0 %v825
    %2675 = vmatprep.subr.mxu0 %v834
    %2676 = vmatpush1.msra.mxu0 %v833
    %2677 = vmatprep.subr.mxu0 %v842
    %2678 = vmatpush1.msra.mxu0 %v841
    %2679 = vmatprep.subr.mxu0 %v850
    %2680 = vmatpush1.msra.mxu0 %v849
    %2681 = vmatprep.subr.mxu0 %v858
    %2682 = vmatpush1.msra.mxu0 %v857
    %2683 = vmatprep.subr.mxu0 %v866
    %2684 = vmatpush1.msra.mxu0 %v865
    %2685 = vmatprep.subr.mxu0 %v874
    %2686 = vmatpush1.msra.mxu0 %v873
    %2687 = vmatprep.subr.mxu0 %v882
    %2688 = vmatpush1.msra.mxu0 %v881
    %2689 = vmatprep.mubr.f32.mxu0 %v2194
    %2690 = vmatmul.mubr.f32.gmra.mrb[0].mxu0 %v2193
    %v2691 = vpop.f32.mrb[0].mxu0
    %v2692 = vadd.f32 %v943, %v2691
    %v2693 = vpop.f32.mrb[0].mxu0
    %v2694 = vadd.f32 %v947, %v2693
    %2695 = vdwg.mxu0
    %2696 = vmatprep.subr.mxu0 %v890
    %2697 = vmatpush1.msra.mxu0 %v889
    %2698 = vmatprep.subr.mxu0 %v898
    %2699 = vmatpush1.msra.mxu0 %v897
    %2700 = vmatprep.subr.mxu0 0.0
    %2701 = vmatpush1.msra.mxu0 0.0
    %2702 = vmatprep.subr.mxu0 0.0
    %2703 = vmatpush1.msra.mxu0 0.0
    %2704 = vmatprep.subr.mxu0 0.0
    %2705 = vmatpush1.msra.mxu0 0.0
    %2706 = vmatprep.subr.mxu0 0.0
    %2707 = vmatpush1.msra.mxu0 0.0
    %2708 = vmatprep.subr.mxu0 0.0
    %2709 = vmatpush1.msra.mxu0 0.0
    %2710 = vmatprep.subr.mxu0 0.0
    %2711 = vmatpush1.msra.mxu0 0.0
    %2712 = vmatprep.subr.mxu0 0.0
    %2713 = vmatpush1.msra.mxu0 0.0
    %2714 = vmatprep.subr.mxu0 0.0
    %2715 = vmatpush1.msra.mxu0 0.0
    %2716 = vmatprep.subr.mxu0 0.0
    %2717 = vmatpush1.msra.mxu0 0.0
    %2718 = vmatprep.subr.mxu0 0.0
    %2719 = vmatpush1.msra.mxu0 0.0
    %2720 = vmatprep.subr.mxu0 0.0
    %2721 = vmatpush1.msra.mxu0 0.0
    %2722 = vmatprep.subr.mxu0 0.0
    %2723 = vmatpush1.msra.mxu0 0.0
    %2724 = vmatprep.subr.mxu0 0.0
    %2725 = vmatpush1.msra.mxu0 0.0
    %2726 = vmatprep.subr.mxu0 0.0
    %2727 = vmatpush1.msra.mxu0 0.0
    %2728 = vmatprep.subr.mxu0 0.0
    %2729 = vmatpush1.msra.mxu0 0.0
    %2730 = vmatprep.subr.mxu0 0.0
    %2731 = vmatpush1.msra.mxu0 0.0
    %2732 = vmatprep.subr.mxu0 0.0
    %2733 = vmatpush1.msra.mxu0 0.0
    %2734 = vmatprep.subr.mxu0 0.0
    %2735 = vmatpush1.msra.mxu0 0.0
    %2736 = vmatprep.subr.mxu0 0.0
    %2737 = vmatpush1.msra.mxu0 0.0
    %2738 = vmatprep.subr.mxu0 0.0
    %2739 = vmatpush1.msra.mxu0 0.0
    %2740 = vmatprep.subr.mxu0 0.0
    %2741 = vmatpush1.msra.mxu0 0.0
    %2742 = vmatprep.subr.mxu0 0.0
    %2743 = vmatpush1.msra.mxu0 0.0
    %2744 = vmatprep.subr.mxu0 0.0
    %2745 = vmatpush1.msra.mxu0 0.0
    %2746 = vmatprep.subr.mxu0 0.0
    %2747 = vmatpush1.msra.mxu0 0.0
    %2748 = vmatprep.subr.mxu0 0.0
    %2749 = vmatpush1.msra.mxu0 0.0
    %2750 = vmatprep.subr.mxu0 0.0
    %2751 = vmatpush1.msra.mxu0 0.0
    %2752 = vmatprep.subr.mxu0 0.0
    %2753 = vmatpush1.msra.mxu0 0.0
    %2754 = vmatprep.subr.mxu0 0.0
    %2755 = vmatpush1.msra.mxu0 0.0
    %2756 = vmatprep.subr.mxu0 0.0
    %2757 = vmatpush1.msra.mxu0 0.0
    %2758 = vmatprep.subr.mxu0 0.0
    %2759 = vmatpush1.msra.mxu0 0.0
    %2760 = vmatprep.mubr.f32.mxu0 0.0
    %2761 = vmatmul.mubr.f32.gmra.mrb[0].mxu0 %v2197
    %v2762 = vpop.f32.mrb[0].mxu0
    %v2763 = vadd.f32 %v2692, %v2762
    %v2764 = vpop.f32.mrb[0].mxu0
    %v2765 = vadd.f32 %v2694, %v2764
    %2766 = vdwg.mxu0
    %v2767 = vmul.f32 %v2337, 0.5
    %v2768 = vmul.f32 %v2339, 0.5
    %v2769 = vtanh.pop %v2767
    %v2770 = vtanh.pop %v2768
    %v2771 = vadd.f32 %v2769, 1.0
    %v2772 = vadd.f32 %v2770, 1.0
    %v2773 = vmul.f32 %v2771, 0.5
    %v2774 = vmul.f32 %v2772, 0.5
    %v2775 = vmul.f32 %v2479, 0.5
    %v2776 = vmul.f32 %v2481, 0.5
    %v2777 = vtanh.pop %v2775
    %v2778 = vtanh.pop %v2776
    %v2779 = vadd.f32 %v2777, 1.0
    %v2780 = vadd.f32 %v2778, 1.0
    %v2781 = vmul.f32 %v2779, 0.5
    %v2782 = vmul.f32 %v2780, 0.5
    %v2783 = vtanh.pop %v2621
    %v2784 = vtanh.pop %v2623
    %v2785 = vmul.f32 %v2763, 0.5
    %v2786 = vmul.f32 %v2765, 0.5
    %v2787 = vtanh.pop %v2785
    %v2788 = vtanh.pop %v2786
    %v2789 = vadd.f32 %v2787, 1.0
    %v2790 = vadd.f32 %v2788, 1.0
    %v2791 = vmul.f32 %v2789, 0.5
    %v2792 = vmul.f32 %v2790, 0.5
    %v2793 = vmul.f32 %v2781, %v2177
    %v2794 = vmul.f32 %v2782, %v2178
    %v2795 = vmul.f32 %v2773, %v2783
    %v2796 = vmul.f32 %v2774, %v2784
    %v2797 = vadd.f32 %v2793, %v2795
    %v2798 = vadd.f32 %v2794, %v2796
    %v2799 = vtanh.pop %v2797
    %v2800 = vtanh.pop %v2798
    %v2801 = vmul.f32 %v2791, %v2799
    %v2802 = vmul.f32 %v2792, %v2800
    %2803 = vst [vmem:[#allocation2] sm:$0xff] %v2801
    %2804 = vst [vmem:[#allocation2 + $0x8] sm:$0xff] %v2802
    %2805 = vrot.lane.b32.xlu0 %v626, 125
    %v2806 = vpop.permute.xlu0 %2805
    %2808 = vst.msk [vmem:[#allocation2 + $0x10] sm:$0xff] %vm904, %v2806
    %2809 = vrot.lane.b32.xlu0 %v626, 124
    %v2810 = vpop.permute.xlu0 %2809
    %2812 = vst.msk [vmem:[#allocation2 + $0x10] sm:$0xff] %vm910, %v2810
    %v2813 = vld [vmem:[#allocation2] sm:$0xff]
    %v2814 = vld [vmem:[#allocation2 + $0x8] sm:$0xff]
    %v2815 = vld [vmem:[#allocation2 + $0x10] sm:$0xff]
    %v2817 = vsel %vm902, %v2815, 0
    %2819 = vmatprep.subr.mxu0 %v628
    %2820 = vmatpush1.msra.mxu0 %v627
    %2821 = vmatprep.subr.mxu0 %v636
    %2822 = vmatpush1.msra.mxu0 %v635
    %2823 = vmatprep.subr.mxu0 %v644
    %2824 = vmatpush1.msra.mxu0 %v643
    %2825 = vmatprep.subr.mxu0 %v652
    %2826 = vmatpush1.msra.mxu0 %v651
    %2827 = vmatprep.subr.mxu0 %v660
    %2828 = vmatpush1.msra.mxu0 %v659
    %2829 = vmatprep.subr.mxu0 %v668
    %2830 = vmatpush1.msra.mxu0 %v667
    %2831 = vmatprep.subr.mxu0 %v676
    %2832 = vmatpush1.msra.mxu0 %v675
    %2833 = vmatprep.subr.mxu0 %v684
    %2834 = vmatpush1.msra.mxu0 %v683
    %2835 = vmatprep.subr.mxu0 %v692
    %2836 = vmatpush1.msra.mxu0 %v691
    %2837 = vmatprep.subr.mxu0 %v700
    %2838 = vmatpush1.msra.mxu0 %v699
    %2839 = vmatprep.subr.mxu0 %v708
    %2840 = vmatpush1.msra.mxu0 %v707
    %2841 = vmatprep.subr.mxu0 %v716
    %2842 = vmatpush1.msra.mxu0 %v715
    %2843 = vmatprep.subr.mxu0 %v724
    %2844 = vmatpush1.msra.mxu0 %v723
    %2845 = vmatprep.subr.mxu0 %v732
    %2846 = vmatpush1.msra.mxu0 %v731
    %2847 = vmatprep.subr.mxu0 %v740
    %2848 = vmatpush1.msra.mxu0 %v739
    %2849 = vmatprep.subr.mxu0 %v748
    %2850 = vmatpush1.msra.mxu0 %v747
    %2851 = vmatprep.subr.mxu0 %v756
    %2852 = vmatpush1.msra.mxu0 %v755
    %2853 = vmatprep.subr.mxu0 %v764
    %2854 = vmatpush1.msra.mxu0 %v763
    %2855 = vmatprep.subr.mxu0 %v772
    %2856 = vmatpush1.msra.mxu0 %v771
    %2857 = vmatprep.subr.mxu0 %v780
    %2858 = vmatpush1.msra.mxu0 %v779
    %2859 = vmatprep.subr.mxu0 %v788
    %2860 = vmatpush1.msra.mxu0 %v787
    %2861 = vmatprep.subr.mxu0 %v796
    %2862 = vmatpush1.msra.mxu0 %v795
    %2863 = vmatprep.subr.mxu0 %v804
    %2864 = vmatpush1.msra.mxu0 %v803
    %2865 = vmatprep.subr.mxu0 %v812
    %2866 = vmatpush1.msra.mxu0 %v811
    %2867 = vmatprep.subr.mxu0 %v820
    %2868 = vmatpush1.msra.mxu0 %v819
    %2869 = vmatprep.subr.mxu0 %v828
    %2870 = vmatpush1.msra.mxu0 %v827
    %2871 = vmatprep.subr.mxu0 %v836
    %2872 = vmatpush1.msra.mxu0 %v835
    %2873 = vmatprep.subr.mxu0 %v844
    %2874 = vmatpush1.msra.mxu0 %v843
    %2875 = vmatprep.subr.mxu0 %v852
    %2876 = vmatpush1.msra.mxu0 %v851
    %2877 = vmatprep.subr.mxu0 %v860
    %2878 = vmatpush1.msra.mxu0 %v859
    %2879 = vmatprep.subr.mxu0 %v868
    %2880 = vmatpush1.msra.mxu0 %v867
    %2881 = vmatprep.subr.mxu0 %v876
    %2882 = vmatpush1.msra.mxu0 %v875
    %2883 = vmatprep.mubr.f32.mxu0 %v2814
    %2884 = vmatmul.mubr.f32.gmra.mrb[0].mxu0 %v2813
    %v2885 = vpop.f32.mrb[0].mxu0
    %v2886 = vadd.f32 %v919, %v2885
    %v2887 = vpop.f32.mrb[0].mxu0
    %v2888 = vadd.f32 %v923, %v2887
    %2889 = vdwg.mxu0
    %2890 = vmatprep.subr.mxu0 %v884
    %2891 = vmatpush1.msra.mxu0 %v883
    %2892 = vmatprep.subr.mxu0 %v892
    %2893 = vmatpush1.msra.mxu0 %v891
    %2894 = vmatprep.subr.mxu0 0.0
    %2895 = vmatpush1.msra.mxu0 0.0
    %2896 = vmatprep.subr.mxu0 0.0
    %2897 = vmatpush1.msra.mxu0 0.0
    %2898 = vmatprep.subr.mxu0 0.0
    %2899 = vmatpush1.msra.mxu0 0.0
    %2900 = vmatprep.subr.mxu0 0.0
    %2901 = vmatpush1.msra.mxu0 0.0
    %2902 = vmatprep.subr.mxu0 0.0
    %2903 = vmatpush1.msra.mxu0 0.0
    %2904 = vmatprep.subr.mxu0 0.0
    %2905 = vmatpush1.msra.mxu0 0.0
    %2906 = vmatprep.subr.mxu0 0.0
    %2907 = vmatpush1.msra.mxu0 0.0
    %2908 = vmatprep.subr.mxu0 0.0
    %2909 = vmatpush1.msra.mxu0 0.0
    %2910 = vmatprep.subr.mxu0 0.0
    %2911 = vmatpush1.msra.mxu0 0.0
    %2912 = vmatprep.subr.mxu0 0.0
    %2913 = vmatpush1.msra.mxu0 0.0
    %2914 = vmatprep.subr.mxu0 0.0
    %2915 = vmatpush1.msra.mxu0 0.0
    %2916 = vmatprep.subr.mxu0 0.0
    %2917 = vmatpush1.msra.mxu0 0.0
    %2918 = vmatprep.subr.mxu0 0.0
    %2919 = vmatpush1.msra.mxu0 0.0
    %2920 = vmatprep.subr.mxu0 0.0
    %2921 = vmatpush1.msra.mxu0 0.0
    %2922 = vmatprep.subr.mxu0 0.0
    %2923 = vmatpush1.msra.mxu0 0.0
    %2924 = vmatprep.subr.mxu0 0.0
    %2925 = vmatpush1.msra.mxu0 0.0
    %2926 = vmatprep.subr.mxu0 0.0
    %2927 = vmatpush1.msra.mxu0 0.0
    %2928 = vmatprep.subr.mxu0 0.0
    %2929 = vmatpush1.msra.mxu0 0.0
    %2930 = vmatprep.subr.mxu0 0.0
    %2931 = vmatpush1.msra.mxu0 0.0
    %2932 = vmatprep.subr.mxu0 0.0
    %2933 = vmatpush1.msra.mxu0 0.0
    %2934 = vmatprep.subr.mxu0 0.0
    %2935 = vmatpush1.msra.mxu0 0.0
    %2936 = vmatprep.subr.mxu0 0.0
    %2937 = vmatpush1.msra.mxu0 0.0
    %2938 = vmatprep.subr.mxu0 0.0
    %2939 = vmatpush1.msra.mxu0 0.0
    %2940 = vmatprep.subr.mxu0 0.0
    %2941 = vmatpush1.msra.mxu0 0.0
    %2942 = vmatprep.subr.mxu0 0.0
    %2943 = vmatpush1.msra.mxu0 0.0
    %2944 = vmatprep.subr.mxu0 0.0
    %2945 = vmatpush1.msra.mxu0 0.0
    %2946 = vmatprep.subr.mxu0 0.0
    %2947 = vmatpush1.msra.mxu0 0.0
    %2948 = vmatprep.subr.mxu0 0.0
    %2949 = vmatpush1.msra.mxu0 0.0
    %2950 = vmatprep.subr.mxu0 0.0
    %2951 = vmatpush1.msra.mxu0 0.0
    %2952 = vmatprep.subr.mxu0 0.0
    %2953 = vmatpush1.msra.mxu0 0.0
    %2954 = vmatprep.mubr.f32.mxu0 0.0
    %2955 = vmatmul.mubr.f32.gmra.mrb[0].mxu0 %v2817
    %v2956 = vpop.f32.mrb[0].mxu0
    %v2957 = vadd.f32 %v2886, %v2956
    %v2958 = vpop.f32.mrb[0].mxu0
    %v2959 = vadd.f32 %v2888, %v2958
    %2960 = vdwg.mxu0
    %2961 = vmatprep.subr.mxu0 %v630
    %2962 = vmatpush1.msra.mxu0 %v629
    %2963 = vmatprep.subr.mxu0 %v638
    %2964 = vmatpush1.msra.mxu0 %v637
    %2965 = vmatprep.subr.mxu0 %v646
    %2966 = vmatpush1.msra.mxu0 %v645
    %2967 = vmatprep.subr.mxu0 %v654
    %2968 = vmatpush1.msra.mxu0 %v653
    %2969 = vmatprep.subr.mxu0 %v662
    %2970 = vmatpush1.msra.mxu0 %v661
    %2971 = vmatprep.subr.mxu0 %v670
    %2972 = vmatpush1.msra.mxu0 %v669
    %2973 = vmatprep.subr.mxu0 %v678
    %2974 = vmatpush1.msra.mxu0 %v677
    %2975 = vmatprep.subr.mxu0 %v686
    %2976 = vmatpush1.msra.mxu0 %v685
    %2977 = vmatprep.subr.mxu0 %v694
    %2978 = vmatpush1.msra.mxu0 %v693
    %2979 = vmatprep.subr.mxu0 %v702
    %2980 = vmatpush1.msra.mxu0 %v701
    %2981 = vmatprep.subr.mxu0 %v710
    %2982 = vmatpush1.msra.mxu0 %v709
    %2983 = vmatprep.subr.mxu0 %v718
    %2984 = vmatpush1.msra.mxu0 %v717
    %2985 = vmatprep.subr.mxu0 %v726
    %2986 = vmatpush1.msra.mxu0 %v725
    %2987 = vmatprep.subr.mxu0 %v734
    %2988 = vmatpush1.msra.mxu0 %v733
    %2989 = vmatprep.subr.mxu0 %v742
    %2990 = vmatpush1.msra.mxu0 %v741
    %2991 = vmatprep.subr.mxu0 %v750
    %2992 = vmatpush1.msra.mxu0 %v749
    %2993 = vmatprep.subr.mxu0 %v758
    %2994 = vmatpush1.msra.mxu0 %v757
    %2995 = vmatprep.subr.mxu0 %v766
    %2996 = vmatpush1.msra.mxu0 %v765
    %2997 = vmatprep.subr.mxu0 %v774
    %2998 = vmatpush1.msra.mxu0 %v773
    %2999 = vmatprep.subr.mxu0 %v782
    %3000 = vmatpush1.msra.mxu0 %v781
    %3001 = vmatprep.subr.mxu0 %v790
    %3002 = vmatpush1.msra.mxu0 %v789
    %3003 = vmatprep.subr.mxu0 %v798
    %3004 = vmatpush1.msra.mxu0 %v797
    %3005 = vmatprep.subr.mxu0 %v806
    %3006 = vmatpush1.msra.mxu0 %v805
    %3007 = vmatprep.subr.mxu0 %v814
    %3008 = vmatpush1.msra.mxu0 %v813
    %3009 = vmatprep.subr.mxu0 %v822
    %3010 = vmatpush1.msra.mxu0 %v821
    %3011 = vmatprep.subr.mxu0 %v830
    %3012 = vmatpush1.msra.mxu0 %v829
    %3013 = vmatprep.subr.mxu0 %v838
    %3014 = vmatpush1.msra.mxu0 %v837
    %3015 = vmatprep.subr.mxu0 %v846
    %3016 = vmatpush1.msra.mxu0 %v845
    %3017 = vmatprep.subr.mxu0 %v854
    %3018 = vmatpush1.msra.mxu0 %v853
    %3019 = vmatprep.subr.mxu0 %v862
    %3020 = vmatpush1.msra.mxu0 %v861
    %3021 = vmatprep.subr.mxu0 %v870
    %3022 = vmatpush1.msra.mxu0 %v869
    %3023 = vmatprep.subr.mxu0 %v878
    %3024 = vmatpush1.msra.mxu0 %v877
    %3025 = vmatprep.mubr.f32.mxu0 %v2814
    %3026 = vmatmul.mubr.f32.gmra.mrb[0].mxu0 %v2813
    %v3027 = vpop.f32.mrb[0].mxu0
    %v3028 = vadd.f32 %v927, %v3027
    %v3029 = vpop.f32.mrb[0].mxu0
    %v3030 = vadd.f32 %v931, %v3029
    %3031 = vdwg.mxu0
    %3032 = vmatprep.subr.mxu0 %v886
    %3033 = vmatpush1.msra.mxu0 %v885
    %3034 = vmatprep.subr.mxu0 %v894
    %3035 = vmatpush1.msra.mxu0 %v893
    %3036 = vmatprep.subr.mxu0 0.0
    %3037 = vmatpush1.msra.mxu0 0.0
    %3038 = vmatprep.subr.mxu0 0.0
    %3039 = vmatpush1.msra.mxu0 0.0
    %3040 = vmatprep.subr.mxu0 0.0
    %3041 = vmatpush1.msra.mxu0 0.0
    %3042 = vmatprep.subr.mxu0 0.0
    %3043 = vmatpush1.msra.mxu0 0.0
    %3044 = vmatprep.subr.mxu0 0.0
    %3045 = vmatpush1.msra.mxu0 0.0
    %3046 = vmatprep.subr.mxu0 0.0
    %3047 = vmatpush1.msra.mxu0 0.0
    %3048 = vmatprep.subr.mxu0 0.0
    %3049 = vmatpush1.msra.mxu0 0.0
    %3050 = vmatprep.subr.mxu0 0.0
    %3051 = vmatpush1.msra.mxu0 0.0
    %3052 = vmatprep.subr.mxu0 0.0
    %3053 = vmatpush1.msra.mxu0 0.0
    %3054 = vmatprep.subr.mxu0 0.0
    %3055 = vmatpush1.msra.mxu0 0.0
    %3056 = vmatprep.subr.mxu0 0.0
    %3057 = vmatpush1.msra.mxu0 0.0
    %3058 = vmatprep.subr.mxu0 0.0
    %3059 = vmatpush1.msra.mxu0 0.0
    %3060 = vmatprep.subr.mxu0 0.0
    %3061 = vmatpush1.msra.mxu0 0.0
    %3062 = vmatprep.subr.mxu0 0.0
    %3063 = vmatpush1.msra.mxu0 0.0
    %3064 = vmatprep.subr.mxu0 0.0
    %3065 = vmatpush1.msra.mxu0 0.0
    %3066 = vmatprep.subr.mxu0 0.0
    %3067 = vmatpush1.msra.mxu0 0.0
    %3068 = vmatprep.subr.mxu0 0.0
    %3069 = vmatpush1.msra.mxu0 0.0
    %3070 = vmatprep.subr.mxu0 0.0
    %3071 = vmatpush1.msra.mxu0 0.0
    %3072 = vmatprep.subr.mxu0 0.0
    %3073 = vmatpush1.msra.mxu0 0.0
    %3074 = vmatprep.subr.mxu0 0.0
    %3075 = vmatpush1.msra.mxu0 0.0
    %3076 = vmatprep.subr.mxu0 0.0
    %3077 = vmatpush1.msra.mxu0 0.0
    %3078 = vmatprep.subr.mxu0 0.0
    %3079 = vmatpush1.msra.mxu0 0.0
    %3080 = vmatprep.subr.mxu0 0.0
    %3081 = vmatpush1.msra.mxu0 0.0
    %3082 = vmatprep.subr.mxu0 0.0
    %3083 = vmatpush1.msra.mxu0 0.0
    %3084 = vmatprep.subr.mxu0 0.0
    %3085 = vmatpush1.msra.mxu0 0.0
    %3086 = vmatprep.subr.mxu0 0.0
    %3087 = vmatpush1.msra.mxu0 0.0
    %3088 = vmatprep.subr.mxu0 0.0
    %3089 = vmatpush1.msra.mxu0 0.0
    %3090 = vmatprep.subr.mxu0 0.0
    %3091 = vmatpush1.msra.mxu0 0.0
    %3092 = vmatprep.subr.mxu0 0.0
    %3093 = vmatpush1.msra.mxu0 0.0
    %3094 = vmatprep.subr.mxu0 0.0
    %3095 = vmatpush1.msra.mxu0 0.0
    %3096 = vmatprep.mubr.f32.mxu0 0.0
    %3097 = vmatmul.mubr.f32.gmra.mrb[0].mxu0 %v2817
    %v3098 = vpop.f32.mrb[0].mxu0
    %v3099 = vadd.f32 %v3028, %v3098
    %v3100 = vpop.f32.mrb[0].mxu0
    %v3101 = vadd.f32 %v3030, %v3100
    %3102 = vdwg.mxu0
    %3103 = vmatprep.subr.mxu0 %v632
    %3104 = vmatpush1.msra.mxu0 %v631
    %3105 = vmatprep.subr.mxu0 %v640
    %3106 = vmatpush1.msra.mxu0 %v639
    %3107 = vmatprep.subr.mxu0 %v648
    %3108 = vmatpush1.msra.mxu0 %v647
    %3109 = vmatprep.subr.mxu0 %v656
    %3110 = vmatpush1.msra.mxu0 %v655
    %3111 = vmatprep.subr.mxu0 %v664
    %3112 = vmatpush1.msra.mxu0 %v663
    %3113 = vmatprep.subr.mxu0 %v672
    %3114 = vmatpush1.msra.mxu0 %v671
    %3115 = vmatprep.subr.mxu0 %v680
    %3116 = vmatpush1.msra.mxu0 %v679
    %3117 = vmatprep.subr.mxu0 %v688
    %3118 = vmatpush1.msra.mxu0 %v687
    %3119 = vmatprep.subr.mxu0 %v696
    %3120 = vmatpush1.msra.mxu0 %v695
    %3121 = vmatprep.subr.mxu0 %v704
    %3122 = vmatpush1.msra.mxu0 %v703
    %3123 = vmatprep.subr.mxu0 %v712
    %3124 = vmatpush1.msra.mxu0 %v711
    %3125 = vmatprep.subr.mxu0 %v720
    %3126 = vmatpush1.msra.mxu0 %v719
    %3127 = vmatprep.subr.mxu0 %v728
    %3128 = vmatpush1.msra.mxu0 %v727
    %3129 = vmatprep.subr.mxu0 %v736
    %3130 = vmatpush1.msra.mxu0 %v735
    %3131 = vmatprep.subr.mxu0 %v744
    %3132 = vmatpush1.msra.mxu0 %v743
    %3133 = vmatprep.subr.mxu0 %v752
    %3134 = vmatpush1.msra.mxu0 %v751
    %3135 = vmatprep.subr.mxu0 %v760
    %3136 = vmatpush1.msra.mxu0 %v759
    %3137 = vmatprep.subr.mxu0 %v768
    %3138 = vmatpush1.msra.mxu0 %v767
    %3139 = vmatprep.subr.mxu0 %v776
    %3140 = vmatpush1.msra.mxu0 %v775
    %3141 = vmatprep.subr.mxu0 %v784
    %3142 = vmatpush1.msra.mxu0 %v783
    %3143 = vmatprep.subr.mxu0 %v792
    %3144 = vmatpush1.msra.mxu0 %v791
    %3145 = vmatprep.subr.mxu0 %v800
    %3146 = vmatpush1.msra.mxu0 %v799
    %3147 = vmatprep.subr.mxu0 %v808
    %3148 = vmatpush1.msra.mxu0 %v807
    %3149 = vmatprep.subr.mxu0 %v816
    %3150 = vmatpush1.msra.mxu0 %v815
    %3151 = vmatprep.subr.mxu0 %v824
    %3152 = vmatpush1.msra.mxu0 %v823
    %3153 = vmatprep.subr.mxu0 %v832
    %3154 = vmatpush1.msra.mxu0 %v831
    %3155 = vmatprep.subr.mxu0 %v840
    %3156 = vmatpush1.msra.mxu0 %v839
    %3157 = vmatprep.subr.mxu0 %v848
    %3158 = vmatpush1.msra.mxu0 %v847
    %3159 = vmatprep.subr.mxu0 %v856
    %3160 = vmatpush1.msra.mxu0 %v855
    %3161 = vmatprep.subr.mxu0 %v864
    %3162 = vmatpush1.msra.mxu0 %v863
    %3163 = vmatprep.subr.mxu0 %v872
    %3164 = vmatpush1.msra.mxu0 %v871
    %3165 = vmatprep.subr.mxu0 %v880
    %3166 = vmatpush1.msra.mxu0 %v879
    %3167 = vmatprep.mubr.f32.mxu0 %v2814
    %3168 = vmatmul.mubr.f32.gmra.mrb[0].mxu0 %v2813
    %v3169 = vpop.f32.mrb[0].mxu0
    %v3170 = vadd.f32 %v935, %v3169
    %v3171 = vpop.f32.mrb[0].mxu0
    %v3172 = vadd.f32 %v939, %v3171
    %3173 = vdwg.mxu0
    %3174 = vmatprep.subr.mxu0 %v888
    %3175 = vmatpush1.msra.mxu0 %v887
    %3176 = vmatprep.subr.mxu0 %v896
    %3177 = vmatpush1.msra.mxu0 %v895
    %3178 = vmatprep.subr.mxu0 0.0
    %3179 = vmatpush1.msra.mxu0 0.0
    %3180 = vmatprep.subr.mxu0 0.0
    %3181 = vmatpush1.msra.mxu0 0.0
    %3182 = vmatprep.subr.mxu0 0.0
    %3183 = vmatpush1.msra.mxu0 0.0
    %3184 = vmatprep.subr.mxu0 0.0
    %3185 = vmatpush1.msra.mxu0 0.0
    %3186 = vmatprep.subr.mxu0 0.0
    %3187 = vmatpush1.msra.mxu0 0.0
    %3188 = vmatprep.subr.mxu0 0.0
    %3189 = vmatpush1.msra.mxu0 0.0
    %3190 = vmatprep.subr.mxu0 0.0
    %3191 = vmatpush1.msra.mxu0 0.0
    %3192 = vmatprep.subr.mxu0 0.0
    %3193 = vmatpush1.msra.mxu0 0.0
    %3194 = vmatprep.subr.mxu0 0.0
    %3195 = vmatpush1.msra.mxu0 0.0
    %3196 = vmatprep.subr.mxu0 0.0
    %3197 = vmatpush1.msra.mxu0 0.0
    %3198 = vmatprep.subr.mxu0 0.0
    %3199 = vmatpush1.msra.mxu0 0.0
    %3200 = vmatprep.subr.mxu0 0.0
    %3201 = vmatpush1.msra.mxu0 0.0
    %3202 = vmatprep.subr.mxu0 0.0
    %3203 = vmatpush1.msra.mxu0 0.0
    %3204 = vmatprep.subr.mxu0 0.0
    %3205 = vmatpush1.msra.mxu0 0.0
    %3206 = vmatprep.subr.mxu0 0.0
    %3207 = vmatpush1.msra.mxu0 0.0
    %3208 = vmatprep.subr.mxu0 0.0
    %3209 = vmatpush1.msra.mxu0 0.0
    %3210 = vmatprep.subr.mxu0 0.0
    %3211 = vmatpush1.msra.mxu0 0.0
    %3212 = vmatprep.subr.mxu0 0.0
    %3213 = vmatpush1.msra.mxu0 0.0
    %3214 = vmatprep.subr.mxu0 0.0
    %3215 = vmatpush1.msra.mxu0 0.0
    %3216 = vmatprep.subr.mxu0 0.0
    %3217 = vmatpush1.msra.mxu0 0.0
    %3218 = vmatprep.subr.mxu0 0.0
    %3219 = vmatpush1.msra.mxu0 0.0
    %3220 = vmatprep.subr.mxu0 0.0
    %3221 = vmatpush1.msra.mxu0 0.0
    %3222 = vmatprep.subr.mxu0 0.0
    %3223 = vmatpush1.msra.mxu0 0.0
    %3224 = vmatprep.subr.mxu0 0.0
    %3225 = vmatpush1.msra.mxu0 0.0
    %3226 = vmatprep.subr.mxu0 0.0
    %3227 = vmatpush1.msra.mxu0 0.0
    %3228 = vmatprep.subr.mxu0 0.0
    %3229 = vmatpush1.msra.mxu0 0.0
    %3230 = vmatprep.subr.mxu0 0.0
    %3231 = vmatpush1.msra.mxu0 0.0
    %3232 = vmatprep.subr.mxu0 0.0
    %3233 = vmatpush1.msra.mxu0 0.0
    %3234 = vmatprep.subr.mxu0 0.0
    %3235 = vmatpush1.msra.mxu0 0.0
    %3236 = vmatprep.subr.mxu0 0.0
    %3237 = vmatpush1.msra.mxu0 0.0
    %3238 = vmatprep.mubr.f32.mxu0 0.0
    %3239 = vmatmul.mubr.f32.gmra.mrb[0].mxu0 %v2817
    %v3240 = vpop.f32.mrb[0].mxu0
    %v3241 = vadd.f32 %v3170, %v3240
    %v3242 = vpop.f32.mrb[0].mxu0
    %v3243 = vadd.f32 %v3172, %v3242
    %3244 = vdwg.mxu0
    %3245 = vmatprep.subr.mxu0 %v634
    %3246 = vmatpush1.msra.mxu0 %v633
    %3247 = vmatprep.subr.mxu0 %v642
    %3248 = vmatpush1.msra.mxu0 %v641
    %3249 = vmatprep.subr.mxu0 %v650
    %3250 = vmatpush1.msra.mxu0 %v649
    %3251 = vmatprep.subr.mxu0 %v658
    %3252 = vmatpush1.msra.mxu0 %v657
    %3253 = vmatprep.subr.mxu0 %v666
    %3254 = vmatpush1.msra.mxu0 %v665
    %3255 = vmatprep.subr.mxu0 %v674
    %3256 = vmatpush1.msra.mxu0 %v673
    %3257 = vmatprep.subr.mxu0 %v682
    %3258 = vmatpush1.msra.mxu0 %v681
    %3259 = vmatprep.subr.mxu0 %v690
    %3260 = vmatpush1.msra.mxu0 %v689
    %3261 = vmatprep.subr.mxu0 %v698
    %3262 = vmatpush1.msra.mxu0 %v697
    %3263 = vmatprep.subr.mxu0 %v706
    %3264 = vmatpush1.msra.mxu0 %v705
    %3265 = vmatprep.subr.mxu0 %v714
    %3266 = vmatpush1.msra.mxu0 %v713
    %3267 = vmatprep.subr.mxu0 %v722
    %3268 = vmatpush1.msra.mxu0 %v721
    %3269 = vmatprep.subr.mxu0 %v730
    %3270 = vmatpush1.msra.mxu0 %v729
    %3271 = vmatprep.subr.mxu0 %v738
    %3272 = vmatpush1.msra.mxu0 %v737
    %3273 = vmatprep.subr.mxu0 %v746
    %3274 = vmatpush1.msra.mxu0 %v745
    %3275 = vmatprep.subr.mxu0 %v754
    %3276 = vmatpush1.msra.mxu0 %v753
    %3277 = vmatprep.subr.mxu0 %v762
    %3278 = vmatpush1.msra.mxu0 %v761
    %3279 = vmatprep.subr.mxu0 %v770
    %3280 = vmatpush1.msra.mxu0 %v769
    %3281 = vmatprep.subr.mxu0 %v778
    %3282 = vmatpush1.msra.mxu0 %v777
    %3283 = vmatprep.subr.mxu0 %v786
    %3284 = vmatpush1.msra.mxu0 %v785
    %3285 = vmatprep.subr.mxu0 %v794
    %3286 = vmatpush1.msra.mxu0 %v793
    %3287 = vmatprep.subr.mxu0 %v802
    %3288 = vmatpush1.msra.mxu0 %v801
    %3289 = vmatprep.subr.mxu0 %v810
    %3290 = vmatpush1.msra.mxu0 %v809
    %3291 = vmatprep.subr.mxu0 %v818
    %3292 = vmatpush1.msra.mxu0 %v817
    %3293 = vmatprep.subr.mxu0 %v826
    %3294 = vmatpush1.msra.mxu0 %v825
    %3295 = vmatprep.subr.mxu0 %v834
    %3296 = vmatpush1.msra.mxu0 %v833
    %3297 = vmatprep.subr.mxu0 %v842
    %3298 = vmatpush1.msra.mxu0 %v841
    %3299 = vmatprep.subr.mxu0 %v850
    %3300 = vmatpush1.msra.mxu0 %v849
    %3301 = vmatprep.subr.mxu0 %v858
    %3302 = vmatpush1.msra.mxu0 %v857
    %3303 = vmatprep.subr.mxu0 %v866
    %3304 = vmatpush1.msra.mxu0 %v865
    %3305 = vmatprep.subr.mxu0 %v874
    %3306 = vmatpush1.msra.mxu0 %v873
    %3307 = vmatprep.subr.mxu0 %v882
    %3308 = vmatpush1.msra.mxu0 %v881
    %3309 = vmatprep.mubr.f32.mxu0 %v2814
    %3310 = vmatmul.mubr.f32.gmra.mrb[0].mxu0 %v2813
    %v3311 = vpop.f32.mrb[0].mxu0
    %v3312 = vadd.f32 %v943, %v3311
    %v3313 = vpop.f32.mrb[0].mxu0
    %v3314 = vadd.f32 %v947, %v3313
    %3315 = vdwg.mxu0
    %3316 = vmatprep.subr.mxu0 %v890
    %3317 = vmatpush1.msra.mxu0 %v889
    %3318 = vmatprep.subr.mxu0 %v898
    %3319 = vmatpush1.msra.mxu0 %v897
    %3320 = vmatprep.subr.mxu0 0.0
    %3321 = vmatpush1.msra.mxu0 0.0
    %3322 = vmatprep.subr.mxu0 0.0
    %3323 = vmatpush1.msra.mxu0 0.0
    %3324 = vmatprep.subr.mxu0 0.0
    %3325 = vmatpush1.msra.mxu0 0.0
    %3326 = vmatprep.subr.mxu0 0.0
    %3327 = vmatpush1.msra.mxu0 0.0
    %3328 = vmatprep.subr.mxu0 0.0
    %3329 = vmatpush1.msra.mxu0 0.0
    %3330 = vmatprep.subr.mxu0 0.0
    %3331 = vmatpush1.msra.mxu0 0.0
    %3332 = vmatprep.subr.mxu0 0.0
    %3333 = vmatpush1.msra.mxu0 0.0
    %3334 = vmatprep.subr.mxu0 0.0
    %3335 = vmatpush1.msra.mxu0 0.0
    %3336 = vmatprep.subr.mxu0 0.0
    %3337 = vmatpush1.msra.mxu0 0.0
    %3338 = vmatprep.subr.mxu0 0.0
    %3339 = vmatpush1.msra.mxu0 0.0
    %3340 = vmatprep.subr.mxu0 0.0
    %3341 = vmatpush1.msra.mxu0 0.0
    %3342 = vmatprep.subr.mxu0 0.0
    %3343 = vmatpush1.msra.mxu0 0.0
    %3344 = vmatprep.subr.mxu0 0.0
    %3345 = vmatpush1.msra.mxu0 0.0
    %3346 = vmatprep.subr.mxu0 0.0
    %3347 = vmatpush1.msra.mxu0 0.0
    %3348 = vmatprep.subr.mxu0 0.0
    %3349 = vmatpush1.msra.mxu0 0.0
    %3350 = vmatprep.subr.mxu0 0.0
    %3351 = vmatpush1.msra.mxu0 0.0
    %3352 = vmatprep.subr.mxu0 0.0
    %3353 = vmatpush1.msra.mxu0 0.0
    %3354 = vmatprep.subr.mxu0 0.0
    %3355 = vmatpush1.msra.mxu0 0.0
    %3356 = vmatprep.subr.mxu0 0.0
    %3357 = vmatpush1.msra.mxu0 0.0
    %3358 = vmatprep.subr.mxu0 0.0
    %3359 = vmatpush1.msra.mxu0 0.0
    %3360 = vmatprep.subr.mxu0 0.0
    %3361 = vmatpush1.msra.mxu0 0.0
    %3362 = vmatprep.subr.mxu0 0.0
    %3363 = vmatpush1.msra.mxu0 0.0
    %3364 = vmatprep.subr.mxu0 0.0
    %3365 = vmatpush1.msra.mxu0 0.0
    %3366 = vmatprep.subr.mxu0 0.0
    %3367 = vmatpush1.msra.mxu0 0.0
    %3368 = vmatprep.subr.mxu0 0.0
    %3369 = vmatpush1.msra.mxu0 0.0
    %3370 = vmatprep.subr.mxu0 0.0
    %3371 = vmatpush1.msra.mxu0 0.0
    %3372 = vmatprep.subr.mxu0 0.0
    %3373 = vmatpush1.msra.mxu0 0.0
    %3374 = vmatprep.subr.mxu0 0.0
    %3375 = vmatpush1.msra.mxu0 0.0
    %3376 = vmatprep.subr.mxu0 0.0
    %3377 = vmatpush1.msra.mxu0 0.0
    %3378 = vmatprep.subr.mxu0 0.0
    %3379 = vmatpush1.msra.mxu0 0.0
    %3380 = vmatprep.mubr.f32.mxu0 0.0
    %3381 = vmatmul.mubr.f32.gmra.mrb[0].mxu0 %v2817
    %v3382 = vpop.f32.mrb[0].mxu0
    %v3383 = vadd.f32 %v3312, %v3382
    %v3384 = vpop.f32.mrb[0].mxu0
    %v3385 = vadd.f32 %v3314, %v3384
    %3386 = vdwg.mxu0
    %v3387 = vmul.f32 %v2957, 0.5
    %v3388 = vmul.f32 %v2959, 0.5
    %v3389 = vtanh.pop %v3387
    %v3390 = vtanh.pop %v3388
    %v3391 = vadd.f32 %v3389, 1.0
    %v3392 = vadd.f32 %v3390, 1.0
    %v3393 = vmul.f32 %v3391, 0.5
    %v3394 = vmul.f32 %v3392, 0.5
    %v3395 = vmul.f32 %v3099, 0.5
    %v3396 = vmul.f32 %v3101, 0.5
    %v3397 = vtanh.pop %v3395
    %v3398 = vtanh.pop %v3396
    %v3399 = vadd.f32 %v3397, 1.0
    %v3400 = vadd.f32 %v3398, 1.0
    %v3401 = vmul.f32 %v3399, 0.5
    %v3402 = vmul.f32 %v3400, 0.5
    %v3403 = vtanh.pop %v3241
    %v3404 = vtanh.pop %v3243
    %v3405 = vmul.f32 %v3383, 0.5
    %v3406 = vmul.f32 %v3385, 0.5
    %v3407 = vtanh.pop %v3405
    %v3408 = vtanh.pop %v3406
    %v3409 = vadd.f32 %v3407, 1.0
    %v3410 = vadd.f32 %v3408, 1.0
    %v3411 = vmul.f32 %v3409, 0.5
    %v3412 = vmul.f32 %v3410, 0.5
    %v3413 = vmul.f32 %v3401, %v2797
    %v3414 = vmul.f32 %v3402, %v2798
    %v3415 = vmul.f32 %v3393, %v3403
    %v3416 = vmul.f32 %v3394, %v3404
    %v3417 = vadd.f32 %v3413, %v3415
    %v3418 = vadd.f32 %v3414, %v3416
    %v3419 = vtanh.pop %v3417
    %v3420 = vtanh.pop %v3418
    %v3421 = vmul.f32 %v3411, %v3419
    %v3422 = vmul.f32 %v3412, %v3420
    %3423 = vst [vmem:[#allocation2] sm:$0xff] %v3421
    %3424 = vst [vmem:[#allocation2 + $0x8] sm:$0xff] %v3422
    %3425 = vst.msk [vmem:[#allocation2 + $0x10] sm:$0xff] %vm904, %v2810
    %3426 = vst.msk [vmem:[#allocation2 + $0x10] sm:$0xff] %vm910, %v2806
    %v3427 = vld [vmem:[#allocation2] sm:$0xff]
    %v3428 = vld [vmem:[#allocation2 + $0x8] sm:$0xff]
    %v3429 = vld [vmem:[#allocation2 + $0x10] sm:$0xff]
    %v3431 = vsel %vm902, %v3429, 0
    %3433 = vmatprep.subr.mxu0 %v628
    %3434 = vmatpush1.msra.mxu0 %v627
    %3435 = vmatprep.subr.mxu0 %v636
    %3436 = vmatpush1.msra.mxu0 %v635
    %3437 = vmatprep.subr.mxu0 %v644
    %3438 = vmatpush1.msra.mxu0 %v643
    %3439 = vmatprep.subr.mxu0 %v652
    %3440 = vmatpush1.msra.mxu0 %v651
    %3441 = vmatprep.subr.mxu0 %v660
    %3442 = vmatpush1.msra.mxu0 %v659
    %3443 = vmatprep.subr.mxu0 %v668
    %3444 = vmatpush1.msra.mxu0 %v667
    %3445 = vmatprep.subr.mxu0 %v676
    %3446 = vmatpush1.msra.mxu0 %v675
    %3447 = vmatprep.subr.mxu0 %v684
    %3448 = vmatpush1.msra.mxu0 %v683
    %3449 = vmatprep.subr.mxu0 %v692
    %3450 = vmatpush1.msra.mxu0 %v691
    %3451 = vmatprep.subr.mxu0 %v700
    %3452 = vmatpush1.msra.mxu0 %v699
    %3453 = vmatprep.subr.mxu0 %v708
    %3454 = vmatpush1.msra.mxu0 %v707
    %3455 = vmatprep.subr.mxu0 %v716
    %3456 = vmatpush1.msra.mxu0 %v715
    %3457 = vmatprep.subr.mxu0 %v724
    %3458 = vmatpush1.msra.mxu0 %v723
    %3459 = vmatprep.subr.mxu0 %v732
    %3460 = vmatpush1.msra.mxu0 %v731
    %3461 = vmatprep.subr.mxu0 %v740
    %3462 = vmatpush1.msra.mxu0 %v739
    %3463 = vmatprep.subr.mxu0 %v748
    %3464 = vmatpush1.msra.mxu0 %v747
    %3465 = vmatprep.subr.mxu0 %v756
    %3466 = vmatpush1.msra.mxu0 %v755
    %3467 = vmatprep.subr.mxu0 %v764
    %3468 = vmatpush1.msra.mxu0 %v763
    %3469 = vmatprep.subr.mxu0 %v772
    %3470 = vmatpush1.msra.mxu0 %v771
    %3471 = vmatprep.subr.mxu0 %v780
    %3472 = vmatpush1.msra.mxu0 %v779
    %3473 = vmatprep.subr.mxu0 %v788
    %3474 = vmatpush1.msra.mxu0 %v787
    %3475 = vmatprep.subr.mxu0 %v796
    %3476 = vmatpush1.msra.mxu0 %v795
    %3477 = vmatprep.subr.mxu0 %v804
    %3478 = vmatpush1.msra.mxu0 %v803
    %3479 = vmatprep.subr.mxu0 %v812
    %3480 = vmatpush1.msra.mxu0 %v811
    %3481 = vmatprep.subr.mxu0 %v820
    %3482 = vmatpush1.msra.mxu0 %v819
    %3483 = vmatprep.subr.mxu0 %v828
    %3484 = vmatpush1.msra.mxu0 %v827
    %3485 = vmatprep.subr.mxu0 %v836
    %3486 = vmatpush1.msra.mxu0 %v835
    %3487 = vmatprep.subr.mxu0 %v844
    %3488 = vmatpush1.msra.mxu0 %v843
    %3489 = vmatprep.subr.mxu0 %v852
    %3490 = vmatpush1.msra.mxu0 %v851
    %3491 = vmatprep.subr.mxu0 %v860
    %3492 = vmatpush1.msra.mxu0 %v859
    %3493 = vmatprep.subr.mxu0 %v868
    %3494 = vmatpush1.msra.mxu0 %v867
    %3495 = vmatprep.subr.mxu0 %v876
    %3496 = vmatpush1.msra.mxu0 %v875
    %3497 = vmatprep.mubr.f32.mxu0 %v3428
    %3498 = vmatmul.mubr.f32.gmra.mrb[0].mxu0 %v3427
    %v3499 = vpop.f32.mrb[0].mxu0
    %v3500 = vadd.f32 %v919, %v3499
    %v3501 = vpop.f32.mrb[0].mxu0
    %v3502 = vadd.f32 %v923, %v3501
    %3503 = vdwg.mxu0
    %3504 = vmatprep.subr.mxu0 %v884
    %3505 = vmatpush1.msra.mxu0 %v883
    %3506 = vmatprep.subr.mxu0 %v892
    %3507 = vmatpush1.msra.mxu0 %v891
    %3508 = vmatprep.subr.mxu0 0.0
    %3509 = vmatpush1.msra.mxu0 0.0
    %3510 = vmatprep.subr.mxu0 0.0
    %3511 = vmatpush1.msra.mxu0 0.0
    %3512 = vmatprep.subr.mxu0 0.0
    %3513 = vmatpush1.msra.mxu0 0.0
    %3514 = vmatprep.subr.mxu0 0.0
    %3515 = vmatpush1.msra.mxu0 0.0
    %3516 = vmatprep.subr.mxu0 0.0
    %3517 = vmatpush1.msra.mxu0 0.0
    %3518 = vmatprep.subr.mxu0 0.0
    %3519 = vmatpush1.msra.mxu0 0.0
    %3520 = vmatprep.subr.mxu0 0.0
    %3521 = vmatpush1.msra.mxu0 0.0
    %3522 = vmatprep.subr.mxu0 0.0
    %3523 = vmatpush1.msra.mxu0 0.0
    %3524 = vmatprep.subr.mxu0 0.0
    %3525 = vmatpush1.msra.mxu0 0.0
    %3526 = vmatprep.subr.mxu0 0.0
    %3527 = vmatpush1.msra.mxu0 0.0
    %3528 = vmatprep.subr.mxu0 0.0
    %3529 = vmatpush1.msra.mxu0 0.0
    %3530 = vmatprep.subr.mxu0 0.0
    %3531 = vmatpush1.msra.mxu0 0.0
    %3532 = vmatprep.subr.mxu0 0.0
    %3533 = vmatpush1.msra.mxu0 0.0
    %3534 = vmatprep.subr.mxu0 0.0
    %3535 = vmatpush1.msra.mxu0 0.0
    %3536 = vmatprep.subr.mxu0 0.0
    %3537 = vmatpush1.msra.mxu0 0.0
    %3538 = vmatprep.subr.mxu0 0.0
    %3539 = vmatpush1.msra.mxu0 0.0
    %3540 = vmatprep.subr.mxu0 0.0
    %3541 = vmatpush1.msra.mxu0 0.0
    %3542 = vmatprep.subr.mxu0 0.0
    %3543 = vmatpush1.msra.mxu0 0.0
    %3544 = vmatprep.subr.mxu0 0.0
    %3545 = vmatpush1.msra.mxu0 0.0
    %3546 = vmatprep.subr.mxu0 0.0
    %3547 = vmatpush1.msra.mxu0 0.0
    %3548 = vmatprep.subr.mxu0 0.0
    %3549 = vmatpush1.msra.mxu0 0.0
    %3550 = vmatprep.subr.mxu0 0.0
    %3551 = vmatpush1.msra.mxu0 0.0
    %3552 = vmatprep.subr.mxu0 0.0
    %3553 = vmatpush1.msra.mxu0 0.0
    %3554 = vmatprep.subr.mxu0 0.0
    %3555 = vmatpush1.msra.mxu0 0.0
    %3556 = vmatprep.subr.mxu0 0.0
    %3557 = vmatpush1.msra.mxu0 0.0
    %3558 = vmatprep.subr.mxu0 0.0
    %3559 = vmatpush1.msra.mxu0 0.0
    %3560 = vmatprep.subr.mxu0 0.0
    %3561 = vmatpush1.msra.mxu0 0.0
    %3562 = vmatprep.subr.mxu0 0.0
    %3563 = vmatpush1.msra.mxu0 0.0
    %3564 = vmatprep.subr.mxu0 0.0
    %3565 = vmatpush1.msra.mxu0 0.0
    %3566 = vmatprep.subr.mxu0 0.0
    %3567 = vmatpush1.msra.mxu0 0.0
    %3568 = vmatprep.mubr.f32.mxu0 0.0
    %3569 = vmatmul.mubr.f32.gmra.mrb[0].mxu0 %v3431
    %v3570 = vpop.f32.mrb[0].mxu0
    %v3571 = vadd.f32 %v3500, %v3570
    %v3572 = vpop.f32.mrb[0].mxu0
    %v3573 = vadd.f32 %v3502, %v3572
    %3574 = vdwg.mxu0
    %3575 = vmatprep.subr.mxu0 %v630
    %3576 = vmatpush1.msra.mxu0 %v629
    %3577 = vmatprep.subr.mxu0 %v638
    %3578 = vmatpush1.msra.mxu0 %v637
    %3579 = vmatprep.subr.mxu0 %v646
    %3580 = vmatpush1.msra.mxu0 %v645
    %3581 = vmatprep.subr.mxu0 %v654
    %3582 = vmatpush1.msra.mxu0 %v653
    %3583 = vmatprep.subr.mxu0 %v662
    %3584 = vmatpush1.msra.mxu0 %v661
    %3585 = vmatprep.subr.mxu0 %v670
    %3586 = vmatpush1.msra.mxu0 %v669
    %3587 = vmatprep.subr.mxu0 %v678
    %3588 = vmatpush1.msra.mxu0 %v677
    %3589 = vmatprep.subr.mxu0 %v686
    %3590 = vmatpush1.msra.mxu0 %v685
    %3591 = vmatprep.subr.mxu0 %v694
    %3592 = vmatpush1.msra.mxu0 %v693
    %3593 = vmatprep.subr.mxu0 %v702
    %3594 = vmatpush1.msra.mxu0 %v701
    %3595 = vmatprep.subr.mxu0 %v710
    %3596 = vmatpush1.msra.mxu0 %v709
    %3597 = vmatprep.subr.mxu0 %v718
    %3598 = vmatpush1.msra.mxu0 %v717
    %3599 = vmatprep.subr.mxu0 %v726
    %3600 = vmatpush1.msra.mxu0 %v725
    %3601 = vmatprep.subr.mxu0 %v734
    %3602 = vmatpush1.msra.mxu0 %v733
    %3603 = vmatprep.subr.mxu0 %v742
    %3604 = vmatpush1.msra.mxu0 %v741
    %3605 = vmatprep.subr.mxu0 %v750
    %3606 = vmatpush1.msra.mxu0 %v749
    %3607 = vmatprep.subr.mxu0 %v758
    %3608 = vmatpush1.msra.mxu0 %v757
    %3609 = vmatprep.subr.mxu0 %v766
    %3610 = vmatpush1.msra.mxu0 %v765
    %3611 = vmatprep.subr.mxu0 %v774
    %3612 = vmatpush1.msra.mxu0 %v773
    %3613 = vmatprep.subr.mxu0 %v782
    %3614 = vmatpush1.msra.mxu0 %v781
    %3615 = vmatprep.subr.mxu0 %v790
    %3616 = vmatpush1.msra.mxu0 %v789
    %3617 = vmatprep.subr.mxu0 %v798
    %3618 = vmatpush1.msra.mxu0 %v797
    %3619 = vmatprep.subr.mxu0 %v806
    %3620 = vmatpush1.msra.mxu0 %v805
    %3621 = vmatprep.subr.mxu0 %v814
    %3622 = vmatpush1.msra.mxu0 %v813
    %3623 = vmatprep.subr.mxu0 %v822
    %3624 = vmatpush1.msra.mxu0 %v821
    %3625 = vmatprep.subr.mxu0 %v830
    %3626 = vmatpush1.msra.mxu0 %v829
    %3627 = vmatprep.subr.mxu0 %v838
    %3628 = vmatpush1.msra.mxu0 %v837
    %3629 = vmatprep.subr.mxu0 %v846
    %3630 = vmatpush1.msra.mxu0 %v845
    %3631 = vmatprep.subr.mxu0 %v854
    %3632 = vmatpush1.msra.mxu0 %v853
    %3633 = vmatprep.subr.mxu0 %v862
    %3634 = vmatpush1.msra.mxu0 %v861
    %3635 = vmatprep.subr.mxu0 %v870
    %3636 = vmatpush1.msra.mxu0 %v869
    %3637 = vmatprep.subr.mxu0 %v878
    %3638 = vmatpush1.msra.mxu0 %v877
    %3639 = vmatprep.mubr.f32.mxu0 %v3428
    %3640 = vmatmul.mubr.f32.gmra.mrb[0].mxu0 %v3427
    %v3641 = vpop.f32.mrb[0].mxu0
    %v3642 = vadd.f32 %v927, %v3641
    %v3643 = vpop.f32.mrb[0].mxu0
    %v3644 = vadd.f32 %v931, %v3643
    %3645 = vdwg.mxu0
    %3646 = vmatprep.subr.mxu0 %v886
    %3647 = vmatpush1.msra.mxu0 %v885
    %3648 = vmatprep.subr.mxu0 %v894
    %3649 = vmatpush1.msra.mxu0 %v893
    %3650 = vmatprep.subr.mxu0 0.0
    %3651 = vmatpush1.msra.mxu0 0.0
    %3652 = vmatprep.subr.mxu0 0.0
    %3653 = vmatpush1.msra.mxu0 0.0
    %3654 = vmatprep.subr.mxu0 0.0
    %3655 = vmatpush1.msra.mxu0 0.0
    %3656 = vmatprep.subr.mxu0 0.0
    %3657 = vmatpush1.msra.mxu0 0.0
    %3658 = vmatprep.subr.mxu0 0.0
    %3659 = vmatpush1.msra.mxu0 0.0
    %3660 = vmatprep.subr.mxu0 0.0
    %3661 = vmatpush1.msra.mxu0 0.0
    %3662 = vmatprep.subr.mxu0 0.0
    %3663 = vmatpush1.msra.mxu0 0.0
    %3664 = vmatprep.subr.mxu0 0.0
    %3665 = vmatpush1.msra.mxu0 0.0
    %3666 = vmatprep.subr.mxu0 0.0
    %3667 = vmatpush1.msra.mxu0 0.0
    %3668 = vmatprep.subr.mxu0 0.0
    %3669 = vmatpush1.msra.mxu0 0.0
    %3670 = vmatprep.subr.mxu0 0.0
    %3671 = vmatpush1.msra.mxu0 0.0
    %3672 = vmatprep.subr.mxu0 0.0
    %3673 = vmatpush1.msra.mxu0 0.0
    %3674 = vmatprep.subr.mxu0 0.0
    %3675 = vmatpush1.msra.mxu0 0.0
    %3676 = vmatprep.subr.mxu0 0.0
    %3677 = vmatpush1.msra.mxu0 0.0
    %3678 = vmatprep.subr.mxu0 0.0
    %3679 = vmatpush1.msra.mxu0 0.0
    %3680 = vmatprep.subr.mxu0 0.0
    %3681 = vmatpush1.msra.mxu0 0.0
    %3682 = vmatprep.subr.mxu0 0.0
    %3683 = vmatpush1.msra.mxu0 0.0
    %3684 = vmatprep.subr.mxu0 0.0
    %3685 = vmatpush1.msra.mxu0 0.0
    %3686 = vmatprep.subr.mxu0 0.0
    %3687 = vmatpush1.msra.mxu0 0.0
    %3688 = vmatprep.subr.mxu0 0.0
    %3689 = vmatpush1.msra.mxu0 0.0
    %3690 = vmatprep.subr.mxu0 0.0
    %3691 = vmatpush1.msra.mxu0 0.0
    %3692 = vmatprep.subr.mxu0 0.0
    %3693 = vmatpush1.msra.mxu0 0.0
    %3694 = vmatprep.subr.mxu0 0.0
    %3695 = vmatpush1.msra.mxu0 0.0
    %3696 = vmatprep.subr.mxu0 0.0
    %3697 = vmatpush1.msra.mxu0 0.0
    %3698 = vmatprep.subr.mxu0 0.0
    %3699 = vmatpush1.msra.mxu0 0.0
    %3700 = vmatprep.subr.mxu0 0.0
    %3701 = vmatpush1.msra.mxu0 0.0
    %3702 = vmatprep.subr.mxu0 0.0
    %3703 = vmatpush1.msra.mxu0 0.0
    %3704 = vmatprep.subr.mxu0 0.0
    %3705 = vmatpush1.msra.mxu0 0.0
    %3706 = vmatprep.subr.mxu0 0.0
    %3707 = vmatpush1.msra.mxu0 0.0
    %3708 = vmatprep.subr.mxu0 0.0
    %3709 = vmatpush1.msra.mxu0 0.0
    %3710 = vmatprep.mubr.f32.mxu0 0.0
    %3711 = vmatmul.mubr.f32.gmra.mrb[0].mxu0 %v3431
    %v3712 = vpop.f32.mrb[0].mxu0
    %v3713 = vadd.f32 %v3642, %v3712
    %v3714 = vpop.f32.mrb[0].mxu0
    %v3715 = vadd.f32 %v3644, %v3714
    %3716 = vdwg.mxu0
    %3717 = vmatprep.subr.mxu0 %v632
    %3718 = vmatpush1.msra.mxu0 %v631
    %3719 = vmatprep.subr.mxu0 %v640
    %3720 = vmatpush1.msra.mxu0 %v639
    %3721 = vmatprep.subr.mxu0 %v648
    %3722 = vmatpush1.msra.mxu0 %v647
    %3723 = vmatprep.subr.mxu0 %v656
    %3724 = vmatpush1.msra.mxu0 %v655
    %3725 = vmatprep.subr.mxu0 %v664
    %3726 = vmatpush1.msra.mxu0 %v663
    %3727 = vmatprep.subr.mxu0 %v672
    %3728 = vmatpush1.msra.mxu0 %v671
    %3729 = vmatprep.subr.mxu0 %v680
    %3730 = vmatpush1.msra.mxu0 %v679
    %3731 = vmatprep.subr.mxu0 %v688
    %3732 = vmatpush1.msra.mxu0 %v687
    %3733 = vmatprep.subr.mxu0 %v696
    %3734 = vmatpush1.msra.mxu0 %v695
    %3735 = vmatprep.subr.mxu0 %v704
    %3736 = vmatpush1.msra.mxu0 %v703
    %3737 = vmatprep.subr.mxu0 %v712
    %3738 = vmatpush1.msra.mxu0 %v711
    %3739 = vmatprep.subr.mxu0 %v720
    %3740 = vmatpush1.msra.mxu0 %v719
    %3741 = vmatprep.subr.mxu0 %v728
    %3742 = vmatpush1.msra.mxu0 %v727
    %3743 = vmatprep.subr.mxu0 %v736
    %3744 = vmatpush1.msra.mxu0 %v735
    %3745 = vmatprep.subr.mxu0 %v744
    %3746 = vmatpush1.msra.mxu0 %v743
    %3747 = vmatprep.subr.mxu0 %v752
    %3748 = vmatpush1.msra.mxu0 %v751
    %3749 = vmatprep.subr.mxu0 %v760
    %3750 = vmatpush1.msra.mxu0 %v759
    %3751 = vmatprep.subr.mxu0 %v768
    %3752 = vmatpush1.msra.mxu0 %v767
    %3753 = vmatprep.subr.mxu0 %v776
    %3754 = vmatpush1.msra.mxu0 %v775
    %3755 = vmatprep.subr.mxu0 %v784
    %3756 = vmatpush1.msra.mxu0 %v783
    %3757 = vmatprep.subr.mxu0 %v792
    %3758 = vmatpush1.msra.mxu0 %v791
    %3759 = vmatprep.subr.mxu0 %v800
    %3760 = vmatpush1.msra.mxu0 %v799
    %3761 = vmatprep.subr.mxu0 %v808
    %3762 = vmatpush1.msra.mxu0 %v807
    %3763 = vmatprep.subr.mxu0 %v816
    %3764 = vmatpush1.msra.mxu0 %v815
    %3765 = vmatprep.subr.mxu0 %v824
    %3766 = vmatpush1.msra.mxu0 %v823
    %3767 = vmatprep.subr.mxu0 %v832
    %3768 = vmatpush1.msra.mxu0 %v831
    %3769 = vmatprep.subr.mxu0 %v840
    %3770 = vmatpush1.msra.mxu0 %v839
    %3771 = vmatprep.subr.mxu0 %v848
    %3772 = vmatpush1.msra.mxu0 %v847
    %3773 = vmatprep.subr.mxu0 %v856
    %3774 = vmatpush1.msra.mxu0 %v855
    %3775 = vmatprep.subr.mxu0 %v864
    %3776 = vmatpush1.msra.mxu0 %v863
    %3777 = vmatprep.subr.mxu0 %v872
    %3778 = vmatpush1.msra.mxu0 %v871
    %3779 = vmatprep.subr.mxu0 %v880
    %3780 = vmatpush1.msra.mxu0 %v879
    %3781 = vmatprep.mubr.f32.mxu0 %v3428
    %3782 = vmatmul.mubr.f32.gmra.mrb[0].mxu0 %v3427
    %v3783 = vpop.f32.mrb[0].mxu0
    %v3784 = vadd.f32 %v935, %v3783
    %v3785 = vpop.f32.mrb[0].mxu0
    %v3786 = vadd.f32 %v939, %v3785
    %3787 = vdwg.mxu0
    %3788 = vmatprep.subr.mxu0 %v888
    %3789 = vmatpush1.msra.mxu0 %v887
    %3790 = vmatprep.subr.mxu0 %v896
    %3791 = vmatpush1.msra.mxu0 %v895
    %3792 = vmatprep.subr.mxu0 0.0
    %3793 = vmatpush1.msra.mxu0 0.0
    %3794 = vmatprep.subr.mxu0 0.0
    %3795 = vmatpush1.msra.mxu0 0.0
    %3796 = vmatprep.subr.mxu0 0.0
    %3797 = vmatpush1.msra.mxu0 0.0
    %3798 = vmatprep.subr.mxu0 0.0
    %3799 = vmatpush1.msra.mxu0 0.0
    %3800 = vmatprep.subr.mxu0 0.0
    %3801 = vmatpush1.msra.mxu0 0.0
    %3802 = vmatprep.subr.mxu0 0.0
    %3803 = vmatpush1.msra.mxu0 0.0
    %3804 = vmatprep.subr.mxu0 0.0
    %3805 = vmatpush1.msra.mxu0 0.0
    %3806 = vmatprep.subr.mxu0 0.0
    %3807 = vmatpush1.msra.mxu0 0.0
    %3808 = vmatprep.subr.mxu0 0.0
    %3809 = vmatpush1.msra.mxu0 0.0
    %3810 = vmatprep.subr.mxu0 0.0
    %3811 = vmatpush1.msra.mxu0 0.0
    %3812 = vmatprep.subr.mxu0 0.0
    %3813 = vmatpush1.msra.mxu0 0.0
    %3814 = vmatprep.subr.mxu0 0.0
    %3815 = vmatpush1.msra.mxu0 0.0
    %3816 = vmatprep.subr.mxu0 0.0
    %3817 = vmatpush1.msra.mxu0 0.0
    %3818 = vmatprep.subr.mxu0 0.0
    %3819 = vmatpush1.msra.mxu0 0.0
    %3820 = vmatprep.subr.mxu0 0.0
    %3821 = vmatpush1.msra.mxu0 0.0
    %3822 = vmatprep.subr.mxu0 0.0
    %3823 = vmatpush1.msra.mxu0 0.0
    %3824 = vmatprep.subr.mxu0 0.0
    %3825 = vmatpush1.msra.mxu0 0.0
    %3826 = vmatprep.subr.mxu0 0.0
    %3827 = vmatpush1.msra.mxu0 0.0
    %3828 = vmatprep.subr.mxu0 0.0
    %3829 = vmatpush1.msra.mxu0 0.0
    %3830 = vmatprep.subr.mxu0 0.0
    %3831 = vmatpush1.msra.mxu0 0.0
    %3832 = vmatprep.subr.mxu0 0.0
    %3833 = vmatpush1.msra.mxu0 0.0
    %3834 = vmatprep.subr.mxu0 0.0
    %3835 = vmatpush1.msra.mxu0 0.0
    %3836 = vmatprep.subr.mxu0 0.0
    %3837 = vmatpush1.msra.mxu0 0.0
    %3838 = vmatprep.subr.mxu0 0.0
    %3839 = vmatpush1.msra.mxu0 0.0
    %3840 = vmatprep.subr.mxu0 0.0
    %3841 = vmatpush1.msra.mxu0 0.0
    %3842 = vmatprep.subr.mxu0 0.0
    %3843 = vmatpush1.msra.mxu0 0.0
    %3844 = vmatprep.subr.mxu0 0.0
    %3845 = vmatpush1.msra.mxu0 0.0
    %3846 = vmatprep.subr.mxu0 0.0
    %3847 = vmatpush1.msra.mxu0 0.0
    %3848 = vmatprep.subr.mxu0 0.0
    %3849 = vmatpush1.msra.mxu0 0.0
    %3850 = vmatprep.subr.mxu0 0.0
    %3851 = vmatpush1.msra.mxu0 0.0
    %3852 = vmatprep.mubr.f32.mxu0 0.0
    %3853 = vmatmul.mubr.f32.gmra.mrb[0].mxu0 %v3431
    %v3854 = vpop.f32.mrb[0].mxu0
    %v3855 = vadd.f32 %v3784, %v3854
    %v3856 = vpop.f32.mrb[0].mxu0
    %v3857 = vadd.f32 %v3786, %v3856
    %3858 = vdwg.mxu0
    %3859 = vmatprep.subr.mxu0 %v634
    %3860 = vmatpush1.msra.mxu0 %v633
    %3861 = vmatprep.subr.mxu0 %v642
    %3862 = vmatpush1.msra.mxu0 %v641
    %3863 = vmatprep.subr.mxu0 %v650
    %3864 = vmatpush1.msra.mxu0 %v649
    %3865 = vmatprep.subr.mxu0 %v658
    %3866 = vmatpush1.msra.mxu0 %v657
    %3867 = vmatprep.subr.mxu0 %v666
    %3868 = vmatpush1.msra.mxu0 %v665
    %3869 = vmatprep.subr.mxu0 %v674
    %3870 = vmatpush1.msra.mxu0 %v673
    %3871 = vmatprep.subr.mxu0 %v682
    %3872 = vmatpush1.msra.mxu0 %v681
    %3873 = vmatprep.subr.mxu0 %v690
    %3874 = vmatpush1.msra.mxu0 %v689
    %3875 = vmatprep.subr.mxu0 %v698
    %3876 = vmatpush1.msra.mxu0 %v697
    %3877 = vmatprep.subr.mxu0 %v706
    %3878 = vmatpush1.msra.mxu0 %v705
    %3879 = vmatprep.subr.mxu0 %v714
    %3880 = vmatpush1.msra.mxu0 %v713
    %3881 = vmatprep.subr.mxu0 %v722
    %3882 = vmatpush1.msra.mxu0 %v721
    %3883 = vmatprep.subr.mxu0 %v730
    %3884 = vmatpush1.msra.mxu0 %v729
    %3885 = vmatprep.subr.mxu0 %v738
    %3886 = vmatpush1.msra.mxu0 %v737
    %3887 = vmatprep.subr.mxu0 %v746
    %3888 = vmatpush1.msra.mxu0 %v745
    %3889 = vmatprep.subr.mxu0 %v754
    %3890 = vmatpush1.msra.mxu0 %v753
    %3891 = vmatprep.subr.mxu0 %v762
    %3892 = vmatpush1.msra.mxu0 %v761
    %3893 = vmatprep.subr.mxu0 %v770
    %3894 = vmatpush1.msra.mxu0 %v769
    %3895 = vmatprep.subr.mxu0 %v778
    %3896 = vmatpush1.msra.mxu0 %v777
    %3897 = vmatprep.subr.mxu0 %v786
    %3898 = vmatpush1.msra.mxu0 %v785
    %3899 = vmatprep.subr.mxu0 %v794
    %3900 = vmatpush1.msra.mxu0 %v793
    %3901 = vmatprep.subr.mxu0 %v802
    %3902 = vmatpush1.msra.mxu0 %v801
    %3903 = vmatprep.subr.mxu0 %v810
    %3904 = vmatpush1.msra.mxu0 %v809
    %3905 = vmatprep.subr.mxu0 %v818
    %3906 = vmatpush1.msra.mxu0 %v817
    %3907 = vmatprep.subr.mxu0 %v826
    %3908 = vmatpush1.msra.mxu0 %v825
    %3909 = vmatprep.subr.mxu0 %v834
    %3910 = vmatpush1.msra.mxu0 %v833
    %3911 = vmatprep.subr.mxu0 %v842
    %3912 = vmatpush1.msra.mxu0 %v841
    %3913 = vmatprep.subr.mxu0 %v850
    %3914 = vmatpush1.msra.mxu0 %v849
    %3915 = vmatprep.subr.mxu0 %v858
    %3916 = vmatpush1.msra.mxu0 %v857
    %3917 = vmatprep.subr.mxu0 %v866
    %3918 = vmatpush1.msra.mxu0 %v865
    %3919 = vmatprep.subr.mxu0 %v874
    %3920 = vmatpush1.msra.mxu0 %v873
    %3921 = vmatprep.subr.mxu0 %v882
    %3922 = vmatpush1.msra.mxu0 %v881
    %3923 = vmatprep.mubr.f32.mxu0 %v3428
    %3924 = vmatmul.mubr.f32.gmra.mrb[0].mxu0 %v3427
    %v3925 = vpop.f32.mrb[0].mxu0
    %v3926 = vadd.f32 %v943, %v3925
    %v3927 = vpop.f32.mrb[0].mxu0
    %v3928 = vadd.f32 %v947, %v3927
    %3929 = vdwg.mxu0
    %3930 = vmatprep.subr.mxu0 %v890
    %3931 = vmatpush1.msra.mxu0 %v889
    %3932 = vmatprep.subr.mxu0 %v898
    %3933 = vmatpush1.msra.mxu0 %v897
    %3934 = vmatprep.subr.mxu0 0.0
    %3935 = vmatpush1.msra.mxu0 0.0
    %3936 = vmatprep.subr.mxu0 0.0
    %3937 = vmatpush1.msra.mxu0 0.0
    %3938 = vmatprep.subr.mxu0 0.0
    %3939 = vmatpush1.msra.mxu0 0.0
    %3940 = vmatprep.subr.mxu0 0.0
    %3941 = vmatpush1.msra.mxu0 0.0
    %3942 = vmatprep.subr.mxu0 0.0
    %3943 = vmatpush1.msra.mxu0 0.0
    %3944 = vmatprep.subr.mxu0 0.0
    %3945 = vmatpush1.msra.mxu0 0.0
    %3946 = vmatprep.subr.mxu0 0.0
    %3947 = vmatpush1.msra.mxu0 0.0
    %3948 = vmatprep.subr.mxu0 0.0
    %3949 = vmatpush1.msra.mxu0 0.0
    %3950 = vmatprep.subr.mxu0 0.0
    %3951 = vmatpush1.msra.mxu0 0.0
    %3952 = vmatprep.subr.mxu0 0.0
    %3953 = vmatpush1.msra.mxu0 0.0
    %3954 = vmatprep.subr.mxu0 0.0
    %3955 = vmatpush1.msra.mxu0 0.0
    %3956 = vmatprep.subr.mxu0 0.0
    %3957 = vmatpush1.msra.mxu0 0.0
    %3958 = vmatprep.subr.mxu0 0.0
    %3959 = vmatpush1.msra.mxu0 0.0
    %3960 = vmatprep.subr.mxu0 0.0
    %3961 = vmatpush1.msra.mxu0 0.0
    %3962 = vmatprep.subr.mxu0 0.0
    %3963 = vmatpush1.msra.mxu0 0.0
    %3964 = vmatprep.subr.mxu0 0.0
    %3965 = vmatpush1.msra.mxu0 0.0
    %3966 = vmatprep.subr.mxu0 0.0
    %3967 = vmatpush1.msra.mxu0 0.0
    %3968 = vmatprep.subr.mxu0 0.0
    %3969 = vmatpush1.msra.mxu0 0.0
    %3970 = vmatprep.subr.mxu0 0.0
    %3971 = vmatpush1.msra.mxu0 0.0
    %3972 = vmatprep.subr.mxu0 0.0
    %3973 = vmatpush1.msra.mxu0 0.0
    %3974 = vmatprep.subr.mxu0 0.0
    %3975 = vmatpush1.msra.mxu0 0.0
    %3976 = vmatprep.subr.mxu0 0.0
    %3977 = vmatpush1.msra.mxu0 0.0
    %3978 = vmatprep.subr.mxu0 0.0
    %3979 = vmatpush1.msra.mxu0 0.0
    %3980 = vmatprep.subr.mxu0 0.0
    %3981 = vmatpush1.msra.mxu0 0.0
    %3982 = vmatprep.subr.mxu0 0.0
    %3983 = vmatpush1.msra.mxu0 0.0
    %3984 = vmatprep.subr.mxu0 0.0
    %3985 = vmatpush1.msra.mxu0 0.0
    %3986 = vmatprep.subr.mxu0 0.0
    %3987 = vmatpush1.msra.mxu0 0.0
    %3988 = vmatprep.subr.mxu0 0.0
    %3989 = vmatpush1.msra.mxu0 0.0
    %3990 = vmatprep.subr.mxu0 0.0
    %3991 = vmatpush1.msra.mxu0 0.0
    %3992 = vmatprep.subr.mxu0 0.0
    %3993 = vmatpush1.msra.mxu0 0.0
    %3994 = vmatprep.mubr.f32.mxu0 0.0
    %3995 = vmatmul.mubr.f32.gmra.mrb[0].mxu0 %v3431
    %v3996 = vpop.f32.mrb[0].mxu0
    %v3997 = vadd.f32 %v3926, %v3996
    %v3998 = vpop.f32.mrb[0].mxu0
    %v3999 = vadd.f32 %v3928, %v3998
    %4000 = vdwg.mxu0
    %v4001 = vmul.f32 %v3571, 0.5
    %v4002 = vmul.f32 %v3573, 0.5
    %v4003 = vtanh.pop %v4001
    %v4004 = vtanh.pop %v4002
    %v4005 = vadd.f32 %v4003, 1.0
    %v4006 = vadd.f32 %v4004, 1.0
    %v4007 = vmul.f32 %v4005, 0.5
    %v4008 = vmul.f32 %v4006, 0.5
    %v4009 = vmul.f32 %v3713, 0.5
    %v4010 = vmul.f32 %v3715, 0.5
    %v4011 = vtanh.pop %v4009
    %v4012 = vtanh.pop %v4010
    %v4013 = vadd.f32 %v4011, 1.0
    %v4014 = vadd.f32 %v4012, 1.0
    %v4015 = vmul.f32 %v4013, 0.5
    %v4016 = vmul.f32 %v4014, 0.5
    %v4017 = vtanh.pop %v3855
    %v4018 = vtanh.pop %v3857
    %v4019 = vmul.f32 %v3997, 0.5
    %v4020 = vmul.f32 %v3999, 0.5
    %v4021 = vtanh.pop %v4019
    %v4022 = vtanh.pop %v4020
    %v4023 = vadd.f32 %v4021, 1.0
    %v4024 = vadd.f32 %v4022, 1.0
    %v4025 = vmul.f32 %v4023, 0.5
    %v4026 = vmul.f32 %v4024, 0.5
    %v4027 = vmul.f32 %v4015, %v3417
    %v4028 = vmul.f32 %v4016, %v3418
    %v4029 = vmul.f32 %v4007, %v4017
    %v4030 = vmul.f32 %v4008, %v4018
    %v4031 = vadd.f32 %v4027, %v4029
    %v4032 = vadd.f32 %v4028, %v4030
    %v4033 = vtanh.pop %v4031
    %v4034 = vtanh.pop %v4032
    %v4035 = vmul.f32 %v4025, %v4033
    %v4036 = vmul.f32 %v4026, %v4034
    %4037 = vst [vmem:[#allocation2] sm:$0xff] %v4035
    %4038 = vst [vmem:[#allocation2 + $0x8] sm:$0xff] %v4036
    %4039 = vst.msk [vmem:[#allocation2 + $0x10] sm:$0xff] %vm904, %v2190
    %4040 = vst.msk [vmem:[#allocation2 + $0x10] sm:$0xff] %vm910, %v2186
    %v4041 = vld [vmem:[#allocation2] sm:$0xff]
    %v4042 = vld [vmem:[#allocation2 + $0x8] sm:$0xff]
    %v4043 = vld [vmem:[#allocation2 + $0x10] sm:$0xff]
    %v4045 = vsel %vm902, %v4043, 0
    %4047 = vmatprep.subr.mxu0 %v628
    %4048 = vmatpush1.msra.mxu0 %v627
    %4049 = vmatprep.subr.mxu0 %v636
    %4050 = vmatpush1.msra.mxu0 %v635
    %4051 = vmatprep.subr.mxu0 %v644
    %4052 = vmatpush1.msra.mxu0 %v643
    %4053 = vmatprep.subr.mxu0 %v652
    %4054 = vmatpush1.msra.mxu0 %v651
    %4055 = vmatprep.subr.mxu0 %v660
    %4056 = vmatpush1.msra.mxu0 %v659
    %4057 = vmatprep.subr.mxu0 %v668
    %4058 = vmatpush1.msra.mxu0 %v667
    %4059 = vmatprep.subr.mxu0 %v676
    %4060 = vmatpush1.msra.mxu0 %v675
    %4061 = vmatprep.subr.mxu0 %v684
    %4062 = vmatpush1.msra.mxu0 %v683
    %4063 = vmatprep.subr.mxu0 %v692
    %4064 = vmatpush1.msra.mxu0 %v691
    %4065 = vmatprep.subr.mxu0 %v700
    %4066 = vmatpush1.msra.mxu0 %v699
    %4067 = vmatprep.subr.mxu0 %v708
    %4068 = vmatpush1.msra.mxu0 %v707
    %4069 = vmatprep.subr.mxu0 %v716
    %4070 = vmatpush1.msra.mxu0 %v715
    %4071 = vmatprep.subr.mxu0 %v724
    %4072 = vmatpush1.msra.mxu0 %v723
    %4073 = vmatprep.subr.mxu0 %v732
    %4074 = vmatpush1.msra.mxu0 %v731
    %4075 = vmatprep.subr.mxu0 %v740
    %4076 = vmatpush1.msra.mxu0 %v739
    %4077 = vmatprep.subr.mxu0 %v748
    %4078 = vmatpush1.msra.mxu0 %v747
    %4079 = vmatprep.subr.mxu0 %v756
    %4080 = vmatpush1.msra.mxu0 %v755
    %4081 = vmatprep.subr.mxu0 %v764
    %4082 = vmatpush1.msra.mxu0 %v763
    %4083 = vmatprep.subr.mxu0 %v772
    %4084 = vmatpush1.msra.mxu0 %v771
    %4085 = vmatprep.subr.mxu0 %v780
    %4086 = vmatpush1.msra.mxu0 %v779
    %4087 = vmatprep.subr.mxu0 %v788
    %4088 = vmatpush1.msra.mxu0 %v787
    %4089 = vmatprep.subr.mxu0 %v796
    %4090 = vmatpush1.msra.mxu0 %v795
    %4091 = vmatprep.subr.mxu0 %v804
    %4092 = vmatpush1.msra.mxu0 %v803
    %4093 = vmatprep.subr.mxu0 %v812
    %4094 = vmatpush1.msra.mxu0 %v811
    %4095 = vmatprep.subr.mxu0 %v820
    %4096 = vmatpush1.msra.mxu0 %v819
    %4097 = vmatprep.subr.mxu0 %v828
    %4098 = vmatpush1.msra.mxu0 %v827
    %4099 = vmatprep.subr.mxu0 %v836
    %4100 = vmatpush1.msra.mxu0 %v835
    %4101 = vmatprep.subr.mxu0 %v844
    %4102 = vmatpush1.msra.mxu0 %v843
    %4103 = vmatprep.subr.mxu0 %v852
    %4104 = vmatpush1.msra.mxu0 %v851
    %4105 = vmatprep.subr.mxu0 %v860
    %4106 = vmatpush1.msra.mxu0 %v859
    %4107 = vmatprep.subr.mxu0 %v868
    %4108 = vmatpush1.msra.mxu0 %v867
    %4109 = vmatprep.subr.mxu0 %v876
    %4110 = vmatpush1.msra.mxu0 %v875
    %4111 = vmatprep.mubr.f32.mxu0 %v4042
    %4112 = vmatmul.mubr.f32.gmra.mrb[0].mxu0 %v4041
    %v4113 = vpop.f32.mrb[0].mxu0
    %v4114 = vadd.f32 %v919, %v4113
    %v4115 = vpop.f32.mrb[0].mxu0
    %v4116 = vadd.f32 %v923, %v4115
    %4117 = vdwg.mxu0
    %4118 = vmatprep.subr.mxu0 %v884
    %4119 = vmatpush1.msra.mxu0 %v883
    %4120 = vmatprep.subr.mxu0 %v892
    %4121 = vmatpush1.msra.mxu0 %v891
    %4122 = vmatprep.subr.mxu0 0.0
    %4123 = vmatpush1.msra.mxu0 0.0
    %4124 = vmatprep.subr.mxu0 0.0
    %4125 = vmatpush1.msra.mxu0 0.0
    %4126 = vmatprep.subr.mxu0 0.0
    %4127 = vmatpush1.msra.mxu0 0.0
    %4128 = vmatprep.subr.mxu0 0.0
    %4129 = vmatpush1.msra.mxu0 0.0
    %4130 = vmatprep.subr.mxu0 0.0
    %4131 = vmatpush1.msra.mxu0 0.0
    %4132 = vmatprep.subr.mxu0 0.0
    %4133 = vmatpush1.msra.mxu0 0.0
    %4134 = vmatprep.subr.mxu0 0.0
    %4135 = vmatpush1.msra.mxu0 0.0
    %4136 = vmatprep.subr.mxu0 0.0
    %4137 = vmatpush1.msra.mxu0 0.0
    %4138 = vmatprep.subr.mxu0 0.0
    %4139 = vmatpush1.msra.mxu0 0.0
    %4140 = vmatprep.subr.mxu0 0.0
    %4141 = vmatpush1.msra.mxu0 0.0
    %4142 = vmatprep.subr.mxu0 0.0
    %4143 = vmatpush1.msra.mxu0 0.0
    %4144 = vmatprep.subr.mxu0 0.0
    %4145 = vmatpush1.msra.mxu0 0.0
    %4146 = vmatprep.subr.mxu0 0.0
    %4147 = vmatpush1.msra.mxu0 0.0
    %4148 = vmatprep.subr.mxu0 0.0
    %4149 = vmatpush1.msra.mxu0 0.0
    %4150 = vmatprep.subr.mxu0 0.0
    %4151 = vmatpush1.msra.mxu0 0.0
    %4152 = vmatprep.subr.mxu0 0.0
    %4153 = vmatpush1.msra.mxu0 0.0
    %4154 = vmatprep.subr.mxu0 0.0
    %4155 = vmatpush1.msra.mxu0 0.0
    %4156 = vmatprep.subr.mxu0 0.0
    %4157 = vmatpush1.msra.mxu0 0.0
    %4158 = vmatprep.subr.mxu0 0.0
    %4159 = vmatpush1.msra.mxu0 0.0
    %4160 = vmatprep.subr.mxu0 0.0
    %4161 = vmatpush1.msra.mxu0 0.0
    %4162 = vmatprep.subr.mxu0 0.0
    %4163 = vmatpush1.msra.mxu0 0.0
    %4164 = vmatprep.subr.mxu0 0.0
    %4165 = vmatpush1.msra.mxu0 0.0
    %4166 = vmatprep.subr.mxu0 0.0
    %4167 = vmatpush1.msra.mxu0 0.0
    %4168 = vmatprep.subr.mxu0 0.0
    %4169 = vmatpush1.msra.mxu0 0.0
    %4170 = vmatprep.subr.mxu0 0.0
    %4171 = vmatpush1.msra.mxu0 0.0
    %4172 = vmatprep.subr.mxu0 0.0
    %4173 = vmatpush1.msra.mxu0 0.0
    %4174 = vmatprep.subr.mxu0 0.0
    %4175 = vmatpush1.msra.mxu0 0.0
    %4176 = vmatprep.subr.mxu0 0.0
    %4177 = vmatpush1.msra.mxu0 0.0
    %4178 = vmatprep.subr.mxu0 0.0
    %4179 = vmatpush1.msra.mxu0 0.0
    %4180 = vmatprep.subr.mxu0 0.0
    %4181 = vmatpush1.msra.mxu0 0.0
    %4182 = vmatprep.mubr.f32.mxu0 0.0
    %4183 = vmatmul.mubr.f32.gmra.mrb[0].mxu0 %v4045
    %v4184 = vpop.f32.mrb[0].mxu0
    %v4185 = vadd.f32 %v4114, %v4184
    %v4186 = vpop.f32.mrb[0].mxu0
    %v4187 = vadd.f32 %v4116, %v4186
    %4188 = vdwg.mxu0
    %4189 = vmatprep.subr.mxu0 %v630
    %4190 = vmatpush1.msra.mxu0 %v629
    %4191 = vmatprep.subr.mxu0 %v638
    %4192 = vmatpush1.msra.mxu0 %v637
    %4193 = vmatprep.subr.mxu0 %v646
    %4194 = vmatpush1.msra.mxu0 %v645
    %4195 = vmatprep.subr.mxu0 %v654
    %4196 = vmatpush1.msra.mxu0 %v653
    %4197 = vmatprep.subr.mxu0 %v662
    %4198 = vmatpush1.msra.mxu0 %v661
    %4199 = vmatprep.subr.mxu0 %v670
    %4200 = vmatpush1.msra.mxu0 %v669
    %4201 = vmatprep.subr.mxu0 %v678
    %4202 = vmatpush1.msra.mxu0 %v677
    %4203 = vmatprep.subr.mxu0 %v686
    %4204 = vmatpush1.msra.mxu0 %v685
    %4205 = vmatprep.subr.mxu0 %v694
    %4206 = vmatpush1.msra.mxu0 %v693
    %4207 = vmatprep.subr.mxu0 %v702
    %4208 = vmatpush1.msra.mxu0 %v701
    %4209 = vmatprep.subr.mxu0 %v710
    %4210 = vmatpush1.msra.mxu0 %v709
    %4211 = vmatprep.subr.mxu0 %v718
    %4212 = vmatpush1.msra.mxu0 %v717
    %4213 = vmatprep.subr.mxu0 %v726
    %4214 = vmatpush1.msra.mxu0 %v725
    %4215 = vmatprep.subr.mxu0 %v734
    %4216 = vmatpush1.msra.mxu0 %v733
    %4217 = vmatprep.subr.mxu0 %v742
    %4218 = vmatpush1.msra.mxu0 %v741
    %4219 = vmatprep.subr.mxu0 %v750
    %4220 = vmatpush1.msra.mxu0 %v749
    %4221 = vmatprep.subr.mxu0 %v758
    %4222 = vmatpush1.msra.mxu0 %v757
    %4223 = vmatprep.subr.mxu0 %v766
    %4224 = vmatpush1.msra.mxu0 %v765
    %4225 = vmatprep.subr.mxu0 %v774
    %4226 = vmatpush1.msra.mxu0 %v773
    %4227 = vmatprep.subr.mxu0 %v782
    %4228 = vmatpush1.msra.mxu0 %v781
    %4229 = vmatprep.subr.mxu0 %v790
    %4230 = vmatpush1.msra.mxu0 %v789
    %4231 = vmatprep.subr.mxu0 %v798
    %4232 = vmatpush1.msra.mxu0 %v797
    %4233 = vmatprep.subr.mxu0 %v806
    %4234 = vmatpush1.msra.mxu0 %v805
    %4235 = vmatprep.subr.mxu0 %v814
    %4236 = vmatpush1.msra.mxu0 %v813
    %4237 = vmatprep.subr.mxu0 %v822
    %4238 = vmatpush1.msra.mxu0 %v821
    %4239 = vmatprep.subr.mxu0 %v830
    %4240 = vmatpush1.msra.mxu0 %v829
    %4241 = vmatprep.subr.mxu0 %v838
    %4242 = vmatpush1.msra.mxu0 %v837
    %4243 = vmatprep.subr.mxu0 %v846
    %4244 = vmatpush1.msra.mxu0 %v845
    %4245 = vmatprep.subr.mxu0 %v854
    %4246 = vmatpush1.msra.mxu0 %v853
    %4247 = vmatprep.subr.mxu0 %v862
    %4248 = vmatpush1.msra.mxu0 %v861
    %4249 = vmatprep.subr.mxu0 %v870
    %4250 = vmatpush1.msra.mxu0 %v869
    %4251 = vmatprep.subr.mxu0 %v878
    %4252 = vmatpush1.msra.mxu0 %v877
    %4253 = vmatprep.mubr.f32.mxu0 %v4042
    %4254 = vmatmul.mubr.f32.gmra.mrb[0].mxu0 %v4041
    %v4255 = vpop.f32.mrb[0].mxu0
    %v4256 = vadd.f32 %v927, %v4255
    %v4257 = vpop.f32.mrb[0].mxu0
    %v4258 = vadd.f32 %v931, %v4257
    %4259 = vdwg.mxu0
    %4260 = vmatprep.subr.mxu0 %v886
    %4261 = vmatpush1.msra.mxu0 %v885
    %4262 = vmatprep.subr.mxu0 %v894
    %4263 = vmatpush1.msra.mxu0 %v893
    %4264 = vmatprep.subr.mxu0 0.0
    %4265 = vmatpush1.msra.mxu0 0.0
    %4266 = vmatprep.subr.mxu0 0.0
    %4267 = vmatpush1.msra.mxu0 0.0
    %4268 = vmatprep.subr.mxu0 0.0
    %4269 = vmatpush1.msra.mxu0 0.0
    %4270 = vmatprep.subr.mxu0 0.0
    %4271 = vmatpush1.msra.mxu0 0.0
    %4272 = vmatprep.subr.mxu0 0.0
    %4273 = vmatpush1.msra.mxu0 0.0
    %4274 = vmatprep.subr.mxu0 0.0
    %4275 = vmatpush1.msra.mxu0 0.0
    %4276 = vmatprep.subr.mxu0 0.0
    %4277 = vmatpush1.msra.mxu0 0.0
    %4278 = vmatprep.subr.mxu0 0.0
    %4279 = vmatpush1.msra.mxu0 0.0
    %4280 = vmatprep.subr.mxu0 0.0
    %4281 = vmatpush1.msra.mxu0 0.0
    %4282 = vmatprep.subr.mxu0 0.0
    %4283 = vmatpush1.msra.mxu0 0.0
    %4284 = vmatprep.subr.mxu0 0.0
    %4285 = vmatpush1.msra.mxu0 0.0
    %4286 = vmatprep.subr.mxu0 0.0
    %4287 = vmatpush1.msra.mxu0 0.0
    %4288 = vmatprep.subr.mxu0 0.0
    %4289 = vmatpush1.msra.mxu0 0.0
    %4290 = vmatprep.subr.mxu0 0.0
    %4291 = vmatpush1.msra.mxu0 0.0
    %4292 = vmatprep.subr.mxu0 0.0
    %4293 = vmatpush1.msra.mxu0 0.0
    %4294 = vmatprep.subr.mxu0 0.0
    %4295 = vmatpush1.msra.mxu0 0.0
    %4296 = vmatprep.subr.mxu0 0.0
    %4297 = vmatpush1.msra.mxu0 0.0
    %4298 = vmatprep.subr.mxu0 0.0
    %4299 = vmatpush1.msra.mxu0 0.0
    %4300 = vmatprep.subr.mxu0 0.0
    %4301 = vmatpush1.msra.mxu0 0.0
    %4302 = vmatprep.subr.mxu0 0.0
    %4303 = vmatpush1.msra.mxu0 0.0
    %4304 = vmatprep.subr.mxu0 0.0
    %4305 = vmatpush1.msra.mxu0 0.0
    %4306 = vmatprep.subr.mxu0 0.0
    %4307 = vmatpush1.msra.mxu0 0.0
    %4308 = vmatprep.subr.mxu0 0.0
    %4309 = vmatpush1.msra.mxu0 0.0
    %4310 = vmatprep.subr.mxu0 0.0
    %4311 = vmatpush1.msra.mxu0 0.0
    %4312 = vmatprep.subr.mxu0 0.0
    %4313 = vmatpush1.msra.mxu0 0.0
    %4314 = vmatprep.subr.mxu0 0.0
    %4315 = vmatpush1.msra.mxu0 0.0
    %4316 = vmatprep.subr.mxu0 0.0
    %4317 = vmatpush1.msra.mxu0 0.0
    %4318 = vmatprep.subr.mxu0 0.0
    %4319 = vmatpush1.msra.mxu0 0.0
    %4320 = vmatprep.subr.mxu0 0.0
    %4321 = vmatpush1.msra.mxu0 0.0
    %4322 = vmatprep.subr.mxu0 0.0
    %4323 = vmatpush1.msra.mxu0 0.0
    %4324 = vmatprep.mubr.f32.mxu0 0.0
    %4325 = vmatmul.mubr.f32.gmra.mrb[0].mxu0 %v4045
    %v4326 = vpop.f32.mrb[0].mxu0
    %v4327 = vadd.f32 %v4256, %v4326
    %v4328 = vpop.f32.mrb[0].mxu0
    %v4329 = vadd.f32 %v4258, %v4328
    %4330 = vdwg.mxu0
    %4331 = vmatprep.subr.mxu0 %v632
    %4332 = vmatpush1.msra.mxu0 %v631
    %4333 = vmatprep.subr.mxu0 %v640
    %4334 = vmatpush1.msra.mxu0 %v639
    %4335 = vmatprep.subr.mxu0 %v648
    %4336 = vmatpush1.msra.mxu0 %v647
    %4337 = vmatprep.subr.mxu0 %v656
    %4338 = vmatpush1.msra.mxu0 %v655
    %4339 = vmatprep.subr.mxu0 %v664
    %4340 = vmatpush1.msra.mxu0 %v663
    %4341 = vmatprep.subr.mxu0 %v672
    %4342 = vmatpush1.msra.mxu0 %v671
    %4343 = vmatprep.subr.mxu0 %v680
    %4344 = vmatpush1.msra.mxu0 %v679
    %4345 = vmatprep.subr.mxu0 %v688
    %4346 = vmatpush1.msra.mxu0 %v687
    %4347 = vmatprep.subr.mxu0 %v696
    %4348 = vmatpush1.msra.mxu0 %v695
    %4349 = vmatprep.subr.mxu0 %v704
    %4350 = vmatpush1.msra.mxu0 %v703
    %4351 = vmatprep.subr.mxu0 %v712
    %4352 = vmatpush1.msra.mxu0 %v711
    %4353 = vmatprep.subr.mxu0 %v720
    %4354 = vmatpush1.msra.mxu0 %v719
    %4355 = vmatprep.subr.mxu0 %v728
    %4356 = vmatpush1.msra.mxu0 %v727
    %4357 = vmatprep.subr.mxu0 %v736
    %4358 = vmatpush1.msra.mxu0 %v735
    %4359 = vmatprep.subr.mxu0 %v744
    %4360 = vmatpush1.msra.mxu0 %v743
    %4361 = vmatprep.subr.mxu0 %v752
    %4362 = vmatpush1.msra.mxu0 %v751
    %4363 = vmatprep.subr.mxu0 %v760
    %4364 = vmatpush1.msra.mxu0 %v759
    %4365 = vmatprep.subr.mxu0 %v768
    %4366 = vmatpush1.msra.mxu0 %v767
    %4367 = vmatprep.subr.mxu0 %v776
    %4368 = vmatpush1.msra.mxu0 %v775
    %4369 = vmatprep.subr.mxu0 %v784
    %4370 = vmatpush1.msra.mxu0 %v783
    %4371 = vmatprep.subr.mxu0 %v792
    %4372 = vmatpush1.msra.mxu0 %v791
    %4373 = vmatprep.subr.mxu0 %v800
    %4374 = vmatpush1.msra.mxu0 %v799
    %4375 = vmatprep.subr.mxu0 %v808
    %4376 = vmatpush1.msra.mxu0 %v807
    %4377 = vmatprep.subr.mxu0 %v816
    %4378 = vmatpush1.msra.mxu0 %v815
    %4379 = vmatprep.subr.mxu0 %v824
    %4380 = vmatpush1.msra.mxu0 %v823
    %4381 = vmatprep.subr.mxu0 %v832
    %4382 = vmatpush1.msra.mxu0 %v831
    %4383 = vmatprep.subr.mxu0 %v840
    %4384 = vmatpush1.msra.mxu0 %v839
    %4385 = vmatprep.subr.mxu0 %v848
    %4386 = vmatpush1.msra.mxu0 %v847
    %4387 = vmatprep.subr.mxu0 %v856
    %4388 = vmatpush1.msra.mxu0 %v855
    %4389 = vmatprep.subr.mxu0 %v864
    %4390 = vmatpush1.msra.mxu0 %v863
    %4391 = vmatprep.subr.mxu0 %v872
    %4392 = vmatpush1.msra.mxu0 %v871
    %4393 = vmatprep.subr.mxu0 %v880
    %4394 = vmatpush1.msra.mxu0 %v879
    %4395 = vmatprep.mubr.f32.mxu0 %v4042
    %4396 = vmatmul.mubr.f32.gmra.mrb[0].mxu0 %v4041
    %v4397 = vpop.f32.mrb[0].mxu0
    %v4398 = vadd.f32 %v935, %v4397
    %v4399 = vpop.f32.mrb[0].mxu0
    %v4400 = vadd.f32 %v939, %v4399
    %4401 = vdwg.mxu0
    %4402 = vmatprep.subr.mxu0 %v888
    %4403 = vmatpush1.msra.mxu0 %v887
    %4404 = vmatprep.subr.mxu0 %v896
    %4405 = vmatpush1.msra.mxu0 %v895
    %4406 = vmatprep.subr.mxu0 0.0
    %4407 = vmatpush1.msra.mxu0 0.0
    %4408 = vmatprep.subr.mxu0 0.0
    %4409 = vmatpush1.msra.mxu0 0.0
    %4410 = vmatprep.subr.mxu0 0.0
    %4411 = vmatpush1.msra.mxu0 0.0
    %4412 = vmatprep.subr.mxu0 0.0
    %4413 = vmatpush1.msra.mxu0 0.0
    %4414 = vmatprep.subr.mxu0 0.0
    %4415 = vmatpush1.msra.mxu0 0.0
    %4416 = vmatprep.subr.mxu0 0.0
    %4417 = vmatpush1.msra.mxu0 0.0
    %4418 = vmatprep.subr.mxu0 0.0
    %4419 = vmatpush1.msra.mxu0 0.0
    %4420 = vmatprep.subr.mxu0 0.0
    %4421 = vmatpush1.msra.mxu0 0.0
    %4422 = vmatprep.subr.mxu0 0.0
    %4423 = vmatpush1.msra.mxu0 0.0
    %4424 = vmatprep.subr.mxu0 0.0
    %4425 = vmatpush1.msra.mxu0 0.0
    %4426 = vmatprep.subr.mxu0 0.0
    %4427 = vmatpush1.msra.mxu0 0.0
    %4428 = vmatprep.subr.mxu0 0.0
    %4429 = vmatpush1.msra.mxu0 0.0
    %4430 = vmatprep.subr.mxu0 0.0
    %4431 = vmatpush1.msra.mxu0 0.0
    %4432 = vmatprep.subr.mxu0 0.0
    %4433 = vmatpush1.msra.mxu0 0.0
    %4434 = vmatprep.subr.mxu0 0.0
    %4435 = vmatpush1.msra.mxu0 0.0
    %4436 = vmatprep.subr.mxu0 0.0
    %4437 = vmatpush1.msra.mxu0 0.0
    %4438 = vmatprep.subr.mxu0 0.0
    %4439 = vmatpush1.msra.mxu0 0.0
    %4440 = vmatprep.subr.mxu0 0.0
    %4441 = vmatpush1.msra.mxu0 0.0
    %4442 = vmatprep.subr.mxu0 0.0
    %4443 = vmatpush1.msra.mxu0 0.0
    %4444 = vmatprep.subr.mxu0 0.0
    %4445 = vmatpush1.msra.mxu0 0.0
    %4446 = vmatprep.subr.mxu0 0.0
    %4447 = vmatpush1.msra.mxu0 0.0
    %4448 = vmatprep.subr.mxu0 0.0
    %4449 = vmatpush1.msra.mxu0 0.0
    %4450 = vmatprep.subr.mxu0 0.0
    %4451 = vmatpush1.msra.mxu0 0.0
    %4452 = vmatprep.subr.mxu0 0.0
    %4453 = vmatpush1.msra.mxu0 0.0
    %4454 = vmatprep.subr.mxu0 0.0
    %4455 = vmatpush1.msra.mxu0 0.0
    %4456 = vmatprep.subr.mxu0 0.0
    %4457 = vmatpush1.msra.mxu0 0.0
    %4458 = vmatprep.subr.mxu0 0.0
    %4459 = vmatpush1.msra.mxu0 0.0
    %4460 = vmatprep.subr.mxu0 0.0
    %4461 = vmatpush1.msra.mxu0 0.0
    %4462 = vmatprep.subr.mxu0 0.0
    %4463 = vmatpush1.msra.mxu0 0.0
    %4464 = vmatprep.subr.mxu0 0.0
    %4465 = vmatpush1.msra.mxu0 0.0
    %4466 = vmatprep.mubr.f32.mxu0 0.0
    %4467 = vmatmul.mubr.f32.gmra.mrb[0].mxu0 %v4045
    %v4468 = vpop.f32.mrb[0].mxu0
    %v4469 = vadd.f32 %v4398, %v4468
    %v4470 = vpop.f32.mrb[0].mxu0
    %v4471 = vadd.f32 %v4400, %v4470
    %4472 = vdwg.mxu0
    %4473 = vmatprep.subr.mxu0 %v634
    %4474 = vmatpush1.msra.mxu0 %v633
    %4475 = vmatprep.subr.mxu0 %v642
    %4476 = vmatpush1.msra.mxu0 %v641
    %4477 = vmatprep.subr.mxu0 %v650
    %4478 = vmatpush1.msra.mxu0 %v649
    %4479 = vmatprep.subr.mxu0 %v658
    %4480 = vmatpush1.msra.mxu0 %v657
    %4481 = vmatprep.subr.mxu0 %v666
    %4482 = vmatpush1.msra.mxu0 %v665
    %4483 = vmatprep.subr.mxu0 %v674
    %4484 = vmatpush1.msra.mxu0 %v673
    %4485 = vmatprep.subr.mxu0 %v682
    %4486 = vmatpush1.msra.mxu0 %v681
    %4487 = vmatprep.subr.mxu0 %v690
    %4488 = vmatpush1.msra.mxu0 %v689
    %4489 = vmatprep.subr.mxu0 %v698
    %4490 = vmatpush1.msra.mxu0 %v697
    %4491 = vmatprep.subr.mxu0 %v706
    %4492 = vmatpush1.msra.mxu0 %v705
    %4493 = vmatprep.subr.mxu0 %v714
    %4494 = vmatpush1.msra.mxu0 %v713
    %4495 = vmatprep.subr.mxu0 %v722
    %4496 = vmatpush1.msra.mxu0 %v721
    %4497 = vmatprep.subr.mxu0 %v730
    %4498 = vmatpush1.msra.mxu0 %v729
    %4499 = vmatprep.subr.mxu0 %v738
    %4500 = vmatpush1.msra.mxu0 %v737
    %4501 = vmatprep.subr.mxu0 %v746
    %4502 = vmatpush1.msra.mxu0 %v745
    %4503 = vmatprep.subr.mxu0 %v754
    %4504 = vmatpush1.msra.mxu0 %v753
    %4505 = vmatprep.subr.mxu0 %v762
    %4506 = vmatpush1.msra.mxu0 %v761
    %4507 = vmatprep.subr.mxu0 %v770
    %4508 = vmatpush1.msra.mxu0 %v769
    %4509 = vmatprep.subr.mxu0 %v778
    %4510 = vmatpush1.msra.mxu0 %v777
    %4511 = vmatprep.subr.mxu0 %v786
    %4512 = vmatpush1.msra.mxu0 %v785
    %4513 = vmatprep.subr.mxu0 %v794
    %4514 = vmatpush1.msra.mxu0 %v793
    %4515 = vmatprep.subr.mxu0 %v802
    %4516 = vmatpush1.msra.mxu0 %v801
    %4517 = vmatprep.subr.mxu0 %v810
    %4518 = vmatpush1.msra.mxu0 %v809
    %4519 = vmatprep.subr.mxu0 %v818
    %4520 = vmatpush1.msra.mxu0 %v817
    %4521 = vmatprep.subr.mxu0 %v826
    %4522 = vmatpush1.msra.mxu0 %v825
    %4523 = vmatprep.subr.mxu0 %v834
    %4524 = vmatpush1.msra.mxu0 %v833
    %4525 = vmatprep.subr.mxu0 %v842
    %4526 = vmatpush1.msra.mxu0 %v841
    %4527 = vmatprep.subr.mxu0 %v850
    %4528 = vmatpush1.msra.mxu0 %v849
    %4529 = vmatprep.subr.mxu0 %v858
    %4530 = vmatpush1.msra.mxu0 %v857
    %4531 = vmatprep.subr.mxu0 %v866
    %4532 = vmatpush1.msra.mxu0 %v865
    %4533 = vmatprep.subr.mxu0 %v874
    %4534 = vmatpush1.msra.mxu0 %v873
    %4535 = vmatprep.subr.mxu0 %v882
    %4536 = vmatpush1.msra.mxu0 %v881
    %4537 = vmatprep.mubr.f32.mxu0 %v4042
    %4538 = vmatmul.mubr.f32.gmra.mrb[0].mxu0 %v4041
    %v4539 = vpop.f32.mrb[0].mxu0
    %v4540 = vadd.f32 %v943, %v4539
    %v4541 = vpop.f32.mrb[0].mxu0
    %v4542 = vadd.f32 %v947, %v4541
    %4543 = vdwg.mxu0
    %4544 = vmatprep.subr.mxu0 %v890
    %4545 = vmatpush1.msra.mxu0 %v889
    %4546 = vmatprep.subr.mxu0 %v898
    %4547 = vmatpush1.msra.mxu0 %v897
    %4548 = vmatprep.subr.mxu0 0.0
    %4549 = vmatpush1.msra.mxu0 0.0
    %4550 = vmatprep.subr.mxu0 0.0
    %4551 = vmatpush1.msra.mxu0 0.0
    %4552 = vmatprep.subr.mxu0 0.0
    %4553 = vmatpush1.msra.mxu0 0.0
    %4554 = vmatprep.subr.mxu0 0.0
    %4555 = vmatpush1.msra.mxu0 0.0
    %4556 = vmatprep.subr.mxu0 0.0
    %4557 = vmatpush1.msra.mxu0 0.0
    %4558 = vmatprep.subr.mxu0 0.0
    %4559 = vmatpush1.msra.mxu0 0.0
    %4560 = vmatprep.subr.mxu0 0.0
    %4561 = vmatpush1.msra.mxu0 0.0
    %4562 = vmatprep.subr.mxu0 0.0
    %4563 = vmatpush1.msra.mxu0 0.0
    %4564 = vmatprep.subr.mxu0 0.0
    %4565 = vmatpush1.msra.mxu0 0.0
    %4566 = vmatprep.subr.mxu0 0.0
    %4567 = vmatpush1.msra.mxu0 0.0
    %4568 = vmatprep.subr.mxu0 0.0
    %4569 = vmatpush1.msra.mxu0 0.0
    %4570 = vmatprep.subr.mxu0 0.0
    %4571 = vmatpush1.msra.mxu0 0.0
    %4572 = vmatprep.subr.mxu0 0.0
    %4573 = vmatpush1.msra.mxu0 0.0
    %4574 = vmatprep.subr.mxu0 0.0
    %4575 = vmatpush1.msra.mxu0 0.0
    %4576 = vmatprep.subr.mxu0 0.0
    %4577 = vmatpush1.msra.mxu0 0.0
    %4578 = vmatprep.subr.mxu0 0.0
    %4579 = vmatpush1.msra.mxu0 0.0
    %4580 = vmatprep.subr.mxu0 0.0
    %4581 = vmatpush1.msra.mxu0 0.0
    %4582 = vmatprep.subr.mxu0 0.0
    %4583 = vmatpush1.msra.mxu0 0.0
    %4584 = vmatprep.subr.mxu0 0.0
    %4585 = vmatpush1.msra.mxu0 0.0
    %4586 = vmatprep.subr.mxu0 0.0
    %4587 = vmatpush1.msra.mxu0 0.0
    %4588 = vmatprep.subr.mxu0 0.0
    %4589 = vmatpush1.msra.mxu0 0.0
    %4590 = vmatprep.subr.mxu0 0.0
    %4591 = vmatpush1.msra.mxu0 0.0
    %4592 = vmatprep.subr.mxu0 0.0
    %4593 = vmatpush1.msra.mxu0 0.0
    %4594 = vmatprep.subr.mxu0 0.0
    %4595 = vmatpush1.msra.mxu0 0.0
    %4596 = vmatprep.subr.mxu0 0.0
    %4597 = vmatpush1.msra.mxu0 0.0
    %4598 = vmatprep.subr.mxu0 0.0
    %4599 = vmatpush1.msra.mxu0 0.0
    %4600 = vmatprep.subr.mxu0 0.0
    %4601 = vmatpush1.msra.mxu0 0.0
    %4602 = vmatprep.subr.mxu0 0.0
    %4603 = vmatpush1.msra.mxu0 0.0
    %4604 = vmatprep.subr.mxu0 0.0
    %4605 = vmatpush1.msra.mxu0 0.0
    %4606 = vmatprep.subr.mxu0 0.0
    %4607 = vmatpush1.msra.mxu0 0.0
    %4608 = vmatprep.mubr.f32.mxu0 0.0
    %4609 = vmatmul.mubr.f32.gmra.mrb[0].mxu0 %v4045
    %v4610 = vpop.f32.mrb[0].mxu0
    %v4611 = vadd.f32 %v4540, %v4610
    %v4612 = vpop.f32.mrb[0].mxu0
    %v4613 = vadd.f32 %v4542, %v4612
    %4614 = vdwg.mxu0
    %v4615 = vmul.f32 %v4185, 0.5
    %v4616 = vmul.f32 %v4187, 0.5
    %v4617 = vtanh.pop %v4615
    %v4618 = vtanh.pop %v4616
    %v4619 = vadd.f32 %v4617, 1.0
    %v4620 = vadd.f32 %v4618, 1.0
    %v4621 = vmul.f32 %v4619, 0.5
    %v4622 = vmul.f32 %v4620, 0.5
    %v4623 = vmul.f32 %v4327, 0.5
    %v4624 = vmul.f32 %v4329, 0.5
    %v4625 = vtanh.pop %v4623
    %v4626 = vtanh.pop %v4624
    %v4627 = vadd.f32 %v4625, 1.0
    %v4628 = vadd.f32 %v4626, 1.0
    %v4629 = vmul.f32 %v4627, 0.5
    %v4630 = vmul.f32 %v4628, 0.5
    %v4631 = vtanh.pop %v4469
    %v4632 = vtanh.pop %v4471
    %v4633 = vmul.f32 %v4611, 0.5
    %v4634 = vmul.f32 %v4613, 0.5
    %v4635 = vtanh.pop %v4633
    %v4636 = vtanh.pop %v4634
    %v4637 = vadd.f32 %v4635, 1.0
    %v4638 = vadd.f32 %v4636, 1.0
    %v4639 = vmul.f32 %v4637, 0.5
    %v4640 = vmul.f32 %v4638, 0.5
    %v4641 = vmul.f32 %v4629, %v4031
    %v4642 = vmul.f32 %v4630, %v4032
    %v4643 = vmul.f32 %v4621, %v4631
    %v4644 = vmul.f32 %v4622, %v4632
    %v4645 = vadd.f32 %v4641, %v4643
    %v4646 = vadd.f32 %v4642, %v4644
    %v4647 = vtanh.pop %v4645
    %v4648 = vtanh.pop %v4646
    %v4649 = vmul.f32 %v4639, %v4647
    %v4650 = vmul.f32 %v4640, %v4648
    %4651 = vst [vmem:[#allocation2] sm:$0xff] %v4649
    %4652 = vst [vmem:[#allocation2 + $0x8] sm:$0xff] %v4650
    %4653 = vst.msk [vmem:[#allocation2 + $0x10] sm:$0xff] %vm904, %v1570
    %4654 = vst.msk [vmem:[#allocation2 + $0x10] sm:$0xff] %vm910, %v1566
    %v4655 = vld [vmem:[#allocation2] sm:$0xff]
    %v4656 = vld [vmem:[#allocation2 + $0x8] sm:$0xff]
    %v4657 = vld [vmem:[#allocation2 + $0x10] sm:$0xff]
    %v4659 = vsel %vm902, %v4657, 0
    %4661 = vmatprep.subr.mxu0 %v628
    %4662 = vmatpush1.msra.mxu0 %v627
    %4663 = vmatprep.subr.mxu0 %v636
    %4664 = vmatpush1.msra.mxu0 %v635
    %4665 = vmatprep.subr.mxu0 %v644
    %4666 = vmatpush1.msra.mxu0 %v643
    %4667 = vmatprep.subr.mxu0 %v652
    %4668 = vmatpush1.msra.mxu0 %v651
    %4669 = vmatprep.subr.mxu0 %v660
    %4670 = vmatpush1.msra.mxu0 %v659
    %4671 = vmatprep.subr.mxu0 %v668
    %4672 = vmatpush1.msra.mxu0 %v667
    %4673 = vmatprep.subr.mxu0 %v676
    %4674 = vmatpush1.msra.mxu0 %v675
    %4675 = vmatprep.subr.mxu0 %v684
    %4676 = vmatpush1.msra.mxu0 %v683
    %4677 = vmatprep.subr.mxu0 %v692
    %4678 = vmatpush1.msra.mxu0 %v691
    %4679 = vmatprep.subr.mxu0 %v700
    %4680 = vmatpush1.msra.mxu0 %v699
    %4681 = vmatprep.subr.mxu0 %v708
    %4682 = vmatpush1.msra.mxu0 %v707
    %4683 = vmatprep.subr.mxu0 %v716
    %4684 = vmatpush1.msra.mxu0 %v715
    %4685 = vmatprep.subr.mxu0 %v724
    %4686 = vmatpush1.msra.mxu0 %v723
    %4687 = vmatprep.subr.mxu0 %v732
    %4688 = vmatpush1.msra.mxu0 %v731
    %4689 = vmatprep.subr.mxu0 %v740
    %4690 = vmatpush1.msra.mxu0 %v739
    %4691 = vmatprep.subr.mxu0 %v748
    %4692 = vmatpush1.msra.mxu0 %v747
    %4693 = vmatprep.subr.mxu0 %v756
    %4694 = vmatpush1.msra.mxu0 %v755
    %4695 = vmatprep.subr.mxu0 %v764
    %4696 = vmatpush1.msra.mxu0 %v763
    %4697 = vmatprep.subr.mxu0 %v772
    %4698 = vmatpush1.msra.mxu0 %v771
    %4699 = vmatprep.subr.mxu0 %v780
    %4700 = vmatpush1.msra.mxu0 %v779
    %4701 = vmatprep.subr.mxu0 %v788
    %4702 = vmatpush1.msra.mxu0 %v787
    %4703 = vmatprep.subr.mxu0 %v796
    %4704 = vmatpush1.msra.mxu0 %v795
    %4705 = vmatprep.subr.mxu0 %v804
    %4706 = vmatpush1.msra.mxu0 %v803
    %4707 = vmatprep.subr.mxu0 %v812
    %4708 = vmatpush1.msra.mxu0 %v811
    %4709 = vmatprep.subr.mxu0 %v820
    %4710 = vmatpush1.msra.mxu0 %v819
    %4711 = vmatprep.subr.mxu0 %v828
    %4712 = vmatpush1.msra.mxu0 %v827
    %4713 = vmatprep.subr.mxu0 %v836
    %4714 = vmatpush1.msra.mxu0 %v835
    %4715 = vmatprep.subr.mxu0 %v844
    %4716 = vmatpush1.msra.mxu0 %v843
    %4717 = vmatprep.subr.mxu0 %v852
    %4718 = vmatpush1.msra.mxu0 %v851
    %4719 = vmatprep.subr.mxu0 %v860
    %4720 = vmatpush1.msra.mxu0 %v859
    %4721 = vmatprep.subr.mxu0 %v868
    %4722 = vmatpush1.msra.mxu0 %v867
    %4723 = vmatprep.subr.mxu0 %v876
    %4724 = vmatpush1.msra.mxu0 %v875
    %4725 = vmatprep.mubr.f32.mxu0 %v4656
    %4726 = vmatmul.mubr.f32.gmra.mrb[0].mxu0 %v4655
    %v4727 = vpop.f32.mrb[0].mxu0
    %v4728 = vadd.f32 %v919, %v4727
    %v4729 = vpop.f32.mrb[0].mxu0
    %v4730 = vadd.f32 %v923, %v4729
    %4731 = vdwg.mxu0
    %4732 = vmatprep.subr.mxu0 %v884
    %4733 = vmatpush1.msra.mxu0 %v883
    %4734 = vmatprep.subr.mxu0 %v892
    %4735 = vmatpush1.msra.mxu0 %v891
    %4736 = vmatprep.subr.mxu0 0.0
    %4737 = vmatpush1.msra.mxu0 0.0
    %4738 = vmatprep.subr.mxu0 0.0
    %4739 = vmatpush1.msra.mxu0 0.0
    %4740 = vmatprep.subr.mxu0 0.0
    %4741 = vmatpush1.msra.mxu0 0.0
    %4742 = vmatprep.subr.mxu0 0.0
    %4743 = vmatpush1.msra.mxu0 0.0
    %4744 = vmatprep.subr.mxu0 0.0
    %4745 = vmatpush1.msra.mxu0 0.0
    %4746 = vmatprep.subr.mxu0 0.0
    %4747 = vmatpush1.msra.mxu0 0.0
    %4748 = vmatprep.subr.mxu0 0.0
    %4749 = vmatpush1.msra.mxu0 0.0
    %4750 = vmatprep.subr.mxu0 0.0
    %4751 = vmatpush1.msra.mxu0 0.0
    %4752 = vmatprep.subr.mxu0 0.0
    %4753 = vmatpush1.msra.mxu0 0.0
    %4754 = vmatprep.subr.mxu0 0.0
    %4755 = vmatpush1.msra.mxu0 0.0
    %4756 = vmatprep.subr.mxu0 0.0
    %4757 = vmatpush1.msra.mxu0 0.0
    %4758 = vmatprep.subr.mxu0 0.0
    %4759 = vmatpush1.msra.mxu0 0.0
    %4760 = vmatprep.subr.mxu0 0.0
    %4761 = vmatpush1.msra.mxu0 0.0
    %4762 = vmatprep.subr.mxu0 0.0
    %4763 = vmatpush1.msra.mxu0 0.0
    %4764 = vmatprep.subr.mxu0 0.0
    %4765 = vmatpush1.msra.mxu0 0.0
    %4766 = vmatprep.subr.mxu0 0.0
    %4767 = vmatpush1.msra.mxu0 0.0
    %4768 = vmatprep.subr.mxu0 0.0
    %4769 = vmatpush1.msra.mxu0 0.0
    %4770 = vmatprep.subr.mxu0 0.0
    %4771 = vmatpush1.msra.mxu0 0.0
    %4772 = vmatprep.subr.mxu0 0.0
    %4773 = vmatpush1.msra.mxu0 0.0
    %4774 = vmatprep.subr.mxu0 0.0
    %4775 = vmatpush1.msra.mxu0 0.0
    %4776 = vmatprep.subr.mxu0 0.0
    %4777 = vmatpush1.msra.mxu0 0.0
    %4778 = vmatprep.subr.mxu0 0.0
    %4779 = vmatpush1.msra.mxu0 0.0
    %4780 = vmatprep.subr.mxu0 0.0
    %4781 = vmatpush1.msra.mxu0 0.0
    %4782 = vmatprep.subr.mxu0 0.0
    %4783 = vmatpush1.msra.mxu0 0.0
    %4784 = vmatprep.subr.mxu0 0.0
    %4785 = vmatpush1.msra.mxu0 0.0
    %4786 = vmatprep.subr.mxu0 0.0
    %4787 = vmatpush1.msra.mxu0 0.0
    %4788 = vmatprep.subr.mxu0 0.0
    %4789 = vmatpush1.msra.mxu0 0.0
    %4790 = vmatprep.subr.mxu0 0.0
    %4791 = vmatpush1.msra.mxu0 0.0
    %4792 = vmatprep.subr.mxu0 0.0
    %4793 = vmatpush1.msra.mxu0 0.0
    %4794 = vmatprep.subr.mxu0 0.0
    %4795 = vmatpush1.msra.mxu0 0.0
    %4796 = vmatprep.mubr.f32.mxu0 0.0
    %4797 = vmatmul.mubr.f32.gmra.mrb[0].mxu0 %v4659
    %v4798 = vpop.f32.mrb[0].mxu0
    %v4799 = vadd.f32 %v4728, %v4798
    %v4800 = vpop.f32.mrb[0].mxu0
    %v4801 = vadd.f32 %v4730, %v4800
    %4802 = vdwg.mxu0
    %4803 = vmatprep.subr.mxu0 %v630
    %4804 = vmatpush1.msra.mxu0 %v629
    %4805 = vmatprep.subr.mxu0 %v638
    %4806 = vmatpush1.msra.mxu0 %v637
    %4807 = vmatprep.subr.mxu0 %v646
    %4808 = vmatpush1.msra.mxu0 %v645
    %4809 = vmatprep.subr.mxu0 %v654
    %4810 = vmatpush1.msra.mxu0 %v653
    %4811 = vmatprep.subr.mxu0 %v662
    %4812 = vmatpush1.msra.mxu0 %v661
    %4813 = vmatprep.subr.mxu0 %v670
    %4814 = vmatpush1.msra.mxu0 %v669
    %4815 = vmatprep.subr.mxu0 %v678
    %4816 = vmatpush1.msra.mxu0 %v677
    %4817 = vmatprep.subr.mxu0 %v686
    %4818 = vmatpush1.msra.mxu0 %v685
    %4819 = vmatprep.subr.mxu0 %v694
    %4820 = vmatpush1.msra.mxu0 %v693
    %4821 = vmatprep.subr.mxu0 %v702
    %4822 = vmatpush1.msra.mxu0 %v701
    %4823 = vmatprep.subr.mxu0 %v710
    %4824 = vmatpush1.msra.mxu0 %v709
    %4825 = vmatprep.subr.mxu0 %v718
    %4826 = vmatpush1.msra.mxu0 %v717
    %4827 = vmatprep.subr.mxu0 %v726
    %4828 = vmatpush1.msra.mxu0 %v725
    %4829 = vmatprep.subr.mxu0 %v734
    %4830 = vmatpush1.msra.mxu0 %v733
    %4831 = vmatprep.subr.mxu0 %v742
    %4832 = vmatpush1.msra.mxu0 %v741
    %4833 = vmatprep.subr.mxu0 %v750
    %4834 = vmatpush1.msra.mxu0 %v749
    %4835 = vmatprep.subr.mxu0 %v758
    %4836 = vmatpush1.msra.mxu0 %v757
    %4837 = vmatprep.subr.mxu0 %v766
    %4838 = vmatpush1.msra.mxu0 %v765
    %4839 = vmatprep.subr.mxu0 %v774
    %4840 = vmatpush1.msra.mxu0 %v773
    %4841 = vmatprep.subr.mxu0 %v782
    %4842 = vmatpush1.msra.mxu0 %v781
    %4843 = vmatprep.subr.mxu0 %v790
    %4844 = vmatpush1.msra.mxu0 %v789
    %4845 = vmatprep.subr.mxu0 %v798
    %4846 = vmatpush1.msra.mxu0 %v797
    %4847 = vmatprep.subr.mxu0 %v806
    %4848 = vmatpush1.msra.mxu0 %v805
    %4849 = vmatprep.subr.mxu0 %v814
    %4850 = vmatpush1.msra.mxu0 %v813
    %4851 = vmatprep.subr.mxu0 %v822
    %4852 = vmatpush1.msra.mxu0 %v821
    %4853 = vmatprep.subr.mxu0 %v830
    %4854 = vmatpush1.msra.mxu0 %v829
    %4855 = vmatprep.subr.mxu0 %v838
    %4856 = vmatpush1.msra.mxu0 %v837
    %4857 = vmatprep.subr.mxu0 %v846
    %4858 = vmatpush1.msra.mxu0 %v845
    %4859 = vmatprep.subr.mxu0 %v854
    %4860 = vmatpush1.msra.mxu0 %v853
    %4861 = vmatprep.subr.mxu0 %v862
    %4862 = vmatpush1.msra.mxu0 %v861
    %4863 = vmatprep.subr.mxu0 %v870
    %4864 = vmatpush1.msra.mxu0 %v869
    %4865 = vmatprep.subr.mxu0 %v878
    %4866 = vmatpush1.msra.mxu0 %v877
    %4867 = vmatprep.mubr.f32.mxu0 %v4656
    %4868 = vmatmul.mubr.f32.gmra.mrb[0].mxu0 %v4655
    %v4869 = vpop.f32.mrb[0].mxu0
    %v4870 = vadd.f32 %v927, %v4869
    %v4871 = vpop.f32.mrb[0].mxu0
    %v4872 = vadd.f32 %v931, %v4871
    %4873 = vdwg.mxu0
    %4874 = vmatprep.subr.mxu0 %v886
    %4875 = vmatpush1.msra.mxu0 %v885
    %4876 = vmatprep.subr.mxu0 %v894
    %4877 = vmatpush1.msra.mxu0 %v893
    %4878 = vmatprep.subr.mxu0 0.0
    %4879 = vmatpush1.msra.mxu0 0.0
    %4880 = vmatprep.subr.mxu0 0.0
    %4881 = vmatpush1.msra.mxu0 0.0
    %4882 = vmatprep.subr.mxu0 0.0
    %4883 = vmatpush1.msra.mxu0 0.0
    %4884 = vmatprep.subr.mxu0 0.0
    %4885 = vmatpush1.msra.mxu0 0.0
    %4886 = vmatprep.subr.mxu0 0.0
    %4887 = vmatpush1.msra.mxu0 0.0
    %4888 = vmatprep.subr.mxu0 0.0
    %4889 = vmatpush1.msra.mxu0 0.0
    %4890 = vmatprep.subr.mxu0 0.0
    %4891 = vmatpush1.msra.mxu0 0.0
    %4892 = vmatprep.subr.mxu0 0.0
    %4893 = vmatpush1.msra.mxu0 0.0
    %4894 = vmatprep.subr.mxu0 0.0
    %4895 = vmatpush1.msra.mxu0 0.0
    %4896 = vmatprep.subr.mxu0 0.0
    %4897 = vmatpush1.msra.mxu0 0.0
    %4898 = vmatprep.subr.mxu0 0.0
    %4899 = vmatpush1.msra.mxu0 0.0
    %4900 = vmatprep.subr.mxu0 0.0
    %4901 = vmatpush1.msra.mxu0 0.0
    %4902 = vmatprep.subr.mxu0 0.0
    %4903 = vmatpush1.msra.mxu0 0.0
    %4904 = vmatprep.subr.mxu0 0.0
    %4905 = vmatpush1.msra.mxu0 0.0
    %4906 = vmatprep.subr.mxu0 0.0
    %4907 = vmatpush1.msra.mxu0 0.0
    %4908 = vmatprep.subr.mxu0 0.0
    %4909 = vmatpush1.msra.mxu0 0.0
    %4910 = vmatprep.subr.mxu0 0.0
    %4911 = vmatpush1.msra.mxu0 0.0
    %4912 = vmatprep.subr.mxu0 0.0
    %4913 = vmatpush1.msra.mxu0 0.0
    %4914 = vmatprep.subr.mxu0 0.0
    %4915 = vmatpush1.msra.mxu0 0.0
    %4916 = vmatprep.subr.mxu0 0.0
    %4917 = vmatpush1.msra.mxu0 0.0
    %4918 = vmatprep.subr.mxu0 0.0
    %4919 = vmatpush1.msra.mxu0 0.0
    %4920 = vmatprep.subr.mxu0 0.0
    %4921 = vmatpush1.msra.mxu0 0.0
    %4922 = vmatprep.subr.mxu0 0.0
    %4923 = vmatpush1.msra.mxu0 0.0
    %4924 = vmatprep.subr.mxu0 0.0
    %4925 = vmatpush1.msra.mxu0 0.0
    %4926 = vmatprep.subr.mxu0 0.0
    %4927 = vmatpush1.msra.mxu0 0.0
    %4928 = vmatprep.subr.mxu0 0.0
    %4929 = vmatpush1.msra.mxu0 0.0
    %4930 = vmatprep.subr.mxu0 0.0
    %4931 = vmatpush1.msra.mxu0 0.0
    %4932 = vmatprep.subr.mxu0 0.0
    %4933 = vmatpush1.msra.mxu0 0.0
    %4934 = vmatprep.subr.mxu0 0.0
    %4935 = vmatpush1.msra.mxu0 0.0
    %4936 = vmatprep.subr.mxu0 0.0
    %4937 = vmatpush1.msra.mxu0 0.0
    %4938 = vmatprep.mubr.f32.mxu0 0.0
    %4939 = vmatmul.mubr.f32.gmra.mrb[0].mxu0 %v4659
    %v4940 = vpop.f32.mrb[0].mxu0
    %v4941 = vadd.f32 %v4870, %v4940
    %v4942 = vpop.f32.mrb[0].mxu0
    %v4943 = vadd.f32 %v4872, %v4942
    %4944 = vdwg.mxu0
    %4945 = vmatprep.subr.mxu0 %v632
    %4946 = vmatpush1.msra.mxu0 %v631
    %4947 = vmatprep.subr.mxu0 %v640
    %4948 = vmatpush1.msra.mxu0 %v639
    %4949 = vmatprep.subr.mxu0 %v648
    %4950 = vmatpush1.msra.mxu0 %v647
    %4951 = vmatprep.subr.mxu0 %v656
    %4952 = vmatpush1.msra.mxu0 %v655
    %4953 = vmatprep.subr.mxu0 %v664
    %4954 = vmatpush1.msra.mxu0 %v663
    %4955 = vmatprep.subr.mxu0 %v672
    %4956 = vmatpush1.msra.mxu0 %v671
    %4957 = vmatprep.subr.mxu0 %v680
    %4958 = vmatpush1.msra.mxu0 %v679
    %4959 = vmatprep.subr.mxu0 %v688
    %4960 = vmatpush1.msra.mxu0 %v687
    %4961 = vmatprep.subr.mxu0 %v696
    %4962 = vmatpush1.msra.mxu0 %v695
    %4963 = vmatprep.subr.mxu0 %v704
    %4964 = vmatpush1.msra.mxu0 %v703
    %4965 = vmatprep.subr.mxu0 %v712
    %4966 = vmatpush1.msra.mxu0 %v711
    %4967 = vmatprep.subr.mxu0 %v720
    %4968 = vmatpush1.msra.mxu0 %v719
    %4969 = vmatprep.subr.mxu0 %v728
    %4970 = vmatpush1.msra.mxu0 %v727
    %4971 = vmatprep.subr.mxu0 %v736
    %4972 = vmatpush1.msra.mxu0 %v735
    %4973 = vmatprep.subr.mxu0 %v744
    %4974 = vmatpush1.msra.mxu0 %v743
    %4975 = vmatprep.subr.mxu0 %v752
    %4976 = vmatpush1.msra.mxu0 %v751
    %4977 = vmatprep.subr.mxu0 %v760
    %4978 = vmatpush1.msra.mxu0 %v759
    %4979 = vmatprep.subr.mxu0 %v768
    %4980 = vmatpush1.msra.mxu0 %v767
    %4981 = vmatprep.subr.mxu0 %v776
    %4982 = vmatpush1.msra.mxu0 %v775
    %4983 = vmatprep.subr.mxu0 %v784
    %4984 = vmatpush1.msra.mxu0 %v783
    %4985 = vmatprep.subr.mxu0 %v792
    %4986 = vmatpush1.msra.mxu0 %v791
    %4987 = vmatprep.subr.mxu0 %v800
    %4988 = vmatpush1.msra.mxu0 %v799
    %4989 = vmatprep.subr.mxu0 %v808
    %4990 = vmatpush1.msra.mxu0 %v807
    %4991 = vmatprep.subr.mxu0 %v816
    %4992 = vmatpush1.msra.mxu0 %v815
    %4993 = vmatprep.subr.mxu0 %v824
    %4994 = vmatpush1.msra.mxu0 %v823
    %4995 = vmatprep.subr.mxu0 %v832
    %4996 = vmatpush1.msra.mxu0 %v831
    %4997 = vmatprep.subr.mxu0 %v840
    %4998 = vmatpush1.msra.mxu0 %v839
    %4999 = vmatprep.subr.mxu0 %v848
    %5000 = vmatpush1.msra.mxu0 %v847
    %5001 = vmatprep.subr.mxu0 %v856
    %5002 = vmatpush1.msra.mxu0 %v855
    %5003 = vmatprep.subr.mxu0 %v864
    %5004 = vmatpush1.msra.mxu0 %v863
    %5005 = vmatprep.subr.mxu0 %v872
    %5006 = vmatpush1.msra.mxu0 %v871
    %5007 = vmatprep.subr.mxu0 %v880
    %5008 = vmatpush1.msra.mxu0 %v879
    %5009 = vmatprep.mubr.f32.mxu0 %v4656
    %5010 = vmatmul.mubr.f32.gmra.mrb[0].mxu0 %v4655
    %v5011 = vpop.f32.mrb[0].mxu0
    %v5012 = vadd.f32 %v935, %v5011
    %v5013 = vpop.f32.mrb[0].mxu0
    %v5014 = vadd.f32 %v939, %v5013
    %5015 = vdwg.mxu0
    %5016 = vmatprep.subr.mxu0 %v888
    %5017 = vmatpush1.msra.mxu0 %v887
    %5018 = vmatprep.subr.mxu0 %v896
    %5019 = vmatpush1.msra.mxu0 %v895
    %5020 = vmatprep.subr.mxu0 0.0
    %5021 = vmatpush1.msra.mxu0 0.0
    %5022 = vmatprep.subr.mxu0 0.0
    %5023 = vmatpush1.msra.mxu0 0.0
    %5024 = vmatprep.subr.mxu0 0.0
    %5025 = vmatpush1.msra.mxu0 0.0
    %5026 = vmatprep.subr.mxu0 0.0
    %5027 = vmatpush1.msra.mxu0 0.0
    %5028 = vmatprep.subr.mxu0 0.0
    %5029 = vmatpush1.msra.mxu0 0.0
    %5030 = vmatprep.subr.mxu0 0.0
    %5031 = vmatpush1.msra.mxu0 0.0
    %5032 = vmatprep.subr.mxu0 0.0
    %5033 = vmatpush1.msra.mxu0 0.0
    %5034 = vmatprep.subr.mxu0 0.0
    %5035 = vmatpush1.msra.mxu0 0.0
    %5036 = vmatprep.subr.mxu0 0.0
    %5037 = vmatpush1.msra.mxu0 0.0
    %5038 = vmatprep.subr.mxu0 0.0
    %5039 = vmatpush1.msra.mxu0 0.0
    %5040 = vmatprep.subr.mxu0 0.0
    %5041 = vmatpush1.msra.mxu0 0.0
    %5042 = vmatprep.subr.mxu0 0.0
    %5043 = vmatpush1.msra.mxu0 0.0
    %5044 = vmatprep.subr.mxu0 0.0
    %5045 = vmatpush1.msra.mxu0 0.0
    %5046 = vmatprep.subr.mxu0 0.0
    %5047 = vmatpush1.msra.mxu0 0.0
    %5048 = vmatprep.subr.mxu0 0.0
    %5049 = vmatpush1.msra.mxu0 0.0
    %5050 = vmatprep.subr.mxu0 0.0
    %5051 = vmatpush1.msra.mxu0 0.0
    %5052 = vmatprep.subr.mxu0 0.0
    %5053 = vmatpush1.msra.mxu0 0.0
    %5054 = vmatprep.subr.mxu0 0.0
    %5055 = vmatpush1.msra.mxu0 0.0
    %5056 = vmatprep.subr.mxu0 0.0
    %5057 = vmatpush1.msra.mxu0 0.0
    %5058 = vmatprep.subr.mxu0 0.0
    %5059 = vmatpush1.msra.mxu0 0.0
    %5060 = vmatprep.subr.mxu0 0.0
    %5061 = vmatpush1.msra.mxu0 0.0
    %5062 = vmatprep.subr.mxu0 0.0
    %5063 = vmatpush1.msra.mxu0 0.0
    %5064 = vmatprep.subr.mxu0 0.0
    %5065 = vmatpush1.msra.mxu0 0.0
    %5066 = vmatprep.subr.mxu0 0.0
    %5067 = vmatpush1.msra.mxu0 0.0
    %5068 = vmatprep.subr.mxu0 0.0
    %5069 = vmatpush1.msra.mxu0 0.0
    %5070 = vmatprep.subr.mxu0 0.0
    %5071 = vmatpush1.msra.mxu0 0.0
    %5072 = vmatprep.subr.mxu0 0.0
    %5073 = vmatpush1.msra.mxu0 0.0
    %5074 = vmatprep.subr.mxu0 0.0
    %5075 = vmatpush1.msra.mxu0 0.0
    %5076 = vmatprep.subr.mxu0 0.0
    %5077 = vmatpush1.msra.mxu0 0.0
    %5078 = vmatprep.subr.mxu0 0.0
    %5079 = vmatpush1.msra.mxu0 0.0
    %5080 = vmatprep.mubr.f32.mxu0 0.0
    %5081 = vmatmul.mubr.f32.gmra.mrb[0].mxu0 %v4659
    %v5082 = vpop.f32.mrb[0].mxu0
    %v5083 = vadd.f32 %v5012, %v5082
    %v5084 = vpop.f32.mrb[0].mxu0
    %v5085 = vadd.f32 %v5014, %v5084
    %5086 = vdwg.mxu0
    %5087 = vmatprep.subr.mxu0 %v634
    %5088 = vmatpush1.msra.mxu0 %v633
    %5089 = vmatprep.subr.mxu0 %v642
    %5090 = vmatpush1.msra.mxu0 %v641
    %5091 = vmatprep.subr.mxu0 %v650
    %5092 = vmatpush1.msra.mxu0 %v649
    %5093 = vmatprep.subr.mxu0 %v658
    %5094 = vmatpush1.msra.mxu0 %v657
    %5095 = vmatprep.subr.mxu0 %v666
    %5096 = vmatpush1.msra.mxu0 %v665
    %5097 = vmatprep.subr.mxu0 %v674
    %5098 = vmatpush1.msra.mxu0 %v673
    %5099 = vmatprep.subr.mxu0 %v682
    %5100 = vmatpush1.msra.mxu0 %v681
    %5101 = vmatprep.subr.mxu0 %v690
    %5102 = vmatpush1.msra.mxu0 %v689
    %5103 = vmatprep.subr.mxu0 %v698
    %5104 = vmatpush1.msra.mxu0 %v697
    %5105 = vmatprep.subr.mxu0 %v706
    %5106 = vmatpush1.msra.mxu0 %v705
    %5107 = vmatprep.subr.mxu0 %v714
    %5108 = vmatpush1.msra.mxu0 %v713
    %5109 = vmatprep.subr.mxu0 %v722
    %5110 = vmatpush1.msra.mxu0 %v721
    %5111 = vmatprep.subr.mxu0 %v730
    %5112 = vmatpush1.msra.mxu0 %v729
    %5113 = vmatprep.subr.mxu0 %v738
    %5114 = vmatpush1.msra.mxu0 %v737
    %5115 = vmatprep.subr.mxu0 %v746
    %5116 = vmatpush1.msra.mxu0 %v745
    %5117 = vmatprep.subr.mxu0 %v754
    %5118 = vmatpush1.msra.mxu0 %v753
    %5119 = vmatprep.subr.mxu0 %v762
    %5120 = vmatpush1.msra.mxu0 %v761
    %5121 = vmatprep.subr.mxu0 %v770
    %5122 = vmatpush1.msra.mxu0 %v769
    %5123 = vmatprep.subr.mxu0 %v778
    %5124 = vmatpush1.msra.mxu0 %v777
    %5125 = vmatprep.subr.mxu0 %v786
    %5126 = vmatpush1.msra.mxu0 %v785
    %5127 = vmatprep.subr.mxu0 %v794
    %5128 = vmatpush1.msra.mxu0 %v793
    %5129 = vmatprep.subr.mxu0 %v802
    %5130 = vmatpush1.msra.mxu0 %v801
    %5131 = vmatprep.subr.mxu0 %v810
    %5132 = vmatpush1.msra.mxu0 %v809
    %5133 = vmatprep.subr.mxu0 %v818
    %5134 = vmatpush1.msra.mxu0 %v817
    %5135 = vmatprep.subr.mxu0 %v826
    %5136 = vmatpush1.msra.mxu0 %v825
    %5137 = vmatprep.subr.mxu0 %v834
    %5138 = vmatpush1.msra.mxu0 %v833
    %5139 = vmatprep.subr.mxu0 %v842
    %5140 = vmatpush1.msra.mxu0 %v841
    %5141 = vmatprep.subr.mxu0 %v850
    %5142 = vmatpush1.msra.mxu0 %v849
    %5143 = vmatprep.subr.mxu0 %v858
    %5144 = vmatpush1.msra.mxu0 %v857
    %5145 = vmatprep.subr.mxu0 %v866
    %5146 = vmatpush1.msra.mxu0 %v865
    %5147 = vmatprep.subr.mxu0 %v874
    %5148 = vmatpush1.msra.mxu0 %v873
    %5149 = vmatprep.subr.mxu0 %v882
    %5150 = vmatpush1.msra.mxu0 %v881
    %5151 = vmatprep.mubr.f32.mxu0 %v4656
    %5152 = vmatmul.mubr.f32.gmra.mrb[0].mxu0 %v4655
    %v5153 = vpop.f32.mrb[0].mxu0
    %v5154 = vadd.f32 %v943, %v5153
    %v5155 = vpop.f32.mrb[0].mxu0
    %v5156 = vadd.f32 %v947, %v5155
    %5157 = vdwg.mxu0
    %5158 = vmatprep.subr.mxu0 %v890
    %5159 = vmatpush1.msra.mxu0 %v889
    %5160 = vmatprep.subr.mxu0 %v898
    %5161 = vmatpush1.msra.mxu0 %v897
    %5162 = vmatprep.subr.mxu0 0.0
    %5163 = vmatpush1.msra.mxu0 0.0
    %5164 = vmatprep.subr.mxu0 0.0
    %5165 = vmatpush1.msra.mxu0 0.0
    %5166 = vmatprep.subr.mxu0 0.0
    %5167 = vmatpush1.msra.mxu0 0.0
    %5168 = vmatprep.subr.mxu0 0.0
    %5169 = vmatpush1.msra.mxu0 0.0
    %5170 = vmatprep.subr.mxu0 0.0
    %5171 = vmatpush1.msra.mxu0 0.0
    %5172 = vmatprep.subr.mxu0 0.0
    %5173 = vmatpush1.msra.mxu0 0.0
    %5174 = vmatprep.subr.mxu0 0.0
    %5175 = vmatpush1.msra.mxu0 0.0
    %5176 = vmatprep.subr.mxu0 0.0
    %5177 = vmatpush1.msra.mxu0 0.0
    %5178 = vmatprep.subr.mxu0 0.0
    %5179 = vmatpush1.msra.mxu0 0.0
    %5180 = vmatprep.subr.mxu0 0.0
    %5181 = vmatpush1.msra.mxu0 0.0
    %5182 = vmatprep.subr.mxu0 0.0
    %5183 = vmatpush1.msra.mxu0 0.0
    %5184 = vmatprep.subr.mxu0 0.0
    %5185 = vmatpush1.msra.mxu0 0.0
    %5186 = vmatprep.subr.mxu0 0.0
    %5187 = vmatpush1.msra.mxu0 0.0
    %5188 = vmatprep.subr.mxu0 0.0
    %5189 = vmatpush1.msra.mxu0 0.0
    %5190 = vmatprep.subr.mxu0 0.0
    %5191 = vmatpush1.msra.mxu0 0.0
    %5192 = vmatprep.subr.mxu0 0.0
    %5193 = vmatpush1.msra.mxu0 0.0
    %5194 = vmatprep.subr.mxu0 0.0
    %5195 = vmatpush1.msra.mxu0 0.0
    %5196 = vmatprep.subr.mxu0 0.0
    %5197 = vmatpush1.msra.mxu0 0.0
    %5198 = vmatprep.subr.mxu0 0.0
    %5199 = vmatpush1.msra.mxu0 0.0
    %5200 = vmatprep.subr.mxu0 0.0
    %5201 = vmatpush1.msra.mxu0 0.0
    %5202 = vmatprep.subr.mxu0 0.0
    %5203 = vmatpush1.msra.mxu0 0.0
    %5204 = vmatprep.subr.mxu0 0.0
    %5205 = vmatpush1.msra.mxu0 0.0
    %5206 = vmatprep.subr.mxu0 0.0
    %5207 = vmatpush1.msra.mxu0 0.0
    %5208 = vmatprep.subr.mxu0 0.0
    %5209 = vmatpush1.msra.mxu0 0.0
    %5210 = vmatprep.subr.mxu0 0.0
    %5211 = vmatpush1.msra.mxu0 0.0
    %5212 = vmatprep.subr.mxu0 0.0
    %5213 = vmatpush1.msra.mxu0 0.0
    %5214 = vmatprep.subr.mxu0 0.0
    %5215 = vmatpush1.msra.mxu0 0.0
    %5216 = vmatprep.subr.mxu0 0.0
    %5217 = vmatpush1.msra.mxu0 0.0
    %5218 = vmatprep.subr.mxu0 0.0
    %5219 = vmatpush1.msra.mxu0 0.0
    %5220 = vmatprep.subr.mxu0 0.0
    %5221 = vmatpush1.msra.mxu0 0.0
    %5222 = vmatprep.mubr.f32.mxu0 0.0
    %5223 = vmatmul.mubr.f32.gmra.mrb[0].mxu0 %v4659
    %v5224 = vpop.f32.mrb[0].mxu0
    %v5225 = vadd.f32 %v5154, %v5224
    %v5226 = vpop.f32.mrb[0].mxu0
    %v5227 = vadd.f32 %v5156, %v5226
    %5228 = vdwg.mxu0
    %v5229 = vmul.f32 %v4799, 0.5
    %v5230 = vmul.f32 %v4801, 0.5
    %v5231 = vtanh.pop %v5229
    %v5232 = vtanh.pop %v5230
    %v5233 = vadd.f32 %v5231, 1.0
    %v5234 = vadd.f32 %v5232, 1.0
    %v5235 = vmul.f32 %v5233, 0.5
    %v5236 = vmul.f32 %v5234, 0.5
    %v5237 = vmul.f32 %v4941, 0.5
    %v5238 = vmul.f32 %v4943, 0.5
    %v5239 = vtanh.pop %v5237
    %v5240 = vtanh.pop %v5238
    %v5241 = vadd.f32 %v5239, 1.0
    %v5242 = vadd.f32 %v5240, 1.0
    %v5243 = vmul.f32 %v5241, 0.5
    %v5244 = vmul.f32 %v5242, 0.5
    %v5245 = vtanh.pop %v5083
    %v5246 = vtanh.pop %v5085
    %v5247 = vmul.f32 %v5225, 0.5
    %v5248 = vmul.f32 %v5227, 0.5
    %v5249 = vtanh.pop %v5247
    %v5250 = vtanh.pop %v5248
    %v5251 = vadd.f32 %v5249, 1.0
    %v5252 = vadd.f32 %v5250, 1.0
    %v5253 = vmul.f32 %v5251, 0.5
    %v5254 = vmul.f32 %v5252, 0.5
    %v5255 = vmul.f32 %v5243, %v4645
    %v5256 = vmul.f32 %v5244, %v4646
    %v5257 = vmul.f32 %v5235, %v5245
    %v5258 = vmul.f32 %v5236, %v5246
    %v5259 = vadd.f32 %v5255, %v5257
    %v5260 = vadd.f32 %v5256, %v5258
    %v5261 = vtanh.pop %v5259
    %v5262 = vtanh.pop %v5260
    %v5263 = vmul.f32 %v5253, %v5261
    %v5264 = vmul.f32 %v5254, %v5262
    %5265 = vst [vmem:[#allocation2] sm:$0xff] %v5263
    %5266 = vst [vmem:[#allocation2 + $0x8] sm:$0xff] %v5264
    %5267 = vst.msk [vmem:[#allocation2 + $0x10] sm:$0xff] %vm904, %v908
    %5268 = vst.msk [vmem:[#allocation2 + $0x10] sm:$0xff] %vm910, %v626
    %v5269 = vld [vmem:[#allocation2] sm:$0xff]
    %v5270 = vld [vmem:[#allocation2 + $0x8] sm:$0xff]
    %v5271 = vld [vmem:[#allocation2 + $0x10] sm:$0xff]
    %v5273 = vsel %vm902, %v5271, 0
    %5275 = vmatprep.subr.mxu0 %v628
    %5276 = vmatpush1.msra.mxu0 %v627
    %5277 = vmatprep.subr.mxu0 %v636
    %5278 = vmatpush1.msra.mxu0 %v635
    %5279 = vmatprep.subr.mxu0 %v644
    %5280 = vmatpush1.msra.mxu0 %v643
    %5281 = vmatprep.subr.mxu0 %v652
    %5282 = vmatpush1.msra.mxu0 %v651
    %5283 = vmatprep.subr.mxu0 %v660
    %5284 = vmatpush1.msra.mxu0 %v659
    %5285 = vmatprep.subr.mxu0 %v668
    %5286 = vmatpush1.msra.mxu0 %v667
    %5287 = vmatprep.subr.mxu0 %v676
    %5288 = vmatpush1.msra.mxu0 %v675
    %5289 = vmatprep.subr.mxu0 %v684
    %5290 = vmatpush1.msra.mxu0 %v683
    %5291 = vmatprep.subr.mxu0 %v692
    %5292 = vmatpush1.msra.mxu0 %v691
    %5293 = vmatprep.subr.mxu0 %v700
    %5294 = vmatpush1.msra.mxu0 %v699
    %5295 = vmatprep.subr.mxu0 %v708
    %5296 = vmatpush1.msra.mxu0 %v707
    %5297 = vmatprep.subr.mxu0 %v716
    %5298 = vmatpush1.msra.mxu0 %v715
    %5299 = vmatprep.subr.mxu0 %v724
    %5300 = vmatpush1.msra.mxu0 %v723
    %5301 = vmatprep.subr.mxu0 %v732
    %5302 = vmatpush1.msra.mxu0 %v731
    %5303 = vmatprep.subr.mxu0 %v740
    %5304 = vmatpush1.msra.mxu0 %v739
    %5305 = vmatprep.subr.mxu0 %v748
    %5306 = vmatpush1.msra.mxu0 %v747
    %5307 = vmatprep.subr.mxu0 %v756
    %5308 = vmatpush1.msra.mxu0 %v755
    %5309 = vmatprep.subr.mxu0 %v764
    %5310 = vmatpush1.msra.mxu0 %v763
    %5311 = vmatprep.subr.mxu0 %v772
    %5312 = vmatpush1.msra.mxu0 %v771
    %5313 = vmatprep.subr.mxu0 %v780
    %5314 = vmatpush1.msra.mxu0 %v779
    %5315 = vmatprep.subr.mxu0 %v788
    %5316 = vmatpush1.msra.mxu0 %v787
    %5317 = vmatprep.subr.mxu0 %v796
    %5318 = vmatpush1.msra.mxu0 %v795
    %5319 = vmatprep.subr.mxu0 %v804
    %5320 = vmatpush1.msra.mxu0 %v803
    %5321 = vmatprep.subr.mxu0 %v812
    %5322 = vmatpush1.msra.mxu0 %v811
    %5323 = vmatprep.subr.mxu0 %v820
    %5324 = vmatpush1.msra.mxu0 %v819
    %5325 = vmatprep.subr.mxu0 %v828
    %5326 = vmatpush1.msra.mxu0 %v827
    %5327 = vmatprep.subr.mxu0 %v836
    %5328 = vmatpush1.msra.mxu0 %v835
    %5329 = vmatprep.subr.mxu0 %v844
    %5330 = vmatpush1.msra.mxu0 %v843
    %5331 = vmatprep.subr.mxu0 %v852
    %5332 = vmatpush1.msra.mxu0 %v851
    %5333 = vmatprep.subr.mxu0 %v860
    %5334 = vmatpush1.msra.mxu0 %v859
    %5335 = vmatprep.subr.mxu0 %v868
    %5336 = vmatpush1.msra.mxu0 %v867
    %5337 = vmatprep.subr.mxu0 %v876
    %5338 = vmatpush1.msra.mxu0 %v875
    %5339 = vmatprep.mubr.f32.mxu0 %v5270
    %5340 = vmatmul.mubr.f32.gmra.mrb[0].mxu0 %v5269
    %v5341 = vpop.f32.mrb[0].mxu0
    %v5342 = vadd.f32 %v919, %v5341
    %v5343 = vpop.f32.mrb[0].mxu0
    %v5344 = vadd.f32 %v923, %v5343
    %5345 = vdwg.mxu0
    %5346 = vmatprep.subr.mxu0 %v884
    %5347 = vmatpush1.msra.mxu0 %v883
    %5348 = vmatprep.subr.mxu0 %v892
    %5349 = vmatpush1.msra.mxu0 %v891
    %5350 = vmatprep.subr.mxu0 0.0
    %5351 = vmatpush1.msra.mxu0 0.0
    %5352 = vmatprep.subr.mxu0 0.0
    %5353 = vmatpush1.msra.mxu0 0.0
    %5354 = vmatprep.subr.mxu0 0.0
    %5355 = vmatpush1.msra.mxu0 0.0
    %5356 = vmatprep.subr.mxu0 0.0
    %5357 = vmatpush1.msra.mxu0 0.0
    %5358 = vmatprep.subr.mxu0 0.0
    %5359 = vmatpush1.msra.mxu0 0.0
    %5360 = vmatprep.subr.mxu0 0.0
    %5361 = vmatpush1.msra.mxu0 0.0
    %5362 = vmatprep.subr.mxu0 0.0
    %5363 = vmatpush1.msra.mxu0 0.0
    %5364 = vmatprep.subr.mxu0 0.0
    %5365 = vmatpush1.msra.mxu0 0.0
    %5366 = vmatprep.subr.mxu0 0.0
    %5367 = vmatpush1.msra.mxu0 0.0
    %5368 = vmatprep.subr.mxu0 0.0
    %5369 = vmatpush1.msra.mxu0 0.0
    %5370 = vmatprep.subr.mxu0 0.0
    %5371 = vmatpush1.msra.mxu0 0.0
    %5372 = vmatprep.subr.mxu0 0.0
    %5373 = vmatpush1.msra.mxu0 0.0
    %5374 = vmatprep.subr.mxu0 0.0
    %5375 = vmatpush1.msra.mxu0 0.0
    %5376 = vmatprep.subr.mxu0 0.0
    %5377 = vmatpush1.msra.mxu0 0.0
    %5378 = vmatprep.subr.mxu0 0.0
    %5379 = vmatpush1.msra.mxu0 0.0
    %5380 = vmatprep.subr.mxu0 0.0
    %5381 = vmatpush1.msra.mxu0 0.0
    %5382 = vmatprep.subr.mxu0 0.0
    %5383 = vmatpush1.msra.mxu0 0.0
    %5384 = vmatprep.subr.mxu0 0.0
    %5385 = vmatpush1.msra.mxu0 0.0
    %5386 = vmatprep.subr.mxu0 0.0
    %5387 = vmatpush1.msra.mxu0 0.0
    %5388 = vmatprep.subr.mxu0 0.0
    %5389 = vmatpush1.msra.mxu0 0.0
    %5390 = vmatprep.subr.mxu0 0.0
    %5391 = vmatpush1.msra.mxu0 0.0
    %5392 = vmatprep.subr.mxu0 0.0
    %5393 = vmatpush1.msra.mxu0 0.0
    %5394 = vmatprep.subr.mxu0 0.0
    %5395 = vmatpush1.msra.mxu0 0.0
    %5396 = vmatprep.subr.mxu0 0.0
    %5397 = vmatpush1.msra.mxu0 0.0
    %5398 = vmatprep.subr.mxu0 0.0
    %5399 = vmatpush1.msra.mxu0 0.0
    %5400 = vmatprep.subr.mxu0 0.0
    %5401 = vmatpush1.msra.mxu0 0.0
    %5402 = vmatprep.subr.mxu0 0.0
    %5403 = vmatpush1.msra.mxu0 0.0
    %5404 = vmatprep.subr.mxu0 0.0
    %5405 = vmatpush1.msra.mxu0 0.0
    %5406 = vmatprep.subr.mxu0 0.0
    %5407 = vmatpush1.msra.mxu0 0.0
    %5408 = vmatprep.subr.mxu0 0.0
    %5409 = vmatpush1.msra.mxu0 0.0
    %5410 = vmatprep.mubr.f32.mxu0 0.0
    %5411 = vmatmul.mubr.f32.gmra.mrb[0].mxu0 %v5273
    %v5412 = vpop.f32.mrb[0].mxu0
    %v5413 = vadd.f32 %v5342, %v5412
    %v5414 = vpop.f32.mrb[0].mxu0
    %v5415 = vadd.f32 %v5344, %v5414
    %5416 = vdwg.mxu0
    %5417 = vmatprep.subr.mxu0 %v630
    %5418 = vmatpush1.msra.mxu0 %v629
    %5419 = vmatprep.subr.mxu0 %v638
    %5420 = vmatpush1.msra.mxu0 %v637
    %5421 = vmatprep.subr.mxu0 %v646
    %5422 = vmatpush1.msra.mxu0 %v645
    %5423 = vmatprep.subr.mxu0 %v654
    %5424 = vmatpush1.msra.mxu0 %v653
    %5425 = vmatprep.subr.mxu0 %v662
    %5426 = vmatpush1.msra.mxu0 %v661
    %5427 = vmatprep.subr.mxu0 %v670
    %5428 = vmatpush1.msra.mxu0 %v669
    %5429 = vmatprep.subr.mxu0 %v678
    %5430 = vmatpush1.msra.mxu0 %v677
    %5431 = vmatprep.subr.mxu0 %v686
    %5432 = vmatpush1.msra.mxu0 %v685
    %5433 = vmatprep.subr.mxu0 %v694
    %5434 = vmatpush1.msra.mxu0 %v693
    %5435 = vmatprep.subr.mxu0 %v702
    %5436 = vmatpush1.msra.mxu0 %v701
    %5437 = vmatprep.subr.mxu0 %v710
    %5438 = vmatpush1.msra.mxu0 %v709
    %5439 = vmatprep.subr.mxu0 %v718
    %5440 = vmatpush1.msra.mxu0 %v717
    %5441 = vmatprep.subr.mxu0 %v726
    %5442 = vmatpush1.msra.mxu0 %v725
    %5443 = vmatprep.subr.mxu0 %v734
    %5444 = vmatpush1.msra.mxu0 %v733
    %5445 = vmatprep.subr.mxu0 %v742
    %5446 = vmatpush1.msra.mxu0 %v741
    %5447 = vmatprep.subr.mxu0 %v750
    %5448 = vmatpush1.msra.mxu0 %v749
    %5449 = vmatprep.subr.mxu0 %v758
    %5450 = vmatpush1.msra.mxu0 %v757
    %5451 = vmatprep.subr.mxu0 %v766
    %5452 = vmatpush1.msra.mxu0 %v765
    %5453 = vmatprep.subr.mxu0 %v774
    %5454 = vmatpush1.msra.mxu0 %v773
    %5455 = vmatprep.subr.mxu0 %v782
    %5456 = vmatpush1.msra.mxu0 %v781
    %5457 = vmatprep.subr.mxu0 %v790
    %5458 = vmatpush1.msra.mxu0 %v789
    %5459 = vmatprep.subr.mxu0 %v798
    %5460 = vmatpush1.msra.mxu0 %v797
    %5461 = vmatprep.subr.mxu0 %v806
    %5462 = vmatpush1.msra.mxu0 %v805
    %5463 = vmatprep.subr.mxu0 %v814
    %5464 = vmatpush1.msra.mxu0 %v813
    %5465 = vmatprep.subr.mxu0 %v822
    %5466 = vmatpush1.msra.mxu0 %v821
    %5467 = vmatprep.subr.mxu0 %v830
    %5468 = vmatpush1.msra.mxu0 %v829
    %5469 = vmatprep.subr.mxu0 %v838
    %5470 = vmatpush1.msra.mxu0 %v837
    %5471 = vmatprep.subr.mxu0 %v846
    %5472 = vmatpush1.msra.mxu0 %v845
    %5473 = vmatprep.subr.mxu0 %v854
    %5474 = vmatpush1.msra.mxu0 %v853
    %5475 = vmatprep.subr.mxu0 %v862
    %5476 = vmatpush1.msra.mxu0 %v861
    %5477 = vmatprep.subr.mxu0 %v870
    %5478 = vmatpush1.msra.mxu0 %v869
    %5479 = vmatprep.subr.mxu0 %v878
    %5480 = vmatpush1.msra.mxu0 %v877
    %5481 = vmatprep.mubr.f32.mxu0 %v5270
    %5482 = vmatmul.mubr.f32.gmra.mrb[0].mxu0 %v5269
    %v5483 = vpop.f32.mrb[0].mxu0
    %v5484 = vadd.f32 %v927, %v5483
    %v5485 = vpop.f32.mrb[0].mxu0
    %v5486 = vadd.f32 %v931, %v5485
    %5487 = vdwg.mxu0
    %5488 = vmatprep.subr.mxu0 %v886
    %5489 = vmatpush1.msra.mxu0 %v885
    %5490 = vmatprep.subr.mxu0 %v894
    %5491 = vmatpush1.msra.mxu0 %v893
    %5492 = vmatprep.subr.mxu0 0.0
    %5493 = vmatpush1.msra.mxu0 0.0
    %5494 = vmatprep.subr.mxu0 0.0
    %5495 = vmatpush1.msra.mxu0 0.0
    %5496 = vmatprep.subr.mxu0 0.0
    %5497 = vmatpush1.msra.mxu0 0.0
    %5498 = vmatprep.subr.mxu0 0.0
    %5499 = vmatpush1.msra.mxu0 0.0
    %5500 = vmatprep.subr.mxu0 0.0
    %5501 = vmatpush1.msra.mxu0 0.0
    %5502 = vmatprep.subr.mxu0 0.0
    %5503 = vmatpush1.msra.mxu0 0.0
    %5504 = vmatprep.subr.mxu0 0.0
    %5505 = vmatpush1.msra.mxu0 0.0
    %5506 = vmatprep.subr.mxu0 0.0
    %5507 = vmatpush1.msra.mxu0 0.0
    %5508 = vmatprep.subr.mxu0 0.0
    %5509 = vmatpush1.msra.mxu0 0.0
    %5510 = vmatprep.subr.mxu0 0.0
    %5511 = vmatpush1.msra.mxu0 0.0
    %5512 = vmatprep.subr.mxu0 0.0
    %5513 = vmatpush1.msra.mxu0 0.0
    %5514 = vmatprep.subr.mxu0 0.0
    %5515 = vmatpush1.msra.mxu0 0.0
    %5516 = vmatprep.subr.mxu0 0.0
    %5517 = vmatpush1.msra.mxu0 0.0
    %5518 = vmatprep.subr.mxu0 0.0
    %5519 = vmatpush1.msra.mxu0 0.0
    %5520 = vmatprep.subr.mxu0 0.0
    %5521 = vmatpush1.msra.mxu0 0.0
    %5522 = vmatprep.subr.mxu0 0.0
    %5523 = vmatpush1.msra.mxu0 0.0
    %5524 = vmatprep.subr.mxu0 0.0
    %5525 = vmatpush1.msra.mxu0 0.0
    %5526 = vmatprep.subr.mxu0 0.0
    %5527 = vmatpush1.msra.mxu0 0.0
    %5528 = vmatprep.subr.mxu0 0.0
    %5529 = vmatpush1.msra.mxu0 0.0
    %5530 = vmatprep.subr.mxu0 0.0
    %5531 = vmatpush1.msra.mxu0 0.0
    %5532 = vmatprep.subr.mxu0 0.0
    %5533 = vmatpush1.msra.mxu0 0.0
    %5534 = vmatprep.subr.mxu0 0.0
    %5535 = vmatpush1.msra.mxu0 0.0
    %5536 = vmatprep.subr.mxu0 0.0
    %5537 = vmatpush1.msra.mxu0 0.0
    %5538 = vmatprep.subr.mxu0 0.0
    %5539 = vmatpush1.msra.mxu0 0.0
    %5540 = vmatprep.subr.mxu0 0.0
    %5541 = vmatpush1.msra.mxu0 0.0
    %5542 = vmatprep.subr.mxu0 0.0
    %5543 = vmatpush1.msra.mxu0 0.0
    %5544 = vmatprep.subr.mxu0 0.0
    %5545 = vmatpush1.msra.mxu0 0.0
    %5546 = vmatprep.subr.mxu0 0.0
    %5547 = vmatpush1.msra.mxu0 0.0
    %5548 = vmatprep.subr.mxu0 0.0
    %5549 = vmatpush1.msra.mxu0 0.0
    %5550 = vmatprep.subr.mxu0 0.0
    %5551 = vmatpush1.msra.mxu0 0.0
    %5552 = vmatprep.mubr.f32.mxu0 0.0
    %5553 = vmatmul.mubr.f32.gmra.mrb[0].mxu0 %v5273
    %v5554 = vpop.f32.mrb[0].mxu0
    %v5555 = vadd.f32 %v5484, %v5554
    %v5556 = vpop.f32.mrb[0].mxu0
    %v5557 = vadd.f32 %v5486, %v5556
    %5558 = vdwg.mxu0
    %5559 = vmatprep.subr.mxu0 %v632
    %5560 = vmatpush1.msra.mxu0 %v631
    %5561 = vmatprep.subr.mxu0 %v640
    %5562 = vmatpush1.msra.mxu0 %v639
    %5563 = vmatprep.subr.mxu0 %v648
    %5564 = vmatpush1.msra.mxu0 %v647
    %5565 = vmatprep.subr.mxu0 %v656
    %5566 = vmatpush1.msra.mxu0 %v655
    %5567 = vmatprep.subr.mxu0 %v664
    %5568 = vmatpush1.msra.mxu0 %v663
    %5569 = vmatprep.subr.mxu0 %v672
    %5570 = vmatpush1.msra.mxu0 %v671
    %5571 = vmatprep.subr.mxu0 %v680
    %5572 = vmatpush1.msra.mxu0 %v679
    %5573 = vmatprep.subr.mxu0 %v688
    %5574 = vmatpush1.msra.mxu0 %v687
    %5575 = vmatprep.subr.mxu0 %v696
    %5576 = vmatpush1.msra.mxu0 %v695
    %5577 = vmatprep.subr.mxu0 %v704
    %5578 = vmatpush1.msra.mxu0 %v703
    %5579 = vmatprep.subr.mxu0 %v712
    %5580 = vmatpush1.msra.mxu0 %v711
    %5581 = vmatprep.subr.mxu0 %v720
    %5582 = vmatpush1.msra.mxu0 %v719
    %5583 = vmatprep.subr.mxu0 %v728
    %5584 = vmatpush1.msra.mxu0 %v727
    %5585 = vmatprep.subr.mxu0 %v736
    %5586 = vmatpush1.msra.mxu0 %v735
    %5587 = vmatprep.subr.mxu0 %v744
    %5588 = vmatpush1.msra.mxu0 %v743
    %5589 = vmatprep.subr.mxu0 %v752
    %5590 = vmatpush1.msra.mxu0 %v751
    %5591 = vmatprep.subr.mxu0 %v760
    %5592 = vmatpush1.msra.mxu0 %v759
    %5593 = vmatprep.subr.mxu0 %v768
    %5594 = vmatpush1.msra.mxu0 %v767
    %5595 = vmatprep.subr.mxu0 %v776
    %5596 = vmatpush1.msra.mxu0 %v775
    %5597 = vmatprep.subr.mxu0 %v784
    %5598 = vmatpush1.msra.mxu0 %v783
    %5599 = vmatprep.subr.mxu0 %v792
    %5600 = vmatpush1.msra.mxu0 %v791
    %5601 = vmatprep.subr.mxu0 %v800
    %5602 = vmatpush1.msra.mxu0 %v799
    %5603 = vmatprep.subr.mxu0 %v808
    %5604 = vmatpush1.msra.mxu0 %v807
    %5605 = vmatprep.subr.mxu0 %v816
    %5606 = vmatpush1.msra.mxu0 %v815
    %5607 = vmatprep.subr.mxu0 %v824
    %5608 = vmatpush1.msra.mxu0 %v823
    %5609 = vmatprep.subr.mxu0 %v832
    %5610 = vmatpush1.msra.mxu0 %v831
    %5611 = vmatprep.subr.mxu0 %v840
    %5612 = vmatpush1.msra.mxu0 %v839
    %5613 = vmatprep.subr.mxu0 %v848
    %5614 = vmatpush1.msra.mxu0 %v847
    %5615 = vmatprep.subr.mxu0 %v856
    %5616 = vmatpush1.msra.mxu0 %v855
    %5617 = vmatprep.subr.mxu0 %v864
    %5618 = vmatpush1.msra.mxu0 %v863
    %5619 = vmatprep.subr.mxu0 %v872
    %5620 = vmatpush1.msra.mxu0 %v871
    %5621 = vmatprep.subr.mxu0 %v880
    %5622 = vmatpush1.msra.mxu0 %v879
    %5623 = vmatprep.mubr.f32.mxu0 %v5270
    %5624 = vmatmul.mubr.f32.gmra.mrb[0].mxu0 %v5269
    %v5625 = vpop.f32.mrb[0].mxu0
    %v5626 = vadd.f32 %v935, %v5625
    %v5627 = vpop.f32.mrb[0].mxu0
    %v5628 = vadd.f32 %v939, %v5627
    %5629 = vdwg.mxu0
    %5630 = vmatprep.subr.mxu0 %v888
    %5631 = vmatpush1.msra.mxu0 %v887
    %5632 = vmatprep.subr.mxu0 %v896
    %5633 = vmatpush1.msra.mxu0 %v895
    %5634 = vmatprep.subr.mxu0 0.0
    %5635 = vmatpush1.msra.mxu0 0.0
    %5636 = vmatprep.subr.mxu0 0.0
    %5637 = vmatpush1.msra.mxu0 0.0
    %5638 = vmatprep.subr.mxu0 0.0
    %5639 = vmatpush1.msra.mxu0 0.0
    %5640 = vmatprep.subr.mxu0 0.0
    %5641 = vmatpush1.msra.mxu0 0.0
    %5642 = vmatprep.subr.mxu0 0.0
    %5643 = vmatpush1.msra.mxu0 0.0
    %5644 = vmatprep.subr.mxu0 0.0
    %5645 = vmatpush1.msra.mxu0 0.0
    %5646 = vmatprep.subr.mxu0 0.0
    %5647 = vmatpush1.msra.mxu0 0.0
    %5648 = vmatprep.subr.mxu0 0.0
    %5649 = vmatpush1.msra.mxu0 0.0
    %5650 = vmatprep.subr.mxu0 0.0
    %5651 = vmatpush1.msra.mxu0 0.0
    %5652 = vmatprep.subr.mxu0 0.0
    %5653 = vmatpush1.msra.mxu0 0.0
    %5654 = vmatprep.subr.mxu0 0.0
    %5655 = vmatpush1.msra.mxu0 0.0
    %5656 = vmatprep.subr.mxu0 0.0
    %5657 = vmatpush1.msra.mxu0 0.0
    %5658 = vmatprep.subr.mxu0 0.0
    %5659 = vmatpush1.msra.mxu0 0.0
    %5660 = vmatprep.subr.mxu0 0.0
    %5661 = vmatpush1.msra.mxu0 0.0
    %5662 = vmatprep.subr.mxu0 0.0
    %5663 = vmatpush1.msra.mxu0 0.0
    %5664 = vmatprep.subr.mxu0 0.0
    %5665 = vmatpush1.msra.mxu0 0.0
    %5666 = vmatprep.subr.mxu0 0.0
    %5667 = vmatpush1.msra.mxu0 0.0
    %5668 = vmatprep.subr.mxu0 0.0
    %5669 = vmatpush1.msra.mxu0 0.0
    %5670 = vmatprep.subr.mxu0 0.0
    %5671 = vmatpush1.msra.mxu0 0.0
    %5672 = vmatprep.subr.mxu0 0.0
    %5673 = vmatpush1.msra.mxu0 0.0
    %5674 = vmatprep.subr.mxu0 0.0
    %5675 = vmatpush1.msra.mxu0 0.0
    %5676 = vmatprep.subr.mxu0 0.0
    %5677 = vmatpush1.msra.mxu0 0.0
    %5678 = vmatprep.subr.mxu0 0.0
    %5679 = vmatpush1.msra.mxu0 0.0
    %5680 = vmatprep.subr.mxu0 0.0
    %5681 = vmatpush1.msra.mxu0 0.0
    %5682 = vmatprep.subr.mxu0 0.0
    %5683 = vmatpush1.msra.mxu0 0.0
    %5684 = vmatprep.subr.mxu0 0.0
    %5685 = vmatpush1.msra.mxu0 0.0
    %5686 = vmatprep.subr.mxu0 0.0
    %5687 = vmatpush1.msra.mxu0 0.0
    %5688 = vmatprep.subr.mxu0 0.0
    %5689 = vmatpush1.msra.mxu0 0.0
    %5690 = vmatprep.subr.mxu0 0.0
    %5691 = vmatpush1.msra.mxu0 0.0
    %5692 = vmatprep.subr.mxu0 0.0
    %5693 = vmatpush1.msra.mxu0 0.0
    %5694 = vmatprep.mubr.f32.mxu0 0.0
    %5695 = vmatmul.mubr.f32.gmra.mrb[0].mxu0 %v5273
    %v5696 = vpop.f32.mrb[0].mxu0
    %v5697 = vadd.f32 %v5626, %v5696
    %v5698 = vpop.f32.mrb[0].mxu0
    %v5699 = vadd.f32 %v5628, %v5698
    %5700 = vdwg.mxu0
    %5701 = vmatprep.subr.mxu0 %v634
    %5702 = vmatpush1.msra.mxu0 %v633
    %5703 = vmatprep.subr.mxu0 %v642
    %5704 = vmatpush1.msra.mxu0 %v641
    %5705 = vmatprep.subr.mxu0 %v650
    %5706 = vmatpush1.msra.mxu0 %v649
    %5707 = vmatprep.subr.mxu0 %v658
    %5708 = vmatpush1.msra.mxu0 %v657
    %5709 = vmatprep.subr.mxu0 %v666
    %5710 = vmatpush1.msra.mxu0 %v665
    %5711 = vmatprep.subr.mxu0 %v674
    %5712 = vmatpush1.msra.mxu0 %v673
    %5713 = vmatprep.subr.mxu0 %v682
    %5714 = vmatpush1.msra.mxu0 %v681
    %5715 = vmatprep.subr.mxu0 %v690
    %5716 = vmatpush1.msra.mxu0 %v689
    %5717 = vmatprep.subr.mxu0 %v698
    %5718 = vmatpush1.msra.mxu0 %v697
    %5719 = vmatprep.subr.mxu0 %v706
    %5720 = vmatpush1.msra.mxu0 %v705
    %5721 = vmatprep.subr.mxu0 %v714
    %5722 = vmatpush1.msra.mxu0 %v713
    %5723 = vmatprep.subr.mxu0 %v722
    %5724 = vmatpush1.msra.mxu0 %v721
    %5725 = vmatprep.subr.mxu0 %v730
    %5726 = vmatpush1.msra.mxu0 %v729
    %5727 = vmatprep.subr.mxu0 %v738
    %5728 = vmatpush1.msra.mxu0 %v737
    %5729 = vmatprep.subr.mxu0 %v746
    %5730 = vmatpush1.msra.mxu0 %v745
    %5731 = vmatprep.subr.mxu0 %v754
    %5732 = vmatpush1.msra.mxu0 %v753
    %5733 = vmatprep.subr.mxu0 %v762
    %5734 = vmatpush1.msra.mxu0 %v761
    %5735 = vmatprep.subr.mxu0 %v770
    %5736 = vmatpush1.msra.mxu0 %v769
    %5737 = vmatprep.subr.mxu0 %v778
    %5738 = vmatpush1.msra.mxu0 %v777
    %5739 = vmatprep.subr.mxu0 %v786
    %5740 = vmatpush1.msra.mxu0 %v785
    %5741 = vmatprep.subr.mxu0 %v794
    %5742 = vmatpush1.msra.mxu0 %v793
    %5743 = vmatprep.subr.mxu0 %v802
    %5744 = vmatpush1.msra.mxu0 %v801
    %5745 = vmatprep.subr.mxu0 %v810
    %5746 = vmatpush1.msra.mxu0 %v809
    %5747 = vmatprep.subr.mxu0 %v818
    %5748 = vmatpush1.msra.mxu0 %v817
    %5749 = vmatprep.subr.mxu0 %v826
    %5750 = vmatpush1.msra.mxu0 %v825
    %5751 = vmatprep.subr.mxu0 %v834
    %5752 = vmatpush1.msra.mxu0 %v833
    %5753 = vmatprep.subr.mxu0 %v842
    %5754 = vmatpush1.msra.mxu0 %v841
    %5755 = vmatprep.subr.mxu0 %v850
    %5756 = vmatpush1.msra.mxu0 %v849
    %5757 = vmatprep.subr.mxu0 %v858
    %5758 = vmatpush1.msra.mxu0 %v857
    %5759 = vmatprep.subr.mxu0 %v866
    %5760 = vmatpush1.msra.mxu0 %v865
    %5761 = vmatprep.subr.mxu0 %v874
    %5762 = vmatpush1.msra.mxu0 %v873
    %5763 = vmatprep.subr.mxu0 %v882
    %5764 = vmatpush1.msra.mxu0 %v881
    %5765 = vmatprep.mubr.f32.mxu0 %v5270
    %5766 = vmatmul.mubr.f32.gmra.mrb[0].mxu0 %v5269
    %v5767 = vpop.f32.mrb[0].mxu0
    %v5768 = vadd.f32 %v943, %v5767
    %v5769 = vpop.f32.mrb[0].mxu0
    %v5770 = vadd.f32 %v947, %v5769
    %5771 = vdwg.mxu0
    %5772 = vmatprep.subr.mxu0 %v890
    %5773 = vmatpush1.msra.mxu0 %v889
    %5774 = vmatprep.subr.mxu0 %v898
    %5775 = vmatpush1.msra.mxu0 %v897
    %5776 = vmatprep.subr.mxu0 0.0
    %5777 = vmatpush1.msra.mxu0 0.0
    %5778 = vmatprep.subr.mxu0 0.0
    %5779 = vmatpush1.msra.mxu0 0.0
    %5780 = vmatprep.subr.mxu0 0.0
    %5781 = vmatpush1.msra.mxu0 0.0
    %5782 = vmatprep.subr.mxu0 0.0
    %5783 = vmatpush1.msra.mxu0 0.0
    %5784 = vmatprep.subr.mxu0 0.0
    %5785 = vmatpush1.msra.mxu0 0.0
    %5786 = vmatprep.subr.mxu0 0.0
    %5787 = vmatpush1.msra.mxu0 0.0
    %5788 = vmatprep.subr.mxu0 0.0
    %5789 = vmatpush1.msra.mxu0 0.0
    %5790 = vmatprep.subr.mxu0 0.0
    %5791 = vmatpush1.msra.mxu0 0.0
    %5792 = vmatprep.subr.mxu0 0.0
    %5793 = vmatpush1.msra.mxu0 0.0
    %5794 = vmatprep.subr.mxu0 0.0
    %5795 = vmatpush1.msra.mxu0 0.0
    %5796 = vmatprep.subr.mxu0 0.0
    %5797 = vmatpush1.msra.mxu0 0.0
    %5798 = vmatprep.subr.mxu0 0.0
    %5799 = vmatpush1.msra.mxu0 0.0
    %5800 = vmatprep.subr.mxu0 0.0
    %5801 = vmatpush1.msra.mxu0 0.0
    %5802 = vmatprep.subr.mxu0 0.0
    %5803 = vmatpush1.msra.mxu0 0.0
    %5804 = vmatprep.subr.mxu0 0.0
    %5805 = vmatpush1.msra.mxu0 0.0
    %5806 = vmatprep.subr.mxu0 0.0
    %5807 = vmatpush1.msra.mxu0 0.0
    %5808 = vmatprep.subr.mxu0 0.0
    %5809 = vmatpush1.msra.mxu0 0.0
    %5810 = vmatprep.subr.mxu0 0.0
    %5811 = vmatpush1.msra.mxu0 0.0
    %5812 = vmatprep.subr.mxu0 0.0
    %5813 = vmatpush1.msra.mxu0 0.0
    %5814 = vmatprep.subr.mxu0 0.0
    %5815 = vmatpush1.msra.mxu0 0.0
    %5816 = vmatprep.subr.mxu0 0.0
    %5817 = vmatpush1.msra.mxu0 0.0
    %5818 = vmatprep.subr.mxu0 0.0
    %5819 = vmatpush1.msra.mxu0 0.0
    %5820 = vmatprep.subr.mxu0 0.0
    %5821 = vmatpush1.msra.mxu0 0.0
    %5822 = vmatprep.subr.mxu0 0.0
    %5823 = vmatpush1.msra.mxu0 0.0
    %5824 = vmatprep.subr.mxu0 0.0
    %5825 = vmatpush1.msra.mxu0 0.0
    %5826 = vmatprep.subr.mxu0 0.0
    %5827 = vmatpush1.msra.mxu0 0.0
    %5828 = vmatprep.subr.mxu0 0.0
    %5829 = vmatpush1.msra.mxu0 0.0
    %5830 = vmatprep.subr.mxu0 0.0
    %5831 = vmatpush1.msra.mxu0 0.0
    %5832 = vmatprep.subr.mxu0 0.0
    %5833 = vmatpush1.msra.mxu0 0.0
    %5834 = vmatprep.subr.mxu0 0.0
    %5835 = vmatpush1.msra.mxu0 0.0
    %5836 = vmatprep.mubr.f32.mxu0 0.0
    %5837 = vmatmul.mubr.f32.gmra.mrb[0].mxu0 %v5273
    %v5838 = vpop.f32.mrb[0].mxu0
    %v5839 = vadd.f32 %v5768, %v5838
    %v5840 = vpop.f32.mrb[0].mxu0
    %v5841 = vadd.f32 %v5770, %v5840
    %5842 = vdwg.mxu0
    %v5843 = vmul.f32 %v5413, 0.5
    %v5844 = vmul.f32 %v5415, 0.5
    %v5845 = vtanh.pop %v5843
    %v5846 = vtanh.pop %v5844
    %v5847 = vadd.f32 %v5845, 1.0
    %v5848 = vadd.f32 %v5846, 1.0
    %v5849 = vmul.f32 %v5847, 0.5
    %v5850 = vmul.f32 %v5848, 0.5
    %v5851 = vmul.f32 %v5555, 0.5
    %v5852 = vmul.f32 %v5557, 0.5
    %v5853 = vtanh.pop %v5851
    %v5854 = vtanh.pop %v5852
    %v5855 = vadd.f32 %v5853, 1.0
    %v5856 = vadd.f32 %v5854, 1.0
    %v5857 = vmul.f32 %v5855, 0.5
    %v5858 = vmul.f32 %v5856, 0.5
    %v5859 = vtanh.pop %v5697
    %v5860 = vtanh.pop %v5699
    %v5861 = vmul.f32 %v5839, 0.5
    %v5862 = vmul.f32 %v5841, 0.5
    %v5863 = vtanh.pop %v5861
    %v5864 = vtanh.pop %v5862
    %v5865 = vadd.f32 %v5863, 1.0
    %v5866 = vadd.f32 %v5864, 1.0
    %v5867 = vmul.f32 %v5865, 0.5
    %v5868 = vmul.f32 %v5866, 0.5
    %v5869 = vmul.f32 %v5857, %v5259
    %v5870 = vmul.f32 %v5858, %v5260
    %v5871 = vmul.f32 %v5849, %v5859
    %v5872 = vmul.f32 %v5850, %v5860
    %v5873 = vadd.f32 %v5869, %v5871
    %v5874 = vadd.f32 %v5870, %v5872
    %v5875 = vtanh.pop %v5873
    %v5876 = vtanh.pop %v5874
    %v5877 = vmul.f32 %v5867, %v5875
    %v5878 = vmul.f32 %v5868, %v5876
    %5879 = vst [vmem:[#allocation2] sm:$0xff] %v5877
    %5880 = vst [vmem:[#allocation2 + $0x8] sm:$0xff] %v5878
    %5881 = vrot.lane.b32.xlu0 %v626, 120
    %v5882 = vpop.permute.xlu0 %5881
    %5884 = vst.msk [vmem:[#allocation2 + $0x10] sm:$0xff] %vm904, %v5882
    %5885 = vrot.lane.b32.xlu0 %v626, 1
    %v5886 = vpop.permute.xlu0 %5885
    %5888 = vst.msk [vmem:[#allocation2 + $0x10] sm:$0xff] %vm910, %v5886
    %v5889 = vld [vmem:[#allocation2] sm:$0xff]
    %v5890 = vld [vmem:[#allocation2 + $0x8] sm:$0xff]
    %v5891 = vld [vmem:[#allocation2 + $0x10] sm:$0xff]
    %v5893 = vsel %vm902, %v5891, 0
    %5895 = vmatprep.subr.mxu0 %v628
    %5896 = vmatpush1.msra.mxu0 %v627
    %5897 = vmatprep.subr.mxu0 %v636
    %5898 = vmatpush1.msra.mxu0 %v635
    %5899 = vmatprep.subr.mxu0 %v644
    %5900 = vmatpush1.msra.mxu0 %v643
    %5901 = vmatprep.subr.mxu0 %v652
    %5902 = vmatpush1.msra.mxu0 %v651
    %5903 = vmatprep.subr.mxu0 %v660
    %5904 = vmatpush1.msra.mxu0 %v659
    %5905 = vmatprep.subr.mxu0 %v668
    %5906 = vmatpush1.msra.mxu0 %v667
    %5907 = vmatprep.subr.mxu0 %v676
    %5908 = vmatpush1.msra.mxu0 %v675
    %5909 = vmatprep.subr.mxu0 %v684
    %5910 = vmatpush1.msra.mxu0 %v683
    %5911 = vmatprep.subr.mxu0 %v692
    %5912 = vmatpush1.msra.mxu0 %v691
    %5913 = vmatprep.subr.mxu0 %v700
    %5914 = vmatpush1.msra.mxu0 %v699
    %5915 = vmatprep.subr.mxu0 %v708
    %5916 = vmatpush1.msra.mxu0 %v707
    %5917 = vmatprep.subr.mxu0 %v716
    %5918 = vmatpush1.msra.mxu0 %v715
    %5919 = vmatprep.subr.mxu0 %v724
    %5920 = vmatpush1.msra.mxu0 %v723
    %5921 = vmatprep.subr.mxu0 %v732
    %5922 = vmatpush1.msra.mxu0 %v731
    %5923 = vmatprep.subr.mxu0 %v740
    %5924 = vmatpush1.msra.mxu0 %v739
    %5925 = vmatprep.subr.mxu0 %v748
    %5926 = vmatpush1.msra.mxu0 %v747
    %5927 = vmatprep.subr.mxu0 %v756
    %5928 = vmatpush1.msra.mxu0 %v755
    %5929 = vmatprep.subr.mxu0 %v764
    %5930 = vmatpush1.msra.mxu0 %v763
    %5931 = vmatprep.subr.mxu0 %v772
    %5932 = vmatpush1.msra.mxu0 %v771
    %5933 = vmatprep.subr.mxu0 %v780
    %5934 = vmatpush1.msra.mxu0 %v779
    %5935 = vmatprep.subr.mxu0 %v788
    %5936 = vmatpush1.msra.mxu0 %v787
    %5937 = vmatprep.subr.mxu0 %v796
    %5938 = vmatpush1.msra.mxu0 %v795
    %5939 = vmatprep.subr.mxu0 %v804
    %5940 = vmatpush1.msra.mxu0 %v803
    %5941 = vmatprep.subr.mxu0 %v812
    %5942 = vmatpush1.msra.mxu0 %v811
    %5943 = vmatprep.subr.mxu0 %v820
    %5944 = vmatpush1.msra.mxu0 %v819
    %5945 = vmatprep.subr.mxu0 %v828
    %5946 = vmatpush1.msra.mxu0 %v827
    %5947 = vmatprep.subr.mxu0 %v836
    %5948 = vmatpush1.msra.mxu0 %v835
    %5949 = vmatprep.subr.mxu0 %v844
    %5950 = vmatpush1.msra.mxu0 %v843
    %5951 = vmatprep.subr.mxu0 %v852
    %5952 = vmatpush1.msra.mxu0 %v851
    %5953 = vmatprep.subr.mxu0 %v860
    %5954 = vmatpush1.msra.mxu0 %v859
    %5955 = vmatprep.subr.mxu0 %v868
    %5956 = vmatpush1.msra.mxu0 %v867
    %5957 = vmatprep.subr.mxu0 %v876
    %5958 = vmatpush1.msra.mxu0 %v875
    %5959 = vmatprep.mubr.f32.mxu0 %v5890
    %5960 = vmatmul.mubr.f32.gmra.mrb[0].mxu0 %v5889
    %v5961 = vpop.f32.mrb[0].mxu0
    %v5962 = vadd.f32 %v919, %v5961
    %v5963 = vpop.f32.mrb[0].mxu0
    %v5964 = vadd.f32 %v923, %v5963
    %5965 = vdwg.mxu0
    %5966 = vmatprep.subr.mxu0 %v884
    %5967 = vmatpush1.msra.mxu0 %v883
    %5968 = vmatprep.subr.mxu0 %v892
    %5969 = vmatpush1.msra.mxu0 %v891
    %5970 = vmatprep.subr.mxu0 0.0
    %5971 = vmatpush1.msra.mxu0 0.0
    %5972 = vmatprep.subr.mxu0 0.0
    %5973 = vmatpush1.msra.mxu0 0.0
    %5974 = vmatprep.subr.mxu0 0.0
    %5975 = vmatpush1.msra.mxu0 0.0
    %5976 = vmatprep.subr.mxu0 0.0
    %5977 = vmatpush1.msra.mxu0 0.0
    %5978 = vmatprep.subr.mxu0 0.0
    %5979 = vmatpush1.msra.mxu0 0.0
    %5980 = vmatprep.subr.mxu0 0.0
    %5981 = vmatpush1.msra.mxu0 0.0
    %5982 = vmatprep.subr.mxu0 0.0
    %5983 = vmatpush1.msra.mxu0 0.0
    %5984 = vmatprep.subr.mxu0 0.0
    %5985 = vmatpush1.msra.mxu0 0.0
    %5986 = vmatprep.subr.mxu0 0.0
    %5987 = vmatpush1.msra.mxu0 0.0
    %5988 = vmatprep.subr.mxu0 0.0
    %5989 = vmatpush1.msra.mxu0 0.0
    %5990 = vmatprep.subr.mxu0 0.0
    %5991 = vmatpush1.msra.mxu0 0.0
    %5992 = vmatprep.subr.mxu0 0.0
    %5993 = vmatpush1.msra.mxu0 0.0
    %5994 = vmatprep.subr.mxu0 0.0
    %5995 = vmatpush1.msra.mxu0 0.0
    %5996 = vmatprep.subr.mxu0 0.0
    %5997 = vmatpush1.msra.mxu0 0.0
    %5998 = vmatprep.subr.mxu0 0.0
    %5999 = vmatpush1.msra.mxu0 0.0
    %6000 = vmatprep.subr.mxu0 0.0
    %6001 = vmatpush1.msra.mxu0 0.0
    %6002 = vmatprep.subr.mxu0 0.0
    %6003 = vmatpush1.msra.mxu0 0.0
    %6004 = vmatprep.subr.mxu0 0.0
    %6005 = vmatpush1.msra.mxu0 0.0
    %6006 = vmatprep.subr.mxu0 0.0
    %6007 = vmatpush1.msra.mxu0 0.0
    %6008 = vmatprep.subr.mxu0 0.0
    %6009 = vmatpush1.msra.mxu0 0.0
    %6010 = vmatprep.subr.mxu0 0.0
    %6011 = vmatpush1.msra.mxu0 0.0
    %6012 = vmatprep.subr.mxu0 0.0
    %6013 = vmatpush1.msra.mxu0 0.0
    %6014 = vmatprep.subr.mxu0 0.0
    %6015 = vmatpush1.msra.mxu0 0.0
    %6016 = vmatprep.subr.mxu0 0.0
    %6017 = vmatpush1.msra.mxu0 0.0
    %6018 = vmatprep.subr.mxu0 0.0
    %6019 = vmatpush1.msra.mxu0 0.0
    %6020 = vmatprep.subr.mxu0 0.0
    %6021 = vmatpush1.msra.mxu0 0.0
    %6022 = vmatprep.subr.mxu0 0.0
    %6023 = vmatpush1.msra.mxu0 0.0
    %6024 = vmatprep.subr.mxu0 0.0
    %6025 = vmatpush1.msra.mxu0 0.0
    %6026 = vmatprep.subr.mxu0 0.0
    %6027 = vmatpush1.msra.mxu0 0.0
    %6028 = vmatprep.subr.mxu0 0.0
    %6029 = vmatpush1.msra.mxu0 0.0
    %6030 = vmatprep.mubr.f32.mxu0 0.0
    %6031 = vmatmul.mubr.f32.gmra.mrb[0].mxu0 %v5893
    %v6032 = vpop.f32.mrb[0].mxu0
    %v6033 = vadd.f32 %v5962, %v6032
    %v6034 = vpop.f32.mrb[0].mxu0
    %v6035 = vadd.f32 %v5964, %v6034
    %6036 = vdwg.mxu0
    %6037 = vmatprep.subr.mxu0 %v630
    %6038 = vmatpush1.msra.mxu0 %v629
    %6039 = vmatprep.subr.mxu0 %v638
    %6040 = vmatpush1.msra.mxu0 %v637
    %6041 = vmatprep.subr.mxu0 %v646
    %6042 = vmatpush1.msra.mxu0 %v645
    %6043 = vmatprep.subr.mxu0 %v654
    %6044 = vmatpush1.msra.mxu0 %v653
    %6045 = vmatprep.subr.mxu0 %v662
    %6046 = vmatpush1.msra.mxu0 %v661
    %6047 = vmatprep.subr.mxu0 %v670
    %6048 = vmatpush1.msra.mxu0 %v669
    %6049 = vmatprep.subr.mxu0 %v678
    %6050 = vmatpush1.msra.mxu0 %v677
    %6051 = vmatprep.subr.mxu0 %v686
    %6052 = vmatpush1.msra.mxu0 %v685
    %6053 = vmatprep.subr.mxu0 %v694
    %6054 = vmatpush1.msra.mxu0 %v693
    %6055 = vmatprep.subr.mxu0 %v702
    %6056 = vmatpush1.msra.mxu0 %v701
    %6057 = vmatprep.subr.mxu0 %v710
    %6058 = vmatpush1.msra.mxu0 %v709
    %6059 = vmatprep.subr.mxu0 %v718
    %6060 = vmatpush1.msra.mxu0 %v717
    %6061 = vmatprep.subr.mxu0 %v726
    %6062 = vmatpush1.msra.mxu0 %v725
    %6063 = vmatprep.subr.mxu0 %v734
    %6064 = vmatpush1.msra.mxu0 %v733
    %6065 = vmatprep.subr.mxu0 %v742
    %6066 = vmatpush1.msra.mxu0 %v741
    %6067 = vmatprep.subr.mxu0 %v750
    %6068 = vmatpush1.msra.mxu0 %v749
    %6069 = vmatprep.subr.mxu0 %v758
    %6070 = vmatpush1.msra.mxu0 %v757
    %6071 = vmatprep.subr.mxu0 %v766
    %6072 = vmatpush1.msra.mxu0 %v765
    %6073 = vmatprep.subr.mxu0 %v774
    %6074 = vmatpush1.msra.mxu0 %v773
    %6075 = vmatprep.subr.mxu0 %v782
    %6076 = vmatpush1.msra.mxu0 %v781
    %6077 = vmatprep.subr.mxu0 %v790
    %6078 = vmatpush1.msra.mxu0 %v789
    %6079 = vmatprep.subr.mxu0 %v798
    %6080 = vmatpush1.msra.mxu0 %v797
    %6081 = vmatprep.subr.mxu0 %v806
    %6082 = vmatpush1.msra.mxu0 %v805
    %6083 = vmatprep.subr.mxu0 %v814
    %6084 = vmatpush1.msra.mxu0 %v813
    %6085 = vmatprep.subr.mxu0 %v822
    %6086 = vmatpush1.msra.mxu0 %v821
    %6087 = vmatprep.subr.mxu0 %v830
    %6088 = vmatpush1.msra.mxu0 %v829
    %6089 = vmatprep.subr.mxu0 %v838
    %6090 = vmatpush1.msra.mxu0 %v837
    %6091 = vmatprep.subr.mxu0 %v846
    %6092 = vmatpush1.msra.mxu0 %v845
    %6093 = vmatprep.subr.mxu0 %v854
    %6094 = vmatpush1.msra.mxu0 %v853
    %6095 = vmatprep.subr.mxu0 %v862
    %6096 = vmatpush1.msra.mxu0 %v861
    %6097 = vmatprep.subr.mxu0 %v870
    %6098 = vmatpush1.msra.mxu0 %v869
    %6099 = vmatprep.subr.mxu0 %v878
    %6100 = vmatpush1.msra.mxu0 %v877
    %6101 = vmatprep.mubr.f32.mxu0 %v5890
    %6102 = vmatmul.mubr.f32.gmra.mrb[0].mxu0 %v5889
    %v6103 = vpop.f32.mrb[0].mxu0
    %v6104 = vadd.f32 %v927, %v6103
    %v6105 = vpop.f32.mrb[0].mxu0
    %v6106 = vadd.f32 %v931, %v6105
    %6107 = vdwg.mxu0
    %6108 = vmatprep.subr.mxu0 %v886
    %6109 = vmatpush1.msra.mxu0 %v885
    %6110 = vmatprep.subr.mxu0 %v894
    %6111 = vmatpush1.msra.mxu0 %v893
    %6112 = vmatprep.subr.mxu0 0.0
    %6113 = vmatpush1.msra.mxu0 0.0
    %6114 = vmatprep.subr.mxu0 0.0
    %6115 = vmatpush1.msra.mxu0 0.0
    %6116 = vmatprep.subr.mxu0 0.0
    %6117 = vmatpush1.msra.mxu0 0.0
    %6118 = vmatprep.subr.mxu0 0.0
    %6119 = vmatpush1.msra.mxu0 0.0
    %6120 = vmatprep.subr.mxu0 0.0
    %6121 = vmatpush1.msra.mxu0 0.0
    %6122 = vmatprep.subr.mxu0 0.0
    %6123 = vmatpush1.msra.mxu0 0.0
    %6124 = vmatprep.subr.mxu0 0.0
    %6125 = vmatpush1.msra.mxu0 0.0
    %6126 = vmatprep.subr.mxu0 0.0
    %6127 = vmatpush1.msra.mxu0 0.0
    %6128 = vmatprep.subr.mxu0 0.0
    %6129 = vmatpush1.msra.mxu0 0.0
    %6130 = vmatprep.subr.mxu0 0.0
    %6131 = vmatpush1.msra.mxu0 0.0
    %6132 = vmatprep.subr.mxu0 0.0
    %6133 = vmatpush1.msra.mxu0 0.0
    %6134 = vmatprep.subr.mxu0 0.0
    %6135 = vmatpush1.msra.mxu0 0.0
    %6136 = vmatprep.subr.mxu0 0.0
    %6137 = vmatpush1.msra.mxu0 0.0
    %6138 = vmatprep.subr.mxu0 0.0
    %6139 = vmatpush1.msra.mxu0 0.0
    %6140 = vmatprep.subr.mxu0 0.0
    %6141 = vmatpush1.msra.mxu0 0.0
    %6142 = vmatprep.subr.mxu0 0.0
    %6143 = vmatpush1.msra.mxu0 0.0
    %6144 = vmatprep.subr.mxu0 0.0
    %6145 = vmatpush1.msra.mxu0 0.0
    %6146 = vmatprep.subr.mxu0 0.0
    %6147 = vmatpush1.msra.mxu0 0.0
    %6148 = vmatprep.subr.mxu0 0.0
    %6149 = vmatpush1.msra.mxu0 0.0
    %6150 = vmatprep.subr.mxu0 0.0
    %6151 = vmatpush1.msra.mxu0 0.0
    %6152 = vmatprep.subr.mxu0 0.0
    %6153 = vmatpush1.msra.mxu0 0.0
    %6154 = vmatprep.subr.mxu0 0.0
    %6155 = vmatpush1.msra.mxu0 0.0
    %6156 = vmatprep.subr.mxu0 0.0
    %6157 = vmatpush1.msra.mxu0 0.0
    %6158 = vmatprep.subr.mxu0 0.0
    %6159 = vmatpush1.msra.mxu0 0.0
    %6160 = vmatprep.subr.mxu0 0.0
    %6161 = vmatpush1.msra.mxu0 0.0
    %6162 = vmatprep.subr.mxu0 0.0
    %6163 = vmatpush1.msra.mxu0 0.0
    %6164 = vmatprep.subr.mxu0 0.0
    %6165 = vmatpush1.msra.mxu0 0.0
    %6166 = vmatprep.subr.mxu0 0.0
    %6167 = vmatpush1.msra.mxu0 0.0
    %6168 = vmatprep.subr.mxu0 0.0
    %6169 = vmatpush1.msra.mxu0 0.0
    %6170 = vmatprep.subr.mxu0 0.0
    %6171 = vmatpush1.msra.mxu0 0.0
    %6172 = vmatprep.mubr.f32.mxu0 0.0
    %6173 = vmatmul.mubr.f32.gmra.mrb[0].mxu0 %v5893
    %v6174 = vpop.f32.mrb[0].mxu0
    %v6175 = vadd.f32 %v6104, %v6174
    %v6176 = vpop.f32.mrb[0].mxu0
    %v6177 = vadd.f32 %v6106, %v6176
    %6178 = vdwg.mxu0
    %6179 = vmatprep.subr.mxu0 %v632
    %6180 = vmatpush1.msra.mxu0 %v631
    %6181 = vmatprep.subr.mxu0 %v640
    %6182 = vmatpush1.msra.mxu0 %v639
    %6183 = vmatprep.subr.mxu0 %v648
    %6184 = vmatpush1.msra.mxu0 %v647
    %6185 = vmatprep.subr.mxu0 %v656
    %6186 = vmatpush1.msra.mxu0 %v655
    %6187 = vmatprep.subr.mxu0 %v664
    %6188 = vmatpush1.msra.mxu0 %v663
    %6189 = vmatprep.subr.mxu0 %v672
    %6190 = vmatpush1.msra.mxu0 %v671
    %6191 = vmatprep.subr.mxu0 %v680
    %6192 = vmatpush1.msra.mxu0 %v679
    %6193 = vmatprep.subr.mxu0 %v688
    %6194 = vmatpush1.msra.mxu0 %v687
    %6195 = vmatprep.subr.mxu0 %v696
    %6196 = vmatpush1.msra.mxu0 %v695
    %6197 = vmatprep.subr.mxu0 %v704
    %6198 = vmatpush1.msra.mxu0 %v703
    %6199 = vmatprep.subr.mxu0 %v712
    %6200 = vmatpush1.msra.mxu0 %v711
    %6201 = vmatprep.subr.mxu0 %v720
    %6202 = vmatpush1.msra.mxu0 %v719
    %6203 = vmatprep.subr.mxu0 %v728
    %6204 = vmatpush1.msra.mxu0 %v727
    %6205 = vmatprep.subr.mxu0 %v736
    %6206 = vmatpush1.msra.mxu0 %v735
    %6207 = vmatprep.subr.mxu0 %v744
    %6208 = vmatpush1.msra.mxu0 %v743
    %6209 = vmatprep.subr.mxu0 %v752
    %6210 = vmatpush1.msra.mxu0 %v751
    %6211 = vmatprep.subr.mxu0 %v760
    %6212 = vmatpush1.msra.mxu0 %v759
    %6213 = vmatprep.subr.mxu0 %v768
    %6214 = vmatpush1.msra.mxu0 %v767
    %6215 = vmatprep.subr.mxu0 %v776
    %6216 = vmatpush1.msra.mxu0 %v775
    %6217 = vmatprep.subr.mxu0 %v784
    %6218 = vmatpush1.msra.mxu0 %v783
    %6219 = vmatprep.subr.mxu0 %v792
    %6220 = vmatpush1.msra.mxu0 %v791
    %6221 = vmatprep.subr.mxu0 %v800
    %6222 = vmatpush1.msra.mxu0 %v799
    %6223 = vmatprep.subr.mxu0 %v808
    %6224 = vmatpush1.msra.mxu0 %v807
    %6225 = vmatprep.subr.mxu0 %v816
    %6226 = vmatpush1.msra.mxu0 %v815
    %6227 = vmatprep.subr.mxu0 %v824
    %6228 = vmatpush1.msra.mxu0 %v823
    %6229 = vmatprep.subr.mxu0 %v832
    %6230 = vmatpush1.msra.mxu0 %v831
    %6231 = vmatprep.subr.mxu0 %v840
    %6232 = vmatpush1.msra.mxu0 %v839
    %6233 = vmatprep.subr.mxu0 %v848
    %6234 = vmatpush1.msra.mxu0 %v847
    %6235 = vmatprep.subr.mxu0 %v856
    %6236 = vmatpush1.msra.mxu0 %v855
    %6237 = vmatprep.subr.mxu0 %v864
    %6238 = vmatpush1.msra.mxu0 %v863
    %6239 = vmatprep.subr.mxu0 %v872
    %6240 = vmatpush1.msra.mxu0 %v871
    %6241 = vmatprep.subr.mxu0 %v880
    %6242 = vmatpush1.msra.mxu0 %v879
    %6243 = vmatprep.mubr.f32.mxu0 %v5890
    %6244 = vmatmul.mubr.f32.gmra.mrb[0].mxu0 %v5889
    %v6245 = vpop.f32.mrb[0].mxu0
    %v6246 = vadd.f32 %v935, %v6245
    %v6247 = vpop.f32.mrb[0].mxu0
    %v6248 = vadd.f32 %v939, %v6247
    %6249 = vdwg.mxu0
    %6250 = vmatprep.subr.mxu0 %v888
    %6251 = vmatpush1.msra.mxu0 %v887
    %6252 = vmatprep.subr.mxu0 %v896
    %6253 = vmatpush1.msra.mxu0 %v895
    %6254 = vmatprep.subr.mxu0 0.0
    %6255 = vmatpush1.msra.mxu0 0.0
    %6256 = vmatprep.subr.mxu0 0.0
    %6257 = vmatpush1.msra.mxu0 0.0
    %6258 = vmatprep.subr.mxu0 0.0
    %6259 = vmatpush1.msra.mxu0 0.0
    %6260 = vmatprep.subr.mxu0 0.0
    %6261 = vmatpush1.msra.mxu0 0.0
    %6262 = vmatprep.subr.mxu0 0.0
    %6263 = vmatpush1.msra.mxu0 0.0
    %6264 = vmatprep.subr.mxu0 0.0
    %6265 = vmatpush1.msra.mxu0 0.0
    %6266 = vmatprep.subr.mxu0 0.0
    %6267 = vmatpush1.msra.mxu0 0.0
    %6268 = vmatprep.subr.mxu0 0.0
    %6269 = vmatpush1.msra.mxu0 0.0
    %6270 = vmatprep.subr.mxu0 0.0
    %6271 = vmatpush1.msra.mxu0 0.0
    %6272 = vmatprep.subr.mxu0 0.0
    %6273 = vmatpush1.msra.mxu0 0.0
    %6274 = vmatprep.subr.mxu0 0.0
    %6275 = vmatpush1.msra.mxu0 0.0
    %6276 = vmatprep.subr.mxu0 0.0
    %6277 = vmatpush1.msra.mxu0 0.0
    %6278 = vmatprep.subr.mxu0 0.0
    %6279 = vmatpush1.msra.mxu0 0.0
    %6280 = vmatprep.subr.mxu0 0.0
    %6281 = vmatpush1.msra.mxu0 0.0
    %6282 = vmatprep.subr.mxu0 0.0
    %6283 = vmatpush1.msra.mxu0 0.0
    %6284 = vmatprep.subr.mxu0 0.0
    %6285 = vmatpush1.msra.mxu0 0.0
    %6286 = vmatprep.subr.mxu0 0.0
    %6287 = vmatpush1.msra.mxu0 0.0
    %6288 = vmatprep.subr.mxu0 0.0
    %6289 = vmatpush1.msra.mxu0 0.0
    %6290 = vmatprep.subr.mxu0 0.0
    %6291 = vmatpush1.msra.mxu0 0.0
    %6292 = vmatprep.subr.mxu0 0.0
    %6293 = vmatpush1.msra.mxu0 0.0
    %6294 = vmatprep.subr.mxu0 0.0
    %6295 = vmatpush1.msra.mxu0 0.0
    %6296 = vmatprep.subr.mxu0 0.0
    %6297 = vmatpush1.msra.mxu0 0.0
    %6298 = vmatprep.subr.mxu0 0.0
    %6299 = vmatpush1.msra.mxu0 0.0
    %6300 = vmatprep.subr.mxu0 0.0
    %6301 = vmatpush1.msra.mxu0 0.0
    %6302 = vmatprep.subr.mxu0 0.0
    %6303 = vmatpush1.msra.mxu0 0.0
    %6304 = vmatprep.subr.mxu0 0.0
    %6305 = vmatpush1.msra.mxu0 0.0
    %6306 = vmatprep.subr.mxu0 0.0
    %6307 = vmatpush1.msra.mxu0 0.0
    %6308 = vmatprep.subr.mxu0 0.0
    %6309 = vmatpush1.msra.mxu0 0.0
    %6310 = vmatprep.subr.mxu0 0.0
    %6311 = vmatpush1.msra.mxu0 0.0
    %6312 = vmatprep.subr.mxu0 0.0
    %6313 = vmatpush1.msra.mxu0 0.0
    %6314 = vmatprep.mubr.f32.mxu0 0.0
    %6315 = vmatmul.mubr.f32.gmra.mrb[0].mxu0 %v5893
    %v6316 = vpop.f32.mrb[0].mxu0
    %v6317 = vadd.f32 %v6246, %v6316
    %v6318 = vpop.f32.mrb[0].mxu0
    %v6319 = vadd.f32 %v6248, %v6318
    %6320 = vdwg.mxu0
    %6321 = vmatprep.subr.mxu0 %v634
    %6322 = vmatpush1.msra.mxu0 %v633
    %6323 = vmatprep.subr.mxu0 %v642
    %6324 = vmatpush1.msra.mxu0 %v641
    %6325 = vmatprep.subr.mxu0 %v650
    %6326 = vmatpush1.msra.mxu0 %v649
    %6327 = vmatprep.subr.mxu0 %v658
    %6328 = vmatpush1.msra.mxu0 %v657
    %6329 = vmatprep.subr.mxu0 %v666
    %6330 = vmatpush1.msra.mxu0 %v665
    %6331 = vmatprep.subr.mxu0 %v674
    %6332 = vmatpush1.msra.mxu0 %v673
    %6333 = vmatprep.subr.mxu0 %v682
    %6334 = vmatpush1.msra.mxu0 %v681
    %6335 = vmatprep.subr.mxu0 %v690
    %6336 = vmatpush1.msra.mxu0 %v689
    %6337 = vmatprep.subr.mxu0 %v698
    %6338 = vmatpush1.msra.mxu0 %v697
    %6339 = vmatprep.subr.mxu0 %v706
    %6340 = vmatpush1.msra.mxu0 %v705
    %6341 = vmatprep.subr.mxu0 %v714
    %6342 = vmatpush1.msra.mxu0 %v713
    %6343 = vmatprep.subr.mxu0 %v722
    %6344 = vmatpush1.msra.mxu0 %v721
    %6345 = vmatprep.subr.mxu0 %v730
    %6346 = vmatpush1.msra.mxu0 %v729
    %6347 = vmatprep.subr.mxu0 %v738
    %6348 = vmatpush1.msra.mxu0 %v737
    %6349 = vmatprep.subr.mxu0 %v746
    %6350 = vmatpush1.msra.mxu0 %v745
    %6351 = vmatprep.subr.mxu0 %v754
    %6352 = vmatpush1.msra.mxu0 %v753
    %6353 = vmatprep.subr.mxu0 %v762
    %6354 = vmatpush1.msra.mxu0 %v761
    %6355 = vmatprep.subr.mxu0 %v770
    %6356 = vmatpush1.msra.mxu0 %v769
    %6357 = vmatprep.subr.mxu0 %v778
    %6358 = vmatpush1.msra.mxu0 %v777
    %6359 = vmatprep.subr.mxu0 %v786
    %6360 = vmatpush1.msra.mxu0 %v785
    %6361 = vmatprep.subr.mxu0 %v794
    %6362 = vmatpush1.msra.mxu0 %v793
    %6363 = vmatprep.subr.mxu0 %v802
    %6364 = vmatpush1.msra.mxu0 %v801
    %6365 = vmatprep.subr.mxu0 %v810
    %6366 = vmatpush1.msra.mxu0 %v809
    %6367 = vmatprep.subr.mxu0 %v818
    %6368 = vmatpush1.msra.mxu0 %v817
    %6369 = vmatprep.subr.mxu0 %v826
    %6370 = vmatpush1.msra.mxu0 %v825
    %6371 = vmatprep.subr.mxu0 %v834
    %6372 = vmatpush1.msra.mxu0 %v833
    %6373 = vmatprep.subr.mxu0 %v842
    %6374 = vmatpush1.msra.mxu0 %v841
    %6375 = vmatprep.subr.mxu0 %v850
    %6376 = vmatpush1.msra.mxu0 %v849
    %6377 = vmatprep.subr.mxu0 %v858
    %6378 = vmatpush1.msra.mxu0 %v857
    %6379 = vmatprep.subr.mxu0 %v866
    %6380 = vmatpush1.msra.mxu0 %v865
    %6381 = vmatprep.subr.mxu0 %v874
    %6382 = vmatpush1.msra.mxu0 %v873
    %6383 = vmatprep.subr.mxu0 %v882
    %6384 = vmatpush1.msra.mxu0 %v881
    %6385 = vmatprep.mubr.f32.mxu0 %v5890
    %6386 = vmatmul.mubr.f32.gmra.mrb[0].mxu0 %v5889
    %v6387 = vpop.f32.mrb[0].mxu0
    %v6388 = vadd.f32 %v943, %v6387
    %v6389 = vpop.f32.mrb[0].mxu0
    %v6390 = vadd.f32 %v947, %v6389
    %6391 = vdwg.mxu0
    %6392 = vmatprep.subr.mxu0 %v890
    %6393 = vmatpush1.msra.mxu0 %v889
    %6394 = vmatprep.subr.mxu0 %v898
    %6395 = vmatpush1.msra.mxu0 %v897
    %6396 = vmatprep.subr.mxu0 0.0
    %6397 = vmatpush1.msra.mxu0 0.0
    %6398 = vmatprep.subr.mxu0 0.0
    %6399 = vmatpush1.msra.mxu0 0.0
    %6400 = vmatprep.subr.mxu0 0.0
    %6401 = vmatpush1.msra.mxu0 0.0
    %6402 = vmatprep.subr.mxu0 0.0
    %6403 = vmatpush1.msra.mxu0 0.0
    %6404 = vmatprep.subr.mxu0 0.0
    %6405 = vmatpush1.msra.mxu0 0.0
    %6406 = vmatprep.subr.mxu0 0.0
    %6407 = vmatpush1.msra.mxu0 0.0
    %6408 = vmatprep.subr.mxu0 0.0
    %6409 = vmatpush1.msra.mxu0 0.0
    %6410 = vmatprep.subr.mxu0 0.0
    %6411 = vmatpush1.msra.mxu0 0.0
    %6412 = vmatprep.subr.mxu0 0.0
    %6413 = vmatpush1.msra.mxu0 0.0
    %6414 = vmatprep.subr.mxu0 0.0
    %6415 = vmatpush1.msra.mxu0 0.0
    %6416 = vmatprep.subr.mxu0 0.0
    %6417 = vmatpush1.msra.mxu0 0.0
    %6418 = vmatprep.subr.mxu0 0.0
    %6419 = vmatpush1.msra.mxu0 0.0
    %6420 = vmatprep.subr.mxu0 0.0
    %6421 = vmatpush1.msra.mxu0 0.0
    %6422 = vmatprep.subr.mxu0 0.0
    %6423 = vmatpush1.msra.mxu0 0.0
    %6424 = vmatprep.subr.mxu0 0.0
    %6425 = vmatpush1.msra.mxu0 0.0
    %6426 = vmatprep.subr.mxu0 0.0
    %6427 = vmatpush1.msra.mxu0 0.0
    %6428 = vmatprep.subr.mxu0 0.0
    %6429 = vmatpush1.msra.mxu0 0.0
    %6430 = vmatprep.subr.mxu0 0.0
    %6431 = vmatpush1.msra.mxu0 0.0
    %6432 = vmatprep.subr.mxu0 0.0
    %6433 = vmatpush1.msra.mxu0 0.0
    %6434 = vmatprep.subr.mxu0 0.0
    %6435 = vmatpush1.msra.mxu0 0.0
    %6436 = vmatprep.subr.mxu0 0.0
    %6437 = vmatpush1.msra.mxu0 0.0
    %6438 = vmatprep.subr.mxu0 0.0
    %6439 = vmatpush1.msra.mxu0 0.0
    %6440 = vmatprep.subr.mxu0 0.0
    %6441 = vmatpush1.msra.mxu0 0.0
    %6442 = vmatprep.subr.mxu0 0.0
    %6443 = vmatpush1.msra.mxu0 0.0
    %6444 = vmatprep.subr.mxu0 0.0
    %6445 = vmatpush1.msra.mxu0 0.0
    %6446 = vmatprep.subr.mxu0 0.0
    %6447 = vmatpush1.msra.mxu0 0.0
    %6448 = vmatprep.subr.mxu0 0.0
    %6449 = vmatpush1.msra.mxu0 0.0
    %6450 = vmatprep.subr.mxu0 0.0
    %6451 = vmatpush1.msra.mxu0 0.0
    %6452 = vmatprep.subr.mxu0 0.0
    %6453 = vmatpush1.msra.mxu0 0.0
    %6454 = vmatprep.subr.mxu0 0.0
    %6455 = vmatpush1.msra.mxu0 0.0
    %6456 = vmatprep.mubr.f32.mxu0 0.0
    %6457 = vmatmul.mubr.f32.gmra.mrb[0].mxu0 %v5893
    %v6458 = vpop.f32.mrb[0].mxu0
    %v6459 = vadd.f32 %v6388, %v6458
    %v6460 = vpop.f32.mrb[0].mxu0
    %v6461 = vadd.f32 %v6390, %v6460
    %6462 = vdwg.mxu0
    %v6463 = vmul.f32 %v6033, 0.5
    %v6464 = vmul.f32 %v6035, 0.5
    %v6465 = vtanh.pop %v6463
    %v6466 = vtanh.pop %v6464
    %v6467 = vadd.f32 %v6465, 1.0
    %v6468 = vadd.f32 %v6466, 1.0
    %v6469 = vmul.f32 %v6467, 0.5
    %v6470 = vmul.f32 %v6468, 0.5
    %v6471 = vmul.f32 %v6175, 0.5
    %v6472 = vmul.f32 %v6177, 0.5
    %v6473 = vtanh.pop %v6471
    %v6474 = vtanh.pop %v6472
    %v6475 = vadd.f32 %v6473, 1.0
    %v6476 = vadd.f32 %v6474, 1.0
    %v6477 = vmul.f32 %v6475, 0.5
    %v6478 = vmul.f32 %v6476, 0.5
    %v6479 = vtanh.pop %v6317
    %v6480 = vtanh.pop %v6319
    %v6481 = vmul.f32 %v6459, 0.5
    %v6482 = vmul.f32 %v6461, 0.5
    %v6483 = vtanh.pop %v6481
    %v6484 = vtanh.pop %v6482
    %v6485 = vadd.f32 %v6483, 1.0
    %v6486 = vadd.f32 %v6484, 1.0
    %v6487 = vmul.f32 %v6485, 0.5
    %v6488 = vmul.f32 %v6486, 0.5
    %v6489 = vmul.f32 %v6477, %v5873
    %v6490 = vmul.f32 %v6478, %v5874
    %v6491 = vmul.f32 %v6469, %v6479
    %v6492 = vmul.f32 %v6470, %v6480
    %v6493 = vadd.f32 %v6489, %v6491
    %v6494 = vadd.f32 %v6490, %v6492
    %v6495 = vtanh.pop %v6493
    %v6496 = vtanh.pop %v6494
    %v6497 = vmul.f32 %v6487, %v6495
    %v6498 = vmul.f32 %v6488, %v6496
    %v6499 = vadd.f32 %v6497, %v6498
    %v6500 = vadd.f32 %v625, %v6499
    %v6501 = vadd.f32 %v6500, %v570
    %6502 = vst [vmem:[#allocation14] sm:$0xff] %v6501
    // Predicated region
    $region50: #{tpu_custom_call.1} parent=1 // pred_check
      _
    $region51: #{tpu_custom_call.1} parent=1 // pred_check_branch
      %6504 = sbr.rel (0) target = $region53
    $region52: #{tpu_custom_call.1} parent=1 // pred_region
      %s6506 = ssub.s32 128, 128
      %6507 = vsyncadd [#allocation5], %s6506
      %s6509 = sshll.u32 [#allocation14], 4
      %s6510 = int_to_ptr.vmem [resolvable:$true] %s6509
      %6512 = dma.vmem_to_hbm [thread:$0]  %s6510, 128, %s6, [#allocation5]
    $region53: #{tpu_custom_call.1} parent=1 // pred_fallthru
      _
    // Predicated region
    $region54: #{tpu_custom_call.1} parent=1 // pred_check
      _
    $region55: #{tpu_custom_call.1} parent=1 // pred_check_branch
      %6514 = sbr.rel (0) target = $region57
    $region56: #{tpu_custom_call.1} parent=1 // pred_region
      %6515 = dma.done [#allocation5], 128
    $region57: #{tpu_custom_call.1} parent=1 // pred_fallthru
      _
    %6516 = vsyncpa [#allocation4], 1
    %6517 = vsyncpa [#allocation7], 1
    %6518 = vsyncpa [#allocation10], 1
    %6519 = vsyncpa [#allocation13], 1
    %6520 = vsyncpa [#allocation5], 1

</llo_original>
